<compile_context>
chip_gen: v7x
topology: tpu7x:2x2x1
jax: 0.10.0
libtpu: 0.0.40
codegen_flags: <defaults>
</compile_context>

<pallas_src>
import math
import functools

import jax
import jax.numpy as jnp
from jax.experimental import pallas as pl
from jax.experimental.pallas import tpu as pltpu


# ----------------------------- Pallas kernel -------------------------------

def _branch_kernel(patches_ref, convw_ref, pe_ref, inw_ref, ow_ref,
                   l1w_ref, l1b_ref, l2w_ref, vecs_ref, out_ref,
                   *, B, S, E, nhead):
    """One full modality branch: conv+PE, encoder layer, mean pool.

    Activation layout: (B*S, E), rows ordered (batch, seq).
    vecs_ref rows: 0 conv_b | 1 in_proj_b (3E) | 2 out_proj_b | 3 lin2_b
                   4 norm1_g | 5 norm1_b | 6 norm2_g | 7 norm2_b
    """
    f32, bf16 = jnp.float32, jnp.bfloat16
    Dh = E // nhead
    scale = 1.0 / math.sqrt(Dh)

    vecs = vecs_ref[0]                       # (8, 3E) f32
    conv_b = vecs[0:1, :E]
    in_b = vecs[1:2, :]                      # (1, 3E)
    out_b = vecs[2:3, :E]
    l2b = vecs[3:4, :E]
    n1g, n1b = vecs[4:5, :E], vecs[5:6, :E]
    n2g, n2b = vecs[6:7, :E], vecs[7:8, :E]

    def ln(x, g, b):
        mu = jnp.mean(x, axis=-1, keepdims=True)
        xc = x - mu
        var = jnp.mean(xc * xc, axis=-1, keepdims=True)
        return xc * jax.lax.rsqrt(var + 1e-5) * g + b

    # --- conv-as-matmul + bias + positional encoding (PE broadcast in-kernel)
    conv = jnp.dot(patches_ref[0], convw_ref[0],
                   preferred_element_type=f32)               # (B*S, E)
    x = ((conv + conv_b).reshape(B, S, E) + pe_ref[...]).reshape(B * S, E)

    # --- multi-head self attention (batched over B, out-proj fused) ---
    qkv = (jnp.dot(x.astype(bf16), inw_ref[0],
                   preferred_element_type=f32) + in_b)       # (B*S, 3E) f32
    qkv_bf = qkv.astype(bf16).reshape(B, S, 3 * E)           # (B, S, 3E)

    head_outs = []
    for h in range(nhead):                                   # static unroll
        c0 = h * Dh
        q = qkv_bf[:, :, c0:c0 + Dh]                         # (B, S, Dh)
        k = qkv_bf[:, :, E + c0:E + c0 + Dh]
        v = qkv_bf[:, :, 2 * E + c0:2 * E + c0 + Dh]
        s = jnp.einsum('bqd,bkd->bqk', q, k,
                       preferred_element_type=f32) * scale   # (B, S, S) f32
        m = jnp.max(s, axis=-1, keepdims=True)
        p = jnp.exp(s - m)
        p = p * pl.reciprocal(jnp.sum(p, axis=-1, keepdims=True), approx=True)
        head_outs.append(jnp.einsum('bqk,bkd->bqd', p.astype(bf16), v,
                                    preferred_element_type=f32))
    heads = jnp.concatenate(head_outs, axis=-1).reshape(B * S, E)
    sa = (jnp.dot(heads.astype(bf16), ow_ref[0],
                  preferred_element_type=f32) + out_b)       # (B*S, E)

    x = ln(x + sa, n1g, n1b)

    # --- feed forward (bf16 MXU operands, f32 accumulation / elementwise) ---
    ff = (jnp.dot(x.astype(bf16), l1w_ref[0],
                  preferred_element_type=f32) + l1b_ref[0])  # (B*S, dff)
    ff = jnp.maximum(ff, 0.0)
    ff = (jnp.dot(ff.astype(bf16), l2w_ref[0],
                  preferred_element_type=f32) + l2b)
    x = ln(x + ff, n2g, n2b)

    # --- mean pool over sequence, per batch element (reshape + XLU reduce) ---
    out_ref[0] = jnp.mean(x.reshape(B, S, E), axis=1)        # (B, E)


# ------------------------------- JAX glue ----------------------------------

def im2col_3x3(x_nchw, k_pad):
    """NCHW -> (N*H*W, k_pad) patches, pad=1, taps ordered (cin, ky, kx)."""
    N, C, H, W = x_nchw.shape
    xp = jnp.pad(x_nchw, ((0, 0), (0, 0), (1, 1), (1, 1)))
    cols = []
    for c in range(C):
        for ky in range(3):
            for kx in range(3):
                cols.append(xp[:, c, ky:ky + H, kx:kx + W])   # (N, H, W)
    patches = jnp.stack(cols, axis=-1).reshape(N * H * W, C * 9)
    if k_pad > C * 9:
        patches = jnp.pad(patches, ((0, 0), (0, k_pad - C * 9)))
    return patches.astype(jnp.bfloat16)


def prep_conv_weight(conv_w, k_pad):
    """(Cout, Cin, 3, 3) torch layout -> (k_pad, Cout) bf16 matmul weight."""
    Cout, Cin, _, _ = conv_w.shape
    w2 = conv_w.reshape(Cout, Cin * 9).T                      # (Cin*9, Cout)
    return jnp.pad(w2, ((0, k_pad - Cin * 9), (0, 0))).astype(jnp.bfloat16)


def positional_encoding(length, dim):
    position = jnp.arange(length, dtype=jnp.float32)[:, None]
    div_term = jnp.exp(jnp.arange(0, dim, 2, dtype=jnp.float32)
                       * (-math.log(10000.0) / dim))
    angles = position * div_term
    pe = jnp.zeros((length, dim), jnp.float32)
    pe = pe.at[:, 0::2].set(jnp.sin(angles))
    pe = pe.at[:, 1::2].set(jnp.cos(angles))
    return pe                                                  # (length, dim)


def _pack_vecs(conv_b, enc, E):
    """Pack the small per-branch vectors into one (8, 3E) f32 array."""
    W = 3 * E

    def row(v):
        v = v.reshape(1, -1).astype(jnp.float32)
        return jnp.pad(v, ((0, 0), (0, W - v.shape[1])))

    return jnp.concatenate([
        row(conv_b), row(enc["in_proj_b"]), row(enc["out_proj_b"]),
        row(enc["lin2_b"]), row(enc["norm1_g"]), row(enc["norm1_b"]),
        row(enc["norm2_g"]), row(enc["norm2_b"]),
    ], axis=0)                                                 # (8, 3E)


def run_branches(params, audio, image, nhead):
    """Both modality branches in one pallas_call (grid=(2,), 'parallel')."""
    B, Ca, Ha, Wa = audio.shape
    Bi, Ci, Hi, Wi = image.shape
    assert B == Bi
    # TODO(synk): unequal per-branch seq length / d_model would need two
    # separate (grid=(1,)) calls instead of the stacked grid=(2,) call.
    assert Ha * Wa == Hi * Wi
    E = params["audio_conv_w"].shape[0]
    assert params["image_conv_w"].shape[0] == E and E % nhead == 0
    S = Ha * Wa
    dff = params["audio_enc"]["lin1_w"].shape[1]
    k_pad = ((max(Ca, Ci) * 9 + 7) // 8) * 8                   # common padded K

    pa, pi = params["audio_enc"], params["image_enc"]

    # Branch-stacked inputs (leading axis: 0 = audio, 1 = image).
    patches = jnp.stack([im2col_3x3(audio, k_pad),
                         im2col_3x3(image, k_pad)], axis=0)    # (2, B*S, k_pad)
    convw = jnp.stack([prep_conv_weight(params["audio_conv_w"], k_pad),
                       prep_conv_weight(params["image_conv_w"], k_pad)], axis=0)
    pe = positional_encoding(S, E)                             # (S, E)

    def stk_w(name):
        return jnp.stack([pa[name], pi[name]], axis=0).astype(jnp.bfloat16)

    inw, ow = stk_w("in_proj_w"), stk_w("out_proj_w")
    l1w, l2w = stk_w("lin1_w"), stk_w("lin2_w")
    l1b = jnp.stack([pa["lin1_b"].reshape(1, -1),
                     pi["lin1_b"].reshape(1, -1)], axis=0)     # (2, 1, dff) f32
    vecs = jnp.stack([_pack_vecs(params["audio_conv_b"], pa, E),
                      _pack_vecs(params["image_conv_b"], pi, E)], axis=0)

    return pl.pallas_call(
        functools.partial(_branch_kernel, B=B, S=S, E=E, nhead=nhead),
        out_shape=jax.ShapeDtypeStruct((2, B, E), jnp.float32),
        grid=(2,),
        in_specs=[
            pl.BlockSpec((1, B * S, k_pad), lambda g: (g, 0, 0)),  # patches
            pl.BlockSpec((1, k_pad, E), lambda g: (g, 0, 0)),      # conv w
            pl.BlockSpec((S, E), lambda g: (0, 0)),                # pos enc
            pl.BlockSpec((1, E, 3 * E), lambda g: (g, 0, 0)),      # in_proj w
            pl.BlockSpec((1, E, E), lambda g: (g, 0, 0)),          # out_proj w
            pl.BlockSpec((1, E, dff), lambda g: (g, 0, 0)),        # lin1 w
            pl.BlockSpec((1, 1, dff), lambda g: (g, 0, 0)),        # lin1 b
            pl.BlockSpec((1, dff, E), lambda g: (g, 0, 0)),        # lin2 w
            pl.BlockSpec((1, 8, 3 * E), lambda g: (g, 0, 0)),      # packed vecs
        ],
        out_specs=pl.BlockSpec((1, B, E), lambda g: (g, 0, 0)),
        compiler_params=pltpu.CompilerParams(
            dimension_semantics=("parallel",)),
    )(patches, convw, pe, inw, ow, l1w, l1b, l2w, vecs)


def model_forward(params, audio, image, nhead=4):
    """mode='both', use_ais=True, use_images=True path."""
    pooled = run_branches(params, audio, image, nhead)         # (2, B, E)
    # concat + fc_fusion: ~50 KFLOP -> plain XLA (a pallas_call costs more).
    fused = jnp.concatenate([pooled[0], pooled[1]], axis=-1)   # (B, 2E)
    h = jnp.maximum(fused @ params["fusion1_w"] + params["fusion1_b"], 0.0)
    return h @ params["fusion2_w"] + params["fusion2_b"]       # (B, num_classes)


# --------------------------- parameter creation -----------------------------

def init_params(key, num_classes=10, audio_dim=32, img_dim=32, dff=2048):
    keys = iter(jax.random.split(key, 64))

    def w(shape, scale=0.02):
        return jax.random.normal(next(keys), shape, jnp.float32) * scale

    def enc_layer(d):
        return dict(
            in_proj_w=w((d, 3 * d)), in_proj_b=w((3 * d,)),
            out_proj_w=w((d, d)),    out_proj_b=w((d,)),
            lin1_w=w((d, dff)),      lin1_b=w((dff,)),
            lin2_w=w((dff, d)),      lin2_b=w((d,)),
            norm1_g=jnp.ones((d,), jnp.float32),
            norm1_b=jnp.zeros((d,), jnp.float32),
            norm2_g=jnp.ones((d,), jnp.float32),
            norm2_b=jnp.zeros((d,), jnp.float32),
        )

    return dict(
        audio_conv_w=w((audio_dim, 1, 3, 3)), audio_conv_b=w((audio_dim,)),
        image_conv_w=w((img_dim, 3, 3, 3)),   image_conv_b=w((img_dim,)),
        audio_enc=enc_layer(audio_dim),
        image_enc=enc_layer(img_dim),
        # fc_audio / fc_image exist in the module but are unused in mode='both'
        fc_audio_w=w((audio_dim, num_classes)), fc_audio_b=w((num_classes,)),
        fc_image_w=w((img_dim, num_classes)),   fc_image_b=w((num_classes,)),
        fusion1_w=w((audio_dim + img_dim, 256)), fusion1_b=w((256,)),
        fusion2_w=w((256, num_classes)),         fusion2_b=w((num_classes,)),
    )


# --------------------------------- main -------------------------------------

if __name__ == "__main__":
    key = jax.random.PRNGKey(0)
    k_params, k_audio, k_image = jax.random.split(key, 3)

    params = init_params(k_params, num_classes=10, audio_dim=32, img_dim=32)

    # audio: NCHW (B=2, 1, 8, 8) -> seq len 64;  image: NCHW (B=2, 3, 8, 8)
    audio = jax.random.normal(k_audio, (2, 1, 8, 8), jnp.float32)
    image = jax.random.normal(k_image, (2, 3, 8, 8), jnp.float32)

    fwd = jax.jit(model_forward)
    out = fwd(params, audio, image)
    jax.block_until_ready(out)

    assert out.shape == (2, 10), out.shape
    print("KERNEL_OK")
</pallas_src>

<mosaic_0001>
module attributes {stable_mosaic.version = 11 : i64} {
  func.func @_branch_kernel(%arg0: i32, %arg1: memref<1x128x32xbf16, #tpu.memory_space<vmem>>, %arg2: memref<1x32x32xbf16, #tpu.memory_space<vmem>>, %arg3: memref<64x32xf32, #tpu.memory_space<vmem>>, %arg4: memref<1x32x96xbf16, #tpu.memory_space<vmem>>, %arg5: memref<1x32x32xbf16, #tpu.memory_space<vmem>>, %arg6: memref<1x32x2048xbf16, #tpu.memory_space<vmem>>, %arg7: memref<1x1x2048xf32, #tpu.memory_space<vmem>>, %arg8: memref<1x2048x32xbf16, #tpu.memory_space<vmem>>, %arg9: memref<1x8x96xf32, #tpu.memory_space<vmem>>, %arg10: memref<1x2x32xf32, #tpu.memory_space<vmem>>) attributes {dimension_semantics = [#tpu.dimension_semantics<parallel>], iteration_bounds = array<i64: 2>, scalar_prefetch = 0 : i64, scratch_operands = 0 : i64, tpu.core_type = #tpu.core_type<tc>, window_params = [{transform_indices = @transform_0, window_bounds = array<i64: 1, 128, 32>}, {transform_indices = @transform_1, window_bounds = array<i64: 1, 32, 32>}, {pipeline_mode = #tpu.pipeline_mode<synchronous>, transform_indices = @transform_2, window_bounds = array<i64: 64, 32>}, {transform_indices = @transform_3, window_bounds = array<i64: 1, 32, 96>}, {transform_indices = @transform_4, window_bounds = array<i64: 1, 32, 32>}, {transform_indices = @transform_5, window_bounds = array<i64: 1, 32, 2048>}, {transform_indices = @transform_6, window_bounds = array<i64: 1, 1, 2048>}, {transform_indices = @transform_7, window_bounds = array<i64: 1, 2048, 32>}, {transform_indices = @transform_8, window_bounds = array<i64: 1, 8, 96>}, {transform_indices = @transform_9, window_bounds = array<i64: 1, 2, 32>}]} {
    %c0 = arith.constant 0 : index
    %c0_0 = arith.constant 0 : index
    %c0_1 = arith.constant 0 : index
    %0 = vector.load %arg9[%c0, %c0_0, %c0_1] : memref<1x8x96xf32, #tpu.memory_space<vmem>>, vector<1x8x96xf32>
    %1 = vector.shape_cast %0 : vector<1x8x96xf32> to vector<8x96xf32>
    %2 = vector.extract_strided_slice %1 {offsets = [0, 0], sizes = [1, 32], strides = [1, 1]} : vector<8x96xf32> to vector<1x32xf32>
    %3 = vector.extract_strided_slice %1 {offsets = [1, 0], sizes = [1, 96], strides = [1, 1]} : vector<8x96xf32> to vector<1x96xf32>
    %4 = vector.extract_strided_slice %1 {offsets = [2, 0], sizes = [1, 32], strides = [1, 1]} : vector<8x96xf32> to vector<1x32xf32>
    %5 = vector.extract_strided_slice %1 {offsets = [3, 0], sizes = [1, 32], strides = [1, 1]} : vector<8x96xf32> to vector<1x32xf32>
    %6 = vector.extract_strided_slice %1 {offsets = [4, 0], sizes = [1, 32], strides = [1, 1]} : vector<8x96xf32> to vector<1x32xf32>
    %7 = vector.extract_strided_slice %1 {offsets = [5, 0], sizes = [1, 32], strides = [1, 1]} : vector<8x96xf32> to vector<1x32xf32>
    %8 = vector.extract_strided_slice %1 {offsets = [6, 0], sizes = [1, 32], strides = [1, 1]} : vector<8x96xf32> to vector<1x32xf32>
    %9 = vector.extract_strided_slice %1 {offsets = [7, 0], sizes = [1, 32], strides = [1, 1]} : vector<8x96xf32> to vector<1x32xf32>
    %c0_2 = arith.constant 0 : index
    %c0_3 = arith.constant 0 : index
    %c0_4 = arith.constant 0 : index
    %10 = vector.load %arg1[%c0_2, %c0_3, %c0_4] : memref<1x128x32xbf16, #tpu.memory_space<vmem>>, vector<1x128x32xbf16>
    %11 = vector.shape_cast %10 : vector<1x128x32xbf16> to vector<128x32xbf16>
    %c0_5 = arith.constant 0 : index
    %c0_6 = arith.constant 0 : index
    %c0_7 = arith.constant 0 : index
    %12 = vector.load %arg2[%c0_5, %c0_6, %c0_7] : memref<1x32x32xbf16, #tpu.memory_space<vmem>>, vector<1x32x32xbf16>
    %13 = vector.shape_cast %12 : vector<1x32x32xbf16> to vector<32x32xbf16>
    %cst = arith.constant dense<0.000000e+00> : vector<128x32xf32>
    %14 = tpu.matmul %11, %13, %cst {dimension_numbers = #tpu.dot_dimension_numbers<[1], [0], [0], [1], [0, 0, 1, 1], [], []>} : vector<128x32xbf16>, vector<32x32xbf16>, vector<128x32xf32> -> vector<128x32xf32>
    %15 = vector.broadcast %2 : vector<1x32xf32> to vector<128x32xf32>
    %16 = arith.addf %14, %15 : vector<128x32xf32>
    %17 = vector.shape_cast %16 : vector<128x32xf32> to vector<2x64x32xf32>
    %c0_8 = arith.constant 0 : index
    %c0_9 = arith.constant 0 : index
    %18 = vector.load %arg3[%c0_8, %c0_9] : memref<64x32xf32, #tpu.memory_space<vmem>>, vector<64x32xf32>
    %19 = vector.shape_cast %18 : vector<64x32xf32> to vector<1x64x32xf32>
    %20 = vector.broadcast %19 : vector<1x64x32xf32> to vector<2x64x32xf32>
    %21 = arith.addf %17, %20 : vector<2x64x32xf32>
    %22 = vector.shape_cast %21 : vector<2x64x32xf32> to vector<128x32xf32>
    %23 = arith.truncf %22 : vector<128x32xf32> to vector<128x32xbf16>
    %c0_10 = arith.constant 0 : index
    %c0_11 = arith.constant 0 : index
    %c0_12 = arith.constant 0 : index
    %24 = vector.load %arg4[%c0_10, %c0_11, %c0_12] : memref<1x32x96xbf16, #tpu.memory_space<vmem>>, vector<1x32x96xbf16>
    %25 = vector.shape_cast %24 : vector<1x32x96xbf16> to vector<32x96xbf16>
    %cst_13 = arith.constant dense<0.000000e+00> : vector<128x96xf32>
    %26 = tpu.matmul %23, %25, %cst_13 {dimension_numbers = #tpu.dot_dimension_numbers<[1], [0], [0], [1], [0, 0, 1, 1], [], []>} : vector<128x32xbf16>, vector<32x96xbf16>, vector<128x96xf32> -> vector<128x96xf32>
    %27 = vector.broadcast %3 : vector<1x96xf32> to vector<128x96xf32>
    %28 = arith.addf %26, %27 : vector<128x96xf32>
    %29 = arith.truncf %28 : vector<128x96xf32> to vector<128x96xbf16>
    %30 = vector.shape_cast %29 : vector<128x96xbf16> to vector<2x64x96xbf16>
    %31 = vector.extract_strided_slice %30 {offsets = [0, 0, 0], sizes = [2, 64, 8], strides = [1, 1, 1]} : vector<2x64x96xbf16> to vector<2x64x8xbf16>
    %32 = vector.extract_strided_slice %30 {offsets = [0, 0, 32], sizes = [2, 64, 8], strides = [1, 1, 1]} : vector<2x64x96xbf16> to vector<2x64x8xbf16>
    %33 = vector.extract_strided_slice %30 {offsets = [0, 0, 64], sizes = [2, 64, 8], strides = [1, 1, 1]} : vector<2x64x96xbf16> to vector<2x64x8xbf16>
    "tpu.trace_start"() <{level = 10 : i32, message = "bqd,bkd->bqk"}> : () -> ()
    %cst_14 = arith.constant dense<0.000000e+00> : vector<2x64x64xf32>
    %34 = tpu.matmul %31, %32, %cst_14 {dimension_numbers = #tpu.dot_dimension_numbers<[2], [2], [1], [1], [0, 0, 0, 1, 1, 1], [0], [0]>} : vector<2x64x8xbf16>, vector<2x64x8xbf16>, vector<2x64x64xf32> -> vector<2x64x64xf32>
    "tpu.trace_stop"() : () -> ()
    %cst_15 = arith.constant 0.353553385 : f32
    %35 = vector.broadcast %cst_15 : f32 to vector<2x64x64xf32>
    %36 = arith.mulf %34, %35 : vector<2x64x64xf32>
    %cst_16 = arith.constant dense<0xFF800000> : vector<2x64xf32>
    %37 = vector.multi_reduction <maximumf>, %36, %cst_16 [2] : vector<2x64x64xf32> to vector<2x64xf32>
    %38 = vector.shape_cast %37 : vector<2x64xf32> to vector<2x64x1xf32>
    %39 = vector.broadcast %38 : vector<2x64x1xf32> to vector<2x64x64xf32>
    %40 = arith.subf %36, %39 : vector<2x64x64xf32>
    %41 = math.exp %40 : vector<2x64x64xf32>
    %cst_17 = arith.constant dense<0.000000e+00> : vector<2x64xf32>
    %42 = vector.multi_reduction <add>, %41, %cst_17 [2] : vector<2x64x64xf32> to vector<2x64xf32>
    %43 = vector.shape_cast %42 : vector<2x64xf32> to vector<2x64x1xf32>
    %44 = tpu.reciprocal %43 {approx = true} : vector<2x64x1xf32> -> vector<2x64x1xf32>
    %45 = vector.broadcast %44 : vector<2x64x1xf32> to vector<2x64x64xf32>
    %46 = arith.mulf %41, %45 : vector<2x64x64xf32>
    %47 = arith.truncf %46 : vector<2x64x64xf32> to vector<2x64x64xbf16>
    "tpu.trace_start"() <{level = 10 : i32, message = "bqk,bkd->bqd"}> : () -> ()
    %cst_18 = arith.constant dense<0.000000e+00> : vector<2x64x8xf32>
    %48 = tpu.matmul %47, %33, %cst_18 {dimension_numbers = #tpu.dot_dimension_numbers<[2], [1], [1], [2], [0, 0, 0, 1, 1, 2], [0], [0]>} : vector<2x64x64xbf16>, vector<2x64x8xbf16>, vector<2x64x8xf32> -> vector<2x64x8xf32>
    "tpu.trace_stop"() : () -> ()
    %49 = vector.extract_strided_slice %30 {offsets = [0, 0, 8], sizes = [2, 64, 8], strides = [1, 1, 1]} : vector<2x64x96xbf16> to vector<2x64x8xbf16>
    %50 = vector.extract_strided_slice %30 {offsets = [0, 0, 40], sizes = [2, 64, 8], strides = [1, 1, 1]} : vector<2x64x96xbf16> to vector<2x64x8xbf16>
    %51 = vector.extract_strided_slice %30 {offsets = [0, 0, 72], sizes = [2, 64, 8], strides = [1, 1, 1]} : vector<2x64x96xbf16> to vector<2x64x8xbf16>
    "tpu.trace_start"() <{level = 10 : i32, message = "bqd,bkd->bqk"}> : () -> ()
    %cst_19 = arith.constant dense<0.000000e+00> : vector<2x64x64xf32>
    %52 = tpu.matmul %49, %50, %cst_19 {dimension_numbers = #tpu.dot_dimension_numbers<[2], [2], [1], [1], [0, 0, 0, 1, 1, 1], [0], [0]>} : vector<2x64x8xbf16>, vector<2x64x8xbf16>, vector<2x64x64xf32> -> vector<2x64x64xf32>
    "tpu.trace_stop"() : () -> ()
    %cst_20 = arith.constant 0.353553385 : f32
    %53 = vector.broadcast %cst_20 : f32 to vector<2x64x64xf32>
    %54 = arith.mulf %52, %53 : vector<2x64x64xf32>
    %cst_21 = arith.constant dense<0xFF800000> : vector<2x64xf32>
    %55 = vector.multi_reduction <maximumf>, %54, %cst_21 [2] : vector<2x64x64xf32> to vector<2x64xf32>
    %56 = vector.shape_cast %55 : vector<2x64xf32> to vector<2x64x1xf32>
    %57 = vector.broadcast %56 : vector<2x64x1xf32> to vector<2x64x64xf32>
    %58 = arith.subf %54, %57 : vector<2x64x64xf32>
    %59 = math.exp %58 : vector<2x64x64xf32>
    %cst_22 = arith.constant dense<0.000000e+00> : vector<2x64xf32>
    %60 = vector.multi_reduction <add>, %59, %cst_22 [2] : vector<2x64x64xf32> to vector<2x64xf32>
    %61 = vector.shape_cast %60 : vector<2x64xf32> to vector<2x64x1xf32>
    %62 = tpu.reciprocal %61 {approx = true} : vector<2x64x1xf32> -> vector<2x64x1xf32>
    %63 = vector.broadcast %62 : vector<2x64x1xf32> to vector<2x64x64xf32>
    %64 = arith.mulf %59, %63 : vector<2x64x64xf32>
    %65 = arith.truncf %64 : vector<2x64x64xf32> to vector<2x64x64xbf16>
    "tpu.trace_start"() <{level = 10 : i32, message = "bqk,bkd->bqd"}> : () -> ()
    %cst_23 = arith.constant dense<0.000000e+00> : vector<2x64x8xf32>
    %66 = tpu.matmul %65, %51, %cst_23 {dimension_numbers = #tpu.dot_dimension_numbers<[2], [1], [1], [2], [0, 0, 0, 1, 1, 2], [0], [0]>} : vector<2x64x64xbf16>, vector<2x64x8xbf16>, vector<2x64x8xf32> -> vector<2x64x8xf32>
    "tpu.trace_stop"() : () -> ()
    %67 = vector.extract_strided_slice %30 {offsets = [0, 0, 16], sizes = [2, 64, 8], strides = [1, 1, 1]} : vector<2x64x96xbf16> to vector<2x64x8xbf16>
    %68 = vector.extract_strided_slice %30 {offsets = [0, 0, 48], sizes = [2, 64, 8], strides = [1, 1, 1]} : vector<2x64x96xbf16> to vector<2x64x8xbf16>
    %69 = vector.extract_strided_slice %30 {offsets = [0, 0, 80], sizes = [2, 64, 8], strides = [1, 1, 1]} : vector<2x64x96xbf16> to vector<2x64x8xbf16>
    "tpu.trace_start"() <{level = 10 : i32, message = "bqd,bkd->bqk"}> : () -> ()
    %cst_24 = arith.constant dense<0.000000e+00> : vector<2x64x64xf32>
    %70 = tpu.matmul %67, %68, %cst_24 {dimension_numbers = #tpu.dot_dimension_numbers<[2], [2], [1], [1], [0, 0, 0, 1, 1, 1], [0], [0]>} : vector<2x64x8xbf16>, vector<2x64x8xbf16>, vector<2x64x64xf32> -> vector<2x64x64xf32>
    "tpu.trace_stop"() : () -> ()
    %cst_25 = arith.constant 0.353553385 : f32
    %71 = vector.broadcast %cst_25 : f32 to vector<2x64x64xf32>
    %72 = arith.mulf %70, %71 : vector<2x64x64xf32>
    %cst_26 = arith.constant dense<0xFF800000> : vector<2x64xf32>
    %73 = vector.multi_reduction <maximumf>, %72, %cst_26 [2] : vector<2x64x64xf32> to vector<2x64xf32>
    %74 = vector.shape_cast %73 : vector<2x64xf32> to vector<2x64x1xf32>
    %75 = vector.broadcast %74 : vector<2x64x1xf32> to vector<2x64x64xf32>
    %76 = arith.subf %72, %75 : vector<2x64x64xf32>
    %77 = math.exp %76 : vector<2x64x64xf32>
    %cst_27 = arith.constant dense<0.000000e+00> : vector<2x64xf32>
    %78 = vector.multi_reduction <add>, %77, %cst_27 [2] : vector<2x64x64xf32> to vector<2x64xf32>
    %79 = vector.shape_cast %78 : vector<2x64xf32> to vector<2x64x1xf32>
    %80 = tpu.reciprocal %79 {approx = true} : vector<2x64x1xf32> -> vector<2x64x1xf32>
    %81 = vector.broadcast %80 : vector<2x64x1xf32> to vector<2x64x64xf32>
    %82 = arith.mulf %77, %81 : vector<2x64x64xf32>
    %83 = arith.truncf %82 : vector<2x64x64xf32> to vector<2x64x64xbf16>
    "tpu.trace_start"() <{level = 10 : i32, message = "bqk,bkd->bqd"}> : () -> ()
    %cst_28 = arith.constant dense<0.000000e+00> : vector<2x64x8xf32>
    %84 = tpu.matmul %83, %69, %cst_28 {dimension_numbers = #tpu.dot_dimension_numbers<[2], [1], [1], [2], [0, 0, 0, 1, 1, 2], [0], [0]>} : vector<2x64x64xbf16>, vector<2x64x8xbf16>, vector<2x64x8xf32> -> vector<2x64x8xf32>
    "tpu.trace_stop"() : () -> ()
    %85 = vector.extract_strided_slice %30 {offsets = [0, 0, 24], sizes = [2, 64, 8], strides = [1, 1, 1]} : vector<2x64x96xbf16> to vector<2x64x8xbf16>
    %86 = vector.extract_strided_slice %30 {offsets = [0, 0, 56], sizes = [2, 64, 8], strides = [1, 1, 1]} : vector<2x64x96xbf16> to vector<2x64x8xbf16>
    %87 = vector.extract_strided_slice %30 {offsets = [0, 0, 88], sizes = [2, 64, 8], strides = [1, 1, 1]} : vector<2x64x96xbf16> to vector<2x64x8xbf16>
    "tpu.trace_start"() <{level = 10 : i32, message = "bqd,bkd->bqk"}> : () -> ()
    %cst_29 = arith.constant dense<0.000000e+00> : vector<2x64x64xf32>
    %88 = tpu.matmul %85, %86, %cst_29 {dimension_numbers = #tpu.dot_dimension_numbers<[2], [2], [1], [1], [0, 0, 0, 1, 1, 1], [0], [0]>} : vector<2x64x8xbf16>, vector<2x64x8xbf16>, vector<2x64x64xf32> -> vector<2x64x64xf32>
    "tpu.trace_stop"() : () -> ()
    %cst_30 = arith.constant 0.353553385 : f32
    %89 = vector.broadcast %cst_30 : f32 to vector<2x64x64xf32>
    %90 = arith.mulf %88, %89 : vector<2x64x64xf32>
    %cst_31 = arith.constant dense<0xFF800000> : vector<2x64xf32>
    %91 = vector.multi_reduction <maximumf>, %90, %cst_31 [2] : vector<2x64x64xf32> to vector<2x64xf32>
    %92 = vector.shape_cast %91 : vector<2x64xf32> to vector<2x64x1xf32>
    %93 = vector.broadcast %92 : vector<2x64x1xf32> to vector<2x64x64xf32>
    %94 = arith.subf %90, %93 : vector<2x64x64xf32>
    %95 = math.exp %94 : vector<2x64x64xf32>
    %cst_32 = arith.constant dense<0.000000e+00> : vector<2x64xf32>
    %96 = vector.multi_reduction <add>, %95, %cst_32 [2] : vector<2x64x64xf32> to vector<2x64xf32>
    %97 = vector.shape_cast %96 : vector<2x64xf32> to vector<2x64x1xf32>
    %98 = tpu.reciprocal %97 {approx = true} : vector<2x64x1xf32> -> vector<2x64x1xf32>
    %99 = vector.broadcast %98 : vector<2x64x1xf32> to vector<2x64x64xf32>
    %100 = arith.mulf %95, %99 : vector<2x64x64xf32>
    %101 = arith.truncf %100 : vector<2x64x64xf32> to vector<2x64x64xbf16>
    "tpu.trace_start"() <{level = 10 : i32, message = "bqk,bkd->bqd"}> : () -> ()
    %cst_33 = arith.constant dense<0.000000e+00> : vector<2x64x8xf32>
    %102 = tpu.matmul %101, %87, %cst_33 {dimension_numbers = #tpu.dot_dimension_numbers<[2], [1], [1], [2], [0, 0, 0, 1, 1, 2], [0], [0]>} : vector<2x64x64xbf16>, vector<2x64x8xbf16>, vector<2x64x8xf32> -> vector<2x64x8xf32>
    "tpu.trace_stop"() : () -> ()
    %103 = tpu.concatenate %48, %66, %84, %102 in 2 : vector<2x64x8xf32>, vector<2x64x8xf32>, vector<2x64x8xf32>, vector<2x64x8xf32> -> vector<2x64x32xf32>
    %104 = vector.shape_cast %103 : vector<2x64x32xf32> to vector<128x32xf32>
    %105 = arith.truncf %104 : vector<128x32xf32> to vector<128x32xbf16>
    %c0_34 = arith.constant 0 : index
    %c0_35 = arith.constant 0 : index
    %c0_36 = arith.constant 0 : index
    %106 = vector.load %arg5[%c0_34, %c0_35, %c0_36] : memref<1x32x32xbf16, #tpu.memory_space<vmem>>, vector<1x32x32xbf16>
    %107 = vector.shape_cast %106 : vector<1x32x32xbf16> to vector<32x32xbf16>
    %cst_37 = arith.constant dense<0.000000e+00> : vector<128x32xf32>
    %108 = tpu.matmul %105, %107, %cst_37 {dimension_numbers = #tpu.dot_dimension_numbers<[1], [0], [0], [1], [0, 0, 1, 1], [], []>} : vector<128x32xbf16>, vector<32x32xbf16>, vector<128x32xf32> -> vector<128x32xf32>
    %109 = vector.broadcast %4 : vector<1x32xf32> to vector<128x32xf32>
    %110 = arith.addf %108, %109 : vector<128x32xf32>
    %111 = arith.addf %22, %110 : vector<128x32xf32>
    %cst_38 = arith.constant dense<0.000000e+00> : vector<128xf32>
    %112 = vector.multi_reduction <add>, %111, %cst_38 [1] : vector<128x32xf32> to vector<128xf32>
    %113 = vector.shape_cast %112 : vector<128xf32> to vector<128x1xf32>
    %cst_39 = arith.constant 3.200000e+01 : f32
    %114 = vector.broadcast %cst_39 : f32 to vector<128x1xf32>
    %115 = arith.divf %113, %114 : vector<128x1xf32>
    %116 = vector.broadcast %115 : vector<128x1xf32> to vector<128x32xf32>
    %117 = arith.subf %111, %116 : vector<128x32xf32>
    %118 = arith.mulf %117, %117 : vector<128x32xf32>
    %cst_40 = arith.constant dense<0.000000e+00> : vector<128xf32>
    %119 = vector.multi_reduction <add>, %118, %cst_40 [1] : vector<128x32xf32> to vector<128xf32>
    %120 = vector.shape_cast %119 : vector<128xf32> to vector<128x1xf32>
    %cst_41 = arith.constant 3.200000e+01 : f32
    %121 = vector.broadcast %cst_41 : f32 to vector<128x1xf32>
    %122 = arith.divf %120, %121 : vector<128x1xf32>
    %cst_42 = arith.constant 9.99999974E-6 : f32
    %123 = vector.broadcast %cst_42 : f32 to vector<128x1xf32>
    %124 = arith.addf %122, %123 : vector<128x1xf32>
    %125 = math.rsqrt %124 : vector<128x1xf32>
    %126 = vector.broadcast %125 : vector<128x1xf32> to vector<128x32xf32>
    %127 = arith.mulf %117, %126 : vector<128x32xf32>
    %128 = vector.broadcast %6 : vector<1x32xf32> to vector<128x32xf32>
    %129 = arith.mulf %127, %128 : vector<128x32xf32>
    %130 = vector.broadcast %7 : vector<1x32xf32> to vector<128x32xf32>
    %131 = arith.addf %129, %130 : vector<128x32xf32>
    %132 = arith.truncf %131 : vector<128x32xf32> to vector<128x32xbf16>
    %c0_43 = arith.constant 0 : index
    %c0_44 = arith.constant 0 : index
    %c0_45 = arith.constant 0 : index
    %133 = vector.load %arg6[%c0_43, %c0_44, %c0_45] : memref<1x32x2048xbf16, #tpu.memory_space<vmem>>, vector<1x32x2048xbf16>
    %134 = vector.shape_cast %133 : vector<1x32x2048xbf16> to vector<32x2048xbf16>
    %cst_46 = arith.constant dense<0.000000e+00> : vector<128x2048xf32>
    %135 = tpu.matmul %132, %134, %cst_46 {dimension_numbers = #tpu.dot_dimension_numbers<[1], [0], [0], [1], [0, 0, 1, 1], [], []>} : vector<128x32xbf16>, vector<32x2048xbf16>, vector<128x2048xf32> -> vector<128x2048xf32>
    %c0_47 = arith.constant 0 : index
    %c0_48 = arith.constant 0 : index
    %c0_49 = arith.constant 0 : index
    %136 = vector.load %arg7[%c0_47, %c0_48, %c0_49] : memref<1x1x2048xf32, #tpu.memory_space<vmem>>, vector<1x1x2048xf32>
    %137 = vector.shape_cast %136 : vector<1x1x2048xf32> to vector<1x2048xf32>
    %138 = vector.broadcast %137 : vector<1x2048xf32> to vector<128x2048xf32>
    %139 = arith.addf %135, %138 : vector<128x2048xf32>
    %cst_50 = arith.constant 0.000000e+00 : f32
    %140 = vector.broadcast %cst_50 : f32 to vector<128x2048xf32>
    %141 = arith.maximumf %139, %140 : vector<128x2048xf32>
    %142 = arith.truncf %141 : vector<128x2048xf32> to vector<128x2048xbf16>
    %c0_51 = arith.constant 0 : index
    %c0_52 = arith.constant 0 : index
    %c0_53 = arith.constant 0 : index
    %143 = vector.load %arg8[%c0_51, %c0_52, %c0_53] : memref<1x2048x32xbf16, #tpu.memory_space<vmem>>, vector<1x2048x32xbf16>
    %144 = vector.shape_cast %143 : vector<1x2048x32xbf16> to vector<2048x32xbf16>
    %cst_54 = arith.constant dense<0.000000e+00> : vector<128x32xf32>
    %145 = tpu.matmul %142, %144, %cst_54 {dimension_numbers = #tpu.dot_dimension_numbers<[1], [0], [0], [1], [0, 0, 1, 1], [], []>} : vector<128x2048xbf16>, vector<2048x32xbf16>, vector<128x32xf32> -> vector<128x32xf32>
    %146 = vector.broadcast %5 : vector<1x32xf32> to vector<128x32xf32>
    %147 = arith.addf %145, %146 : vector<128x32xf32>
    %148 = arith.addf %131, %147 : vector<128x32xf32>
    %cst_55 = arith.constant dense<0.000000e+00> : vector<128xf32>
    %149 = vector.multi_reduction <add>, %148, %cst_55 [1] : vector<128x32xf32> to vector<128xf32>
    %150 = vector.shape_cast %149 : vector<128xf32> to vector<128x1xf32>
    %cst_56 = arith.constant 3.200000e+01 : f32
    %151 = vector.broadcast %cst_56 : f32 to vector<128x1xf32>
    %152 = arith.divf %150, %151 : vector<128x1xf32>
    %153 = vector.broadcast %152 : vector<128x1xf32> to vector<128x32xf32>
    %154 = arith.subf %148, %153 : vector<128x32xf32>
    %155 = arith.mulf %154, %154 : vector<128x32xf32>
    %cst_57 = arith.constant dense<0.000000e+00> : vector<128xf32>
    %156 = vector.multi_reduction <add>, %155, %cst_57 [1] : vector<128x32xf32> to vector<128xf32>
    %157 = vector.shape_cast %156 : vector<128xf32> to vector<128x1xf32>
    %cst_58 = arith.constant 3.200000e+01 : f32
    %158 = vector.broadcast %cst_58 : f32 to vector<128x1xf32>
    %159 = arith.divf %157, %158 : vector<128x1xf32>
    %cst_59 = arith.constant 9.99999974E-6 : f32
    %160 = vector.broadcast %cst_59 : f32 to vector<128x1xf32>
    %161 = arith.addf %159, %160 : vector<128x1xf32>
    %162 = math.rsqrt %161 : vector<128x1xf32>
    %163 = vector.broadcast %162 : vector<128x1xf32> to vector<128x32xf32>
    %164 = arith.mulf %154, %163 : vector<128x32xf32>
    %165 = vector.broadcast %8 : vector<1x32xf32> to vector<128x32xf32>
    %166 = arith.mulf %164, %165 : vector<128x32xf32>
    %167 = vector.broadcast %9 : vector<1x32xf32> to vector<128x32xf32>
    %168 = arith.addf %166, %167 : vector<128x32xf32>
    %169 = vector.shape_cast %168 : vector<128x32xf32> to vector<2x64x32xf32>
    %cst_60 = arith.constant dense<0.000000e+00> : vector<2x32xf32>
    %170 = vector.multi_reduction <add>, %169, %cst_60 [1] : vector<2x64x32xf32> to vector<2x32xf32>
    %cst_61 = arith.constant 6.400000e+01 : f32
    %171 = vector.broadcast %cst_61 : f32 to vector<2x32xf32>
    %172 = arith.divf %170, %171 : vector<2x32xf32>
    %c0_62 = arith.constant 0 : index
    %c0_63 = arith.constant 0 : index
    %c0_64 = arith.constant 0 : index
    %173 = vector.load %arg10[%c0_62, %c0_63, %c0_64] : memref<1x2x32xf32, #tpu.memory_space<vmem>>, vector<1x2x32xf32>
    %174 = vector.shape_cast %173 : vector<1x2x32xf32> to vector<2x32xf32>
    %175 = vector.shape_cast %172 : vector<2x32xf32> to vector<1x2x32xf32>
    tpu.vector_store %arg10[%c0_62, %c0_63, %c0_64], %175 {strides = array<i32>} : memref<1x2x32xf32, #tpu.memory_space<vmem>>, vector<1x2x32xf32>,
    return
  }
  func.func @transform_0(%arg0: i32) -> (i32, i32, i32) {
    %c0_i32 = arith.constant 0 : i32
    %c0_i32_0 = arith.constant 0 : i32
    %c0_i32_1 = arith.constant 0 : i32
    return %arg0, %c0_i32, %c0_i32_0 : i32, i32, i32
  }
  func.func @transform_1(%arg0: i32) -> (i32, i32, i32) {
    %c0_i32 = arith.constant 0 : i32
    %c0_i32_0 = arith.constant 0 : i32
    %c0_i32_1 = arith.constant 0 : i32
    return %arg0, %c0_i32, %c0_i32_0 : i32, i32, i32
  }
  func.func @transform_2(%arg0: i32) -> (i32, i32) {
    %c0_i32 = arith.constant 0 : i32
    %c0_i32_0 = arith.constant 0 : i32
    %c0_i32_1 = arith.constant 0 : i32
    return %c0_i32, %c0_i32_0 : i32, i32
  }
  func.func @transform_3(%arg0: i32) -> (i32, i32, i32) {
    %c0_i32 = arith.constant 0 : i32
    %c0_i32_0 = arith.constant 0 : i32
    %c0_i32_1 = arith.constant 0 : i32
    return %arg0, %c0_i32, %c0_i32_0 : i32, i32, i32
  }
  func.func @transform_4(%arg0: i32) -> (i32, i32, i32) {
    %c0_i32 = arith.constant 0 : i32
    %c0_i32_0 = arith.constant 0 : i32
    %c0_i32_1 = arith.constant 0 : i32
    return %arg0, %c0_i32, %c0_i32_0 : i32, i32, i32
  }
  func.func @transform_5(%arg0: i32) -> (i32, i32, i32) {
    %c0_i32 = arith.constant 0 : i32
    %c0_i32_0 = arith.constant 0 : i32
    %c0_i32_1 = arith.constant 0 : i32
    return %arg0, %c0_i32, %c0_i32_0 : i32, i32, i32
  }
  func.func @transform_6(%arg0: i32) -> (i32, i32, i32) {
    %c0_i32 = arith.constant 0 : i32
    %c0_i32_0 = arith.constant 0 : i32
    %c0_i32_1 = arith.constant 0 : i32
    return %arg0, %c0_i32, %c0_i32_0 : i32, i32, i32
  }
  func.func @transform_7(%arg0: i32) -> (i32, i32, i32) {
    %c0_i32 = arith.constant 0 : i32
    %c0_i32_0 = arith.constant 0 : i32
    %c0_i32_1 = arith.constant 0 : i32
    return %arg0, %c0_i32, %c0_i32_0 : i32, i32, i32
  }
  func.func @transform_8(%arg0: i32) -> (i32, i32, i32) {
    %c0_i32 = arith.constant 0 : i32
    %c0_i32_0 = arith.constant 0 : i32
    %c0_i32_1 = arith.constant 0 : i32
    return %arg0, %c0_i32, %c0_i32_0 : i32, i32, i32
  }
  func.func @transform_9(%arg0: i32) -> (i32, i32, i32) {
    %c0_i32 = arith.constant 0 : i32
    %c0_i32_0 = arith.constant 0 : i32
    %c0_i32_1 = arith.constant 0 : i32
    return %arg0, %c0_i32, %c0_i32_0 : i32, i32, i32
  }
}

</mosaic_0001>

<llo_original>
// kernel: model_forward.1
$region0: #{model_forward.1}
  #allocation0 [shape = 'u32[]', space=smem, size = 0x4, offset = 0x4, fixed_abs, tag = 'smem constant byte address 0x4 - core index']
  #allocation1 [shape = 'u32[144,128]{1,0:T(1,128)}', space=vmem, size = 0x12000, scoped, tag = 'internal scratch']
  %s0 = inlined_call_operand.vmem [shape: bf16[2,128,32], index: 0, kind: input, shape index: {}]
  %s1 = inlined_call_operand.vmem [shape: bf16[2,32,32], index: 1, kind: input, shape index: {}]
  %s2 = inlined_call_operand.vmem [shape: f32[64,32], index: 2, kind: input, shape index: {}]
  %s3 = inlined_call_operand.vmem [shape: bf16[2,32,96], index: 3, kind: input, shape index: {}]
  %s4 = inlined_call_operand.vmem [shape: bf16[2,32,32], index: 4, kind: input, shape index: {}]
  %s5 = inlined_call_operand.vmem [shape: bf16[2,32,2048], index: 5, kind: input, shape index: {}]
  %s6 = inlined_call_operand.vmem [shape: f32[2,1,2048], index: 6, kind: input, shape index: {}]
  %s7 = inlined_call_operand.vmem [shape: bf16[2,2048,32], index: 7, kind: input, shape index: {}]
  %s8 = inlined_call_operand.vmem [shape: f32[2,8,96], index: 8, kind: input, shape index: {}]
  %s9 = inlined_call_operand.vmem [shape: f32[2,2,32], index: 9, kind: output, shape index: {}]
  %s10 = sld [smem:[#allocation0]]
  $region69: #{model_forward.1} parent=0
    _
  %s12 = ssub.s32 1, %s10
  %s13 = scalar_select 0, %s12, %s10
  loop: start=0, step=1, limit=4
  $region2: #{model_forward.1} parent=0 // loop_pre_header
    _
  $region3: #{model_forward.1} parent=0 // loop_header
    %s15 = sphi 0, %s19
    %p16 = scmp.ge.s32.totalorder %s15, 4
    %s25 = sphi 0, %s27
    %s28 = sphi 0, %s25
    %s29 = sphi 0, %s28
    %s45 = sphi 0, %s29
    %s51 = sphi 0, %s53
    %s54 = sphi 0, %s51
    %s55 = sphi 0, %s54
    %s71 = sphi 0, %s55
    %s75 = sphi 0, %s75
    %s77 = sphi 0, %s75
    %s78 = sphi 0, %s77
    %s92 = sphi 0, %s78
    %s98 = sphi 0, %s100
    %s101 = sphi 0, %s98
    %s102 = sphi 0, %s101
    %s118 = sphi 0, %s102
    %s124 = sphi 0, %s126
    %s127 = sphi 0, %s124
    %s128 = sphi 0, %s127
    %s144 = sphi 0, %s128
    %s150 = sphi 0, %s152
    %s153 = sphi 0, %s150
    %s154 = sphi 0, %s153
    %s170 = sphi 0, %s154
    %s176 = sphi 0, %s178
    %s179 = sphi 0, %s176
    %s180 = sphi 0, %s179
    %s196 = sphi 0, %s180
    %s202 = sphi 0, %s204
    %s205 = sphi 0, %s202
    %s206 = sphi 0, %s205
    %s222 = sphi 0, %s206
    %s228 = sphi 0, %s230
    %s231 = sphi 0, %s228
    %s232 = sphi 0, %s231
    %s248 = sphi 0, %s232
    %s254 = sphi 0, %s256
    %s257 = sphi 0, %s254
    %s258 = sphi 0, %s257
    %s274 = sphi 0, %s258
  $region4: #{model_forward.1} parent=0 // loop_header_branch
    %18 = sbr.rel (%p16) target = $region8
  $region5: #{model_forward.1} parent=0 // loop_body
    %s20 = ssub.s32 %s15, 1
    %s21 = ssub.s32 %s15, 2
    %s22 = sadd.s32 %s15, 1
    %s23 = ssub.s32 %s15, %s22
    %p24 = scmp.eq.s32.totalorder %s23, 0
    %s26 = sadd.s32 %s25, 1
    %s27 = scalar_select %p24, %s25, %s26
    %p30 = pneg %p24
    %p31 = scmp.eq.s32.totalorder %s15, 1
    %p32 = por %p30, %p31
    %p33 = scmp.ne.s32.totalorder %s25, %s28
    %p34 = scmp.eq.s32.totalorder %s15, 0
    %p35 = por %p33, %p34
    %p36 = scmp.ne.s32.totalorder %s25, %s28
    %p37 = scmp.eq.s32.totalorder %s20, 1
    %p38 = por %p36, %p37
    %p39 = scmp.ne.s32.totalorder %s28, %s29
    %p40 = scmp.eq.s32.totalorder %s20, 0
    %p41 = por %p39, %p40
    %p42 = scmp.ne.s32.totalorder %s28, %s29
    %p43 = scmp.eq.s32.totalorder %s21, 1
    %p44 = por %p42, %p43
    %p46 = scmp.ne.s32.totalorder %s29, %s45
    %p47 = scmp.eq.s32.totalorder %s21, 0
    %p48 = por %p46, %p47
    %s49 = ssub.s32 %s15, %s22
    %p50 = scmp.eq.s32.totalorder %s49, 0
    %s52 = sadd.s32 %s51, 1
    %s53 = scalar_select %p50, %s51, %s52
    %p56 = pneg %p50
    %p57 = scmp.eq.s32.totalorder %s15, 1
    %p58 = por %p56, %p57
    %p59 = scmp.ne.s32.totalorder %s51, %s54
    %p60 = scmp.eq.s32.totalorder %s15, 0
    %p61 = por %p59, %p60
    %p62 = scmp.ne.s32.totalorder %s51, %s54
    %p63 = scmp.eq.s32.totalorder %s20, 1
    %p64 = por %p62, %p63
    %p65 = scmp.ne.s32.totalorder %s54, %s55
    %p66 = scmp.eq.s32.totalorder %s20, 0
    %p67 = por %p65, %p66
    %p68 = scmp.ne.s32.totalorder %s54, %s55
    %p69 = scmp.eq.s32.totalorder %s21, 1
    %p70 = por %p68, %p69
    %p72 = scmp.ne.s32.totalorder %s55, %s71
    %p73 = scmp.eq.s32.totalorder %s21, 0
    %p74 = por %p72, %p73
    %s76 = sadd.s32 %s75, 1
    %p79 = scmp.eq.s32.totalorder %s15, 1
    %p80 = scmp.ne.s32.totalorder %s75, %s77
    %p81 = scmp.eq.s32.totalorder %s15, 0
    %p82 = por %p80, %p81
    %p83 = scmp.ne.s32.totalorder %s75, %s77
    %p84 = scmp.eq.s32.totalorder %s20, 1
    %p85 = por %p83, %p84
    %p86 = scmp.ne.s32.totalorder %s77, %s78
    %p87 = scmp.eq.s32.totalorder %s20, 0
    %p88 = por %p86, %p87
    %p89 = scmp.ne.s32.totalorder %s77, %s78
    %p90 = scmp.eq.s32.totalorder %s21, 1
    %p91 = por %p89, %p90
    %p93 = scmp.ne.s32.totalorder %s78, %s92
    %p94 = scmp.eq.s32.totalorder %s21, 0
    %p95 = por %p93, %p94
    %s96 = ssub.s32 %s15, %s22
    %p97 = scmp.eq.s32.totalorder %s96, 0
    %s99 = sadd.s32 %s98, 1
    %s100 = scalar_select %p97, %s98, %s99
    %p103 = pneg %p97
    %p104 = scmp.eq.s32.totalorder %s15, 1
    %p105 = por %p103, %p104
    %p106 = scmp.ne.s32.totalorder %s98, %s101
    %p107 = scmp.eq.s32.totalorder %s15, 0
    %p108 = por %p106, %p107
    %p109 = scmp.ne.s32.totalorder %s98, %s101
    %p110 = scmp.eq.s32.totalorder %s20, 1
    %p111 = por %p109, %p110
    %p112 = scmp.ne.s32.totalorder %s101, %s102
    %p113 = scmp.eq.s32.totalorder %s20, 0
    %p114 = por %p112, %p113
    %p115 = scmp.ne.s32.totalorder %s101, %s102
    %p116 = scmp.eq.s32.totalorder %s21, 1
    %p117 = por %p115, %p116
    %p119 = scmp.ne.s32.totalorder %s102, %s118
    %p120 = scmp.eq.s32.totalorder %s21, 0
    %p121 = por %p119, %p120
    %s122 = ssub.s32 %s15, %s22
    %p123 = scmp.eq.s32.totalorder %s122, 0
    %s125 = sadd.s32 %s124, 1
    %s126 = scalar_select %p123, %s124, %s125
    %p129 = pneg %p123
    %p130 = scmp.eq.s32.totalorder %s15, 1
    %p131 = por %p129, %p130
    %p132 = scmp.ne.s32.totalorder %s124, %s127
    %p133 = scmp.eq.s32.totalorder %s15, 0
    %p134 = por %p132, %p133
    %p135 = scmp.ne.s32.totalorder %s124, %s127
    %p136 = scmp.eq.s32.totalorder %s20, 1
    %p137 = por %p135, %p136
    %p138 = scmp.ne.s32.totalorder %s127, %s128
    %p139 = scmp.eq.s32.totalorder %s20, 0
    %p140 = por %p138, %p139
    %p141 = scmp.ne.s32.totalorder %s127, %s128
    %p142 = scmp.eq.s32.totalorder %s21, 1
    %p143 = por %p141, %p142
    %p145 = scmp.ne.s32.totalorder %s128, %s144
    %p146 = scmp.eq.s32.totalorder %s21, 0
    %p147 = por %p145, %p146
    %s148 = ssub.s32 %s15, %s22
    %p149 = scmp.eq.s32.totalorder %s148, 0
    %s151 = sadd.s32 %s150, 1
    %s152 = scalar_select %p149, %s150, %s151
    %p155 = pneg %p149
    %p156 = scmp.eq.s32.totalorder %s15, 1
    %p157 = por %p155, %p156
    %p158 = scmp.ne.s32.totalorder %s150, %s153
    %p159 = scmp.eq.s32.totalorder %s15, 0
    %p160 = por %p158, %p159
    %p161 = scmp.ne.s32.totalorder %s150, %s153
    %p162 = scmp.eq.s32.totalorder %s20, 1
    %p163 = por %p161, %p162
    %p164 = scmp.ne.s32.totalorder %s153, %s154
    %p165 = scmp.eq.s32.totalorder %s20, 0
    %p166 = por %p164, %p165
    %p167 = scmp.ne.s32.totalorder %s153, %s154
    %p168 = scmp.eq.s32.totalorder %s21, 1
    %p169 = por %p167, %p168
    %p171 = scmp.ne.s32.totalorder %s154, %s170
    %p172 = scmp.eq.s32.totalorder %s21, 0
    %p173 = por %p171, %p172
    %s174 = ssub.s32 %s15, %s22
    %p175 = scmp.eq.s32.totalorder %s174, 0
    %s177 = sadd.s32 %s176, 1
    %s178 = scalar_select %p175, %s176, %s177
    %p181 = pneg %p175
    %p182 = scmp.eq.s32.totalorder %s15, 1
    %p183 = por %p181, %p182
    %p184 = scmp.ne.s32.totalorder %s176, %s179
    %p185 = scmp.eq.s32.totalorder %s15, 0
    %p186 = por %p184, %p185
    %p187 = scmp.ne.s32.totalorder %s176, %s179
    %p188 = scmp.eq.s32.totalorder %s20, 1
    %p189 = por %p187, %p188
    %p190 = scmp.ne.s32.totalorder %s179, %s180
    %p191 = scmp.eq.s32.totalorder %s20, 0
    %p192 = por %p190, %p191
    %p193 = scmp.ne.s32.totalorder %s179, %s180
    %p194 = scmp.eq.s32.totalorder %s21, 1
    %p195 = por %p193, %p194
    %p197 = scmp.ne.s32.totalorder %s180, %s196
    %p198 = scmp.eq.s32.totalorder %s21, 0
    %p199 = por %p197, %p198
    %s200 = ssub.s32 %s15, %s22
    %p201 = scmp.eq.s32.totalorder %s200, 0
    %s203 = sadd.s32 %s202, 1
    %s204 = scalar_select %p201, %s202, %s203
    %p207 = pneg %p201
    %p208 = scmp.eq.s32.totalorder %s15, 1
    %p209 = por %p207, %p208
    %p210 = scmp.ne.s32.totalorder %s202, %s205
    %p211 = scmp.eq.s32.totalorder %s15, 0
    %p212 = por %p210, %p211
    %p213 = scmp.ne.s32.totalorder %s202, %s205
    %p214 = scmp.eq.s32.totalorder %s20, 1
    %p215 = por %p213, %p214
    %p216 = scmp.ne.s32.totalorder %s205, %s206
    %p217 = scmp.eq.s32.totalorder %s20, 0
    %p218 = por %p216, %p217
    %p219 = scmp.ne.s32.totalorder %s205, %s206
    %p220 = scmp.eq.s32.totalorder %s21, 1
    %p221 = por %p219, %p220
    %p223 = scmp.ne.s32.totalorder %s206, %s222
    %p224 = scmp.eq.s32.totalorder %s21, 0
    %p225 = por %p223, %p224
    %s226 = ssub.s32 %s15, %s22
    %p227 = scmp.eq.s32.totalorder %s226, 0
    %s229 = sadd.s32 %s228, 1
    %s230 = scalar_select %p227, %s228, %s229
    %p233 = pneg %p227
    %p234 = scmp.eq.s32.totalorder %s15, 1
    %p235 = por %p233, %p234
    %p236 = scmp.ne.s32.totalorder %s228, %s231
    %p237 = scmp.eq.s32.totalorder %s15, 0
    %p238 = por %p236, %p237
    %p239 = scmp.ne.s32.totalorder %s228, %s231
    %p240 = scmp.eq.s32.totalorder %s20, 1
    %p241 = por %p239, %p240
    %p242 = scmp.ne.s32.totalorder %s231, %s232
    %p243 = scmp.eq.s32.totalorder %s20, 0
    %p244 = por %p242, %p243
    %p245 = scmp.ne.s32.totalorder %s231, %s232
    %p246 = scmp.eq.s32.totalorder %s21, 1
    %p247 = por %p245, %p246
    %p249 = scmp.ne.s32.totalorder %s232, %s248
    %p250 = scmp.eq.s32.totalorder %s21, 0
    %p251 = por %p249, %p250
    %s252 = ssub.s32 %s15, %s22
    %p253 = scmp.eq.s32.totalorder %s252, 0
    %s255 = sadd.s32 %s254, 1
    %s256 = scalar_select %p253, %s254, %s255
    %p259 = pneg %p253
    %p260 = scmp.eq.s32.totalorder %s15, 1
    %p261 = por %p259, %p260
    %p262 = scmp.ne.s32.totalorder %s254, %s257
    %p263 = scmp.eq.s32.totalorder %s15, 0
    %p264 = por %p262, %p263
    %p265 = scmp.ne.s32.totalorder %s254, %s257
    %p266 = scmp.eq.s32.totalorder %s20, 1
    %p267 = por %p265, %p266
    %p268 = scmp.ne.s32.totalorder %s257, %s258
    %p269 = scmp.eq.s32.totalorder %s20, 0
    %p270 = por %p268, %p269
    %p271 = scmp.ne.s32.totalorder %s257, %s258
    %p272 = scmp.eq.s32.totalorder %s21, 1
    %p273 = por %p271, %p272
    %p275 = scmp.ne.s32.totalorder %s258, %s274
    %p276 = scmp.eq.s32.totalorder %s21, 0
    %p277 = por %p275, %p276
    %p278 = scmp.le.s32.totalorder 1, %s15
    %p279 = scmp.lt.s32.totalorder %s15, 3
    %p280 = pnand %p278, %p279
    %p281 = pneg %p280
    // Predicated region
    $region9: #{model_forward.1} parent=5 // pred_check
      _
    $region10: #{model_forward.1} parent=5 // pred_check_branch
      %283 = sbr.rel (%p280) target = $region12
    $region11: #{model_forward.1} parent=5 // pred_region
      %s284 = ssub.s32 %s15, 1
      // Predicated region
      $region13: #{model_forward.1} parent=11 // pred_check
        %p285 = pneg %p88
      $region14: #{model_forward.1} parent=11 // pred_check_branch
        %287 = sbr.rel (%p285) target = $region16
      $region15: #{model_forward.1} parent=11 // pred_region
        _
      $region16: #{model_forward.1} parent=11 // pred_fallthru
        _
    $region12: #{model_forward.1} parent=5 // pred_fallthru
      _
    %p288 = scmp.lt.s32.totalorder %s15, 2
    // Predicated region
    $region17: #{model_forward.1} parent=5 // pred_check
      %p289 = pneg %p288
    $region18: #{model_forward.1} parent=5 // pred_check_branch
      %291 = sbr.rel (%p289) target = $region20
    $region19: #{model_forward.1} parent=5 // pred_region
      // Predicated region
      $region21: #{model_forward.1} parent=19 // pred_check
        %p292 = pneg %p35
      $region22: #{model_forward.1} parent=19 // pred_check_branch
        %294 = sbr.rel (%p292) target = $region24
      $region23: #{model_forward.1} parent=19 // pred_region
        %p295 = scmp.lt.s32.totalorder %s15, 1
        %s296 = scalar_select %p295, %s15, 1
        %s297 = smul.addr %s296, 16
        %s298 = smul.addr %s297, 4
        %s299 = scalar_lea.vmem %s0, %s298
      $region24: #{model_forward.1} parent=19 // pred_fallthru
        _
      // Predicated region
      $region25: #{model_forward.1} parent=19 // pred_check
        %p300 = pneg %p61
      $region26: #{model_forward.1} parent=19 // pred_check_branch
        %302 = sbr.rel (%p300) target = $region28
      $region27: #{model_forward.1} parent=19 // pred_region
        %p303 = scmp.lt.s32.totalorder %s15, 1
        %s304 = scalar_select %p303, %s15, 1
        %s305 = smul.addr %s304, 4
        %s306 = smul.addr %s305, 4
        %s307 = scalar_lea.vmem %s1, %s306
      $region28: #{model_forward.1} parent=19 // pred_fallthru
        _
      // Predicated region
      $region29: #{model_forward.1} parent=19 // pred_check
        %p308 = pneg %p108
      $region30: #{model_forward.1} parent=19 // pred_check_branch
        %310 = sbr.rel (%p308) target = $region32
      $region31: #{model_forward.1} parent=19 // pred_region
        %p311 = scmp.lt.s32.totalorder %s15, 1
        %s312 = scalar_select %p311, %s15, 1
        %s313 = smul.addr %s312, 4
        %s314 = smul.addr %s313, 4
        %s315 = scalar_lea.vmem %s3, %s314
      $region32: #{model_forward.1} parent=19 // pred_fallthru
        _
      // Predicated region
      $region33: #{model_forward.1} parent=19 // pred_check
        %p316 = pneg %p134
      $region34: #{model_forward.1} parent=19 // pred_check_branch
        %318 = sbr.rel (%p316) target = $region36
      $region35: #{model_forward.1} parent=19 // pred_region
        %p319 = scmp.lt.s32.totalorder %s15, 1
        %s320 = scalar_select %p319, %s15, 1
        %s321 = smul.addr %s320, 4
        %s322 = smul.addr %s321, 4
        %s323 = scalar_lea.vmem %s4, %s322
      $region36: #{model_forward.1} parent=19 // pred_fallthru
        _
      // Predicated region
      $region37: #{model_forward.1} parent=19 // pred_check
        %p324 = pneg %p160
      $region38: #{model_forward.1} parent=19 // pred_check_branch
        %326 = sbr.rel (%p324) target = $region40
      $region39: #{model_forward.1} parent=19 // pred_region
        %p327 = scmp.lt.s32.totalorder %s15, 1
        %s328 = scalar_select %p327, %s15, 1
        %s329 = smul.addr %s328, 64
        %s330 = smul.addr %s329, 4
        %s331 = scalar_lea.vmem %s5, %s330
      $region40: #{model_forward.1} parent=19 // pred_fallthru
        _
      // Predicated region
      $region41: #{model_forward.1} parent=19 // pred_check
        %p332 = pneg %p186
      $region42: #{model_forward.1} parent=19 // pred_check_branch
        %334 = sbr.rel (%p332) target = $region44
      $region43: #{model_forward.1} parent=19 // pred_region
        %p335 = scmp.lt.s32.totalorder %s15, 1
        %s336 = scalar_select %p335, %s15, 1
        %s337 = smul.addr %s336, 16
        %s338 = scalar_lea.vmem %s6, %s337
      $region44: #{model_forward.1} parent=19 // pred_fallthru
        _
      // Predicated region
      $region45: #{model_forward.1} parent=19 // pred_check
        %p339 = pneg %p212
      $region46: #{model_forward.1} parent=19 // pred_check_branch
        %341 = sbr.rel (%p339) target = $region48
      $region47: #{model_forward.1} parent=19 // pred_region
        %p342 = scmp.lt.s32.totalorder %s15, 1
        %s343 = scalar_select %p342, %s15, 1
        %s344 = smul.addr %s343, 256
        %s345 = smul.addr %s344, 4
        %s346 = scalar_lea.vmem %s7, %s345
      $region48: #{model_forward.1} parent=19 // pred_fallthru
        _
      // Predicated region
      $region49: #{model_forward.1} parent=19 // pred_check
        %p347 = pneg %p238
      $region50: #{model_forward.1} parent=19 // pred_check_branch
        %349 = sbr.rel (%p347) target = $region52
      $region51: #{model_forward.1} parent=19 // pred_region
        %p350 = scmp.lt.s32.totalorder %s15, 1
        %s351 = scalar_select %p350, %s15, 1
        %s352 = smul.addr %s351, 8
        %s353 = scalar_lea.vmem %s8, %s352
      $region52: #{model_forward.1} parent=19 // pred_fallthru
        _
    $region20: #{model_forward.1} parent=5 // pred_fallthru
      _
    %p354 = scmp.le.s32.totalorder 1, %s15
    %p355 = scmp.lt.s32.totalorder %s15, 3
    %p356 = pnand %p354, %p355
    %p357 = pneg %p356
    // Predicated region
    $region53: #{model_forward.1} parent=5 // pred_check
      _
    $region54: #{model_forward.1} parent=5 // pred_check_branch
      %359 = sbr.rel (%p356) target = $region56
    $region55: #{model_forward.1} parent=5 // pred_region
      %s360 = ssub.s32 %s15, 1
      %p361 = scmp.lt.s32.totalorder %s20, 1
      %s362 = scalar_select %p361, %s20, 1
      %s363 = smul.addr %s362, 16
      %s364 = smul.addr %s363, 4
      %s365 = scalar_lea.vmem %s0, %s364
      %p366 = pneg %p41
      %p367 = pneg %p38
      %p368 = scmp.lt.s32.totalorder %s20, 1
      %s369 = scalar_select %p368, %s20, 1
      %s370 = smul.addr %s369, 4
      %s371 = smul.addr %s370, 4
      %s372 = scalar_lea.vmem %s1, %s371
      %p373 = pneg %p67
      %p374 = pneg %p64
      %p375 = pneg %p88
      %p376 = pneg %p85
      %p377 = scmp.lt.s32.totalorder %s20, 1
      %s378 = scalar_select %p377, %s20, 1
      %s379 = smul.addr %s378, 4
      %s380 = smul.addr %s379, 4
      %s381 = scalar_lea.vmem %s3, %s380
      %p382 = pneg %p114
      %p383 = pneg %p111
      %p384 = scmp.lt.s32.totalorder %s20, 1
      %s385 = scalar_select %p384, %s20, 1
      %s386 = smul.addr %s385, 4
      %s387 = smul.addr %s386, 4
      %s388 = scalar_lea.vmem %s4, %s387
      %p389 = pneg %p140
      %p390 = pneg %p137
      %p391 = scmp.lt.s32.totalorder %s20, 1
      %s392 = scalar_select %p391, %s20, 1
      %s393 = smul.addr %s392, 64
      %s394 = smul.addr %s393, 4
      %s395 = scalar_lea.vmem %s5, %s394
      %p396 = pneg %p166
      %p397 = pneg %p163
      %p398 = scmp.lt.s32.totalorder %s20, 1
      %s399 = scalar_select %p398, %s20, 1
      %s400 = smul.addr %s399, 16
      %s401 = scalar_lea.vmem %s6, %s400
      %p402 = pneg %p192
      %p403 = pneg %p189
      %p404 = scmp.lt.s32.totalorder %s20, 1
      %s405 = scalar_select %p404, %s20, 1
      %s406 = smul.addr %s405, 256
      %s407 = smul.addr %s406, 4
      %s408 = scalar_lea.vmem %s7, %s407
      %p409 = pneg %p218
      %p410 = pneg %p215
      %p411 = scmp.lt.s32.totalorder %s20, 1
      %s412 = scalar_select %p411, %s20, 1
      %s413 = smul.addr %s412, 8
      %s414 = scalar_lea.vmem %s8, %s413
      %p415 = pneg %p244
      %p416 = pneg %p241
      %p417 = pneg %p270
      %p418 = pneg %p267
      %p419 = scmp.lt.s32.totalorder %s20, 1
      %s420 = scalar_select %p419, %s20, 1
      %s421 = smul.addr %s420, 2
      %s422 = scalar_lea.vmem %s9, %s421
      %p423 = scmp.lt.s32.totalorder %s20, 1
      %s424 = scalar_select %p423, %s20, 1
      %s425 = smul.addr %s424, 16
      %s426 = smul.addr %s425, 4
      %s427 = scalar_lea.vmem %s0, %s426
      %p428 = scmp.lt.s32.totalorder %s20, 1
      %s429 = scalar_select %p428, %s20, 1
      %s430 = smul.addr %s429, 4
      %s431 = smul.addr %s430, 4
      %s432 = scalar_lea.vmem %s1, %s431
      %p433 = scmp.lt.s32.totalorder %s20, 1
      %s434 = scalar_select %p433, %s20, 1
      %s435 = smul.addr %s434, 4
      %s436 = smul.addr %s435, 4
      %s437 = scalar_lea.vmem %s3, %s436
      %p438 = scmp.lt.s32.totalorder %s20, 1
      %s439 = scalar_select %p438, %s20, 1
      %s440 = smul.addr %s439, 4
      %s441 = smul.addr %s440, 4
      %s442 = scalar_lea.vmem %s4, %s441
      %p443 = scmp.lt.s32.totalorder %s20, 1
      %s444 = scalar_select %p443, %s20, 1
      %s445 = smul.addr %s444, 64
      %s446 = smul.addr %s445, 4
      %s447 = scalar_lea.vmem %s5, %s446
      %p448 = scmp.lt.s32.totalorder %s20, 1
      %s449 = scalar_select %p448, %s20, 1
      %s450 = smul.addr %s449, 16
      %s451 = scalar_lea.vmem %s6, %s450
      %p452 = scmp.lt.s32.totalorder %s20, 1
      %s453 = scalar_select %p452, %s20, 1
      %s454 = smul.addr %s453, 256
      %s455 = smul.addr %s454, 4
      %s456 = scalar_lea.vmem %s7, %s455
      %p457 = scmp.lt.s32.totalorder %s20, 1
      %s458 = scalar_select %p457, %s20, 1
      %s459 = smul.addr %s458, 8
      %s460 = scalar_lea.vmem %s8, %s459
      %p461 = scmp.lt.s32.totalorder %s20, 1
      %s462 = scalar_select %p461, %s20, 1
      %s463 = smul.addr %s462, 2
      %s464 = scalar_lea.vmem %s9, %s463
      %v466 = vld [vmem:[%s460] sm:$0xff]
      %v467 = vld [vmem:[%s427] sm:$0xf]
      %v468 = vld [vmem:[%s427 + $0x4] sm:$0xf]
      %v469 = vld [vmem:[%s427 + $0x8] sm:$0xf]
      %v470 = vld [vmem:[%s427 + $0xc] sm:$0xf]
      %v471 = vld [vmem:[%s427 + $0x10] sm:$0xf]
      %v472 = vld [vmem:[%s427 + $0x14] sm:$0xf]
      %v473 = vld [vmem:[%s427 + $0x18] sm:$0xf]
      %v474 = vld [vmem:[%s427 + $0x1c] sm:$0xf]
      %v475 = vld [vmem:[%s427 + $0x20] sm:$0xf]
      %v476 = vld [vmem:[%s427 + $0x24] sm:$0xf]
      %v477 = vld [vmem:[%s427 + $0x28] sm:$0xf]
      %v478 = vld [vmem:[%s427 + $0x2c] sm:$0xf]
      %v479 = vld [vmem:[%s427 + $0x30] sm:$0xf]
      %v480 = vld [vmem:[%s427 + $0x34] sm:$0xf]
      %v481 = vld [vmem:[%s427 + $0x38] sm:$0xf]
      %v482 = vld [vmem:[%s427 + $0x3c] sm:$0xf]
      %v483 = vld [vmem:[%s432] sm:$0xf]
      %v484 = vld [vmem:[%s432 + $0x4] sm:$0xf]
      %v485 = vld [vmem:[%s432 + $0x8] sm:$0xf]
      %v486 = vld [vmem:[%s432 + $0xc] sm:$0xf]
      %v487 = vlaneseq
      %v488 = vshrl.u32 %v487, 7
      %v489 = vsub.s32 0, %v488
      %v490 = vrot.slane %v466, %v489
      %v507 = vunpack.c.l.b16 %v467
      %v508 = vunpack.c.l.b16 %v468
      %v509 = vunpack.c.l.b16 %v469
      %v510 = vunpack.c.l.b16 %v470
      %v511 = vunpack.c.l.b16 %v471
      %v512 = vunpack.c.l.b16 %v472
      %v513 = vunpack.c.l.b16 %v473
      %v514 = vunpack.c.l.b16 %v474
      %v515 = vunpack.c.l.b16 %v475
      %v516 = vunpack.c.l.b16 %v476
      %v517 = vunpack.c.l.b16 %v477
      %v518 = vunpack.c.l.b16 %v478
      %v519 = vunpack.c.l.b16 %v479
      %v520 = vunpack.c.l.b16 %v480
      %v521 = vunpack.c.l.b16 %v481
      %v522 = vunpack.c.l.b16 %v482
      %v523 = vpack.c.b16 %v508, %v507
      %v524 = vpack.c.b16 %v510, %v509
      %v525 = vpack.c.b16 %v512, %v511
      %v526 = vpack.c.b16 %v514, %v513
      %v527 = vpack.c.b16 %v516, %v515
      %v528 = vpack.c.b16 %v518, %v517
      %v529 = vpack.c.b16 %v520, %v519
      %v530 = vpack.c.b16 %v522, %v521
      %v535 = vunpack.c.l.b16 %v483
      %v536 = vunpack.c.l.b16 %v484
      %v537 = vunpack.c.l.b16 %v485
      %v538 = vunpack.c.l.b16 %v486
      %v539 = vpack.c.b16 %v536, %v535
      %v540 = vpack.c.b16 %v538, %v537
      %vm543 = vcmask 261120
      %v545 = vsel %vm543, %v523, 0
      %v548 = vsel %vm543, %v524, 0
      %v551 = vsel %vm543, %v525, 0
      %v554 = vsel %vm543, %v526, 0
      %v557 = vsel %vm543, %v527, 0
      %v560 = vsel %vm543, %v528, 0
      %v563 = vsel %vm543, %v529, 0
      %v566 = vsel %vm543, %v530, 0
      %568 = vmatprep.subr.bf16.mxu0 0
      %569 = vmatpush1.bf16.msra.mxu0 %v539
      %570 = vmatprep.subr.bf16.mxu0 0
      %571 = vmatpush1.bf16.msra.mxu0 %v540
      %572 = vmatprep.subr.bf16.mxu0 0
      %573 = vmatpush1.bf16.msra.mxu0 0
      %574 = vmatprep.subr.bf16.mxu0 0
      %575 = vmatpush1.bf16.msra.mxu0 0
      %576 = vmatprep.subr.bf16.mxu0 0
      %577 = vmatpush1.bf16.msra.mxu0 0
      %578 = vmatprep.subr.bf16.mxu0 0
      %579 = vmatpush1.bf16.msra.mxu0 0
      %580 = vmatprep.subr.bf16.mxu0 0
      %581 = vmatpush1.bf16.msra.mxu0 0
      %582 = vmatprep.subr.bf16.mxu0 0
      %583 = vmatpush1.bf16.msra.mxu0 0
      %584 = vmatprep.subr.bf16.mxu0 0
      %585 = vmatpush1.bf16.msra.mxu0 0
      %586 = vmatprep.subr.bf16.mxu0 0
      %587 = vmatpush1.bf16.msra.mxu0 0
      %588 = vmatprep.subr.bf16.mxu0 0
      %589 = vmatpush1.bf16.msra.mxu0 0
      %590 = vmatprep.subr.bf16.mxu0 0
      %591 = vmatpush1.bf16.msra.mxu0 0
      %592 = vmatprep.subr.bf16.mxu0 0
      %593 = vmatpush1.bf16.msra.mxu0 0
      %594 = vmatprep.subr.bf16.mxu0 0
      %595 = vmatpush1.bf16.msra.mxu0 0
      %596 = vmatprep.subr.bf16.mxu0 0
      %597 = vmatpush1.bf16.msra.mxu0 0
      %598 = vmatprep.subr.bf16.mxu0 0
      %599 = vmatpush1.bf16.msra.mxu0 0
      %600 = vmatprep.mubr.bf16.mxu0 0
      %601 = vmatmul.mubr.bf16.gmra.mrb[0].mxu0 %v545
      %v602 = vpop.f32.mrb[0].mxu0
      %v603 = vadd.f32 %v490, %v602
      %v604 = vpop.f32.mrb[0].mxu0
      %v605 = vpop.f32.mrb[0].mxu0
      %v606 = vadd.f32 %v490, %v605
      %v607 = vpop.f32.mrb[0].mxu0
      %608 = vmatprep.mubr.bf16.mxu0 0
      %609 = vmatmul.mubr.bf16.gmra.mrb[0].mxu0 %v548
      %v610 = vpop.f32.mrb[0].mxu0
      %v611 = vadd.f32 %v490, %v610
      %v612 = vpop.f32.mrb[0].mxu0
      %v613 = vpop.f32.mrb[0].mxu0
      %v614 = vadd.f32 %v490, %v613
      %v615 = vpop.f32.mrb[0].mxu0
      %616 = vmatprep.mubr.bf16.mxu0 0
      %617 = vmatmul.mubr.bf16.gmra.mrb[0].mxu0 %v551
      %v618 = vpop.f32.mrb[0].mxu0
      %v619 = vadd.f32 %v490, %v618
      %v620 = vpop.f32.mrb[0].mxu0
      %v621 = vpop.f32.mrb[0].mxu0
      %v622 = vadd.f32 %v490, %v621
      %v623 = vpop.f32.mrb[0].mxu0
      %624 = vmatprep.mubr.bf16.mxu0 0
      %625 = vmatmul.mubr.bf16.gmra.mrb[0].mxu0 %v554
      %v626 = vpop.f32.mrb[0].mxu0
      %v627 = vadd.f32 %v490, %v626
      %v628 = vpop.f32.mrb[0].mxu0
      %v629 = vpop.f32.mrb[0].mxu0
      %v630 = vadd.f32 %v490, %v629
      %v631 = vpop.f32.mrb[0].mxu0
      %632 = vmatprep.mubr.bf16.mxu0 0
      %633 = vmatmul.mubr.bf16.gmra.mrb[0].mxu0 %v557
      %v634 = vpop.f32.mrb[0].mxu0
      %v635 = vadd.f32 %v490, %v634
      %v636 = vpop.f32.mrb[0].mxu0
      %v637 = vpop.f32.mrb[0].mxu0
      %v638 = vadd.f32 %v490, %v637
      %v639 = vpop.f32.mrb[0].mxu0
      %640 = vmatprep.mubr.bf16.mxu0 0
      %641 = vmatmul.mubr.bf16.gmra.mrb[0].mxu0 %v560
      %v642 = vpop.f32.mrb[0].mxu0
      %v643 = vadd.f32 %v490, %v642
      %v644 = vpop.f32.mrb[0].mxu0
      %v645 = vpop.f32.mrb[0].mxu0
      %v646 = vadd.f32 %v490, %v645
      %v647 = vpop.f32.mrb[0].mxu0
      %648 = vmatprep.mubr.bf16.mxu0 0
      %649 = vmatmul.mubr.bf16.gmra.mrb[0].mxu0 %v563
      %v650 = vpop.f32.mrb[0].mxu0
      %v651 = vadd.f32 %v490, %v650
      %v652 = vpop.f32.mrb[0].mxu0
      %v653 = vpop.f32.mrb[0].mxu0
      %v654 = vadd.f32 %v490, %v653
      %v655 = vpop.f32.mrb[0].mxu0
      %656 = vmatprep.mubr.bf16.mxu0 0
      %657 = vmatmul.mubr.bf16.gmra.mrb[0].mxu0 %v566
      %v658 = vpop.f32.mrb[0].mxu0
      %v659 = vadd.f32 %v490, %v658
      %v660 = vpop.f32.mrb[0].mxu0
      %v661 = vpop.f32.mrb[0].mxu0
      %v662 = vadd.f32 %v490, %v661
      %v663 = vpop.f32.mrb[0].mxu0
      %664 = vdwg.mxu0
      %v665 = vld [vmem:[%s2] sm:$0xff]
      %v666 = vld [vmem:[%s2 + $0x8] sm:$0xff]
      %v667 = vld [vmem:[%s2 + $0x10] sm:$0xff]
      %v668 = vld [vmem:[%s2 + $0x18] sm:$0xff]
      %v669 = vld [vmem:[%s2 + $0x20] sm:$0xff]
      %v670 = vld [vmem:[%s2 + $0x28] sm:$0xff]
      %v671 = vld [vmem:[%s2 + $0x30] sm:$0xff]
      %v672 = vld [vmem:[%s2 + $0x38] sm:$0xff]
      %v673 = vadd.f32 %v603, %v665
      %v674 = vadd.f32 %v606, %v666
      %v675 = vadd.f32 %v611, %v667
      %v676 = vadd.f32 %v614, %v668
      %v677 = vadd.f32 %v619, %v669
      %v678 = vadd.f32 %v622, %v670
      %v679 = vadd.f32 %v627, %v671
      %v680 = vadd.f32 %v630, %v672
      %v681 = vadd.f32 %v635, %v665
      %v682 = vadd.f32 %v638, %v666
      %v683 = vadd.f32 %v643, %v667
      %v684 = vadd.f32 %v646, %v668
      %v685 = vadd.f32 %v651, %v669
      %v686 = vadd.f32 %v654, %v670
      %v687 = vadd.f32 %v659, %v671
      %v688 = vadd.f32 %v662, %v672
      %v689 = vpack.c.bf16 %v674, %v673
      %v690 = vpack.c.bf16 %v676, %v675
      %v691 = vpack.c.bf16 %v678, %v677
      %v692 = vpack.c.bf16 %v680, %v679
      %v693 = vpack.c.bf16 %v682, %v681
      %v694 = vpack.c.bf16 %v684, %v683
      %v695 = vpack.c.bf16 %v686, %v685
      %v696 = vpack.c.bf16 %v688, %v687
      %v697 = vld [vmem:[%s437] sm:$0xf]
      %v698 = vld [vmem:[%s437 + $0x4] sm:$0xf]
      %v699 = vld [vmem:[%s437 + $0x8] sm:$0xf]
      %v700 = vld [vmem:[%s437 + $0xc] sm:$0xf]
      %v701 = vlaneseq
      %v702 = vshrl.u32 %v701, 7
      %v703 = vsub.s32 1, %v702
      %v704 = vrot.slane %v466, %v703
      %v709 = vunpack.c.l.b16 %v697
      %v710 = vunpack.c.l.b16 %v698
      %v711 = vunpack.c.l.b16 %v699
      %v712 = vunpack.c.l.b16 %v700
      %v713 = vpack.c.b16 %v710, %v709
      %v714 = vpack.c.b16 %v712, %v711
      %v718 = vsel %vm543, %v689, 0
      %v721 = vsel %vm543, %v690, 0
      %v724 = vsel %vm543, %v691, 0
      %v727 = vsel %vm543, %v692, 0
      %v730 = vsel %vm543, %v693, 0
      %v733 = vsel %vm543, %v694, 0
      %v736 = vsel %vm543, %v695, 0
      %v739 = vsel %vm543, %v696, 0
      %741 = vmatprep.subr.bf16.mxu0 0
      %742 = vmatpush1.bf16.msra.mxu0 %v713
      %743 = vmatprep.subr.bf16.mxu0 0
      %744 = vmatpush1.bf16.msra.mxu0 %v714
      %745 = vmatprep.subr.bf16.mxu0 0
      %746 = vmatpush1.bf16.msra.mxu0 0
      %747 = vmatprep.subr.bf16.mxu0 0
      %748 = vmatpush1.bf16.msra.mxu0 0
      %749 = vmatprep.subr.bf16.mxu0 0
      %750 = vmatpush1.bf16.msra.mxu0 0
      %751 = vmatprep.subr.bf16.mxu0 0
      %752 = vmatpush1.bf16.msra.mxu0 0
      %753 = vmatprep.subr.bf16.mxu0 0
      %754 = vmatpush1.bf16.msra.mxu0 0
      %755 = vmatprep.subr.bf16.mxu0 0
      %756 = vmatpush1.bf16.msra.mxu0 0
      %757 = vmatprep.subr.bf16.mxu0 0
      %758 = vmatpush1.bf16.msra.mxu0 0
      %759 = vmatprep.subr.bf16.mxu0 0
      %760 = vmatpush1.bf16.msra.mxu0 0
      %761 = vmatprep.subr.bf16.mxu0 0
      %762 = vmatpush1.bf16.msra.mxu0 0
      %763 = vmatprep.subr.bf16.mxu0 0
      %764 = vmatpush1.bf16.msra.mxu0 0
      %765 = vmatprep.subr.bf16.mxu0 0
      %766 = vmatpush1.bf16.msra.mxu0 0
      %767 = vmatprep.subr.bf16.mxu0 0
      %768 = vmatpush1.bf16.msra.mxu0 0
      %769 = vmatprep.subr.bf16.mxu0 0
      %770 = vmatpush1.bf16.msra.mxu0 0
      %771 = vmatprep.subr.bf16.mxu0 0
      %772 = vmatpush1.bf16.msra.mxu0 0
      %773 = vmatprep.mubr.bf16.mxu0 0
      %774 = vmatmul.mubr.bf16.gmra.mrb[0].mxu0 %v718
      %v775 = vpop.f32.mrb[0].mxu0
      %v776 = vadd.f32 %v704, %v775
      %v777 = vpop.f32.mrb[0].mxu0
      %v778 = vpop.f32.mrb[0].mxu0
      %v779 = vadd.f32 %v704, %v778
      %v780 = vpop.f32.mrb[0].mxu0
      %781 = vmatprep.mubr.bf16.mxu0 0
      %782 = vmatmul.mubr.bf16.gmra.mrb[0].mxu0 %v721
      %v783 = vpop.f32.mrb[0].mxu0
      %v784 = vadd.f32 %v704, %v783
      %v785 = vpop.f32.mrb[0].mxu0
      %v786 = vpop.f32.mrb[0].mxu0
      %v787 = vadd.f32 %v704, %v786
      %v788 = vpop.f32.mrb[0].mxu0
      %789 = vmatprep.mubr.bf16.mxu0 0
      %790 = vmatmul.mubr.bf16.gmra.mrb[0].mxu0 %v724
      %v791 = vpop.f32.mrb[0].mxu0
      %v792 = vadd.f32 %v704, %v791
      %v793 = vpop.f32.mrb[0].mxu0
      %v794 = vpop.f32.mrb[0].mxu0
      %v795 = vadd.f32 %v704, %v794
      %v796 = vpop.f32.mrb[0].mxu0
      %797 = vmatprep.mubr.bf16.mxu0 0
      %798 = vmatmul.mubr.bf16.gmra.mrb[0].mxu0 %v727
      %v799 = vpop.f32.mrb[0].mxu0
      %v800 = vadd.f32 %v704, %v799
      %v801 = vpop.f32.mrb[0].mxu0
      %v802 = vpop.f32.mrb[0].mxu0
      %v803 = vadd.f32 %v704, %v802
      %v804 = vpop.f32.mrb[0].mxu0
      %805 = vmatprep.mubr.bf16.mxu0 0
      %806 = vmatmul.mubr.bf16.gmra.mrb[0].mxu0 %v730
      %v807 = vpop.f32.mrb[0].mxu0
      %v808 = vadd.f32 %v704, %v807
      %v809 = vpop.f32.mrb[0].mxu0
      %v810 = vpop.f32.mrb[0].mxu0
      %v811 = vadd.f32 %v704, %v810
      %v812 = vpop.f32.mrb[0].mxu0
      %813 = vmatprep.mubr.bf16.mxu0 0
      %814 = vmatmul.mubr.bf16.gmra.mrb[0].mxu0 %v733
      %v815 = vpop.f32.mrb[0].mxu0
      %v816 = vadd.f32 %v704, %v815
      %v817 = vpop.f32.mrb[0].mxu0
      %v818 = vpop.f32.mrb[0].mxu0
      %v819 = vadd.f32 %v704, %v818
      %v820 = vpop.f32.mrb[0].mxu0
      %821 = vmatprep.mubr.bf16.mxu0 0
      %822 = vmatmul.mubr.bf16.gmra.mrb[0].mxu0 %v736
      %v823 = vpop.f32.mrb[0].mxu0
      %v824 = vadd.f32 %v704, %v823
      %v825 = vpop.f32.mrb[0].mxu0
      %v826 = vpop.f32.mrb[0].mxu0
      %v827 = vadd.f32 %v704, %v826
      %v828 = vpop.f32.mrb[0].mxu0
      %829 = vmatprep.mubr.bf16.mxu0 0
      %830 = vmatmul.mubr.bf16.gmra.mrb[0].mxu0 %v739
      %v831 = vpop.f32.mrb[0].mxu0
      %v832 = vadd.f32 %v704, %v831
      %v833 = vpop.f32.mrb[0].mxu0
      %v834 = vpop.f32.mrb[0].mxu0
      %v835 = vadd.f32 %v704, %v834
      %v836 = vpop.f32.mrb[0].mxu0
      %837 = vdwg.mxu0
      %v838 = vpack.c.bf16 %v779, %v776
      %v839 = vpack.c.bf16 %v787, %v784
      %v840 = vpack.c.bf16 %v795, %v792
      %v841 = vpack.c.bf16 %v803, %v800
      %v842 = vpack.c.bf16 %v811, %v808
      %v843 = vpack.c.bf16 %v819, %v816
      %v844 = vpack.c.bf16 %v827, %v824
      %v845 = vpack.c.bf16 %v835, %v832
      %850 = vrot.lane.b32.xlu0 %v838, 96
      %v851 = vpop.permute.xlu0 %850
      %852 = vrot.lane.b32.xlu0 %v839, 96
      %v853 = vpop.permute.xlu0 %852
      %854 = vrot.lane.b32.xlu0 %v840, 96
      %v855 = vpop.permute.xlu0 %854
      %856 = vrot.lane.b32.xlu0 %v841, 96
      %v857 = vpop.permute.xlu0 %856
      %vm858 = vcmask 64512
      %v860 = vsel %vm858, %v838, 0
      %v863 = vsel %vm858, %v839, 0
      %v866 = vsel %vm858, %v840, 0
      %v869 = vsel %vm858, %v841, 0
      %v872 = vsel %vm858, %v851, 0
      %v875 = vsel %vm858, %v853, 0
      %v878 = vsel %vm858, %v855, 0
      %v881 = vsel %vm858, %v857, 0
      %883 = vmatprep.subr.bf16.mxu0 0
      %884 = vmatpush1.bf16.xpose.msra.mxu0 %v872
      %885 = vmatprep.subr.bf16.mxu0 0
      %886 = vmatpush1.bf16.xpose.msra.mxu0 %v875
      %887 = vmatprep.subr.bf16.mxu0 0
      %888 = vmatpush1.bf16.xpose.msra.mxu0 %v878
      %889 = vmatprep.subr.bf16.mxu0 0
      %890 = vmatpush1.bf16.xpose.msra.mxu0 %v881
      %891 = vmatprep.subr.bf16.mxu0 0
      %892 = vmatpush1.bf16.xpose.msra.mxu0 0
      %893 = vmatprep.subr.bf16.mxu0 0
      %894 = vmatpush1.bf16.xpose.msra.mxu0 0
      %895 = vmatprep.subr.bf16.mxu0 0
      %896 = vmatpush1.bf16.xpose.msra.mxu0 0
      %897 = vmatprep.subr.bf16.mxu0 0
      %898 = vmatpush1.bf16.xpose.msra.mxu0 0
      %899 = vmatprep.subr.bf16.mxu0 0
      %900 = vmatpush1.bf16.xpose.msra.mxu0 0
      %901 = vmatprep.subr.bf16.mxu0 0
      %902 = vmatpush1.bf16.xpose.msra.mxu0 0
      %903 = vmatprep.subr.bf16.mxu0 0
      %904 = vmatpush1.bf16.xpose.msra.mxu0 0
      %905 = vmatprep.subr.bf16.mxu0 0
      %906 = vmatpush1.bf16.xpose.msra.mxu0 0
      %907 = vmatprep.subr.bf16.mxu0 0
      %908 = vmatpush1.bf16.xpose.msra.mxu0 0
      %909 = vmatprep.subr.bf16.mxu0 0
      %910 = vmatpush1.bf16.xpose.msra.mxu0 0
      %911 = vmatprep.subr.bf16.mxu0 0
      %912 = vmatpush1.bf16.xpose.msra.mxu0 0
      %913 = vmatprep.subr.bf16.mxu0 0
      %914 = vmatpush1.bf16.xpose.msra.mxu0 0
      %915 = vmatprep.mubr.bf16.mxu0 0
      %916 = vmatmul.mubr.bf16.gmra.mrb[0].mxu0 %v860
      %v917 = vpop.f32.mrb[0].mxu0
      %v918 = vadd.f32 0.0, %v917
      %v919 = vpop.f32.mrb[0].mxu0
      %v920 = vpop.f32.mrb[0].mxu0
      %v921 = vadd.f32 0.0, %v920
      %v922 = vpop.f32.mrb[0].mxu0
      %923 = vmatprep.mubr.bf16.mxu0 0
      %924 = vmatmul.mubr.bf16.gmra.mrb[0].mxu0 %v863
      %v925 = vpop.f32.mrb[0].mxu0
      %v926 = vadd.f32 0.0, %v925
      %v927 = vpop.f32.mrb[0].mxu0
      %v928 = vpop.f32.mrb[0].mxu0
      %v929 = vadd.f32 0.0, %v928
      %v930 = vpop.f32.mrb[0].mxu0
      %931 = vmatprep.mubr.bf16.mxu0 0
      %932 = vmatmul.mubr.bf16.gmra.mrb[0].mxu0 %v866
      %v933 = vpop.f32.mrb[0].mxu0
      %v934 = vadd.f32 0.0, %v933
      %v935 = vpop.f32.mrb[0].mxu0
      %v936 = vpop.f32.mrb[0].mxu0
      %v937 = vadd.f32 0.0, %v936
      %v938 = vpop.f32.mrb[0].mxu0
      %939 = vmatprep.mubr.bf16.mxu0 0
      %940 = vmatmul.mubr.bf16.gmra.mrb[0].mxu0 %v869
      %v941 = vpop.f32.mrb[0].mxu0
      %v942 = vadd.f32 0.0, %v941
      %v943 = vpop.f32.mrb[0].mxu0
      %v944 = vpop.f32.mrb[0].mxu0
      %v945 = vadd.f32 0.0, %v944
      %v946 = vpop.f32.mrb[0].mxu0
      %947 = vdwg.mxu0
      %952 = vrot.lane.b32.xlu0 %v842, 96
      %v953 = vpop.permute.xlu0 %952
      %954 = vrot.lane.b32.xlu0 %v843, 96
      %v955 = vpop.permute.xlu0 %954
      %956 = vrot.lane.b32.xlu0 %v844, 96
      %v957 = vpop.permute.xlu0 %956
      %958 = vrot.lane.b32.xlu0 %v845, 96
      %v959 = vpop.permute.xlu0 %958
      %v961 = vsel %vm858, %v842, 0
      %v964 = vsel %vm858, %v843, 0
      %v967 = vsel %vm858, %v844, 0
      %v970 = vsel %vm858, %v845, 0
      %v973 = vsel %vm858, %v953, 0
      %v976 = vsel %vm858, %v955, 0
      %v979 = vsel %vm858, %v957, 0
      %v982 = vsel %vm858, %v959, 0
      %984 = vmatprep.subr.bf16.mxu0 0
      %985 = vmatpush1.bf16.xpose.msra.mxu0 %v973
      %986 = vmatprep.subr.bf16.mxu0 0
      %987 = vmatpush1.bf16.xpose.msra.mxu0 %v976
      %988 = vmatprep.subr.bf16.mxu0 0
      %989 = vmatpush1.bf16.xpose.msra.mxu0 %v979
      %990 = vmatprep.subr.bf16.mxu0 0
      %991 = vmatpush1.bf16.xpose.msra.mxu0 %v982
      %992 = vmatprep.subr.bf16.mxu0 0
      %993 = vmatpush1.bf16.xpose.msra.mxu0 0
      %994 = vmatprep.subr.bf16.mxu0 0
      %995 = vmatpush1.bf16.xpose.msra.mxu0 0
      %996 = vmatprep.subr.bf16.mxu0 0
      %997 = vmatpush1.bf16.xpose.msra.mxu0 0
      %998 = vmatprep.subr.bf16.mxu0 0
      %999 = vmatpush1.bf16.xpose.msra.mxu0 0
      %1000 = vmatprep.subr.bf16.mxu0 0
      %1001 = vmatpush1.bf16.xpose.msra.mxu0 0
      %1002 = vmatprep.subr.bf16.mxu0 0
      %1003 = vmatpush1.bf16.xpose.msra.mxu0 0
      %1004 = vmatprep.subr.bf16.mxu0 0
      %1005 = vmatpush1.bf16.xpose.msra.mxu0 0
      %1006 = vmatprep.subr.bf16.mxu0 0
      %1007 = vmatpush1.bf16.xpose.msra.mxu0 0
      %1008 = vmatprep.subr.bf16.mxu0 0
      %1009 = vmatpush1.bf16.xpose.msra.mxu0 0
      %1010 = vmatprep.subr.bf16.mxu0 0
      %1011 = vmatpush1.bf16.xpose.msra.mxu0 0
      %1012 = vmatprep.subr.bf16.mxu0 0
      %1013 = vmatpush1.bf16.xpose.msra.mxu0 0
      %1014 = vmatprep.subr.bf16.mxu0 0
      %1015 = vmatpush1.bf16.xpose.msra.mxu0 0
      %1016 = vmatprep.mubr.bf16.mxu0 0
      %1017 = vmatmul.mubr.bf16.gmra.mrb[0].mxu0 %v961
      %v1018 = vpop.f32.mrb[0].mxu0
      %v1019 = vadd.f32 0.0, %v1018
      %v1020 = vpop.f32.mrb[0].mxu0
      %v1021 = vpop.f32.mrb[0].mxu0
      %v1022 = vadd.f32 0.0, %v1021
      %v1023 = vpop.f32.mrb[0].mxu0
      %1024 = vmatprep.mubr.bf16.mxu0 0
      %1025 = vmatmul.mubr.bf16.gmra.mrb[0].mxu0 %v964
      %v1026 = vpop.f32.mrb[0].mxu0
      %v1027 = vadd.f32 0.0, %v1026
      %v1028 = vpop.f32.mrb[0].mxu0
      %v1029 = vpop.f32.mrb[0].mxu0
      %v1030 = vadd.f32 0.0, %v1029
      %v1031 = vpop.f32.mrb[0].mxu0
      %1032 = vmatprep.mubr.bf16.mxu0 0
      %1033 = vmatmul.mubr.bf16.gmra.mrb[0].mxu0 %v967
      %v1034 = vpop.f32.mrb[0].mxu0
      %v1035 = vadd.f32 0.0, %v1034
      %v1036 = vpop.f32.mrb[0].mxu0
      %v1037 = vpop.f32.mrb[0].mxu0
      %v1038 = vadd.f32 0.0, %v1037
      %v1039 = vpop.f32.mrb[0].mxu0
      %1040 = vmatprep.mubr.bf16.mxu0 0
      %1041 = vmatmul.mubr.bf16.gmra.mrb[0].mxu0 %v970
      %v1042 = vpop.f32.mrb[0].mxu0
      %v1043 = vadd.f32 0.0, %v1042
      %v1044 = vpop.f32.mrb[0].mxu0
      %v1045 = vpop.f32.mrb[0].mxu0
      %v1046 = vadd.f32 0.0, %v1045
      %v1047 = vpop.f32.mrb[0].mxu0
      %1048 = vdwg.mxu0
      %v1049 = vmul.f32 %v918, 0.35355338
      %v1050 = vmul.f32 %v921, 0.35355338
      %v1051 = vmul.f32 %v926, 0.35355338
      %v1052 = vmul.f32 %v929, 0.35355338
      %v1053 = vmul.f32 %v934, 0.35355338
      %v1054 = vmul.f32 %v937, 0.35355338
      %v1055 = vmul.f32 %v942, 0.35355338
      %v1056 = vmul.f32 %v945, 0.35355338
      %v1057 = vmul.f32 %v1019, 0.35355338
      %v1058 = vmul.f32 %v1022, 0.35355338
      %v1059 = vmul.f32 %v1027, 0.35355338
      %v1060 = vmul.f32 %v1030, 0.35355338
      %v1061 = vmul.f32 %v1035, 0.35355338
      %v1062 = vmul.f32 %v1038, 0.35355338
      %v1063 = vmul.f32 %v1043, 0.35355338
      %v1064 = vmul.f32 %v1046, 0.35355338
      %vm1065 = vcmask 523264
      %v1066 = vsel %vm1065, %v1049, -inf
      %1067 = vmax.xlane.f32.xlu0 %v1066
      %v1068 = vpop.xlane.xlu0 %1067
      %v1069 = vsel %vm1065, %v1050, -inf
      %1070 = vmax.xlane.f32.xlu0 %v1069
      %v1071 = vpop.xlane.xlu0 %1070
      %v1072 = vsel %vm1065, %v1051, -inf
      %1073 = vmax.xlane.f32.xlu0 %v1072
      %v1074 = vpop.xlane.xlu0 %1073
      %v1075 = vsel %vm1065, %v1052, -inf
      %1076 = vmax.xlane.f32.xlu0 %v1075
      %v1077 = vpop.xlane.xlu0 %1076
      %v1078 = vsel %vm1065, %v1053, -inf
      %1079 = vmax.xlane.f32.xlu0 %v1078
      %v1080 = vpop.xlane.xlu0 %1079
      %v1081 = vsel %vm1065, %v1054, -inf
      %1082 = vmax.xlane.f32.xlu0 %v1081
      %v1083 = vpop.xlane.xlu0 %1082
      %v1084 = vsel %vm1065, %v1055, -inf
      %1085 = vmax.xlane.f32.xlu0 %v1084
      %v1086 = vpop.xlane.xlu0 %1085
      %v1087 = vsel %vm1065, %v1056, -inf
      %1088 = vmax.xlane.f32.xlu0 %v1087
      %v1089 = vpop.xlane.xlu0 %1088
      %v1090 = vsel %vm1065, %v1057, -inf
      %1091 = vmax.xlane.f32.xlu0 %v1090
      %v1092 = vpop.xlane.xlu0 %1091
      %v1093 = vsel %vm1065, %v1058, -inf
      %1094 = vmax.xlane.f32.xlu0 %v1093
      %v1095 = vpop.xlane.xlu0 %1094
      %v1096 = vsel %vm1065, %v1059, -inf
      %1097 = vmax.xlane.f32.xlu0 %v1096
      %v1098 = vpop.xlane.xlu0 %1097
      %v1099 = vsel %vm1065, %v1060, -inf
      %1100 = vmax.xlane.f32.xlu0 %v1099
      %v1101 = vpop.xlane.xlu0 %1100
      %v1102 = vsel %vm1065, %v1061, -inf
      %1103 = vmax.xlane.f32.xlu0 %v1102
      %v1104 = vpop.xlane.xlu0 %1103
      %v1105 = vsel %vm1065, %v1062, -inf
      %1106 = vmax.xlane.f32.xlu0 %v1105
      %v1107 = vpop.xlane.xlu0 %1106
      %v1108 = vsel %vm1065, %v1063, -inf
      %1109 = vmax.xlane.f32.xlu0 %v1108
      %v1110 = vpop.xlane.xlu0 %1109
      %v1111 = vsel %vm1065, %v1064, -inf
      %1112 = vmax.xlane.f32.xlu0 %v1111
      %v1113 = vpop.xlane.xlu0 %1112
      %v1114 = vsub.f32 %v1049, %v1068
      %v1115 = vsub.f32 %v1050, %v1071
      %v1116 = vsub.f32 %v1051, %v1074
      %v1117 = vsub.f32 %v1052, %v1077
      %v1118 = vsub.f32 %v1053, %v1080
      %v1119 = vsub.f32 %v1054, %v1083
      %v1120 = vsub.f32 %v1055, %v1086
      %v1121 = vsub.f32 %v1056, %v1089
      %v1122 = vsub.f32 %v1057, %v1092
      %v1123 = vsub.f32 %v1058, %v1095
      %v1124 = vsub.f32 %v1059, %v1098
      %v1125 = vsub.f32 %v1060, %v1101
      %v1126 = vsub.f32 %v1061, %v1104
      %v1127 = vsub.f32 %v1062, %v1107
      %v1128 = vsub.f32 %v1063, %v1110
      %v1129 = vsub.f32 %v1064, %v1113
      %v1130 = vmul.f32 %v1114, 1.442695
      %v1131 = vpow.pop %v1130
      %v1132 = vmul.f32 %v1115, 1.442695
      %v1133 = vpow.pop %v1132
      %v1134 = vmul.f32 %v1116, 1.442695
      %v1135 = vpow.pop %v1134
      %v1136 = vmul.f32 %v1117, 1.442695
      %v1137 = vpow.pop %v1136
      %v1138 = vmul.f32 %v1118, 1.442695
      %v1139 = vpow.pop %v1138
      %v1140 = vmul.f32 %v1119, 1.442695
      %v1141 = vpow.pop %v1140
      %v1142 = vmul.f32 %v1120, 1.442695
      %v1143 = vpow.pop %v1142
      %v1144 = vmul.f32 %v1121, 1.442695
      %v1145 = vpow.pop %v1144
      %v1146 = vmul.f32 %v1122, 1.442695
      %v1147 = vpow.pop %v1146
      %v1148 = vmul.f32 %v1123, 1.442695
      %v1149 = vpow.pop %v1148
      %v1150 = vmul.f32 %v1124, 1.442695
      %v1151 = vpow.pop %v1150
      %v1152 = vmul.f32 %v1125, 1.442695
      %v1153 = vpow.pop %v1152
      %v1154 = vmul.f32 %v1126, 1.442695
      %v1155 = vpow.pop %v1154
      %v1156 = vmul.f32 %v1127, 1.442695
      %v1157 = vpow.pop %v1156
      %v1158 = vmul.f32 %v1128, 1.442695
      %v1159 = vpow.pop %v1158
      %v1160 = vmul.f32 %v1129, 1.442695
      %v1161 = vpow.pop %v1160
      %v1162 = vsel %vm1065, %v1131, 0.0
      %1163 = vadd.xlane.f32.xlu0 %v1162
      %v1164 = vpop.xlane.xlu0 %1163
      %v1165 = vsel %vm1065, %v1133, 0.0
      %1166 = vadd.xlane.f32.xlu0 %v1165
      %v1167 = vpop.xlane.xlu0 %1166
      %v1168 = vsel %vm1065, %v1135, 0.0
      %1169 = vadd.xlane.f32.xlu0 %v1168
      %v1170 = vpop.xlane.xlu0 %1169
      %v1171 = vsel %vm1065, %v1137, 0.0
      %1172 = vadd.xlane.f32.xlu0 %v1171
      %v1173 = vpop.xlane.xlu0 %1172
      %v1174 = vsel %vm1065, %v1139, 0.0
      %1175 = vadd.xlane.f32.xlu0 %v1174
      %v1176 = vpop.xlane.xlu0 %1175
      %v1177 = vsel %vm1065, %v1141, 0.0
      %1178 = vadd.xlane.f32.xlu0 %v1177
      %v1179 = vpop.xlane.xlu0 %1178
      %v1180 = vsel %vm1065, %v1143, 0.0
      %1181 = vadd.xlane.f32.xlu0 %v1180
      %v1182 = vpop.xlane.xlu0 %1181
      %v1183 = vsel %vm1065, %v1145, 0.0
      %1184 = vadd.xlane.f32.xlu0 %v1183
      %v1185 = vpop.xlane.xlu0 %1184
      %v1186 = vsel %vm1065, %v1147, 0.0
      %1187 = vadd.xlane.f32.xlu0 %v1186
      %v1188 = vpop.xlane.xlu0 %1187
      %v1189 = vsel %vm1065, %v1149, 0.0
      %1190 = vadd.xlane.f32.xlu0 %v1189
      %v1191 = vpop.xlane.xlu0 %1190
      %v1192 = vsel %vm1065, %v1151, 0.0
      %1193 = vadd.xlane.f32.xlu0 %v1192
      %v1194 = vpop.xlane.xlu0 %1193
      %v1195 = vsel %vm1065, %v1153, 0.0
      %1196 = vadd.xlane.f32.xlu0 %v1195
      %v1197 = vpop.xlane.xlu0 %1196
      %v1198 = vsel %vm1065, %v1155, 0.0
      %1199 = vadd.xlane.f32.xlu0 %v1198
      %v1200 = vpop.xlane.xlu0 %1199
      %v1201 = vsel %vm1065, %v1157, 0.0
      %1202 = vadd.xlane.f32.xlu0 %v1201
      %v1203 = vpop.xlane.xlu0 %1202
      %v1204 = vsel %vm1065, %v1159, 0.0
      %1205 = vadd.xlane.f32.xlu0 %v1204
      %v1206 = vpop.xlane.xlu0 %1205
      %v1207 = vsel %vm1065, %v1161, 0.0
      %1208 = vadd.xlane.f32.xlu0 %v1207
      %v1209 = vpop.xlane.xlu0 %1208
      %v1210 = vrcp.pop %v1164
      %v1211 = vrcp.pop %v1167
      %v1212 = vrcp.pop %v1170
      %v1213 = vrcp.pop %v1173
      %v1214 = vrcp.pop %v1176
      %v1215 = vrcp.pop %v1179
      %v1216 = vrcp.pop %v1182
      %v1217 = vrcp.pop %v1185
      %v1218 = vrcp.pop %v1188
      %v1219 = vrcp.pop %v1191
      %v1220 = vrcp.pop %v1194
      %v1221 = vrcp.pop %v1197
      %v1222 = vrcp.pop %v1200
      %v1223 = vrcp.pop %v1203
      %v1224 = vrcp.pop %v1206
      %v1225 = vrcp.pop %v1209
      %v1226 = vmul.f32 %v1131, %v1210
      %v1227 = vmul.f32 %v1133, %v1211
      %v1228 = vmul.f32 %v1135, %v1212
      %v1229 = vmul.f32 %v1137, %v1213
      %v1230 = vmul.f32 %v1139, %v1214
      %v1231 = vmul.f32 %v1141, %v1215
      %v1232 = vmul.f32 %v1143, %v1216
      %v1233 = vmul.f32 %v1145, %v1217
      %v1234 = vmul.f32 %v1147, %v1218
      %v1235 = vmul.f32 %v1149, %v1219
      %v1236 = vmul.f32 %v1151, %v1220
      %v1237 = vmul.f32 %v1153, %v1221
      %v1238 = vmul.f32 %v1155, %v1222
      %v1239 = vmul.f32 %v1157, %v1223
      %v1240 = vmul.f32 %v1159, %v1224
      %v1241 = vmul.f32 %v1161, %v1225
      %v1242 = vpack.c.bf16 %v1227, %v1226
      %v1243 = vpack.c.bf16 %v1229, %v1228
      %v1244 = vpack.c.bf16 %v1231, %v1230
      %v1245 = vpack.c.bf16 %v1233, %v1232
      %v1246 = vpack.c.bf16 %v1235, %v1234
      %v1247 = vpack.c.bf16 %v1237, %v1236
      %v1248 = vpack.c.bf16 %v1239, %v1238
      %v1249 = vpack.c.bf16 %v1241, %v1240
      %1250 = vrot.lane.b32.xlu0 %v838, 64
      %v1251 = vpop.permute.xlu0 %1250
      %1252 = vrot.lane.b32.xlu0 %v839, 64
      %v1253 = vpop.permute.xlu0 %1252
      %1254 = vrot.lane.b32.xlu0 %v840, 64
      %v1255 = vpop.permute.xlu0 %1254
      %1256 = vrot.lane.b32.xlu0 %v841, 64
      %v1257 = vpop.permute.xlu0 %1256
      %v1263 = vsel %vm1065, %v1242, 0
      %v1266 = vsel %vm1065, %v1243, 0
      %v1269 = vsel %vm1065, %v1244, 0
      %v1272 = vsel %vm1065, %v1245, 0
      %1274 = vmatprep.subr.bf16.mxu0 0
      %1275 = vmatpush1.bf16.msra.mxu0 %v1251
      %1276 = vmatprep.subr.bf16.mxu0 0
      %1277 = vmatpush1.bf16.msra.mxu0 %v1253
      %1278 = vmatprep.subr.bf16.mxu0 0
      %1279 = vmatpush1.bf16.msra.mxu0 %v1255
      %1280 = vmatprep.subr.bf16.mxu0 0
      %1281 = vmatpush1.bf16.msra.mxu0 %v1257
      %1282 = vmatprep.subr.bf16.mxu0 0
      %1283 = vmatpush1.bf16.msra.mxu0 0
      %1284 = vmatprep.subr.bf16.mxu0 0
      %1285 = vmatpush1.bf16.msra.mxu0 0
      %1286 = vmatprep.subr.bf16.mxu0 0
      %1287 = vmatpush1.bf16.msra.mxu0 0
      %1288 = vmatprep.subr.bf16.mxu0 0
      %1289 = vmatpush1.bf16.msra.mxu0 0
      %1290 = vmatprep.subr.bf16.mxu0 0
      %1291 = vmatpush1.bf16.msra.mxu0 0
      %1292 = vmatprep.subr.bf16.mxu0 0
      %1293 = vmatpush1.bf16.msra.mxu0 0
      %1294 = vmatprep.subr.bf16.mxu0 0
      %1295 = vmatpush1.bf16.msra.mxu0 0
      %1296 = vmatprep.subr.bf16.mxu0 0
      %1297 = vmatpush1.bf16.msra.mxu0 0
      %1298 = vmatprep.subr.bf16.mxu0 0
      %1299 = vmatpush1.bf16.msra.mxu0 0
      %1300 = vmatprep.subr.bf16.mxu0 0
      %1301 = vmatpush1.bf16.msra.mxu0 0
      %1302 = vmatprep.subr.bf16.mxu0 0
      %1303 = vmatpush1.bf16.msra.mxu0 0
      %1304 = vmatprep.subr.bf16.mxu0 0
      %1305 = vmatpush1.bf16.msra.mxu0 0
      %1306 = vmatprep.mubr.bf16.mxu0 0
      %1307 = vmatmul.mubr.bf16.gmra.mrb[0].mxu0 %v1263
      %v1308 = vpop.f32.mrb[0].mxu0
      %v1309 = vadd.f32 0.0, %v1308
      %v1310 = vpop.f32.mrb[0].mxu0
      %v1311 = vpop.f32.mrb[0].mxu0
      %v1312 = vadd.f32 0.0, %v1311
      %v1313 = vpop.f32.mrb[0].mxu0
      %1314 = vmatprep.mubr.bf16.mxu0 0
      %1315 = vmatmul.mubr.bf16.gmra.mrb[0].mxu0 %v1266
      %v1316 = vpop.f32.mrb[0].mxu0
      %v1317 = vadd.f32 0.0, %v1316
      %v1318 = vpop.f32.mrb[0].mxu0
      %v1319 = vpop.f32.mrb[0].mxu0
      %v1320 = vadd.f32 0.0, %v1319
      %v1321 = vpop.f32.mrb[0].mxu0
      %1322 = vmatprep.mubr.bf16.mxu0 0
      %1323 = vmatmul.mubr.bf16.gmra.mrb[0].mxu0 %v1269
      %v1324 = vpop.f32.mrb[0].mxu0
      %v1325 = vadd.f32 0.0, %v1324
      %v1326 = vpop.f32.mrb[0].mxu0
      %v1327 = vpop.f32.mrb[0].mxu0
      %v1328 = vadd.f32 0.0, %v1327
      %v1329 = vpop.f32.mrb[0].mxu0
      %1330 = vmatprep.mubr.bf16.mxu0 0
      %1331 = vmatmul.mubr.bf16.gmra.mrb[0].mxu0 %v1272
      %v1332 = vpop.f32.mrb[0].mxu0
      %v1333 = vadd.f32 0.0, %v1332
      %v1334 = vpop.f32.mrb[0].mxu0
      %v1335 = vpop.f32.mrb[0].mxu0
      %v1336 = vadd.f32 0.0, %v1335
      %v1337 = vpop.f32.mrb[0].mxu0
      %1338 = vdwg.mxu0
      %1339 = vrot.lane.b32.xlu0 %v842, 64
      %v1340 = vpop.permute.xlu0 %1339
      %1341 = vrot.lane.b32.xlu0 %v843, 64
      %v1342 = vpop.permute.xlu0 %1341
      %1343 = vrot.lane.b32.xlu0 %v844, 64
      %v1344 = vpop.permute.xlu0 %1343
      %1345 = vrot.lane.b32.xlu0 %v845, 64
      %v1346 = vpop.permute.xlu0 %1345
      %v1352 = vsel %vm1065, %v1246, 0
      %v1355 = vsel %vm1065, %v1247, 0
      %v1358 = vsel %vm1065, %v1248, 0
      %v1361 = vsel %vm1065, %v1249, 0
      %1363 = vmatprep.subr.bf16.mxu0 0
      %1364 = vmatpush1.bf16.msra.mxu0 %v1340
      %1365 = vmatprep.subr.bf16.mxu0 0
      %1366 = vmatpush1.bf16.msra.mxu0 %v1342
      %1367 = vmatprep.subr.bf16.mxu0 0
      %1368 = vmatpush1.bf16.msra.mxu0 %v1344
      %1369 = vmatprep.subr.bf16.mxu0 0
      %1370 = vmatpush1.bf16.msra.mxu0 %v1346
      %1371 = vmatprep.subr.bf16.mxu0 0
      %1372 = vmatpush1.bf16.msra.mxu0 0
      %1373 = vmatprep.subr.bf16.mxu0 0
      %1374 = vmatpush1.bf16.msra.mxu0 0
      %1375 = vmatprep.subr.bf16.mxu0 0
      %1376 = vmatpush1.bf16.msra.mxu0 0
      %1377 = vmatprep.subr.bf16.mxu0 0
      %1378 = vmatpush1.bf16.msra.mxu0 0
      %1379 = vmatprep.subr.bf16.mxu0 0
      %1380 = vmatpush1.bf16.msra.mxu0 0
      %1381 = vmatprep.subr.bf16.mxu0 0
      %1382 = vmatpush1.bf16.msra.mxu0 0
      %1383 = vmatprep.subr.bf16.mxu0 0
      %1384 = vmatpush1.bf16.msra.mxu0 0
      %1385 = vmatprep.subr.bf16.mxu0 0
      %1386 = vmatpush1.bf16.msra.mxu0 0
      %1387 = vmatprep.subr.bf16.mxu0 0
      %1388 = vmatpush1.bf16.msra.mxu0 0
      %1389 = vmatprep.subr.bf16.mxu0 0
      %1390 = vmatpush1.bf16.msra.mxu0 0
      %1391 = vmatprep.subr.bf16.mxu0 0
      %1392 = vmatpush1.bf16.msra.mxu0 0
      %1393 = vmatprep.subr.bf16.mxu0 0
      %1394 = vmatpush1.bf16.msra.mxu0 0
      %1395 = vmatprep.mubr.bf16.mxu0 0
      %1396 = vmatmul.mubr.bf16.gmra.mrb[0].mxu0 %v1352
      %v1397 = vpop.f32.mrb[0].mxu0
      %v1398 = vadd.f32 0.0, %v1397
      %v1399 = vpop.f32.mrb[0].mxu0
      %v1400 = vpop.f32.mrb[0].mxu0
      %v1401 = vadd.f32 0.0, %v1400
      %v1402 = vpop.f32.mrb[0].mxu0
      %1403 = vmatprep.mubr.bf16.mxu0 0
      %1404 = vmatmul.mubr.bf16.gmra.mrb[0].mxu0 %v1355
      %v1405 = vpop.f32.mrb[0].mxu0
      %v1406 = vadd.f32 0.0, %v1405
      %v1407 = vpop.f32.mrb[0].mxu0
      %v1408 = vpop.f32.mrb[0].mxu0
      %v1409 = vadd.f32 0.0, %v1408
      %v1410 = vpop.f32.mrb[0].mxu0
      %1411 = vmatprep.mubr.bf16.mxu0 0
      %1412 = vmatmul.mubr.bf16.gmra.mrb[0].mxu0 %v1358
      %v1413 = vpop.f32.mrb[0].mxu0
      %v1414 = vadd.f32 0.0, %v1413
      %v1415 = vpop.f32.mrb[0].mxu0
      %v1416 = vpop.f32.mrb[0].mxu0
      %v1417 = vadd.f32 0.0, %v1416
      %v1418 = vpop.f32.mrb[0].mxu0
      %1419 = vmatprep.mubr.bf16.mxu0 0
      %1420 = vmatmul.mubr.bf16.gmra.mrb[0].mxu0 %v1361
      %v1421 = vpop.f32.mrb[0].mxu0
      %v1422 = vadd.f32 0.0, %v1421
      %v1423 = vpop.f32.mrb[0].mxu0
      %v1424 = vpop.f32.mrb[0].mxu0
      %v1425 = vadd.f32 0.0, %v1424
      %v1426 = vpop.f32.mrb[0].mxu0
      %1427 = vdwg.mxu0
      %1428 = vrot.lane.b32.xlu0 %v838, 120
      %v1429 = vpop.permute.xlu0 %1428
      %1430 = vrot.lane.b32.xlu0 %v839, 120
      %v1431 = vpop.permute.xlu0 %1430
      %1432 = vrot.lane.b32.xlu0 %v840, 120
      %v1433 = vpop.permute.xlu0 %1432
      %1434 = vrot.lane.b32.xlu0 %v841, 120
      %v1435 = vpop.permute.xlu0 %1434
      %1436 = vrot.lane.b32.xlu0 %v838, 88
      %v1437 = vpop.permute.xlu0 %1436
      %1438 = vrot.lane.b32.xlu0 %v839, 88
      %v1439 = vpop.permute.xlu0 %1438
      %1440 = vrot.lane.b32.xlu0 %v840, 88
      %v1441 = vpop.permute.xlu0 %1440
      %1442 = vrot.lane.b32.xlu0 %v841, 88
      %v1443 = vpop.permute.xlu0 %1442
      %v1445 = vsel %vm858, %v1429, 0
      %v1448 = vsel %vm858, %v1431, 0
      %v1451 = vsel %vm858, %v1433, 0
      %v1454 = vsel %vm858, %v1435, 0
      %v1457 = vsel %vm858, %v1437, 0
      %v1460 = vsel %vm858, %v1439, 0
      %v1463 = vsel %vm858, %v1441, 0
      %v1466 = vsel %vm858, %v1443, 0
      %1468 = vmatprep.subr.bf16.mxu0 0
      %1469 = vmatpush1.bf16.xpose.msra.mxu0 %v1457
      %1470 = vmatprep.subr.bf16.mxu0 0
      %1471 = vmatpush1.bf16.xpose.msra.mxu0 %v1460
      %1472 = vmatprep.subr.bf16.mxu0 0
      %1473 = vmatpush1.bf16.xpose.msra.mxu0 %v1463
      %1474 = vmatprep.subr.bf16.mxu0 0
      %1475 = vmatpush1.bf16.xpose.msra.mxu0 %v1466
      %1476 = vmatprep.subr.bf16.mxu0 0
      %1477 = vmatpush1.bf16.xpose.msra.mxu0 0
      %1478 = vmatprep.subr.bf16.mxu0 0
      %1479 = vmatpush1.bf16.xpose.msra.mxu0 0
      %1480 = vmatprep.subr.bf16.mxu0 0
      %1481 = vmatpush1.bf16.xpose.msra.mxu0 0
      %1482 = vmatprep.subr.bf16.mxu0 0
      %1483 = vmatpush1.bf16.xpose.msra.mxu0 0
      %1484 = vmatprep.subr.bf16.mxu0 0
      %1485 = vmatpush1.bf16.xpose.msra.mxu0 0
      %1486 = vmatprep.subr.bf16.mxu0 0
      %1487 = vmatpush1.bf16.xpose.msra.mxu0 0
      %1488 = vmatprep.subr.bf16.mxu0 0
      %1489 = vmatpush1.bf16.xpose.msra.mxu0 0
      %1490 = vmatprep.subr.bf16.mxu0 0
      %1491 = vmatpush1.bf16.xpose.msra.mxu0 0
      %1492 = vmatprep.subr.bf16.mxu0 0
      %1493 = vmatpush1.bf16.xpose.msra.mxu0 0
      %1494 = vmatprep.subr.bf16.mxu0 0
      %1495 = vmatpush1.bf16.xpose.msra.mxu0 0
      %1496 = vmatprep.subr.bf16.mxu0 0
      %1497 = vmatpush1.bf16.xpose.msra.mxu0 0
      %1498 = vmatprep.subr.bf16.mxu0 0
      %1499 = vmatpush1.bf16.xpose.msra.mxu0 0
      %1500 = vmatprep.mubr.bf16.mxu0 0
      %1501 = vmatmul.mubr.bf16.gmra.mrb[0].mxu0 %v1445
      %v1502 = vpop.f32.mrb[0].mxu0
      %v1503 = vadd.f32 0.0, %v1502
      %v1504 = vpop.f32.mrb[0].mxu0
      %v1505 = vpop.f32.mrb[0].mxu0
      %v1506 = vadd.f32 0.0, %v1505
      %v1507 = vpop.f32.mrb[0].mxu0
      %1508 = vmatprep.mubr.bf16.mxu0 0
      %1509 = vmatmul.mubr.bf16.gmra.mrb[0].mxu0 %v1448
      %v1510 = vpop.f32.mrb[0].mxu0
      %v1511 = vadd.f32 0.0, %v1510
      %v1512 = vpop.f32.mrb[0].mxu0
      %v1513 = vpop.f32.mrb[0].mxu0
      %v1514 = vadd.f32 0.0, %v1513
      %v1515 = vpop.f32.mrb[0].mxu0
      %1516 = vmatprep.mubr.bf16.mxu0 0
      %1517 = vmatmul.mubr.bf16.gmra.mrb[0].mxu0 %v1451
      %v1518 = vpop.f32.mrb[0].mxu0
      %v1519 = vadd.f32 0.0, %v1518
      %v1520 = vpop.f32.mrb[0].mxu0
      %v1521 = vpop.f32.mrb[0].mxu0
      %v1522 = vadd.f32 0.0, %v1521
      %v1523 = vpop.f32.mrb[0].mxu0
      %1524 = vmatprep.mubr.bf16.mxu0 0
      %1525 = vmatmul.mubr.bf16.gmra.mrb[0].mxu0 %v1454
      %v1526 = vpop.f32.mrb[0].mxu0
      %v1527 = vadd.f32 0.0, %v1526
      %v1528 = vpop.f32.mrb[0].mxu0
      %v1529 = vpop.f32.mrb[0].mxu0
      %v1530 = vadd.f32 0.0, %v1529
      %v1531 = vpop.f32.mrb[0].mxu0
      %1532 = vdwg.mxu0
      %1533 = vrot.lane.b32.xlu0 %v842, 120
      %v1534 = vpop.permute.xlu0 %1533
      %1535 = vrot.lane.b32.xlu0 %v843, 120
      %v1536 = vpop.permute.xlu0 %1535
      %1537 = vrot.lane.b32.xlu0 %v844, 120
      %v1538 = vpop.permute.xlu0 %1537
      %1539 = vrot.lane.b32.xlu0 %v845, 120
      %v1540 = vpop.permute.xlu0 %1539
      %1541 = vrot.lane.b32.xlu0 %v842, 88
      %v1542 = vpop.permute.xlu0 %1541
      %1543 = vrot.lane.b32.xlu0 %v843, 88
      %v1544 = vpop.permute.xlu0 %1543
      %1545 = vrot.lane.b32.xlu0 %v844, 88
      %v1546 = vpop.permute.xlu0 %1545
      %1547 = vrot.lane.b32.xlu0 %v845, 88
      %v1548 = vpop.permute.xlu0 %1547
      %v1550 = vsel %vm858, %v1534, 0
      %v1553 = vsel %vm858, %v1536, 0
      %v1556 = vsel %vm858, %v1538, 0
      %v1559 = vsel %vm858, %v1540, 0
      %v1562 = vsel %vm858, %v1542, 0
      %v1565 = vsel %vm858, %v1544, 0
      %v1568 = vsel %vm858, %v1546, 0
      %v1571 = vsel %vm858, %v1548, 0
      %1573 = vmatprep.subr.bf16.mxu0 0
      %1574 = vmatpush1.bf16.xpose.msra.mxu0 %v1562
      %1575 = vmatprep.subr.bf16.mxu0 0
      %1576 = vmatpush1.bf16.xpose.msra.mxu0 %v1565
      %1577 = vmatprep.subr.bf16.mxu0 0
      %1578 = vmatpush1.bf16.xpose.msra.mxu0 %v1568
      %1579 = vmatprep.subr.bf16.mxu0 0
      %1580 = vmatpush1.bf16.xpose.msra.mxu0 %v1571
      %1581 = vmatprep.subr.bf16.mxu0 0
      %1582 = vmatpush1.bf16.xpose.msra.mxu0 0
      %1583 = vmatprep.subr.bf16.mxu0 0
      %1584 = vmatpush1.bf16.xpose.msra.mxu0 0
      %1585 = vmatprep.subr.bf16.mxu0 0
      %1586 = vmatpush1.bf16.xpose.msra.mxu0 0
      %1587 = vmatprep.subr.bf16.mxu0 0
      %1588 = vmatpush1.bf16.xpose.msra.mxu0 0
      %1589 = vmatprep.subr.bf16.mxu0 0
      %1590 = vmatpush1.bf16.xpose.msra.mxu0 0
      %1591 = vmatprep.subr.bf16.mxu0 0
      %1592 = vmatpush1.bf16.xpose.msra.mxu0 0
      %1593 = vmatprep.subr.bf16.mxu0 0
      %1594 = vmatpush1.bf16.xpose.msra.mxu0 0
      %1595 = vmatprep.subr.bf16.mxu0 0
      %1596 = vmatpush1.bf16.xpose.msra.mxu0 0
      %1597 = vmatprep.subr.bf16.mxu0 0
      %1598 = vmatpush1.bf16.xpose.msra.mxu0 0
      %1599 = vmatprep.subr.bf16.mxu0 0
      %1600 = vmatpush1.bf16.xpose.msra.mxu0 0
      %1601 = vmatprep.subr.bf16.mxu0 0
      %1602 = vmatpush1.bf16.xpose.msra.mxu0 0
      %1603 = vmatprep.subr.bf16.mxu0 0
      %1604 = vmatpush1.bf16.xpose.msra.mxu0 0
      %1605 = vmatprep.mubr.bf16.mxu0 0
      %1606 = vmatmul.mubr.bf16.gmra.mrb[0].mxu0 %v1550
      %v1607 = vpop.f32.mrb[0].mxu0
      %v1608 = vadd.f32 0.0, %v1607
      %v1609 = vpop.f32.mrb[0].mxu0
      %v1610 = vpop.f32.mrb[0].mxu0
      %v1611 = vadd.f32 0.0, %v1610
      %v1612 = vpop.f32.mrb[0].mxu0
      %1613 = vmatprep.mubr.bf16.mxu0 0
      %1614 = vmatmul.mubr.bf16.gmra.mrb[0].mxu0 %v1553
      %v1615 = vpop.f32.mrb[0].mxu0
      %v1616 = vadd.f32 0.0, %v1615
      %v1617 = vpop.f32.mrb[0].mxu0
      %v1618 = vpop.f32.mrb[0].mxu0
      %v1619 = vadd.f32 0.0, %v1618
      %v1620 = vpop.f32.mrb[0].mxu0
      %1621 = vmatprep.mubr.bf16.mxu0 0
      %1622 = vmatmul.mubr.bf16.gmra.mrb[0].mxu0 %v1556
      %v1623 = vpop.f32.mrb[0].mxu0
      %v1624 = vadd.f32 0.0, %v1623
      %v1625 = vpop.f32.mrb[0].mxu0
      %v1626 = vpop.f32.mrb[0].mxu0
      %v1627 = vadd.f32 0.0, %v1626
      %v1628 = vpop.f32.mrb[0].mxu0
      %1629 = vmatprep.mubr.bf16.mxu0 0
      %1630 = vmatmul.mubr.bf16.gmra.mrb[0].mxu0 %v1559
      %v1631 = vpop.f32.mrb[0].mxu0
      %v1632 = vadd.f32 0.0, %v1631
      %v1633 = vpop.f32.mrb[0].mxu0
      %v1634 = vpop.f32.mrb[0].mxu0
      %v1635 = vadd.f32 0.0, %v1634
      %v1636 = vpop.f32.mrb[0].mxu0
      %1637 = vdwg.mxu0
      %v1638 = vmul.f32 %v1503, 0.35355338
      %v1639 = vmul.f32 %v1506, 0.35355338
      %v1640 = vmul.f32 %v1511, 0.35355338
      %v1641 = vmul.f32 %v1514, 0.35355338
      %v1642 = vmul.f32 %v1519, 0.35355338
      %v1643 = vmul.f32 %v1522, 0.35355338
      %v1644 = vmul.f32 %v1527, 0.35355338
      %v1645 = vmul.f32 %v1530, 0.35355338
      %v1646 = vmul.f32 %v1608, 0.35355338
      %v1647 = vmul.f32 %v1611, 0.35355338
      %v1648 = vmul.f32 %v1616, 0.35355338
      %v1649 = vmul.f32 %v1619, 0.35355338
      %v1650 = vmul.f32 %v1624, 0.35355338
      %v1651 = vmul.f32 %v1627, 0.35355338
      %v1652 = vmul.f32 %v1632, 0.35355338
      %v1653 = vmul.f32 %v1635, 0.35355338
      %v1654 = vsel %vm1065, %v1638, -inf
      %1655 = vmax.xlane.f32.xlu0 %v1654
      %v1656 = vpop.xlane.xlu0 %1655
      %v1657 = vsel %vm1065, %v1639, -inf
      %1658 = vmax.xlane.f32.xlu0 %v1657
      %v1659 = vpop.xlane.xlu0 %1658
      %v1660 = vsel %vm1065, %v1640, -inf
      %1661 = vmax.xlane.f32.xlu0 %v1660
      %v1662 = vpop.xlane.xlu0 %1661
      %v1663 = vsel %vm1065, %v1641, -inf
      %1664 = vmax.xlane.f32.xlu0 %v1663
      %v1665 = vpop.xlane.xlu0 %1664
      %v1666 = vsel %vm1065, %v1642, -inf
      %1667 = vmax.xlane.f32.xlu0 %v1666
      %v1668 = vpop.xlane.xlu0 %1667
      %v1669 = vsel %vm1065, %v1643, -inf
      %1670 = vmax.xlane.f32.xlu0 %v1669
      %v1671 = vpop.xlane.xlu0 %1670
      %v1672 = vsel %vm1065, %v1644, -inf
      %1673 = vmax.xlane.f32.xlu0 %v1672
      %v1674 = vpop.xlane.xlu0 %1673
      %v1675 = vsel %vm1065, %v1645, -inf
      %1676 = vmax.xlane.f32.xlu0 %v1675
      %v1677 = vpop.xlane.xlu0 %1676
      %v1678 = vsel %vm1065, %v1646, -inf
      %1679 = vmax.xlane.f32.xlu0 %v1678
      %v1680 = vpop.xlane.xlu0 %1679
      %v1681 = vsel %vm1065, %v1647, -inf
      %1682 = vmax.xlane.f32.xlu0 %v1681
      %v1683 = vpop.xlane.xlu0 %1682
      %v1684 = vsel %vm1065, %v1648, -inf
      %1685 = vmax.xlane.f32.xlu0 %v1684
      %v1686 = vpop.xlane.xlu0 %1685
      %v1687 = vsel %vm1065, %v1649, -inf
      %1688 = vmax.xlane.f32.xlu0 %v1687
      %v1689 = vpop.xlane.xlu0 %1688
      %v1690 = vsel %vm1065, %v1650, -inf
      %1691 = vmax.xlane.f32.xlu0 %v1690
      %v1692 = vpop.xlane.xlu0 %1691
      %v1693 = vsel %vm1065, %v1651, -inf
      %1694 = vmax.xlane.f32.xlu0 %v1693
      %v1695 = vpop.xlane.xlu0 %1694
      %v1696 = vsel %vm1065, %v1652, -inf
      %1697 = vmax.xlane.f32.xlu0 %v1696
      %v1698 = vpop.xlane.xlu0 %1697
      %v1699 = vsel %vm1065, %v1653, -inf
      %1700 = vmax.xlane.f32.xlu0 %v1699
      %v1701 = vpop.xlane.xlu0 %1700
      %v1702 = vsub.f32 %v1638, %v1656
      %v1703 = vsub.f32 %v1639, %v1659
      %v1704 = vsub.f32 %v1640, %v1662
      %v1705 = vsub.f32 %v1641, %v1665
      %v1706 = vsub.f32 %v1642, %v1668
      %v1707 = vsub.f32 %v1643, %v1671
      %v1708 = vsub.f32 %v1644, %v1674
      %v1709 = vsub.f32 %v1645, %v1677
      %v1710 = vsub.f32 %v1646, %v1680
      %v1711 = vsub.f32 %v1647, %v1683
      %v1712 = vsub.f32 %v1648, %v1686
      %v1713 = vsub.f32 %v1649, %v1689
      %v1714 = vsub.f32 %v1650, %v1692
      %v1715 = vsub.f32 %v1651, %v1695
      %v1716 = vsub.f32 %v1652, %v1698
      %v1717 = vsub.f32 %v1653, %v1701
      %v1718 = vmul.f32 %v1702, 1.442695
      %v1719 = vpow.pop %v1718
      %v1720 = vmul.f32 %v1703, 1.442695
      %v1721 = vpow.pop %v1720
      %v1722 = vmul.f32 %v1704, 1.442695
      %v1723 = vpow.pop %v1722
      %v1724 = vmul.f32 %v1705, 1.442695
      %v1725 = vpow.pop %v1724
      %v1726 = vmul.f32 %v1706, 1.442695
      %v1727 = vpow.pop %v1726
      %v1728 = vmul.f32 %v1707, 1.442695
      %v1729 = vpow.pop %v1728
      %v1730 = vmul.f32 %v1708, 1.442695
      %v1731 = vpow.pop %v1730
      %v1732 = vmul.f32 %v1709, 1.442695
      %v1733 = vpow.pop %v1732
      %v1734 = vmul.f32 %v1710, 1.442695
      %v1735 = vpow.pop %v1734
      %v1736 = vmul.f32 %v1711, 1.442695
      %v1737 = vpow.pop %v1736
      %v1738 = vmul.f32 %v1712, 1.442695
      %v1739 = vpow.pop %v1738
      %v1740 = vmul.f32 %v1713, 1.442695
      %v1741 = vpow.pop %v1740
      %v1742 = vmul.f32 %v1714, 1.442695
      %v1743 = vpow.pop %v1742
      %v1744 = vmul.f32 %v1715, 1.442695
      %v1745 = vpow.pop %v1744
      %v1746 = vmul.f32 %v1716, 1.442695
      %v1747 = vpow.pop %v1746
      %v1748 = vmul.f32 %v1717, 1.442695
      %v1749 = vpow.pop %v1748
      %v1750 = vsel %vm1065, %v1719, 0.0
      %1751 = vadd.xlane.f32.xlu0 %v1750
      %v1752 = vpop.xlane.xlu0 %1751
      %v1753 = vsel %vm1065, %v1721, 0.0
      %1754 = vadd.xlane.f32.xlu0 %v1753
      %v1755 = vpop.xlane.xlu0 %1754
      %v1756 = vsel %vm1065, %v1723, 0.0
      %1757 = vadd.xlane.f32.xlu0 %v1756
      %v1758 = vpop.xlane.xlu0 %1757
      %v1759 = vsel %vm1065, %v1725, 0.0
      %1760 = vadd.xlane.f32.xlu0 %v1759
      %v1761 = vpop.xlane.xlu0 %1760
      %v1762 = vsel %vm1065, %v1727, 0.0
      %1763 = vadd.xlane.f32.xlu0 %v1762
      %v1764 = vpop.xlane.xlu0 %1763
      %v1765 = vsel %vm1065, %v1729, 0.0
      %1766 = vadd.xlane.f32.xlu0 %v1765
      %v1767 = vpop.xlane.xlu0 %1766
      %v1768 = vsel %vm1065, %v1731, 0.0
      %1769 = vadd.xlane.f32.xlu0 %v1768
      %v1770 = vpop.xlane.xlu0 %1769
      %v1771 = vsel %vm1065, %v1733, 0.0
      %1772 = vadd.xlane.f32.xlu0 %v1771
      %v1773 = vpop.xlane.xlu0 %1772
      %v1774 = vsel %vm1065, %v1735, 0.0
      %1775 = vadd.xlane.f32.xlu0 %v1774
      %v1776 = vpop.xlane.xlu0 %1775
      %v1777 = vsel %vm1065, %v1737, 0.0
      %1778 = vadd.xlane.f32.xlu0 %v1777
      %v1779 = vpop.xlane.xlu0 %1778
      %v1780 = vsel %vm1065, %v1739, 0.0
      %1781 = vadd.xlane.f32.xlu0 %v1780
      %v1782 = vpop.xlane.xlu0 %1781
      %v1783 = vsel %vm1065, %v1741, 0.0
      %1784 = vadd.xlane.f32.xlu0 %v1783
      %v1785 = vpop.xlane.xlu0 %1784
      %v1786 = vsel %vm1065, %v1743, 0.0
      %1787 = vadd.xlane.f32.xlu0 %v1786
      %v1788 = vpop.xlane.xlu0 %1787
      %v1789 = vsel %vm1065, %v1745, 0.0
      %1790 = vadd.xlane.f32.xlu0 %v1789
      %v1791 = vpop.xlane.xlu0 %1790
      %v1792 = vsel %vm1065, %v1747, 0.0
      %1793 = vadd.xlane.f32.xlu0 %v1792
      %v1794 = vpop.xlane.xlu0 %1793
      %v1795 = vsel %vm1065, %v1749, 0.0
      %1796 = vadd.xlane.f32.xlu0 %v1795
      %v1797 = vpop.xlane.xlu0 %1796
      %v1798 = vrcp.pop %v1752
      %v1799 = vrcp.pop %v1755
      %v1800 = vrcp.pop %v1758
      %v1801 = vrcp.pop %v1761
      %v1802 = vrcp.pop %v1764
      %v1803 = vrcp.pop %v1767
      %v1804 = vrcp.pop %v1770
      %v1805 = vrcp.pop %v1773
      %v1806 = vrcp.pop %v1776
      %v1807 = vrcp.pop %v1779
      %v1808 = vrcp.pop %v1782
      %v1809 = vrcp.pop %v1785
      %v1810 = vrcp.pop %v1788
      %v1811 = vrcp.pop %v1791
      %v1812 = vrcp.pop %v1794
      %v1813 = vrcp.pop %v1797
      %v1814 = vmul.f32 %v1719, %v1798
      %v1815 = vmul.f32 %v1721, %v1799
      %v1816 = vmul.f32 %v1723, %v1800
      %v1817 = vmul.f32 %v1725, %v1801
      %v1818 = vmul.f32 %v1727, %v1802
      %v1819 = vmul.f32 %v1729, %v1803
      %v1820 = vmul.f32 %v1731, %v1804
      %v1821 = vmul.f32 %v1733, %v1805
      %v1822 = vmul.f32 %v1735, %v1806
      %v1823 = vmul.f32 %v1737, %v1807
      %v1824 = vmul.f32 %v1739, %v1808
      %v1825 = vmul.f32 %v1741, %v1809
      %v1826 = vmul.f32 %v1743, %v1810
      %v1827 = vmul.f32 %v1745, %v1811
      %v1828 = vmul.f32 %v1747, %v1812
      %v1829 = vmul.f32 %v1749, %v1813
      %v1830 = vpack.c.bf16 %v1815, %v1814
      %v1831 = vpack.c.bf16 %v1817, %v1816
      %v1832 = vpack.c.bf16 %v1819, %v1818
      %v1833 = vpack.c.bf16 %v1821, %v1820
      %v1834 = vpack.c.bf16 %v1823, %v1822
      %v1835 = vpack.c.bf16 %v1825, %v1824
      %v1836 = vpack.c.bf16 %v1827, %v1826
      %v1837 = vpack.c.bf16 %v1829, %v1828
      %1838 = vrot.lane.b32.xlu0 %v838, 56
      %v1839 = vpop.permute.xlu0 %1838
      %1840 = vrot.lane.b32.xlu0 %v839, 56
      %v1841 = vpop.permute.xlu0 %1840
      %1842 = vrot.lane.b32.xlu0 %v840, 56
      %v1843 = vpop.permute.xlu0 %1842
      %1844 = vrot.lane.b32.xlu0 %v841, 56
      %v1845 = vpop.permute.xlu0 %1844
      %v1851 = vsel %vm1065, %v1830, 0
      %v1854 = vsel %vm1065, %v1831, 0
      %v1857 = vsel %vm1065, %v1832, 0
      %v1860 = vsel %vm1065, %v1833, 0
      %1862 = vmatprep.subr.bf16.mxu0 0
      %1863 = vmatpush1.bf16.msra.mxu0 %v1839
      %1864 = vmatprep.subr.bf16.mxu0 0
      %1865 = vmatpush1.bf16.msra.mxu0 %v1841
      %1866 = vmatprep.subr.bf16.mxu0 0
      %1867 = vmatpush1.bf16.msra.mxu0 %v1843
      %1868 = vmatprep.subr.bf16.mxu0 0
      %1869 = vmatpush1.bf16.msra.mxu0 %v1845
      %1870 = vmatprep.subr.bf16.mxu0 0
      %1871 = vmatpush1.bf16.msra.mxu0 0
      %1872 = vmatprep.subr.bf16.mxu0 0
      %1873 = vmatpush1.bf16.msra.mxu0 0
      %1874 = vmatprep.subr.bf16.mxu0 0
      %1875 = vmatpush1.bf16.msra.mxu0 0
      %1876 = vmatprep.subr.bf16.mxu0 0
      %1877 = vmatpush1.bf16.msra.mxu0 0
      %1878 = vmatprep.subr.bf16.mxu0 0
      %1879 = vmatpush1.bf16.msra.mxu0 0
      %1880 = vmatprep.subr.bf16.mxu0 0
      %1881 = vmatpush1.bf16.msra.mxu0 0
      %1882 = vmatprep.subr.bf16.mxu0 0
      %1883 = vmatpush1.bf16.msra.mxu0 0
      %1884 = vmatprep.subr.bf16.mxu0 0
      %1885 = vmatpush1.bf16.msra.mxu0 0
      %1886 = vmatprep.subr.bf16.mxu0 0
      %1887 = vmatpush1.bf16.msra.mxu0 0
      %1888 = vmatprep.subr.bf16.mxu0 0
      %1889 = vmatpush1.bf16.msra.mxu0 0
      %1890 = vmatprep.subr.bf16.mxu0 0
      %1891 = vmatpush1.bf16.msra.mxu0 0
      %1892 = vmatprep.subr.bf16.mxu0 0
      %1893 = vmatpush1.bf16.msra.mxu0 0
      %1894 = vmatprep.mubr.bf16.mxu0 0
      %1895 = vmatmul.mubr.bf16.gmra.mrb[0].mxu0 %v1851
      %v1896 = vpop.f32.mrb[0].mxu0
      %v1897 = vadd.f32 0.0, %v1896
      %v1898 = vpop.f32.mrb[0].mxu0
      %v1899 = vpop.f32.mrb[0].mxu0
      %v1900 = vadd.f32 0.0, %v1899
      %v1901 = vpop.f32.mrb[0].mxu0
      %1902 = vmatprep.mubr.bf16.mxu0 0
      %1903 = vmatmul.mubr.bf16.gmra.mrb[0].mxu0 %v1854
      %v1904 = vpop.f32.mrb[0].mxu0
      %v1905 = vadd.f32 0.0, %v1904
      %v1906 = vpop.f32.mrb[0].mxu0
      %v1907 = vpop.f32.mrb[0].mxu0
      %v1908 = vadd.f32 0.0, %v1907
      %v1909 = vpop.f32.mrb[0].mxu0
      %1910 = vmatprep.mubr.bf16.mxu0 0
      %1911 = vmatmul.mubr.bf16.gmra.mrb[0].mxu0 %v1857
      %v1912 = vpop.f32.mrb[0].mxu0
      %v1913 = vadd.f32 0.0, %v1912
      %v1914 = vpop.f32.mrb[0].mxu0
      %v1915 = vpop.f32.mrb[0].mxu0
      %v1916 = vadd.f32 0.0, %v1915
      %v1917 = vpop.f32.mrb[0].mxu0
      %1918 = vmatprep.mubr.bf16.mxu0 0
      %1919 = vmatmul.mubr.bf16.gmra.mrb[0].mxu0 %v1860
      %v1920 = vpop.f32.mrb[0].mxu0
      %v1921 = vadd.f32 0.0, %v1920
      %v1922 = vpop.f32.mrb[0].mxu0
      %v1923 = vpop.f32.mrb[0].mxu0
      %v1924 = vadd.f32 0.0, %v1923
      %v1925 = vpop.f32.mrb[0].mxu0
      %1926 = vdwg.mxu0
      %1927 = vrot.lane.b32.xlu0 %v842, 56
      %v1928 = vpop.permute.xlu0 %1927
      %1929 = vrot.lane.b32.xlu0 %v843, 56
      %v1930 = vpop.permute.xlu0 %1929
      %1931 = vrot.lane.b32.xlu0 %v844, 56
      %v1932 = vpop.permute.xlu0 %1931
      %1933 = vrot.lane.b32.xlu0 %v845, 56
      %v1934 = vpop.permute.xlu0 %1933
      %v1940 = vsel %vm1065, %v1834, 0
      %v1943 = vsel %vm1065, %v1835, 0
      %v1946 = vsel %vm1065, %v1836, 0
      %v1949 = vsel %vm1065, %v1837, 0
      %1951 = vmatprep.subr.bf16.mxu0 0
      %1952 = vmatpush1.bf16.msra.mxu0 %v1928
      %1953 = vmatprep.subr.bf16.mxu0 0
      %1954 = vmatpush1.bf16.msra.mxu0 %v1930
      %1955 = vmatprep.subr.bf16.mxu0 0
      %1956 = vmatpush1.bf16.msra.mxu0 %v1932
      %1957 = vmatprep.subr.bf16.mxu0 0
      %1958 = vmatpush1.bf16.msra.mxu0 %v1934
      %1959 = vmatprep.subr.bf16.mxu0 0
      %1960 = vmatpush1.bf16.msra.mxu0 0
      %1961 = vmatprep.subr.bf16.mxu0 0
      %1962 = vmatpush1.bf16.msra.mxu0 0
      %1963 = vmatprep.subr.bf16.mxu0 0
      %1964 = vmatpush1.bf16.msra.mxu0 0
      %1965 = vmatprep.subr.bf16.mxu0 0
      %1966 = vmatpush1.bf16.msra.mxu0 0
      %1967 = vmatprep.subr.bf16.mxu0 0
      %1968 = vmatpush1.bf16.msra.mxu0 0
      %1969 = vmatprep.subr.bf16.mxu0 0
      %1970 = vmatpush1.bf16.msra.mxu0 0
      %1971 = vmatprep.subr.bf16.mxu0 0
      %1972 = vmatpush1.bf16.msra.mxu0 0
      %1973 = vmatprep.subr.bf16.mxu0 0
      %1974 = vmatpush1.bf16.msra.mxu0 0
      %1975 = vmatprep.subr.bf16.mxu0 0
      %1976 = vmatpush1.bf16.msra.mxu0 0
      %1977 = vmatprep.subr.bf16.mxu0 0
      %1978 = vmatpush1.bf16.msra.mxu0 0
      %1979 = vmatprep.subr.bf16.mxu0 0
      %1980 = vmatpush1.bf16.msra.mxu0 0
      %1981 = vmatprep.subr.bf16.mxu0 0
      %1982 = vmatpush1.bf16.msra.mxu0 0
      %1983 = vmatprep.mubr.bf16.mxu0 0
      %1984 = vmatmul.mubr.bf16.gmra.mrb[0].mxu0 %v1940
      %v1985 = vpop.f32.mrb[0].mxu0
      %v1986 = vadd.f32 0.0, %v1985
      %v1987 = vpop.f32.mrb[0].mxu0
      %v1988 = vpop.f32.mrb[0].mxu0
      %v1989 = vadd.f32 0.0, %v1988
      %v1990 = vpop.f32.mrb[0].mxu0
      %1991 = vmatprep.mubr.bf16.mxu0 0
      %1992 = vmatmul.mubr.bf16.gmra.mrb[0].mxu0 %v1943
      %v1993 = vpop.f32.mrb[0].mxu0
      %v1994 = vadd.f32 0.0, %v1993
      %v1995 = vpop.f32.mrb[0].mxu0
      %v1996 = vpop.f32.mrb[0].mxu0
      %v1997 = vadd.f32 0.0, %v1996
      %v1998 = vpop.f32.mrb[0].mxu0
      %1999 = vmatprep.mubr.bf16.mxu0 0
      %2000 = vmatmul.mubr.bf16.gmra.mrb[0].mxu0 %v1946
      %v2001 = vpop.f32.mrb[0].mxu0
      %v2002 = vadd.f32 0.0, %v2001
      %v2003 = vpop.f32.mrb[0].mxu0
      %v2004 = vpop.f32.mrb[0].mxu0
      %v2005 = vadd.f32 0.0, %v2004
      %v2006 = vpop.f32.mrb[0].mxu0
      %2007 = vmatprep.mubr.bf16.mxu0 0
      %2008 = vmatmul.mubr.bf16.gmra.mrb[0].mxu0 %v1949
      %v2009 = vpop.f32.mrb[0].mxu0
      %v2010 = vadd.f32 0.0, %v2009
      %v2011 = vpop.f32.mrb[0].mxu0
      %v2012 = vpop.f32.mrb[0].mxu0
      %v2013 = vadd.f32 0.0, %v2012
      %v2014 = vpop.f32.mrb[0].mxu0
      %2015 = vdwg.mxu0
      %2016 = vrot.lane.b32.xlu0 %v838, 112
      %v2017 = vpop.permute.xlu0 %2016
      %2018 = vrot.lane.b32.xlu0 %v839, 112
      %v2019 = vpop.permute.xlu0 %2018
      %2020 = vrot.lane.b32.xlu0 %v840, 112
      %v2021 = vpop.permute.xlu0 %2020
      %2022 = vrot.lane.b32.xlu0 %v841, 112
      %v2023 = vpop.permute.xlu0 %2022
      %2024 = vrot.lane.b32.xlu0 %v838, 80
      %v2025 = vpop.permute.xlu0 %2024
      %2026 = vrot.lane.b32.xlu0 %v839, 80
      %v2027 = vpop.permute.xlu0 %2026
      %2028 = vrot.lane.b32.xlu0 %v840, 80
      %v2029 = vpop.permute.xlu0 %2028
      %2030 = vrot.lane.b32.xlu0 %v841, 80
      %v2031 = vpop.permute.xlu0 %2030
      %v2033 = vsel %vm858, %v2017, 0
      %v2036 = vsel %vm858, %v2019, 0
      %v2039 = vsel %vm858, %v2021, 0
      %v2042 = vsel %vm858, %v2023, 0
      %v2045 = vsel %vm858, %v2025, 0
      %v2048 = vsel %vm858, %v2027, 0
      %v2051 = vsel %vm858, %v2029, 0
      %v2054 = vsel %vm858, %v2031, 0
      %2056 = vmatprep.subr.bf16.mxu0 0
      %2057 = vmatpush1.bf16.xpose.msra.mxu0 %v2045
      %2058 = vmatprep.subr.bf16.mxu0 0
      %2059 = vmatpush1.bf16.xpose.msra.mxu0 %v2048
      %2060 = vmatprep.subr.bf16.mxu0 0
      %2061 = vmatpush1.bf16.xpose.msra.mxu0 %v2051
      %2062 = vmatprep.subr.bf16.mxu0 0
      %2063 = vmatpush1.bf16.xpose.msra.mxu0 %v2054
      %2064 = vmatprep.subr.bf16.mxu0 0
      %2065 = vmatpush1.bf16.xpose.msra.mxu0 0
      %2066 = vmatprep.subr.bf16.mxu0 0
      %2067 = vmatpush1.bf16.xpose.msra.mxu0 0
      %2068 = vmatprep.subr.bf16.mxu0 0
      %2069 = vmatpush1.bf16.xpose.msra.mxu0 0
      %2070 = vmatprep.subr.bf16.mxu0 0
      %2071 = vmatpush1.bf16.xpose.msra.mxu0 0
      %2072 = vmatprep.subr.bf16.mxu0 0
      %2073 = vmatpush1.bf16.xpose.msra.mxu0 0
      %2074 = vmatprep.subr.bf16.mxu0 0
      %2075 = vmatpush1.bf16.xpose.msra.mxu0 0
      %2076 = vmatprep.subr.bf16.mxu0 0
      %2077 = vmatpush1.bf16.xpose.msra.mxu0 0
      %2078 = vmatprep.subr.bf16.mxu0 0
      %2079 = vmatpush1.bf16.xpose.msra.mxu0 0
      %2080 = vmatprep.subr.bf16.mxu0 0
      %2081 = vmatpush1.bf16.xpose.msra.mxu0 0
      %2082 = vmatprep.subr.bf16.mxu0 0
      %2083 = vmatpush1.bf16.xpose.msra.mxu0 0
      %2084 = vmatprep.subr.bf16.mxu0 0
      %2085 = vmatpush1.bf16.xpose.msra.mxu0 0
      %2086 = vmatprep.subr.bf16.mxu0 0
      %2087 = vmatpush1.bf16.xpose.msra.mxu0 0
      %2088 = vmatprep.mubr.bf16.mxu0 0
      %2089 = vmatmul.mubr.bf16.gmra.mrb[0].mxu0 %v2033
      %v2090 = vpop.f32.mrb[0].mxu0
      %v2091 = vadd.f32 0.0, %v2090
      %v2092 = vpop.f32.mrb[0].mxu0
      %v2093 = vpop.f32.mrb[0].mxu0
      %v2094 = vadd.f32 0.0, %v2093
      %v2095 = vpop.f32.mrb[0].mxu0
      %2096 = vmatprep.mubr.bf16.mxu0 0
      %2097 = vmatmul.mubr.bf16.gmra.mrb[0].mxu0 %v2036
      %v2098 = vpop.f32.mrb[0].mxu0
      %v2099 = vadd.f32 0.0, %v2098
      %v2100 = vpop.f32.mrb[0].mxu0
      %v2101 = vpop.f32.mrb[0].mxu0
      %v2102 = vadd.f32 0.0, %v2101
      %v2103 = vpop.f32.mrb[0].mxu0
      %2104 = vmatprep.mubr.bf16.mxu0 0
      %2105 = vmatmul.mubr.bf16.gmra.mrb[0].mxu0 %v2039
      %v2106 = vpop.f32.mrb[0].mxu0
      %v2107 = vadd.f32 0.0, %v2106
      %v2108 = vpop.f32.mrb[0].mxu0
      %v2109 = vpop.f32.mrb[0].mxu0
      %v2110 = vadd.f32 0.0, %v2109
      %v2111 = vpop.f32.mrb[0].mxu0
      %2112 = vmatprep.mubr.bf16.mxu0 0
      %2113 = vmatmul.mubr.bf16.gmra.mrb[0].mxu0 %v2042
      %v2114 = vpop.f32.mrb[0].mxu0
      %v2115 = vadd.f32 0.0, %v2114
      %v2116 = vpop.f32.mrb[0].mxu0
      %v2117 = vpop.f32.mrb[0].mxu0
      %v2118 = vadd.f32 0.0, %v2117
      %v2119 = vpop.f32.mrb[0].mxu0
      %2120 = vdwg.mxu0
      %2121 = vrot.lane.b32.xlu0 %v842, 112
      %v2122 = vpop.permute.xlu0 %2121
      %2123 = vrot.lane.b32.xlu0 %v843, 112
      %v2124 = vpop.permute.xlu0 %2123
      %2125 = vrot.lane.b32.xlu0 %v844, 112
      %v2126 = vpop.permute.xlu0 %2125
      %2127 = vrot.lane.b32.xlu0 %v845, 112
      %v2128 = vpop.permute.xlu0 %2127
      %2129 = vrot.lane.b32.xlu0 %v842, 80
      %v2130 = vpop.permute.xlu0 %2129
      %2131 = vrot.lane.b32.xlu0 %v843, 80
      %v2132 = vpop.permute.xlu0 %2131
      %2133 = vrot.lane.b32.xlu0 %v844, 80
      %v2134 = vpop.permute.xlu0 %2133
      %2135 = vrot.lane.b32.xlu0 %v845, 80
      %v2136 = vpop.permute.xlu0 %2135
      %v2138 = vsel %vm858, %v2122, 0
      %v2141 = vsel %vm858, %v2124, 0
      %v2144 = vsel %vm858, %v2126, 0
      %v2147 = vsel %vm858, %v2128, 0
      %v2150 = vsel %vm858, %v2130, 0
      %v2153 = vsel %vm858, %v2132, 0
      %v2156 = vsel %vm858, %v2134, 0
      %v2159 = vsel %vm858, %v2136, 0
      %2161 = vmatprep.subr.bf16.mxu0 0
      %2162 = vmatpush1.bf16.xpose.msra.mxu0 %v2150
      %2163 = vmatprep.subr.bf16.mxu0 0
      %2164 = vmatpush1.bf16.xpose.msra.mxu0 %v2153
      %2165 = vmatprep.subr.bf16.mxu0 0
      %2166 = vmatpush1.bf16.xpose.msra.mxu0 %v2156
      %2167 = vmatprep.subr.bf16.mxu0 0
      %2168 = vmatpush1.bf16.xpose.msra.mxu0 %v2159
      %2169 = vmatprep.subr.bf16.mxu0 0
      %2170 = vmatpush1.bf16.xpose.msra.mxu0 0
      %2171 = vmatprep.subr.bf16.mxu0 0
      %2172 = vmatpush1.bf16.xpose.msra.mxu0 0
      %2173 = vmatprep.subr.bf16.mxu0 0
      %2174 = vmatpush1.bf16.xpose.msra.mxu0 0
      %2175 = vmatprep.subr.bf16.mxu0 0
      %2176 = vmatpush1.bf16.xpose.msra.mxu0 0
      %2177 = vmatprep.subr.bf16.mxu0 0
      %2178 = vmatpush1.bf16.xpose.msra.mxu0 0
      %2179 = vmatprep.subr.bf16.mxu0 0
      %2180 = vmatpush1.bf16.xpose.msra.mxu0 0
      %2181 = vmatprep.subr.bf16.mxu0 0
      %2182 = vmatpush1.bf16.xpose.msra.mxu0 0
      %2183 = vmatprep.subr.bf16.mxu0 0
      %2184 = vmatpush1.bf16.xpose.msra.mxu0 0
      %2185 = vmatprep.subr.bf16.mxu0 0
      %2186 = vmatpush1.bf16.xpose.msra.mxu0 0
      %2187 = vmatprep.subr.bf16.mxu0 0
      %2188 = vmatpush1.bf16.xpose.msra.mxu0 0
      %2189 = vmatprep.subr.bf16.mxu0 0
      %2190 = vmatpush1.bf16.xpose.msra.mxu0 0
      %2191 = vmatprep.subr.bf16.mxu0 0
      %2192 = vmatpush1.bf16.xpose.msra.mxu0 0
      %2193 = vmatprep.mubr.bf16.mxu0 0
      %2194 = vmatmul.mubr.bf16.gmra.mrb[0].mxu0 %v2138
      %v2195 = vpop.f32.mrb[0].mxu0
      %v2196 = vadd.f32 0.0, %v2195
      %v2197 = vpop.f32.mrb[0].mxu0
      %v2198 = vpop.f32.mrb[0].mxu0
      %v2199 = vadd.f32 0.0, %v2198
      %v2200 = vpop.f32.mrb[0].mxu0
      %2201 = vmatprep.mubr.bf16.mxu0 0
      %2202 = vmatmul.mubr.bf16.gmra.mrb[0].mxu0 %v2141
      %v2203 = vpop.f32.mrb[0].mxu0
      %v2204 = vadd.f32 0.0, %v2203
      %v2205 = vpop.f32.mrb[0].mxu0
      %v2206 = vpop.f32.mrb[0].mxu0
      %v2207 = vadd.f32 0.0, %v2206
      %v2208 = vpop.f32.mrb[0].mxu0
      %2209 = vmatprep.mubr.bf16.mxu0 0
      %2210 = vmatmul.mubr.bf16.gmra.mrb[0].mxu0 %v2144
      %v2211 = vpop.f32.mrb[0].mxu0
      %v2212 = vadd.f32 0.0, %v2211
      %v2213 = vpop.f32.mrb[0].mxu0
      %v2214 = vpop.f32.mrb[0].mxu0
      %v2215 = vadd.f32 0.0, %v2214
      %v2216 = vpop.f32.mrb[0].mxu0
      %2217 = vmatprep.mubr.bf16.mxu0 0
      %2218 = vmatmul.mubr.bf16.gmra.mrb[0].mxu0 %v2147
      %v2219 = vpop.f32.mrb[0].mxu0
      %v2220 = vadd.f32 0.0, %v2219
      %v2221 = vpop.f32.mrb[0].mxu0
      %v2222 = vpop.f32.mrb[0].mxu0
      %v2223 = vadd.f32 0.0, %v2222
      %v2224 = vpop.f32.mrb[0].mxu0
      %2225 = vdwg.mxu0
      %v2226 = vmul.f32 %v2091, 0.35355338
      %v2227 = vmul.f32 %v2094, 0.35355338
      %v2228 = vmul.f32 %v2099, 0.35355338
      %v2229 = vmul.f32 %v2102, 0.35355338
      %v2230 = vmul.f32 %v2107, 0.35355338
      %v2231 = vmul.f32 %v2110, 0.35355338
      %v2232 = vmul.f32 %v2115, 0.35355338
      %v2233 = vmul.f32 %v2118, 0.35355338
      %v2234 = vmul.f32 %v2196, 0.35355338
      %v2235 = vmul.f32 %v2199, 0.35355338
      %v2236 = vmul.f32 %v2204, 0.35355338
      %v2237 = vmul.f32 %v2207, 0.35355338
      %v2238 = vmul.f32 %v2212, 0.35355338
      %v2239 = vmul.f32 %v2215, 0.35355338
      %v2240 = vmul.f32 %v2220, 0.35355338
      %v2241 = vmul.f32 %v2223, 0.35355338
      %v2242 = vsel %vm1065, %v2226, -inf
      %2243 = vmax.xlane.f32.xlu0 %v2242
      %v2244 = vpop.xlane.xlu0 %2243
      %v2245 = vsel %vm1065, %v2227, -inf
      %2246 = vmax.xlane.f32.xlu0 %v2245
      %v2247 = vpop.xlane.xlu0 %2246
      %v2248 = vsel %vm1065, %v2228, -inf
      %2249 = vmax.xlane.f32.xlu0 %v2248
      %v2250 = vpop.xlane.xlu0 %2249
      %v2251 = vsel %vm1065, %v2229, -inf
      %2252 = vmax.xlane.f32.xlu0 %v2251
      %v2253 = vpop.xlane.xlu0 %2252
      %v2254 = vsel %vm1065, %v2230, -inf
      %2255 = vmax.xlane.f32.xlu0 %v2254
      %v2256 = vpop.xlane.xlu0 %2255
      %v2257 = vsel %vm1065, %v2231, -inf
      %2258 = vmax.xlane.f32.xlu0 %v2257
      %v2259 = vpop.xlane.xlu0 %2258
      %v2260 = vsel %vm1065, %v2232, -inf
      %2261 = vmax.xlane.f32.xlu0 %v2260
      %v2262 = vpop.xlane.xlu0 %2261
      %v2263 = vsel %vm1065, %v2233, -inf
      %2264 = vmax.xlane.f32.xlu0 %v2263
      %v2265 = vpop.xlane.xlu0 %2264
      %v2266 = vsel %vm1065, %v2234, -inf
      %2267 = vmax.xlane.f32.xlu0 %v2266
      %v2268 = vpop.xlane.xlu0 %2267
      %v2269 = vsel %vm1065, %v2235, -inf
      %2270 = vmax.xlane.f32.xlu0 %v2269
      %v2271 = vpop.xlane.xlu0 %2270
      %v2272 = vsel %vm1065, %v2236, -inf
      %2273 = vmax.xlane.f32.xlu0 %v2272
      %v2274 = vpop.xlane.xlu0 %2273
      %v2275 = vsel %vm1065, %v2237, -inf
      %2276 = vmax.xlane.f32.xlu0 %v2275
      %v2277 = vpop.xlane.xlu0 %2276
      %v2278 = vsel %vm1065, %v2238, -inf
      %2279 = vmax.xlane.f32.xlu0 %v2278
      %v2280 = vpop.xlane.xlu0 %2279
      %v2281 = vsel %vm1065, %v2239, -inf
      %2282 = vmax.xlane.f32.xlu0 %v2281
      %v2283 = vpop.xlane.xlu0 %2282
      %v2284 = vsel %vm1065, %v2240, -inf
      %2285 = vmax.xlane.f32.xlu0 %v2284
      %v2286 = vpop.xlane.xlu0 %2285
      %v2287 = vsel %vm1065, %v2241, -inf
      %2288 = vmax.xlane.f32.xlu0 %v2287
      %v2289 = vpop.xlane.xlu0 %2288
      %v2290 = vsub.f32 %v2226, %v2244
      %v2291 = vsub.f32 %v2227, %v2247
      %v2292 = vsub.f32 %v2228, %v2250
      %v2293 = vsub.f32 %v2229, %v2253
      %v2294 = vsub.f32 %v2230, %v2256
      %v2295 = vsub.f32 %v2231, %v2259
      %v2296 = vsub.f32 %v2232, %v2262
      %v2297 = vsub.f32 %v2233, %v2265
      %v2298 = vsub.f32 %v2234, %v2268
      %v2299 = vsub.f32 %v2235, %v2271
      %v2300 = vsub.f32 %v2236, %v2274
      %v2301 = vsub.f32 %v2237, %v2277
      %v2302 = vsub.f32 %v2238, %v2280
      %v2303 = vsub.f32 %v2239, %v2283
      %v2304 = vsub.f32 %v2240, %v2286
      %v2305 = vsub.f32 %v2241, %v2289
      %v2306 = vmul.f32 %v2290, 1.442695
      %v2307 = vpow.pop %v2306
      %v2308 = vmul.f32 %v2291, 1.442695
      %v2309 = vpow.pop %v2308
      %v2310 = vmul.f32 %v2292, 1.442695
      %v2311 = vpow.pop %v2310
      %v2312 = vmul.f32 %v2293, 1.442695
      %v2313 = vpow.pop %v2312
      %v2314 = vmul.f32 %v2294, 1.442695
      %v2315 = vpow.pop %v2314
      %v2316 = vmul.f32 %v2295, 1.442695
      %v2317 = vpow.pop %v2316
      %v2318 = vmul.f32 %v2296, 1.442695
      %v2319 = vpow.pop %v2318
      %v2320 = vmul.f32 %v2297, 1.442695
      %v2321 = vpow.pop %v2320
      %v2322 = vmul.f32 %v2298, 1.442695
      %v2323 = vpow.pop %v2322
      %v2324 = vmul.f32 %v2299, 1.442695
      %v2325 = vpow.pop %v2324
      %v2326 = vmul.f32 %v2300, 1.442695
      %v2327 = vpow.pop %v2326
      %v2328 = vmul.f32 %v2301, 1.442695
      %v2329 = vpow.pop %v2328
      %v2330 = vmul.f32 %v2302, 1.442695
      %v2331 = vpow.pop %v2330
      %v2332 = vmul.f32 %v2303, 1.442695
      %v2333 = vpow.pop %v2332
      %v2334 = vmul.f32 %v2304, 1.442695
      %v2335 = vpow.pop %v2334
      %v2336 = vmul.f32 %v2305, 1.442695
      %v2337 = vpow.pop %v2336
      %v2338 = vsel %vm1065, %v2307, 0.0
      %2339 = vadd.xlane.f32.xlu0 %v2338
      %v2340 = vpop.xlane.xlu0 %2339
      %v2341 = vsel %vm1065, %v2309, 0.0
      %2342 = vadd.xlane.f32.xlu0 %v2341
      %v2343 = vpop.xlane.xlu0 %2342
      %v2344 = vsel %vm1065, %v2311, 0.0
      %2345 = vadd.xlane.f32.xlu0 %v2344
      %v2346 = vpop.xlane.xlu0 %2345
      %v2347 = vsel %vm1065, %v2313, 0.0
      %2348 = vadd.xlane.f32.xlu0 %v2347
      %v2349 = vpop.xlane.xlu0 %2348
      %v2350 = vsel %vm1065, %v2315, 0.0
      %2351 = vadd.xlane.f32.xlu0 %v2350
      %v2352 = vpop.xlane.xlu0 %2351
      %v2353 = vsel %vm1065, %v2317, 0.0
      %2354 = vadd.xlane.f32.xlu0 %v2353
      %v2355 = vpop.xlane.xlu0 %2354
      %v2356 = vsel %vm1065, %v2319, 0.0
      %2357 = vadd.xlane.f32.xlu0 %v2356
      %v2358 = vpop.xlane.xlu0 %2357
      %v2359 = vsel %vm1065, %v2321, 0.0
      %2360 = vadd.xlane.f32.xlu0 %v2359
      %v2361 = vpop.xlane.xlu0 %2360
      %v2362 = vsel %vm1065, %v2323, 0.0
      %2363 = vadd.xlane.f32.xlu0 %v2362
      %v2364 = vpop.xlane.xlu0 %2363
      %v2365 = vsel %vm1065, %v2325, 0.0
      %2366 = vadd.xlane.f32.xlu0 %v2365
      %v2367 = vpop.xlane.xlu0 %2366
      %v2368 = vsel %vm1065, %v2327, 0.0
      %2369 = vadd.xlane.f32.xlu0 %v2368
      %v2370 = vpop.xlane.xlu0 %2369
      %v2371 = vsel %vm1065, %v2329, 0.0
      %2372 = vadd.xlane.f32.xlu0 %v2371
      %v2373 = vpop.xlane.xlu0 %2372
      %v2374 = vsel %vm1065, %v2331, 0.0
      %2375 = vadd.xlane.f32.xlu0 %v2374
      %v2376 = vpop.xlane.xlu0 %2375
      %v2377 = vsel %vm1065, %v2333, 0.0
      %2378 = vadd.xlane.f32.xlu0 %v2377
      %v2379 = vpop.xlane.xlu0 %2378
      %v2380 = vsel %vm1065, %v2335, 0.0
      %2381 = vadd.xlane.f32.xlu0 %v2380
      %v2382 = vpop.xlane.xlu0 %2381
      %v2383 = vsel %vm1065, %v2337, 0.0
      %2384 = vadd.xlane.f32.xlu0 %v2383
      %v2385 = vpop.xlane.xlu0 %2384
      %v2386 = vrcp.pop %v2340
      %v2387 = vrcp.pop %v2343
      %v2388 = vrcp.pop %v2346
      %v2389 = vrcp.pop %v2349
      %v2390 = vrcp.pop %v2352
      %v2391 = vrcp.pop %v2355
      %v2392 = vrcp.pop %v2358
      %v2393 = vrcp.pop %v2361
      %v2394 = vrcp.pop %v2364
      %v2395 = vrcp.pop %v2367
      %v2396 = vrcp.pop %v2370
      %v2397 = vrcp.pop %v2373
      %v2398 = vrcp.pop %v2376
      %v2399 = vrcp.pop %v2379
      %v2400 = vrcp.pop %v2382
      %v2401 = vrcp.pop %v2385
      %v2402 = vmul.f32 %v2307, %v2386
      %v2403 = vmul.f32 %v2309, %v2387
      %v2404 = vmul.f32 %v2311, %v2388
      %v2405 = vmul.f32 %v2313, %v2389
      %v2406 = vmul.f32 %v2315, %v2390
      %v2407 = vmul.f32 %v2317, %v2391
      %v2408 = vmul.f32 %v2319, %v2392
      %v2409 = vmul.f32 %v2321, %v2393
      %v2410 = vmul.f32 %v2323, %v2394
      %v2411 = vmul.f32 %v2325, %v2395
      %v2412 = vmul.f32 %v2327, %v2396
      %v2413 = vmul.f32 %v2329, %v2397
      %v2414 = vmul.f32 %v2331, %v2398
      %v2415 = vmul.f32 %v2333, %v2399
      %v2416 = vmul.f32 %v2335, %v2400
      %v2417 = vmul.f32 %v2337, %v2401
      %v2418 = vpack.c.bf16 %v2403, %v2402
      %v2419 = vpack.c.bf16 %v2405, %v2404
      %v2420 = vpack.c.bf16 %v2407, %v2406
      %v2421 = vpack.c.bf16 %v2409, %v2408
      %v2422 = vpack.c.bf16 %v2411, %v2410
      %v2423 = vpack.c.bf16 %v2413, %v2412
      %v2424 = vpack.c.bf16 %v2415, %v2414
      %v2425 = vpack.c.bf16 %v2417, %v2416
      %2426 = vrot.lane.b32.xlu0 %v838, 48
      %v2427 = vpop.permute.xlu0 %2426
      %2428 = vrot.lane.b32.xlu0 %v839, 48
      %v2429 = vpop.permute.xlu0 %2428
      %2430 = vrot.lane.b32.xlu0 %v840, 48
      %v2431 = vpop.permute.xlu0 %2430
      %2432 = vrot.lane.b32.xlu0 %v841, 48
      %v2433 = vpop.permute.xlu0 %2432
      %v2439 = vsel %vm1065, %v2418, 0
      %v2442 = vsel %vm1065, %v2419, 0
      %v2445 = vsel %vm1065, %v2420, 0
      %v2448 = vsel %vm1065, %v2421, 0
      %2450 = vmatprep.subr.bf16.mxu0 0
      %2451 = vmatpush1.bf16.msra.mxu0 %v2427
      %2452 = vmatprep.subr.bf16.mxu0 0
      %2453 = vmatpush1.bf16.msra.mxu0 %v2429
      %2454 = vmatprep.subr.bf16.mxu0 0
      %2455 = vmatpush1.bf16.msra.mxu0 %v2431
      %2456 = vmatprep.subr.bf16.mxu0 0
      %2457 = vmatpush1.bf16.msra.mxu0 %v2433
      %2458 = vmatprep.subr.bf16.mxu0 0
      %2459 = vmatpush1.bf16.msra.mxu0 0
      %2460 = vmatprep.subr.bf16.mxu0 0
      %2461 = vmatpush1.bf16.msra.mxu0 0
      %2462 = vmatprep.subr.bf16.mxu0 0
      %2463 = vmatpush1.bf16.msra.mxu0 0
      %2464 = vmatprep.subr.bf16.mxu0 0
      %2465 = vmatpush1.bf16.msra.mxu0 0
      %2466 = vmatprep.subr.bf16.mxu0 0
      %2467 = vmatpush1.bf16.msra.mxu0 0
      %2468 = vmatprep.subr.bf16.mxu0 0
      %2469 = vmatpush1.bf16.msra.mxu0 0
      %2470 = vmatprep.subr.bf16.mxu0 0
      %2471 = vmatpush1.bf16.msra.mxu0 0
      %2472 = vmatprep.subr.bf16.mxu0 0
      %2473 = vmatpush1.bf16.msra.mxu0 0
      %2474 = vmatprep.subr.bf16.mxu0 0
      %2475 = vmatpush1.bf16.msra.mxu0 0
      %2476 = vmatprep.subr.bf16.mxu0 0
      %2477 = vmatpush1.bf16.msra.mxu0 0
      %2478 = vmatprep.subr.bf16.mxu0 0
      %2479 = vmatpush1.bf16.msra.mxu0 0
      %2480 = vmatprep.subr.bf16.mxu0 0
      %2481 = vmatpush1.bf16.msra.mxu0 0
      %2482 = vmatprep.mubr.bf16.mxu0 0
      %2483 = vmatmul.mubr.bf16.gmra.mrb[0].mxu0 %v2439
      %v2484 = vpop.f32.mrb[0].mxu0
      %v2485 = vadd.f32 0.0, %v2484
      %v2486 = vpop.f32.mrb[0].mxu0
      %v2487 = vpop.f32.mrb[0].mxu0
      %v2488 = vadd.f32 0.0, %v2487
      %v2489 = vpop.f32.mrb[0].mxu0
      %2490 = vmatprep.mubr.bf16.mxu0 0
      %2491 = vmatmul.mubr.bf16.gmra.mrb[0].mxu0 %v2442
      %v2492 = vpop.f32.mrb[0].mxu0
      %v2493 = vadd.f32 0.0, %v2492
      %v2494 = vpop.f32.mrb[0].mxu0
      %v2495 = vpop.f32.mrb[0].mxu0
      %v2496 = vadd.f32 0.0, %v2495
      %v2497 = vpop.f32.mrb[0].mxu0
      %2498 = vmatprep.mubr.bf16.mxu0 0
      %2499 = vmatmul.mubr.bf16.gmra.mrb[0].mxu0 %v2445
      %v2500 = vpop.f32.mrb[0].mxu0
      %v2501 = vadd.f32 0.0, %v2500
      %v2502 = vpop.f32.mrb[0].mxu0
      %v2503 = vpop.f32.mrb[0].mxu0
      %v2504 = vadd.f32 0.0, %v2503
      %v2505 = vpop.f32.mrb[0].mxu0
      %2506 = vmatprep.mubr.bf16.mxu0 0
      %2507 = vmatmul.mubr.bf16.gmra.mrb[0].mxu0 %v2448
      %v2508 = vpop.f32.mrb[0].mxu0
      %v2509 = vadd.f32 0.0, %v2508
      %v2510 = vpop.f32.mrb[0].mxu0
      %v2511 = vpop.f32.mrb[0].mxu0
      %v2512 = vadd.f32 0.0, %v2511
      %v2513 = vpop.f32.mrb[0].mxu0
      %2514 = vdwg.mxu0
      %2515 = vrot.lane.b32.xlu0 %v842, 48
      %v2516 = vpop.permute.xlu0 %2515
      %2517 = vrot.lane.b32.xlu0 %v843, 48
      %v2518 = vpop.permute.xlu0 %2517
      %2519 = vrot.lane.b32.xlu0 %v844, 48
      %v2520 = vpop.permute.xlu0 %2519
      %2521 = vrot.lane.b32.xlu0 %v845, 48
      %v2522 = vpop.permute.xlu0 %2521
      %v2528 = vsel %vm1065, %v2422, 0
      %v2531 = vsel %vm1065, %v2423, 0
      %v2534 = vsel %vm1065, %v2424, 0
      %v2537 = vsel %vm1065, %v2425, 0
      %2539 = vmatprep.subr.bf16.mxu0 0
      %2540 = vmatpush1.bf16.msra.mxu0 %v2516
      %2541 = vmatprep.subr.bf16.mxu0 0
      %2542 = vmatpush1.bf16.msra.mxu0 %v2518
      %2543 = vmatprep.subr.bf16.mxu0 0
      %2544 = vmatpush1.bf16.msra.mxu0 %v2520
      %2545 = vmatprep.subr.bf16.mxu0 0
      %2546 = vmatpush1.bf16.msra.mxu0 %v2522
      %2547 = vmatprep.subr.bf16.mxu0 0
      %2548 = vmatpush1.bf16.msra.mxu0 0
      %2549 = vmatprep.subr.bf16.mxu0 0
      %2550 = vmatpush1.bf16.msra.mxu0 0
      %2551 = vmatprep.subr.bf16.mxu0 0
      %2552 = vmatpush1.bf16.msra.mxu0 0
      %2553 = vmatprep.subr.bf16.mxu0 0
      %2554 = vmatpush1.bf16.msra.mxu0 0
      %2555 = vmatprep.subr.bf16.mxu0 0
      %2556 = vmatpush1.bf16.msra.mxu0 0
      %2557 = vmatprep.subr.bf16.mxu0 0
      %2558 = vmatpush1.bf16.msra.mxu0 0
      %2559 = vmatprep.subr.bf16.mxu0 0
      %2560 = vmatpush1.bf16.msra.mxu0 0
      %2561 = vmatprep.subr.bf16.mxu0 0
      %2562 = vmatpush1.bf16.msra.mxu0 0
      %2563 = vmatprep.subr.bf16.mxu0 0
      %2564 = vmatpush1.bf16.msra.mxu0 0
      %2565 = vmatprep.subr.bf16.mxu0 0
      %2566 = vmatpush1.bf16.msra.mxu0 0
      %2567 = vmatprep.subr.bf16.mxu0 0
      %2568 = vmatpush1.bf16.msra.mxu0 0
      %2569 = vmatprep.subr.bf16.mxu0 0
      %2570 = vmatpush1.bf16.msra.mxu0 0
      %2571 = vmatprep.mubr.bf16.mxu0 0
      %2572 = vmatmul.mubr.bf16.gmra.mrb[0].mxu0 %v2528
      %v2573 = vpop.f32.mrb[0].mxu0
      %v2574 = vadd.f32 0.0, %v2573
      %v2575 = vpop.f32.mrb[0].mxu0
      %v2576 = vpop.f32.mrb[0].mxu0
      %v2577 = vadd.f32 0.0, %v2576
      %v2578 = vpop.f32.mrb[0].mxu0
      %2579 = vmatprep.mubr.bf16.mxu0 0
      %2580 = vmatmul.mubr.bf16.gmra.mrb[0].mxu0 %v2531
      %v2581 = vpop.f32.mrb[0].mxu0
      %v2582 = vadd.f32 0.0, %v2581
      %v2583 = vpop.f32.mrb[0].mxu0
      %v2584 = vpop.f32.mrb[0].mxu0
      %v2585 = vadd.f32 0.0, %v2584
      %v2586 = vpop.f32.mrb[0].mxu0
      %2587 = vmatprep.mubr.bf16.mxu0 0
      %2588 = vmatmul.mubr.bf16.gmra.mrb[0].mxu0 %v2534
      %v2589 = vpop.f32.mrb[0].mxu0
      %v2590 = vadd.f32 0.0, %v2589
      %v2591 = vpop.f32.mrb[0].mxu0
      %v2592 = vpop.f32.mrb[0].mxu0
      %v2593 = vadd.f32 0.0, %v2592
      %v2594 = vpop.f32.mrb[0].mxu0
      %2595 = vmatprep.mubr.bf16.mxu0 0
      %2596 = vmatmul.mubr.bf16.gmra.mrb[0].mxu0 %v2537
      %v2597 = vpop.f32.mrb[0].mxu0
      %v2598 = vadd.f32 0.0, %v2597
      %v2599 = vpop.f32.mrb[0].mxu0
      %v2600 = vpop.f32.mrb[0].mxu0
      %v2601 = vadd.f32 0.0, %v2600
      %v2602 = vpop.f32.mrb[0].mxu0
      %2603 = vdwg.mxu0
      %2604 = vrot.lane.b32.xlu0 %v838, 104
      %v2605 = vpop.permute.xlu0 %2604
      %2606 = vrot.lane.b32.xlu0 %v839, 104
      %v2607 = vpop.permute.xlu0 %2606
      %2608 = vrot.lane.b32.xlu0 %v840, 104
      %v2609 = vpop.permute.xlu0 %2608
      %2610 = vrot.lane.b32.xlu0 %v841, 104
      %v2611 = vpop.permute.xlu0 %2610
      %2612 = vrot.lane.b32.xlu0 %v838, 72
      %v2613 = vpop.permute.xlu0 %2612
      %2614 = vrot.lane.b32.xlu0 %v839, 72
      %v2615 = vpop.permute.xlu0 %2614
      %2616 = vrot.lane.b32.xlu0 %v840, 72
      %v2617 = vpop.permute.xlu0 %2616
      %2618 = vrot.lane.b32.xlu0 %v841, 72
      %v2619 = vpop.permute.xlu0 %2618
      %v2621 = vsel %vm858, %v2605, 0
      %v2624 = vsel %vm858, %v2607, 0
      %v2627 = vsel %vm858, %v2609, 0
      %v2630 = vsel %vm858, %v2611, 0
      %v2633 = vsel %vm858, %v2613, 0
      %v2636 = vsel %vm858, %v2615, 0
      %v2639 = vsel %vm858, %v2617, 0
      %v2642 = vsel %vm858, %v2619, 0
      %2644 = vmatprep.subr.bf16.mxu0 0
      %2645 = vmatpush1.bf16.xpose.msra.mxu0 %v2633
      %2646 = vmatprep.subr.bf16.mxu0 0
      %2647 = vmatpush1.bf16.xpose.msra.mxu0 %v2636
      %2648 = vmatprep.subr.bf16.mxu0 0
      %2649 = vmatpush1.bf16.xpose.msra.mxu0 %v2639
      %2650 = vmatprep.subr.bf16.mxu0 0
      %2651 = vmatpush1.bf16.xpose.msra.mxu0 %v2642
      %2652 = vmatprep.subr.bf16.mxu0 0
      %2653 = vmatpush1.bf16.xpose.msra.mxu0 0
      %2654 = vmatprep.subr.bf16.mxu0 0
      %2655 = vmatpush1.bf16.xpose.msra.mxu0 0
      %2656 = vmatprep.subr.bf16.mxu0 0
      %2657 = vmatpush1.bf16.xpose.msra.mxu0 0
      %2658 = vmatprep.subr.bf16.mxu0 0
      %2659 = vmatpush1.bf16.xpose.msra.mxu0 0
      %2660 = vmatprep.subr.bf16.mxu0 0
      %2661 = vmatpush1.bf16.xpose.msra.mxu0 0
      %2662 = vmatprep.subr.bf16.mxu0 0
      %2663 = vmatpush1.bf16.xpose.msra.mxu0 0
      %2664 = vmatprep.subr.bf16.mxu0 0
      %2665 = vmatpush1.bf16.xpose.msra.mxu0 0
      %2666 = vmatprep.subr.bf16.mxu0 0
      %2667 = vmatpush1.bf16.xpose.msra.mxu0 0
      %2668 = vmatprep.subr.bf16.mxu0 0
      %2669 = vmatpush1.bf16.xpose.msra.mxu0 0
      %2670 = vmatprep.subr.bf16.mxu0 0
      %2671 = vmatpush1.bf16.xpose.msra.mxu0 0
      %2672 = vmatprep.subr.bf16.mxu0 0
      %2673 = vmatpush1.bf16.xpose.msra.mxu0 0
      %2674 = vmatprep.subr.bf16.mxu0 0
      %2675 = vmatpush1.bf16.xpose.msra.mxu0 0
      %2676 = vmatprep.mubr.bf16.mxu0 0
      %2677 = vmatmul.mubr.bf16.gmra.mrb[0].mxu0 %v2621
      %v2678 = vpop.f32.mrb[0].mxu0
      %v2679 = vadd.f32 0.0, %v2678
      %v2680 = vpop.f32.mrb[0].mxu0
      %v2681 = vpop.f32.mrb[0].mxu0
      %v2682 = vadd.f32 0.0, %v2681
      %v2683 = vpop.f32.mrb[0].mxu0
      %2684 = vmatprep.mubr.bf16.mxu0 0
      %2685 = vmatmul.mubr.bf16.gmra.mrb[0].mxu0 %v2624
      %v2686 = vpop.f32.mrb[0].mxu0
      %v2687 = vadd.f32 0.0, %v2686
      %v2688 = vpop.f32.mrb[0].mxu0
      %v2689 = vpop.f32.mrb[0].mxu0
      %v2690 = vadd.f32 0.0, %v2689
      %v2691 = vpop.f32.mrb[0].mxu0
      %2692 = vmatprep.mubr.bf16.mxu0 0
      %2693 = vmatmul.mubr.bf16.gmra.mrb[0].mxu0 %v2627
      %v2694 = vpop.f32.mrb[0].mxu0
      %v2695 = vadd.f32 0.0, %v2694
      %v2696 = vpop.f32.mrb[0].mxu0
      %v2697 = vpop.f32.mrb[0].mxu0
      %v2698 = vadd.f32 0.0, %v2697
      %v2699 = vpop.f32.mrb[0].mxu0
      %2700 = vmatprep.mubr.bf16.mxu0 0
      %2701 = vmatmul.mubr.bf16.gmra.mrb[0].mxu0 %v2630
      %v2702 = vpop.f32.mrb[0].mxu0
      %v2703 = vadd.f32 0.0, %v2702
      %v2704 = vpop.f32.mrb[0].mxu0
      %v2705 = vpop.f32.mrb[0].mxu0
      %v2706 = vadd.f32 0.0, %v2705
      %v2707 = vpop.f32.mrb[0].mxu0
      %2708 = vdwg.mxu0
      %2709 = vrot.lane.b32.xlu0 %v842, 104
      %v2710 = vpop.permute.xlu0 %2709
      %2711 = vrot.lane.b32.xlu0 %v843, 104
      %v2712 = vpop.permute.xlu0 %2711
      %2713 = vrot.lane.b32.xlu0 %v844, 104
      %v2714 = vpop.permute.xlu0 %2713
      %2715 = vrot.lane.b32.xlu0 %v845, 104
      %v2716 = vpop.permute.xlu0 %2715
      %2717 = vrot.lane.b32.xlu0 %v842, 72
      %v2718 = vpop.permute.xlu0 %2717
      %2719 = vrot.lane.b32.xlu0 %v843, 72
      %v2720 = vpop.permute.xlu0 %2719
      %2721 = vrot.lane.b32.xlu0 %v844, 72
      %v2722 = vpop.permute.xlu0 %2721
      %2723 = vrot.lane.b32.xlu0 %v845, 72
      %v2724 = vpop.permute.xlu0 %2723
      %v2726 = vsel %vm858, %v2710, 0
      %v2729 = vsel %vm858, %v2712, 0
      %v2732 = vsel %vm858, %v2714, 0
      %v2735 = vsel %vm858, %v2716, 0
      %v2738 = vsel %vm858, %v2718, 0
      %v2741 = vsel %vm858, %v2720, 0
      %v2744 = vsel %vm858, %v2722, 0
      %v2747 = vsel %vm858, %v2724, 0
      %2749 = vmatprep.subr.bf16.mxu0 0
      %2750 = vmatpush1.bf16.xpose.msra.mxu0 %v2738
      %2751 = vmatprep.subr.bf16.mxu0 0
      %2752 = vmatpush1.bf16.xpose.msra.mxu0 %v2741
      %2753 = vmatprep.subr.bf16.mxu0 0
      %2754 = vmatpush1.bf16.xpose.msra.mxu0 %v2744
      %2755 = vmatprep.subr.bf16.mxu0 0
      %2756 = vmatpush1.bf16.xpose.msra.mxu0 %v2747
      %2757 = vmatprep.subr.bf16.mxu0 0
      %2758 = vmatpush1.bf16.xpose.msra.mxu0 0
      %2759 = vmatprep.subr.bf16.mxu0 0
      %2760 = vmatpush1.bf16.xpose.msra.mxu0 0
      %2761 = vmatprep.subr.bf16.mxu0 0
      %2762 = vmatpush1.bf16.xpose.msra.mxu0 0
      %2763 = vmatprep.subr.bf16.mxu0 0
      %2764 = vmatpush1.bf16.xpose.msra.mxu0 0
      %2765 = vmatprep.subr.bf16.mxu0 0
      %2766 = vmatpush1.bf16.xpose.msra.mxu0 0
      %2767 = vmatprep.subr.bf16.mxu0 0
      %2768 = vmatpush1.bf16.xpose.msra.mxu0 0
      %2769 = vmatprep.subr.bf16.mxu0 0
      %2770 = vmatpush1.bf16.xpose.msra.mxu0 0
      %2771 = vmatprep.subr.bf16.mxu0 0
      %2772 = vmatpush1.bf16.xpose.msra.mxu0 0
      %2773 = vmatprep.subr.bf16.mxu0 0
      %2774 = vmatpush1.bf16.xpose.msra.mxu0 0
      %2775 = vmatprep.subr.bf16.mxu0 0
      %2776 = vmatpush1.bf16.xpose.msra.mxu0 0
      %2777 = vmatprep.subr.bf16.mxu0 0
      %2778 = vmatpush1.bf16.xpose.msra.mxu0 0
      %2779 = vmatprep.subr.bf16.mxu0 0
      %2780 = vmatpush1.bf16.xpose.msra.mxu0 0
      %2781 = vmatprep.mubr.bf16.mxu0 0
      %2782 = vmatmul.mubr.bf16.gmra.mrb[0].mxu0 %v2726
      %v2783 = vpop.f32.mrb[0].mxu0
      %v2784 = vadd.f32 0.0, %v2783
      %v2785 = vpop.f32.mrb[0].mxu0
      %v2786 = vpop.f32.mrb[0].mxu0
      %v2787 = vadd.f32 0.0, %v2786
      %v2788 = vpop.f32.mrb[0].mxu0
      %2789 = vmatprep.mubr.bf16.mxu0 0
      %2790 = vmatmul.mubr.bf16.gmra.mrb[0].mxu0 %v2729
      %v2791 = vpop.f32.mrb[0].mxu0
      %v2792 = vadd.f32 0.0, %v2791
      %v2793 = vpop.f32.mrb[0].mxu0
      %v2794 = vpop.f32.mrb[0].mxu0
      %v2795 = vadd.f32 0.0, %v2794
      %v2796 = vpop.f32.mrb[0].mxu0
      %2797 = vmatprep.mubr.bf16.mxu0 0
      %2798 = vmatmul.mubr.bf16.gmra.mrb[0].mxu0 %v2732
      %v2799 = vpop.f32.mrb[0].mxu0
      %v2800 = vadd.f32 0.0, %v2799
      %v2801 = vpop.f32.mrb[0].mxu0
      %v2802 = vpop.f32.mrb[0].mxu0
      %v2803 = vadd.f32 0.0, %v2802
      %v2804 = vpop.f32.mrb[0].mxu0
      %2805 = vmatprep.mubr.bf16.mxu0 0
      %2806 = vmatmul.mubr.bf16.gmra.mrb[0].mxu0 %v2735
      %v2807 = vpop.f32.mrb[0].mxu0
      %v2808 = vadd.f32 0.0, %v2807
      %v2809 = vpop.f32.mrb[0].mxu0
      %v2810 = vpop.f32.mrb[0].mxu0
      %v2811 = vadd.f32 0.0, %v2810
      %v2812 = vpop.f32.mrb[0].mxu0
      %2813 = vdwg.mxu0
      %v2814 = vmul.f32 %v2679, 0.35355338
      %v2815 = vmul.f32 %v2682, 0.35355338
      %v2816 = vmul.f32 %v2687, 0.35355338
      %v2817 = vmul.f32 %v2690, 0.35355338
      %v2818 = vmul.f32 %v2695, 0.35355338
      %v2819 = vmul.f32 %v2698, 0.35355338
      %v2820 = vmul.f32 %v2703, 0.35355338
      %v2821 = vmul.f32 %v2706, 0.35355338
      %v2822 = vmul.f32 %v2784, 0.35355338
      %v2823 = vmul.f32 %v2787, 0.35355338
      %v2824 = vmul.f32 %v2792, 0.35355338
      %v2825 = vmul.f32 %v2795, 0.35355338
      %v2826 = vmul.f32 %v2800, 0.35355338
      %v2827 = vmul.f32 %v2803, 0.35355338
      %v2828 = vmul.f32 %v2808, 0.35355338
      %v2829 = vmul.f32 %v2811, 0.35355338
      %v2830 = vsel %vm1065, %v2814, -inf
      %2831 = vmax.xlane.f32.xlu0 %v2830
      %v2832 = vpop.xlane.xlu0 %2831
      %v2833 = vsel %vm1065, %v2815, -inf
      %2834 = vmax.xlane.f32.xlu0 %v2833
      %v2835 = vpop.xlane.xlu0 %2834
      %v2836 = vsel %vm1065, %v2816, -inf
      %2837 = vmax.xlane.f32.xlu0 %v2836
      %v2838 = vpop.xlane.xlu0 %2837
      %v2839 = vsel %vm1065, %v2817, -inf
      %2840 = vmax.xlane.f32.xlu0 %v2839
      %v2841 = vpop.xlane.xlu0 %2840
      %v2842 = vsel %vm1065, %v2818, -inf
      %2843 = vmax.xlane.f32.xlu0 %v2842
      %v2844 = vpop.xlane.xlu0 %2843
      %v2845 = vsel %vm1065, %v2819, -inf
      %2846 = vmax.xlane.f32.xlu0 %v2845
      %v2847 = vpop.xlane.xlu0 %2846
      %v2848 = vsel %vm1065, %v2820, -inf
      %2849 = vmax.xlane.f32.xlu0 %v2848
      %v2850 = vpop.xlane.xlu0 %2849
      %v2851 = vsel %vm1065, %v2821, -inf
      %2852 = vmax.xlane.f32.xlu0 %v2851
      %v2853 = vpop.xlane.xlu0 %2852
      %v2854 = vsel %vm1065, %v2822, -inf
      %2855 = vmax.xlane.f32.xlu0 %v2854
      %v2856 = vpop.xlane.xlu0 %2855
      %v2857 = vsel %vm1065, %v2823, -inf
      %2858 = vmax.xlane.f32.xlu0 %v2857
      %v2859 = vpop.xlane.xlu0 %2858
      %v2860 = vsel %vm1065, %v2824, -inf
      %2861 = vmax.xlane.f32.xlu0 %v2860
      %v2862 = vpop.xlane.xlu0 %2861
      %v2863 = vsel %vm1065, %v2825, -inf
      %2864 = vmax.xlane.f32.xlu0 %v2863
      %v2865 = vpop.xlane.xlu0 %2864
      %v2866 = vsel %vm1065, %v2826, -inf
      %2867 = vmax.xlane.f32.xlu0 %v2866
      %v2868 = vpop.xlane.xlu0 %2867
      %v2869 = vsel %vm1065, %v2827, -inf
      %2870 = vmax.xlane.f32.xlu0 %v2869
      %v2871 = vpop.xlane.xlu0 %2870
      %v2872 = vsel %vm1065, %v2828, -inf
      %2873 = vmax.xlane.f32.xlu0 %v2872
      %v2874 = vpop.xlane.xlu0 %2873
      %v2875 = vsel %vm1065, %v2829, -inf
      %2876 = vmax.xlane.f32.xlu0 %v2875
      %v2877 = vpop.xlane.xlu0 %2876
      %v2878 = vsub.f32 %v2814, %v2832
      %v2879 = vsub.f32 %v2815, %v2835
      %v2880 = vsub.f32 %v2816, %v2838
      %v2881 = vsub.f32 %v2817, %v2841
      %v2882 = vsub.f32 %v2818, %v2844
      %v2883 = vsub.f32 %v2819, %v2847
      %v2884 = vsub.f32 %v2820, %v2850
      %v2885 = vsub.f32 %v2821, %v2853
      %v2886 = vsub.f32 %v2822, %v2856
      %v2887 = vsub.f32 %v2823, %v2859
      %v2888 = vsub.f32 %v2824, %v2862
      %v2889 = vsub.f32 %v2825, %v2865
      %v2890 = vsub.f32 %v2826, %v2868
      %v2891 = vsub.f32 %v2827, %v2871
      %v2892 = vsub.f32 %v2828, %v2874
      %v2893 = vsub.f32 %v2829, %v2877
      %v2894 = vmul.f32 %v2878, 1.442695
      %v2895 = vpow.pop %v2894
      %v2896 = vmul.f32 %v2879, 1.442695
      %v2897 = vpow.pop %v2896
      %v2898 = vmul.f32 %v2880, 1.442695
      %v2899 = vpow.pop %v2898
      %v2900 = vmul.f32 %v2881, 1.442695
      %v2901 = vpow.pop %v2900
      %v2902 = vmul.f32 %v2882, 1.442695
      %v2903 = vpow.pop %v2902
      %v2904 = vmul.f32 %v2883, 1.442695
      %v2905 = vpow.pop %v2904
      %v2906 = vmul.f32 %v2884, 1.442695
      %v2907 = vpow.pop %v2906
      %v2908 = vmul.f32 %v2885, 1.442695
      %v2909 = vpow.pop %v2908
      %v2910 = vmul.f32 %v2886, 1.442695
      %v2911 = vpow.pop %v2910
      %v2912 = vmul.f32 %v2887, 1.442695
      %v2913 = vpow.pop %v2912
      %v2914 = vmul.f32 %v2888, 1.442695
      %v2915 = vpow.pop %v2914
      %v2916 = vmul.f32 %v2889, 1.442695
      %v2917 = vpow.pop %v2916
      %v2918 = vmul.f32 %v2890, 1.442695
      %v2919 = vpow.pop %v2918
      %v2920 = vmul.f32 %v2891, 1.442695
      %v2921 = vpow.pop %v2920
      %v2922 = vmul.f32 %v2892, 1.442695
      %v2923 = vpow.pop %v2922
      %v2924 = vmul.f32 %v2893, 1.442695
      %v2925 = vpow.pop %v2924
      %v2926 = vsel %vm1065, %v2895, 0.0
      %2927 = vadd.xlane.f32.xlu0 %v2926
      %v2928 = vpop.xlane.xlu0 %2927
      %v2929 = vsel %vm1065, %v2897, 0.0
      %2930 = vadd.xlane.f32.xlu0 %v2929
      %v2931 = vpop.xlane.xlu0 %2930
      %v2932 = vsel %vm1065, %v2899, 0.0
      %2933 = vadd.xlane.f32.xlu0 %v2932
      %v2934 = vpop.xlane.xlu0 %2933
      %v2935 = vsel %vm1065, %v2901, 0.0
      %2936 = vadd.xlane.f32.xlu0 %v2935
      %v2937 = vpop.xlane.xlu0 %2936
      %v2938 = vsel %vm1065, %v2903, 0.0
      %2939 = vadd.xlane.f32.xlu0 %v2938
      %v2940 = vpop.xlane.xlu0 %2939
      %v2941 = vsel %vm1065, %v2905, 0.0
      %2942 = vadd.xlane.f32.xlu0 %v2941
      %v2943 = vpop.xlane.xlu0 %2942
      %v2944 = vsel %vm1065, %v2907, 0.0
      %2945 = vadd.xlane.f32.xlu0 %v2944
      %v2946 = vpop.xlane.xlu0 %2945
      %v2947 = vsel %vm1065, %v2909, 0.0
      %2948 = vadd.xlane.f32.xlu0 %v2947
      %v2949 = vpop.xlane.xlu0 %2948
      %v2950 = vsel %vm1065, %v2911, 0.0
      %2951 = vadd.xlane.f32.xlu0 %v2950
      %v2952 = vpop.xlane.xlu0 %2951
      %v2953 = vsel %vm1065, %v2913, 0.0
      %2954 = vadd.xlane.f32.xlu0 %v2953
      %v2955 = vpop.xlane.xlu0 %2954
      %v2956 = vsel %vm1065, %v2915, 0.0
      %2957 = vadd.xlane.f32.xlu0 %v2956
      %v2958 = vpop.xlane.xlu0 %2957
      %v2959 = vsel %vm1065, %v2917, 0.0
      %2960 = vadd.xlane.f32.xlu0 %v2959
      %v2961 = vpop.xlane.xlu0 %2960
      %v2962 = vsel %vm1065, %v2919, 0.0
      %2963 = vadd.xlane.f32.xlu0 %v2962
      %v2964 = vpop.xlane.xlu0 %2963
      %v2965 = vsel %vm1065, %v2921, 0.0
      %2966 = vadd.xlane.f32.xlu0 %v2965
      %v2967 = vpop.xlane.xlu0 %2966
      %v2968 = vsel %vm1065, %v2923, 0.0
      %2969 = vadd.xlane.f32.xlu0 %v2968
      %v2970 = vpop.xlane.xlu0 %2969
      %v2971 = vsel %vm1065, %v2925, 0.0
      %2972 = vadd.xlane.f32.xlu0 %v2971
      %v2973 = vpop.xlane.xlu0 %2972
      %v2974 = vrcp.pop %v2928
      %v2975 = vrcp.pop %v2931
      %v2976 = vrcp.pop %v2934
      %v2977 = vrcp.pop %v2937
      %v2978 = vrcp.pop %v2940
      %v2979 = vrcp.pop %v2943
      %v2980 = vrcp.pop %v2946
      %v2981 = vrcp.pop %v2949
      %v2982 = vrcp.pop %v2952
      %v2983 = vrcp.pop %v2955
      %v2984 = vrcp.pop %v2958
      %v2985 = vrcp.pop %v2961
      %v2986 = vrcp.pop %v2964
      %v2987 = vrcp.pop %v2967
      %v2988 = vrcp.pop %v2970
      %v2989 = vrcp.pop %v2973
      %v2990 = vmul.f32 %v2895, %v2974
      %v2991 = vmul.f32 %v2897, %v2975
      %v2992 = vmul.f32 %v2899, %v2976
      %v2993 = vmul.f32 %v2901, %v2977
      %v2994 = vmul.f32 %v2903, %v2978
      %v2995 = vmul.f32 %v2905, %v2979
      %v2996 = vmul.f32 %v2907, %v2980
      %v2997 = vmul.f32 %v2909, %v2981
      %v2998 = vmul.f32 %v2911, %v2982
      %v2999 = vmul.f32 %v2913, %v2983
      %v3000 = vmul.f32 %v2915, %v2984
      %v3001 = vmul.f32 %v2917, %v2985
      %v3002 = vmul.f32 %v2919, %v2986
      %v3003 = vmul.f32 %v2921, %v2987
      %v3004 = vmul.f32 %v2923, %v2988
      %v3005 = vmul.f32 %v2925, %v2989
      %v3006 = vpack.c.bf16 %v2991, %v2990
      %v3007 = vpack.c.bf16 %v2993, %v2992
      %v3008 = vpack.c.bf16 %v2995, %v2994
      %v3009 = vpack.c.bf16 %v2997, %v2996
      %v3010 = vpack.c.bf16 %v2999, %v2998
      %v3011 = vpack.c.bf16 %v3001, %v3000
      %v3012 = vpack.c.bf16 %v3003, %v3002
      %v3013 = vpack.c.bf16 %v3005, %v3004
      %3014 = vrot.lane.b32.xlu0 %v838, 40
      %v3015 = vpop.permute.xlu0 %3014
      %3016 = vrot.lane.b32.xlu0 %v839, 40
      %v3017 = vpop.permute.xlu0 %3016
      %3018 = vrot.lane.b32.xlu0 %v840, 40
      %v3019 = vpop.permute.xlu0 %3018
      %3020 = vrot.lane.b32.xlu0 %v841, 40
      %v3021 = vpop.permute.xlu0 %3020
      %v3027 = vsel %vm1065, %v3006, 0
      %v3030 = vsel %vm1065, %v3007, 0
      %v3033 = vsel %vm1065, %v3008, 0
      %v3036 = vsel %vm1065, %v3009, 0
      %3038 = vmatprep.subr.bf16.mxu0 0
      %3039 = vmatpush1.bf16.msra.mxu0 %v3015
      %3040 = vmatprep.subr.bf16.mxu0 0
      %3041 = vmatpush1.bf16.msra.mxu0 %v3017
      %3042 = vmatprep.subr.bf16.mxu0 0
      %3043 = vmatpush1.bf16.msra.mxu0 %v3019
      %3044 = vmatprep.subr.bf16.mxu0 0
      %3045 = vmatpush1.bf16.msra.mxu0 %v3021
      %3046 = vmatprep.subr.bf16.mxu0 0
      %3047 = vmatpush1.bf16.msra.mxu0 0
      %3048 = vmatprep.subr.bf16.mxu0 0
      %3049 = vmatpush1.bf16.msra.mxu0 0
      %3050 = vmatprep.subr.bf16.mxu0 0
      %3051 = vmatpush1.bf16.msra.mxu0 0
      %3052 = vmatprep.subr.bf16.mxu0 0
      %3053 = vmatpush1.bf16.msra.mxu0 0
      %3054 = vmatprep.subr.bf16.mxu0 0
      %3055 = vmatpush1.bf16.msra.mxu0 0
      %3056 = vmatprep.subr.bf16.mxu0 0
      %3057 = vmatpush1.bf16.msra.mxu0 0
      %3058 = vmatprep.subr.bf16.mxu0 0
      %3059 = vmatpush1.bf16.msra.mxu0 0
      %3060 = vmatprep.subr.bf16.mxu0 0
      %3061 = vmatpush1.bf16.msra.mxu0 0
      %3062 = vmatprep.subr.bf16.mxu0 0
      %3063 = vmatpush1.bf16.msra.mxu0 0
      %3064 = vmatprep.subr.bf16.mxu0 0
      %3065 = vmatpush1.bf16.msra.mxu0 0
      %3066 = vmatprep.subr.bf16.mxu0 0
      %3067 = vmatpush1.bf16.msra.mxu0 0
      %3068 = vmatprep.subr.bf16.mxu0 0
      %3069 = vmatpush1.bf16.msra.mxu0 0
      %3070 = vmatprep.mubr.bf16.mxu0 0
      %3071 = vmatmul.mubr.bf16.gmra.mrb[0].mxu0 %v3027
      %v3072 = vpop.f32.mrb[0].mxu0
      %v3073 = vadd.f32 0.0, %v3072
      %v3074 = vpop.f32.mrb[0].mxu0
      %v3075 = vpop.f32.mrb[0].mxu0
      %v3076 = vadd.f32 0.0, %v3075
      %v3077 = vpop.f32.mrb[0].mxu0
      %3078 = vmatprep.mubr.bf16.mxu0 0
      %3079 = vmatmul.mubr.bf16.gmra.mrb[0].mxu0 %v3030
      %v3080 = vpop.f32.mrb[0].mxu0
      %v3081 = vadd.f32 0.0, %v3080
      %v3082 = vpop.f32.mrb[0].mxu0
      %v3083 = vpop.f32.mrb[0].mxu0
      %v3084 = vadd.f32 0.0, %v3083
      %v3085 = vpop.f32.mrb[0].mxu0
      %3086 = vmatprep.mubr.bf16.mxu0 0
      %3087 = vmatmul.mubr.bf16.gmra.mrb[0].mxu0 %v3033
      %v3088 = vpop.f32.mrb[0].mxu0
      %v3089 = vadd.f32 0.0, %v3088
      %v3090 = vpop.f32.mrb[0].mxu0
      %v3091 = vpop.f32.mrb[0].mxu0
      %v3092 = vadd.f32 0.0, %v3091
      %v3093 = vpop.f32.mrb[0].mxu0
      %3094 = vmatprep.mubr.bf16.mxu0 0
      %3095 = vmatmul.mubr.bf16.gmra.mrb[0].mxu0 %v3036
      %v3096 = vpop.f32.mrb[0].mxu0
      %v3097 = vadd.f32 0.0, %v3096
      %v3098 = vpop.f32.mrb[0].mxu0
      %v3099 = vpop.f32.mrb[0].mxu0
      %v3100 = vadd.f32 0.0, %v3099
      %v3101 = vpop.f32.mrb[0].mxu0
      %3102 = vdwg.mxu0
      %3103 = vrot.lane.b32.xlu0 %v842, 40
      %v3104 = vpop.permute.xlu0 %3103
      %3105 = vrot.lane.b32.xlu0 %v843, 40
      %v3106 = vpop.permute.xlu0 %3105
      %3107 = vrot.lane.b32.xlu0 %v844, 40
      %v3108 = vpop.permute.xlu0 %3107
      %3109 = vrot.lane.b32.xlu0 %v845, 40
      %v3110 = vpop.permute.xlu0 %3109
      %v3116 = vsel %vm1065, %v3010, 0
      %v3119 = vsel %vm1065, %v3011, 0
      %v3122 = vsel %vm1065, %v3012, 0
      %v3125 = vsel %vm1065, %v3013, 0
      %3127 = vmatprep.subr.bf16.mxu0 0
      %3128 = vmatpush1.bf16.msra.mxu0 %v3104
      %3129 = vmatprep.subr.bf16.mxu0 0
      %3130 = vmatpush1.bf16.msra.mxu0 %v3106
      %3131 = vmatprep.subr.bf16.mxu0 0
      %3132 = vmatpush1.bf16.msra.mxu0 %v3108
      %3133 = vmatprep.subr.bf16.mxu0 0
      %3134 = vmatpush1.bf16.msra.mxu0 %v3110
      %3135 = vmatprep.subr.bf16.mxu0 0
      %3136 = vmatpush1.bf16.msra.mxu0 0
      %3137 = vmatprep.subr.bf16.mxu0 0
      %3138 = vmatpush1.bf16.msra.mxu0 0
      %3139 = vmatprep.subr.bf16.mxu0 0
      %3140 = vmatpush1.bf16.msra.mxu0 0
      %3141 = vmatprep.subr.bf16.mxu0 0
      %3142 = vmatpush1.bf16.msra.mxu0 0
      %3143 = vmatprep.subr.bf16.mxu0 0
      %3144 = vmatpush1.bf16.msra.mxu0 0
      %3145 = vmatprep.subr.bf16.mxu0 0
      %3146 = vmatpush1.bf16.msra.mxu0 0
      %3147 = vmatprep.subr.bf16.mxu0 0
      %3148 = vmatpush1.bf16.msra.mxu0 0
      %3149 = vmatprep.subr.bf16.mxu0 0
      %3150 = vmatpush1.bf16.msra.mxu0 0
      %3151 = vmatprep.subr.bf16.mxu0 0
      %3152 = vmatpush1.bf16.msra.mxu0 0
      %3153 = vmatprep.subr.bf16.mxu0 0
      %3154 = vmatpush1.bf16.msra.mxu0 0
      %3155 = vmatprep.subr.bf16.mxu0 0
      %3156 = vmatpush1.bf16.msra.mxu0 0
      %3157 = vmatprep.subr.bf16.mxu0 0
      %3158 = vmatpush1.bf16.msra.mxu0 0
      %3159 = vmatprep.mubr.bf16.mxu0 0
      %3160 = vmatmul.mubr.bf16.gmra.mrb[0].mxu0 %v3116
      %v3161 = vpop.f32.mrb[0].mxu0
      %v3162 = vadd.f32 0.0, %v3161
      %v3163 = vpop.f32.mrb[0].mxu0
      %v3164 = vpop.f32.mrb[0].mxu0
      %v3165 = vadd.f32 0.0, %v3164
      %v3166 = vpop.f32.mrb[0].mxu0
      %3167 = vmatprep.mubr.bf16.mxu0 0
      %3168 = vmatmul.mubr.bf16.gmra.mrb[0].mxu0 %v3119
      %v3169 = vpop.f32.mrb[0].mxu0
      %v3170 = vadd.f32 0.0, %v3169
      %v3171 = vpop.f32.mrb[0].mxu0
      %v3172 = vpop.f32.mrb[0].mxu0
      %v3173 = vadd.f32 0.0, %v3172
      %v3174 = vpop.f32.mrb[0].mxu0
      %3175 = vmatprep.mubr.bf16.mxu0 0
      %3176 = vmatmul.mubr.bf16.gmra.mrb[0].mxu0 %v3122
      %v3177 = vpop.f32.mrb[0].mxu0
      %v3178 = vadd.f32 0.0, %v3177
      %v3179 = vpop.f32.mrb[0].mxu0
      %v3180 = vpop.f32.mrb[0].mxu0
      %v3181 = vadd.f32 0.0, %v3180
      %v3182 = vpop.f32.mrb[0].mxu0
      %3183 = vmatprep.mubr.bf16.mxu0 0
      %3184 = vmatmul.mubr.bf16.gmra.mrb[0].mxu0 %v3125
      %v3185 = vpop.f32.mrb[0].mxu0
      %v3186 = vadd.f32 0.0, %v3185
      %v3187 = vpop.f32.mrb[0].mxu0
      %v3188 = vpop.f32.mrb[0].mxu0
      %v3189 = vadd.f32 0.0, %v3188
      %v3190 = vpop.f32.mrb[0].mxu0
      %3191 = vdwg.mxu0
      %3208 = vrot.lane.b32.xlu0 %v1897, 8
      %v3209 = vpop.permute.xlu0 %3208
      %3210 = vrot.lane.b32.xlu0 %v1900, 8
      %v3211 = vpop.permute.xlu0 %3210
      %3212 = vrot.lane.b32.xlu0 %v1905, 8
      %v3213 = vpop.permute.xlu0 %3212
      %3214 = vrot.lane.b32.xlu0 %v1908, 8
      %v3215 = vpop.permute.xlu0 %3214
      %3216 = vrot.lane.b32.xlu0 %v1913, 8
      %v3217 = vpop.permute.xlu0 %3216
      %3218 = vrot.lane.b32.xlu0 %v1916, 8
      %v3219 = vpop.permute.xlu0 %3218
      %3220 = vrot.lane.b32.xlu0 %v1921, 8
      %v3221 = vpop.permute.xlu0 %3220
      %3222 = vrot.lane.b32.xlu0 %v1924, 8
      %v3223 = vpop.permute.xlu0 %3222
      %3224 = vrot.lane.b32.xlu0 %v1986, 8
      %v3225 = vpop.permute.xlu0 %3224
      %3226 = vrot.lane.b32.xlu0 %v1989, 8
      %v3227 = vpop.permute.xlu0 %3226
      %3228 = vrot.lane.b32.xlu0 %v1994, 8
      %v3229 = vpop.permute.xlu0 %3228
      %3230 = vrot.lane.b32.xlu0 %v1997, 8
      %v3231 = vpop.permute.xlu0 %3230
      %3232 = vrot.lane.b32.xlu0 %v2002, 8
      %v3233 = vpop.permute.xlu0 %3232
      %3234 = vrot.lane.b32.xlu0 %v2005, 8
      %v3235 = vpop.permute.xlu0 %3234
      %3236 = vrot.lane.b32.xlu0 %v2010, 8
      %v3237 = vpop.permute.xlu0 %3236
      %3238 = vrot.lane.b32.xlu0 %v2013, 8
      %v3239 = vpop.permute.xlu0 %3238
      %3272 = vrot.lane.b32.xlu0 %v2485, 16
      %v3273 = vpop.permute.xlu0 %3272
      %3274 = vrot.lane.b32.xlu0 %v2488, 16
      %v3275 = vpop.permute.xlu0 %3274
      %3276 = vrot.lane.b32.xlu0 %v2493, 16
      %v3277 = vpop.permute.xlu0 %3276
      %3278 = vrot.lane.b32.xlu0 %v2496, 16
      %v3279 = vpop.permute.xlu0 %3278
      %3280 = vrot.lane.b32.xlu0 %v2501, 16
      %v3281 = vpop.permute.xlu0 %3280
      %3282 = vrot.lane.b32.xlu0 %v2504, 16
      %v3283 = vpop.permute.xlu0 %3282
      %3284 = vrot.lane.b32.xlu0 %v2509, 16
      %v3285 = vpop.permute.xlu0 %3284
      %3286 = vrot.lane.b32.xlu0 %v2512, 16
      %v3287 = vpop.permute.xlu0 %3286
      %3288 = vrot.lane.b32.xlu0 %v2574, 16
      %v3289 = vpop.permute.xlu0 %3288
      %3290 = vrot.lane.b32.xlu0 %v2577, 16
      %v3291 = vpop.permute.xlu0 %3290
      %3292 = vrot.lane.b32.xlu0 %v2582, 16
      %v3293 = vpop.permute.xlu0 %3292
      %3294 = vrot.lane.b32.xlu0 %v2585, 16
      %v3295 = vpop.permute.xlu0 %3294
      %3296 = vrot.lane.b32.xlu0 %v2590, 16
      %v3297 = vpop.permute.xlu0 %3296
      %3298 = vrot.lane.b32.xlu0 %v2593, 16
      %v3299 = vpop.permute.xlu0 %3298
      %3300 = vrot.lane.b32.xlu0 %v2598, 16
      %v3301 = vpop.permute.xlu0 %3300
      %3302 = vrot.lane.b32.xlu0 %v2601, 16
      %v3303 = vpop.permute.xlu0 %3302
      %3336 = vrot.lane.b32.xlu0 %v3073, 24
      %v3337 = vpop.permute.xlu0 %3336
      %3338 = vrot.lane.b32.xlu0 %v3076, 24
      %v3339 = vpop.permute.xlu0 %3338
      %3340 = vrot.lane.b32.xlu0 %v3081, 24
      %v3341 = vpop.permute.xlu0 %3340
      %3342 = vrot.lane.b32.xlu0 %v3084, 24
      %v3343 = vpop.permute.xlu0 %3342
      %3344 = vrot.lane.b32.xlu0 %v3089, 24
      %v3345 = vpop.permute.xlu0 %3344
      %3346 = vrot.lane.b32.xlu0 %v3092, 24
      %v3347 = vpop.permute.xlu0 %3346
      %3348 = vrot.lane.b32.xlu0 %v3097, 24
      %v3349 = vpop.permute.xlu0 %3348
      %3350 = vrot.lane.b32.xlu0 %v3100, 24
      %v3351 = vpop.permute.xlu0 %3350
      %3352 = vrot.lane.b32.xlu0 %v3162, 24
      %v3353 = vpop.permute.xlu0 %3352
      %3354 = vrot.lane.b32.xlu0 %v3165, 24
      %v3355 = vpop.permute.xlu0 %3354
      %3356 = vrot.lane.b32.xlu0 %v3170, 24
      %v3357 = vpop.permute.xlu0 %3356
      %3358 = vrot.lane.b32.xlu0 %v3173, 24
      %v3359 = vpop.permute.xlu0 %3358
      %3360 = vrot.lane.b32.xlu0 %v3178, 24
      %v3361 = vpop.permute.xlu0 %3360
      %3362 = vrot.lane.b32.xlu0 %v3181, 24
      %v3363 = vpop.permute.xlu0 %3362
      %3364 = vrot.lane.b32.xlu0 %v3186, 24
      %v3365 = vpop.permute.xlu0 %3364
      %3366 = vrot.lane.b32.xlu0 %v3189, 24
      %v3367 = vpop.permute.xlu0 %3366
      %v3384 = vsel %vm858, %v1309, %v3209
      %v3385 = vsel %vm858, %v1312, %v3211
      %v3386 = vsel %vm858, %v1317, %v3213
      %v3387 = vsel %vm858, %v1320, %v3215
      %v3388 = vsel %vm858, %v1325, %v3217
      %v3389 = vsel %vm858, %v1328, %v3219
      %v3390 = vsel %vm858, %v1333, %v3221
      %v3391 = vsel %vm858, %v1336, %v3223
      %v3392 = vsel %vm858, %v1398, %v3225
      %v3393 = vsel %vm858, %v1401, %v3227
      %v3394 = vsel %vm858, %v1406, %v3229
      %v3395 = vsel %vm858, %v1409, %v3231
      %v3396 = vsel %vm858, %v1414, %v3233
      %v3397 = vsel %vm858, %v1417, %v3235
      %v3398 = vsel %vm858, %v1422, %v3237
      %v3399 = vsel %vm858, %v1425, %v3239
      %vm3400 = vcmask 130048
      %v3401 = vsel %vm3400, %v3384, %v3273
      %v3402 = vsel %vm3400, %v3385, %v3275
      %v3403 = vsel %vm3400, %v3386, %v3277
      %v3404 = vsel %vm3400, %v3387, %v3279
      %v3405 = vsel %vm3400, %v3388, %v3281
      %v3406 = vsel %vm3400, %v3389, %v3283
      %v3407 = vsel %vm3400, %v3390, %v3285
      %v3408 = vsel %vm3400, %v3391, %v3287
      %v3409 = vsel %vm3400, %v3392, %v3289
      %v3410 = vsel %vm3400, %v3393, %v3291
      %v3411 = vsel %vm3400, %v3394, %v3293
      %v3412 = vsel %vm3400, %v3395, %v3295
      %v3413 = vsel %vm3400, %v3396, %v3297
      %v3414 = vsel %vm3400, %v3397, %v3299
      %v3415 = vsel %vm3400, %v3398, %v3301
      %v3416 = vsel %vm3400, %v3399, %v3303
      %vm3417 = vcmask 195584
      %v3418 = vsel %vm3417, %v3401, %v3337
      %v3419 = vsel %vm3417, %v3402, %v3339
      %v3420 = vsel %vm3417, %v3403, %v3341
      %v3421 = vsel %vm3417, %v3404, %v3343
      %v3422 = vsel %vm3417, %v3405, %v3345
      %v3423 = vsel %vm3417, %v3406, %v3347
      %v3424 = vsel %vm3417, %v3407, %v3349
      %v3425 = vsel %vm3417, %v3408, %v3351
      %v3426 = vsel %vm3417, %v3409, %v3353
      %v3427 = vsel %vm3417, %v3410, %v3355
      %v3428 = vsel %vm3417, %v3411, %v3357
      %v3429 = vsel %vm3417, %v3412, %v3359
      %v3430 = vsel %vm3417, %v3413, %v3361
      %v3431 = vsel %vm3417, %v3414, %v3363
      %v3432 = vsel %vm3417, %v3415, %v3365
      %v3433 = vsel %vm3417, %v3416, %v3367
      %v3434 = vpack.c.bf16 %v3419, %v3418
      %v3435 = vpack.c.bf16 %v3421, %v3420
      %v3436 = vpack.c.bf16 %v3423, %v3422
      %v3437 = vpack.c.bf16 %v3425, %v3424
      %v3438 = vpack.c.bf16 %v3427, %v3426
      %v3439 = vpack.c.bf16 %v3429, %v3428
      %v3440 = vpack.c.bf16 %v3431, %v3430
      %v3441 = vpack.c.bf16 %v3433, %v3432
      %v3442 = vld [vmem:[%s442] sm:$0xf]
      %v3443 = vld [vmem:[%s442 + $0x4] sm:$0xf]
      %v3444 = vld [vmem:[%s442 + $0x8] sm:$0xf]
      %v3445 = vld [vmem:[%s442 + $0xc] sm:$0xf]
      %v3446 = vlaneseq
      %v3447 = vshrl.u32 %v3446, 7
      %v3448 = vsub.s32 2, %v3447
      %v3449 = vrot.slane %v466, %v3448
      %v3454 = vunpack.c.l.b16 %v3442
      %v3455 = vunpack.c.l.b16 %v3443
      %v3456 = vunpack.c.l.b16 %v3444
      %v3457 = vunpack.c.l.b16 %v3445
      %v3458 = vpack.c.b16 %v3455, %v3454
      %v3459 = vpack.c.b16 %v3457, %v3456
      %v3463 = vsel %vm543, %v3434, 0
      %v3466 = vsel %vm543, %v3435, 0
      %v3469 = vsel %vm543, %v3436, 0
      %v3472 = vsel %vm543, %v3437, 0
      %v3475 = vsel %vm543, %v3438, 0
      %v3478 = vsel %vm543, %v3439, 0
      %v3481 = vsel %vm543, %v3440, 0
      %v3484 = vsel %vm543, %v3441, 0
      %3486 = vmatprep.subr.bf16.mxu0 0
      %3487 = vmatpush1.bf16.msra.mxu0 %v3458
      %3488 = vmatprep.subr.bf16.mxu0 0
      %3489 = vmatpush1.bf16.msra.mxu0 %v3459
      %3490 = vmatprep.subr.bf16.mxu0 0
      %3491 = vmatpush1.bf16.msra.mxu0 0
      %3492 = vmatprep.subr.bf16.mxu0 0
      %3493 = vmatpush1.bf16.msra.mxu0 0
      %3494 = vmatprep.subr.bf16.mxu0 0
      %3495 = vmatpush1.bf16.msra.mxu0 0
      %3496 = vmatprep.subr.bf16.mxu0 0
      %3497 = vmatpush1.bf16.msra.mxu0 0
      %3498 = vmatprep.subr.bf16.mxu0 0
      %3499 = vmatpush1.bf16.msra.mxu0 0
      %3500 = vmatprep.subr.bf16.mxu0 0
      %3501 = vmatpush1.bf16.msra.mxu0 0
      %3502 = vmatprep.subr.bf16.mxu0 0
      %3503 = vmatpush1.bf16.msra.mxu0 0
      %3504 = vmatprep.subr.bf16.mxu0 0
      %3505 = vmatpush1.bf16.msra.mxu0 0
      %3506 = vmatprep.subr.bf16.mxu0 0
      %3507 = vmatpush1.bf16.msra.mxu0 0
      %3508 = vmatprep.subr.bf16.mxu0 0
      %3509 = vmatpush1.bf16.msra.mxu0 0
      %3510 = vmatprep.subr.bf16.mxu0 0
      %3511 = vmatpush1.bf16.msra.mxu0 0
      %3512 = vmatprep.subr.bf16.mxu0 0
      %3513 = vmatpush1.bf16.msra.mxu0 0
      %3514 = vmatprep.subr.bf16.mxu0 0
      %3515 = vmatpush1.bf16.msra.mxu0 0
      %3516 = vmatprep.subr.bf16.mxu0 0
      %3517 = vmatpush1.bf16.msra.mxu0 0
      %3518 = vmatprep.mubr.bf16.mxu0 0
      %3519 = vmatmul.mubr.bf16.gmra.mrb[0].mxu0 %v3463
      %v3520 = vpop.f32.mrb[0].mxu0
      %v3521 = vadd.f32 %v3449, %v3520
      %v3522 = vpop.f32.mrb[0].mxu0
      %v3523 = vpop.f32.mrb[0].mxu0
      %v3524 = vadd.f32 %v3449, %v3523
      %v3525 = vpop.f32.mrb[0].mxu0
      %3526 = vmatprep.mubr.bf16.mxu0 0
      %3527 = vmatmul.mubr.bf16.gmra.mrb[0].mxu0 %v3466
      %v3528 = vpop.f32.mrb[0].mxu0
      %v3529 = vadd.f32 %v3449, %v3528
      %v3530 = vpop.f32.mrb[0].mxu0
      %v3531 = vpop.f32.mrb[0].mxu0
      %v3532 = vadd.f32 %v3449, %v3531
      %v3533 = vpop.f32.mrb[0].mxu0
      %3534 = vmatprep.mubr.bf16.mxu0 0
      %3535 = vmatmul.mubr.bf16.gmra.mrb[0].mxu0 %v3469
      %v3536 = vpop.f32.mrb[0].mxu0
      %v3537 = vadd.f32 %v3449, %v3536
      %v3538 = vpop.f32.mrb[0].mxu0
      %v3539 = vpop.f32.mrb[0].mxu0
      %v3540 = vadd.f32 %v3449, %v3539
      %v3541 = vpop.f32.mrb[0].mxu0
      %3542 = vmatprep.mubr.bf16.mxu0 0
      %3543 = vmatmul.mubr.bf16.gmra.mrb[0].mxu0 %v3472
      %v3544 = vpop.f32.mrb[0].mxu0
      %v3545 = vadd.f32 %v3449, %v3544
      %v3546 = vpop.f32.mrb[0].mxu0
      %v3547 = vpop.f32.mrb[0].mxu0
      %v3548 = vadd.f32 %v3449, %v3547
      %v3549 = vpop.f32.mrb[0].mxu0
      %3550 = vmatprep.mubr.bf16.mxu0 0
      %3551 = vmatmul.mubr.bf16.gmra.mrb[0].mxu0 %v3475
      %v3552 = vpop.f32.mrb[0].mxu0
      %v3553 = vadd.f32 %v3449, %v3552
      %v3554 = vpop.f32.mrb[0].mxu0
      %v3555 = vpop.f32.mrb[0].mxu0
      %v3556 = vadd.f32 %v3449, %v3555
      %v3557 = vpop.f32.mrb[0].mxu0
      %3558 = vmatprep.mubr.bf16.mxu0 0
      %3559 = vmatmul.mubr.bf16.gmra.mrb[0].mxu0 %v3478
      %v3560 = vpop.f32.mrb[0].mxu0
      %v3561 = vadd.f32 %v3449, %v3560
      %v3562 = vpop.f32.mrb[0].mxu0
      %v3563 = vpop.f32.mrb[0].mxu0
      %v3564 = vadd.f32 %v3449, %v3563
      %v3565 = vpop.f32.mrb[0].mxu0
      %3566 = vmatprep.mubr.bf16.mxu0 0
      %3567 = vmatmul.mubr.bf16.gmra.mrb[0].mxu0 %v3481
      %v3568 = vpop.f32.mrb[0].mxu0
      %v3569 = vadd.f32 %v3449, %v3568
      %v3570 = vpop.f32.mrb[0].mxu0
      %v3571 = vpop.f32.mrb[0].mxu0
      %v3572 = vadd.f32 %v3449, %v3571
      %v3573 = vpop.f32.mrb[0].mxu0
      %3574 = vmatprep.mubr.bf16.mxu0 0
      %3575 = vmatmul.mubr.bf16.gmra.mrb[0].mxu0 %v3484
      %v3576 = vpop.f32.mrb[0].mxu0
      %v3577 = vadd.f32 %v3449, %v3576
      %v3578 = vpop.f32.mrb[0].mxu0
      %v3579 = vpop.f32.mrb[0].mxu0
      %v3580 = vadd.f32 %v3449, %v3579
      %v3581 = vpop.f32.mrb[0].mxu0
      %3582 = vdwg.mxu0
      %v3583 = vadd.f32 %v673, %v3521
      %v3584 = vadd.f32 %v674, %v3524
      %v3585 = vadd.f32 %v675, %v3529
      %v3586 = vadd.f32 %v676, %v3532
      %v3587 = vadd.f32 %v677, %v3537
      %v3588 = vadd.f32 %v678, %v3540
      %v3589 = vadd.f32 %v679, %v3545
      %v3590 = vadd.f32 %v680, %v3548
      %v3591 = vadd.f32 %v681, %v3553
      %v3592 = vadd.f32 %v682, %v3556
      %v3593 = vadd.f32 %v683, %v3561
      %v3594 = vadd.f32 %v684, %v3564
      %v3595 = vadd.f32 %v685, %v3569
      %v3596 = vadd.f32 %v686, %v3572
      %v3597 = vadd.f32 %v687, %v3577
      %v3598 = vadd.f32 %v688, %v3580
      %v3599 = vsel %vm543, %v3583, 0.0
      %3600 = vadd.xlane.f32.xlu0 %v3599
      %v3601 = vpop.xlane.xlu0 %3600
      %v3602 = vsel %vm543, %v3584, 0.0
      %3603 = vadd.xlane.f32.xlu0 %v3602
      %v3604 = vpop.xlane.xlu0 %3603
      %v3605 = vsel %vm543, %v3585, 0.0
      %3606 = vadd.xlane.f32.xlu0 %v3605
      %v3607 = vpop.xlane.xlu0 %3606
      %v3608 = vsel %vm543, %v3586, 0.0
      %3609 = vadd.xlane.f32.xlu0 %v3608
      %v3610 = vpop.xlane.xlu0 %3609
      %v3611 = vsel %vm543, %v3587, 0.0
      %3612 = vadd.xlane.f32.xlu0 %v3611
      %v3613 = vpop.xlane.xlu0 %3612
      %v3614 = vsel %vm543, %v3588, 0.0
      %3615 = vadd.xlane.f32.xlu0 %v3614
      %v3616 = vpop.xlane.xlu0 %3615
      %v3617 = vsel %vm543, %v3589, 0.0
      %3618 = vadd.xlane.f32.xlu0 %v3617
      %v3619 = vpop.xlane.xlu0 %3618
      %v3620 = vsel %vm543, %v3590, 0.0
      %3621 = vadd.xlane.f32.xlu0 %v3620
      %v3622 = vpop.xlane.xlu0 %3621
      %v3623 = vsel %vm543, %v3591, 0.0
      %3624 = vadd.xlane.f32.xlu0 %v3623
      %v3625 = vpop.xlane.xlu0 %3624
      %v3626 = vsel %vm543, %v3592, 0.0
      %3627 = vadd.xlane.f32.xlu0 %v3626
      %v3628 = vpop.xlane.xlu0 %3627
      %v3629 = vsel %vm543, %v3593, 0.0
      %3630 = vadd.xlane.f32.xlu0 %v3629
      %v3631 = vpop.xlane.xlu0 %3630
      %v3632 = vsel %vm543, %v3594, 0.0
      %3633 = vadd.xlane.f32.xlu0 %v3632
      %v3634 = vpop.xlane.xlu0 %3633
      %v3635 = vsel %vm543, %v3595, 0.0
      %3636 = vadd.xlane.f32.xlu0 %v3635
      %v3637 = vpop.xlane.xlu0 %3636
      %v3638 = vsel %vm543, %v3596, 0.0
      %3639 = vadd.xlane.f32.xlu0 %v3638
      %v3640 = vpop.xlane.xlu0 %3639
      %v3641 = vsel %vm543, %v3597, 0.0
      %3642 = vadd.xlane.f32.xlu0 %v3641
      %v3643 = vpop.xlane.xlu0 %3642
      %v3644 = vsel %vm543, %v3598, 0.0
      %3645 = vadd.xlane.f32.xlu0 %v3644
      %v3646 = vpop.xlane.xlu0 %3645
      %v3647 = vrcp.pop 32.0
      %v3648 = vmul.f32 %v3601, %v3647
      %v3649 = vmul.f32 %v3604, %v3647
      %v3650 = vmul.f32 %v3607, %v3647
      %v3651 = vmul.f32 %v3610, %v3647
      %v3652 = vmul.f32 %v3613, %v3647
      %v3653 = vmul.f32 %v3616, %v3647
      %v3654 = vmul.f32 %v3619, %v3647
      %v3655 = vmul.f32 %v3622, %v3647
      %v3656 = vmul.f32 %v3625, %v3647
      %v3657 = vmul.f32 %v3628, %v3647
      %v3658 = vmul.f32 %v3631, %v3647
      %v3659 = vmul.f32 %v3634, %v3647
      %v3660 = vmul.f32 %v3637, %v3647
      %v3661 = vmul.f32 %v3640, %v3647
      %v3662 = vmul.f32 %v3643, %v3647
      %v3663 = vmul.f32 %v3646, %v3647
      %v3664 = vsub.f32 %v3583, %v3648
      %v3665 = vsub.f32 %v3584, %v3649
      %v3666 = vsub.f32 %v3585, %v3650
      %v3667 = vsub.f32 %v3586, %v3651
      %v3668 = vsub.f32 %v3587, %v3652
      %v3669 = vsub.f32 %v3588, %v3653
      %v3670 = vsub.f32 %v3589, %v3654
      %v3671 = vsub.f32 %v3590, %v3655
      %v3672 = vsub.f32 %v3591, %v3656
      %v3673 = vsub.f32 %v3592, %v3657
      %v3674 = vsub.f32 %v3593, %v3658
      %v3675 = vsub.f32 %v3594, %v3659
      %v3676 = vsub.f32 %v3595, %v3660
      %v3677 = vsub.f32 %v3596, %v3661
      %v3678 = vsub.f32 %v3597, %v3662
      %v3679 = vsub.f32 %v3598, %v3663
      %v3680 = vmul.f32 %v3664, %v3664
      %v3681 = vmul.f32 %v3665, %v3665
      %v3682 = vmul.f32 %v3666, %v3666
      %v3683 = vmul.f32 %v3667, %v3667
      %v3684 = vmul.f32 %v3668, %v3668
      %v3685 = vmul.f32 %v3669, %v3669
      %v3686 = vmul.f32 %v3670, %v3670
      %v3687 = vmul.f32 %v3671, %v3671
      %v3688 = vmul.f32 %v3672, %v3672
      %v3689 = vmul.f32 %v3673, %v3673
      %v3690 = vmul.f32 %v3674, %v3674
      %v3691 = vmul.f32 %v3675, %v3675
      %v3692 = vmul.f32 %v3676, %v3676
      %v3693 = vmul.f32 %v3677, %v3677
      %v3694 = vmul.f32 %v3678, %v3678
      %v3695 = vmul.f32 %v3679, %v3679
      %v3696 = vsel %vm543, %v3680, 0.0
      %3697 = vadd.xlane.f32.xlu0 %v3696
      %v3698 = vpop.xlane.xlu0 %3697
      %v3699 = vsel %vm543, %v3681, 0.0
      %3700 = vadd.xlane.f32.xlu0 %v3699
      %v3701 = vpop.xlane.xlu0 %3700
      %v3702 = vsel %vm543, %v3682, 0.0
      %3703 = vadd.xlane.f32.xlu0 %v3702
      %v3704 = vpop.xlane.xlu0 %3703
      %v3705 = vsel %vm543, %v3683, 0.0
      %3706 = vadd.xlane.f32.xlu0 %v3705
      %v3707 = vpop.xlane.xlu0 %3706
      %v3708 = vsel %vm543, %v3684, 0.0
      %3709 = vadd.xlane.f32.xlu0 %v3708
      %v3710 = vpop.xlane.xlu0 %3709
      %v3711 = vsel %vm543, %v3685, 0.0
      %3712 = vadd.xlane.f32.xlu0 %v3711
      %v3713 = vpop.xlane.xlu0 %3712
      %v3714 = vsel %vm543, %v3686, 0.0
      %3715 = vadd.xlane.f32.xlu0 %v3714
      %v3716 = vpop.xlane.xlu0 %3715
      %v3717 = vsel %vm543, %v3687, 0.0
      %3718 = vadd.xlane.f32.xlu0 %v3717
      %v3719 = vpop.xlane.xlu0 %3718
      %v3720 = vsel %vm543, %v3688, 0.0
      %3721 = vadd.xlane.f32.xlu0 %v3720
      %v3722 = vpop.xlane.xlu0 %3721
      %v3723 = vsel %vm543, %v3689, 0.0
      %3724 = vadd.xlane.f32.xlu0 %v3723
      %v3725 = vpop.xlane.xlu0 %3724
      %v3726 = vsel %vm543, %v3690, 0.0
      %3727 = vadd.xlane.f32.xlu0 %v3726
      %v3728 = vpop.xlane.xlu0 %3727
      %v3729 = vsel %vm543, %v3691, 0.0
      %3730 = vadd.xlane.f32.xlu0 %v3729
      %v3731 = vpop.xlane.xlu0 %3730
      %v3732 = vsel %vm543, %v3692, 0.0
      %3733 = vadd.xlane.f32.xlu0 %v3732
      %v3734 = vpop.xlane.xlu0 %3733
      %v3735 = vsel %vm543, %v3693, 0.0
      %3736 = vadd.xlane.f32.xlu0 %v3735
      %v3737 = vpop.xlane.xlu0 %3736
      %v3738 = vsel %vm543, %v3694, 0.0
      %3739 = vadd.xlane.f32.xlu0 %v3738
      %v3740 = vpop.xlane.xlu0 %3739
      %v3741 = vsel %vm543, %v3695, 0.0
      %3742 = vadd.xlane.f32.xlu0 %v3741
      %v3743 = vpop.xlane.xlu0 %3742
      %v3744 = vmul.f32 %v3698, %v3647
      %v3745 = vmul.f32 %v3701, %v3647
      %v3746 = vmul.f32 %v3704, %v3647
      %v3747 = vmul.f32 %v3707, %v3647
      %v3748 = vmul.f32 %v3710, %v3647
      %v3749 = vmul.f32 %v3713, %v3647
      %v3750 = vmul.f32 %v3716, %v3647
      %v3751 = vmul.f32 %v3719, %v3647
      %v3752 = vmul.f32 %v3722, %v3647
      %v3753 = vmul.f32 %v3725, %v3647
      %v3754 = vmul.f32 %v3728, %v3647
      %v3755 = vmul.f32 %v3731, %v3647
      %v3756 = vmul.f32 %v3734, %v3647
      %v3757 = vmul.f32 %v3737, %v3647
      %v3758 = vmul.f32 %v3740, %v3647
      %v3759 = vmul.f32 %v3743, %v3647
      %v3760 = vadd.f32 %v3744, 1e-05
      %v3761 = vadd.f32 %v3745, 1e-05
      %v3762 = vadd.f32 %v3746, 1e-05
      %v3763 = vadd.f32 %v3747, 1e-05
      %v3764 = vadd.f32 %v3748, 1e-05
      %v3765 = vadd.f32 %v3749, 1e-05
      %v3766 = vadd.f32 %v3750, 1e-05
      %v3767 = vadd.f32 %v3751, 1e-05
      %v3768 = vadd.f32 %v3752, 1e-05
      %v3769 = vadd.f32 %v3753, 1e-05
      %v3770 = vadd.f32 %v3754, 1e-05
      %v3771 = vadd.f32 %v3755, 1e-05
      %v3772 = vadd.f32 %v3756, 1e-05
      %v3773 = vadd.f32 %v3757, 1e-05
      %v3774 = vadd.f32 %v3758, 1e-05
      %v3775 = vadd.f32 %v3759, 1e-05
      %v3776 = vrsqrt.pop %v3760
      %v3777 = vrsqrt.pop %v3761
      %v3778 = vrsqrt.pop %v3762
      %v3779 = vrsqrt.pop %v3763
      %v3780 = vrsqrt.pop %v3764
      %v3781 = vrsqrt.pop %v3765
      %v3782 = vrsqrt.pop %v3766
      %v3783 = vrsqrt.pop %v3767
      %v3784 = vrsqrt.pop %v3768
      %v3785 = vrsqrt.pop %v3769
      %v3786 = vrsqrt.pop %v3770
      %v3787 = vrsqrt.pop %v3771
      %v3788 = vrsqrt.pop %v3772
      %v3789 = vrsqrt.pop %v3773
      %v3790 = vrsqrt.pop %v3774
      %v3791 = vrsqrt.pop %v3775
      %v3792 = vmul.f32 %v3664, %v3776
      %v3793 = vmul.f32 %v3665, %v3777
      %v3794 = vmul.f32 %v3666, %v3778
      %v3795 = vmul.f32 %v3667, %v3779
      %v3796 = vmul.f32 %v3668, %v3780
      %v3797 = vmul.f32 %v3669, %v3781
      %v3798 = vmul.f32 %v3670, %v3782
      %v3799 = vmul.f32 %v3671, %v3783
      %v3800 = vmul.f32 %v3672, %v3784
      %v3801 = vmul.f32 %v3673, %v3785
      %v3802 = vmul.f32 %v3674, %v3786
      %v3803 = vmul.f32 %v3675, %v3787
      %v3804 = vmul.f32 %v3676, %v3788
      %v3805 = vmul.f32 %v3677, %v3789
      %v3806 = vmul.f32 %v3678, %v3790
      %v3807 = vmul.f32 %v3679, %v3791
      %v3808 = vlaneseq
      %v3809 = vshrl.u32 %v3808, 7
      %v3810 = vsub.s32 4, %v3809
      %v3811 = vrot.slane %v466, %v3810
      %v3812 = vmul.f32 %v3792, %v3811
      %v3813 = vmul.f32 %v3793, %v3811
      %v3814 = vmul.f32 %v3794, %v3811
      %v3815 = vmul.f32 %v3795, %v3811
      %v3816 = vmul.f32 %v3796, %v3811
      %v3817 = vmul.f32 %v3797, %v3811
      %v3818 = vmul.f32 %v3798, %v3811
      %v3819 = vmul.f32 %v3799, %v3811
      %v3820 = vmul.f32 %v3800, %v3811
      %v3821 = vmul.f32 %v3801, %v3811
      %v3822 = vmul.f32 %v3802, %v3811
      %v3823 = vmul.f32 %v3803, %v3811
      %v3824 = vmul.f32 %v3804, %v3811
      %v3825 = vmul.f32 %v3805, %v3811
      %v3826 = vmul.f32 %v3806, %v3811
      %v3827 = vmul.f32 %v3807, %v3811
      %v3828 = vlaneseq
      %v3829 = vshrl.u32 %v3828, 7
      %v3830 = vsub.s32 5, %v3829
      %v3831 = vrot.slane %v466, %v3830
      %v3832 = vadd.f32 %v3812, %v3831
      %v3833 = vadd.f32 %v3813, %v3831
      %v3834 = vadd.f32 %v3814, %v3831
      %v3835 = vadd.f32 %v3815, %v3831
      %v3836 = vadd.f32 %v3816, %v3831
      %v3837 = vadd.f32 %v3817, %v3831
      %v3838 = vadd.f32 %v3818, %v3831
      %v3839 = vadd.f32 %v3819, %v3831
      %v3840 = vadd.f32 %v3820, %v3831
      %v3841 = vadd.f32 %v3821, %v3831
      %v3842 = vadd.f32 %v3822, %v3831
      %v3843 = vadd.f32 %v3823, %v3831
      %v3844 = vadd.f32 %v3824, %v3831
      %v3845 = vadd.f32 %v3825, %v3831
      %v3846 = vadd.f32 %v3826, %v3831
      %v3847 = vadd.f32 %v3827, %v3831
      %v3848 = vpack.c.bf16 %v3833, %v3832
      %v3849 = vpack.c.bf16 %v3835, %v3834
      %v3850 = vpack.c.bf16 %v3837, %v3836
      %v3851 = vpack.c.bf16 %v3839, %v3838
      %v3852 = vpack.c.bf16 %v3841, %v3840
      %v3853 = vpack.c.bf16 %v3843, %v3842
      %v3854 = vpack.c.bf16 %v3845, %v3844
      %v3855 = vpack.c.bf16 %v3847, %v3846
      %v3856 = vld [vmem:[%s447] sm:$0xff]
      %v3857 = vld [vmem:[%s447 + $0x8] sm:$0xff]
      %v3858 = vld [vmem:[%s447 + $0x10] sm:$0xff]
      %v3859 = vld [vmem:[%s447 + $0x18] sm:$0xff]
      %v3860 = vld [vmem:[%s447 + $0x20] sm:$0xff]
      %v3861 = vld [vmem:[%s447 + $0x28] sm:$0xff]
      %v3862 = vld [vmem:[%s447 + $0x30] sm:$0xff]
      %v3863 = vld [vmem:[%s447 + $0x38] sm:$0xff]
      %v3864 = vld [vmem:[%s447 + $0x40] sm:$0xff]
      %v3865 = vld [vmem:[%s447 + $0x48] sm:$0xff]
      %v3866 = vld [vmem:[%s447 + $0x50] sm:$0xff]
      %v3867 = vld [vmem:[%s447 + $0x58] sm:$0xff]
      %v3868 = vld [vmem:[%s447 + $0x60] sm:$0xff]
      %v3869 = vld [vmem:[%s447 + $0x68] sm:$0xff]
      %v3870 = vld [vmem:[%s447 + $0x70] sm:$0xff]
      %v3871 = vld [vmem:[%s447 + $0x78] sm:$0xff]
      %v3872 = vld [vmem:[%s447 + $0x80] sm:$0xff]
      %v3873 = vld [vmem:[%s447 + $0x88] sm:$0xff]
      %v3874 = vld [vmem:[%s447 + $0x90] sm:$0xff]
      %v3875 = vld [vmem:[%s447 + $0x98] sm:$0xff]
      %v3876 = vld [vmem:[%s447 + $0xa0] sm:$0xff]
      %v3877 = vld [vmem:[%s447 + $0xa8] sm:$0xff]
      %v3878 = vld [vmem:[%s447 + $0xb0] sm:$0xff]
      %v3879 = vld [vmem:[%s447 + $0xb8] sm:$0xff]
      %v3880 = vld [vmem:[%s447 + $0xc0] sm:$0xff]
      %v3881 = vld [vmem:[%s447 + $0xc8] sm:$0xff]
      %v3882 = vld [vmem:[%s447 + $0xd0] sm:$0xff]
      %v3883 = vld [vmem:[%s447 + $0xd8] sm:$0xff]
      %v3884 = vld [vmem:[%s447 + $0xe0] sm:$0xff]
      %v3885 = vld [vmem:[%s447 + $0xe8] sm:$0xff]
      %v3886 = vld [vmem:[%s447 + $0xf0] sm:$0xff]
      %v3887 = vld [vmem:[%s447 + $0xf8] sm:$0xff]
      %v3888 = vld [vmem:[%s451] sm:$0xff]
      %v3889 = vld [vmem:[%s451 + $0x8] sm:$0xff]
      %v3892 = vlaneseq
      %v3893 = vshrl.u32 %v3892, 7
      %v3894 = vsub.s32 0, %v3893
      %v3895 = vrot.slane %v3888, %v3894
      %v3896 = vlaneseq
      %v3897 = vshrl.u32 %v3896, 7
      %v3898 = vsub.s32 1, %v3897
      %v3899 = vrot.slane %v3888, %v3898
      %v3900 = vlaneseq
      %v3901 = vshrl.u32 %v3900, 7
      %v3902 = vsub.s32 2, %v3901
      %v3903 = vrot.slane %v3888, %v3902
      %v3904 = vlaneseq
      %v3905 = vshrl.u32 %v3904, 7
      %v3906 = vsub.s32 3, %v3905
      %v3907 = vrot.slane %v3888, %v3906
      %v3908 = vlaneseq
      %v3909 = vshrl.u32 %v3908, 7
      %v3910 = vsub.s32 4, %v3909
      %v3911 = vrot.slane %v3888, %v3910
      %v3912 = vlaneseq
      %v3913 = vshrl.u32 %v3912, 7
      %v3914 = vsub.s32 5, %v3913
      %v3915 = vrot.slane %v3888, %v3914
      %v3916 = vlaneseq
      %v3917 = vshrl.u32 %v3916, 7
      %v3918 = vsub.s32 6, %v3917
      %v3919 = vrot.slane %v3888, %v3918
      %v3920 = vlaneseq
      %v3921 = vshrl.u32 %v3920, 7
      %v3922 = vsub.s32 7, %v3921
      %v3923 = vrot.slane %v3888, %v3922
      %v3924 = vlaneseq
      %v3925 = vshrl.u32 %v3924, 7
      %v3926 = vsub.s32 0, %v3925
      %v3927 = vrot.slane %v3889, %v3926
      %v3928 = vlaneseq
      %v3929 = vshrl.u32 %v3928, 7
      %v3930 = vsub.s32 1, %v3929
      %v3931 = vrot.slane %v3889, %v3930
      %v3932 = vlaneseq
      %v3933 = vshrl.u32 %v3932, 7
      %v3934 = vsub.s32 2, %v3933
      %v3935 = vrot.slane %v3889, %v3934
      %v3936 = vlaneseq
      %v3937 = vshrl.u32 %v3936, 7
      %v3938 = vsub.s32 3, %v3937
      %v3939 = vrot.slane %v3889, %v3938
      %v3940 = vlaneseq
      %v3941 = vshrl.u32 %v3940, 7
      %v3942 = vsub.s32 4, %v3941
      %v3943 = vrot.slane %v3889, %v3942
      %v3944 = vlaneseq
      %v3945 = vshrl.u32 %v3944, 7
      %v3946 = vsub.s32 5, %v3945
      %v3947 = vrot.slane %v3889, %v3946
      %v3948 = vlaneseq
      %v3949 = vshrl.u32 %v3948, 7
      %v3950 = vsub.s32 6, %v3949
      %v3951 = vrot.slane %v3889, %v3950
      %v3952 = vlaneseq
      %v3953 = vshrl.u32 %v3952, 7
      %v3954 = vsub.s32 7, %v3953
      %v3955 = vrot.slane %v3889, %v3954
      %v4004 = vunpack.c.l.b16 %v3856
      %v4005 = vunpack.c.h.b16 %v3856
      %v4006 = vunpack.c.l.b16 %v3857
      %v4007 = vunpack.c.h.b16 %v3857
      %v4008 = vunpack.c.l.b16 %v3858
      %v4009 = vunpack.c.h.b16 %v3858
      %v4010 = vunpack.c.l.b16 %v3859
      %v4011 = vunpack.c.h.b16 %v3859
      %v4012 = vunpack.c.l.b16 %v3860
      %v4013 = vunpack.c.h.b16 %v3860
      %v4014 = vunpack.c.l.b16 %v3861
      %v4015 = vunpack.c.h.b16 %v3861
      %v4016 = vunpack.c.l.b16 %v3862
      %v4017 = vunpack.c.h.b16 %v3862
      %v4018 = vunpack.c.l.b16 %v3863
      %v4019 = vunpack.c.h.b16 %v3863
      %v4020 = vunpack.c.l.b16 %v3864
      %v4021 = vunpack.c.h.b16 %v3864
      %v4022 = vunpack.c.l.b16 %v3865
      %v4023 = vunpack.c.h.b16 %v3865
      %v4024 = vunpack.c.l.b16 %v3866
      %v4025 = vunpack.c.h.b16 %v3866
      %v4026 = vunpack.c.l.b16 %v3867
      %v4027 = vunpack.c.h.b16 %v3867
      %v4028 = vunpack.c.l.b16 %v3868
      %v4029 = vunpack.c.h.b16 %v3868
      %v4030 = vunpack.c.l.b16 %v3869
      %v4031 = vunpack.c.h.b16 %v3869
      %v4032 = vunpack.c.l.b16 %v3870
      %v4033 = vunpack.c.h.b16 %v3870
      %v4034 = vunpack.c.l.b16 %v3871
      %v4035 = vunpack.c.h.b16 %v3871
      %v4036 = vunpack.c.l.b16 %v3872
      %v4037 = vunpack.c.h.b16 %v3872
      %v4038 = vunpack.c.l.b16 %v3873
      %v4039 = vunpack.c.h.b16 %v3873
      %v4040 = vunpack.c.l.b16 %v3874
      %v4041 = vunpack.c.h.b16 %v3874
      %v4042 = vunpack.c.l.b16 %v3875
      %v4043 = vunpack.c.h.b16 %v3875
      %v4044 = vunpack.c.l.b16 %v3876
      %v4045 = vunpack.c.h.b16 %v3876
      %v4046 = vunpack.c.l.b16 %v3877
      %v4047 = vunpack.c.h.b16 %v3877
      %v4048 = vunpack.c.l.b16 %v3878
      %v4049 = vunpack.c.h.b16 %v3878
      %v4050 = vunpack.c.l.b16 %v3879
      %v4051 = vunpack.c.h.b16 %v3879
      %v4052 = vunpack.c.l.b16 %v3880
      %v4053 = vunpack.c.h.b16 %v3880
      %v4054 = vunpack.c.l.b16 %v3881
      %v4055 = vunpack.c.h.b16 %v3881
      %v4056 = vunpack.c.l.b16 %v3882
      %v4057 = vunpack.c.h.b16 %v3882
      %v4058 = vunpack.c.l.b16 %v3883
      %v4059 = vunpack.c.h.b16 %v3883
      %v4060 = vunpack.c.l.b16 %v3884
      %v4061 = vunpack.c.h.b16 %v3884
      %v4062 = vunpack.c.l.b16 %v3885
      %v4063 = vunpack.c.h.b16 %v3885
      %v4064 = vunpack.c.l.b16 %v3886
      %v4065 = vunpack.c.h.b16 %v3886
      %v4066 = vunpack.c.l.b16 %v3887
      %v4067 = vunpack.c.h.b16 %v3887
      %v4068 = vpack.c.b16 %v4020, %v4004
      %v4069 = vpack.c.b16 %v4021, %v4005
      %v4070 = vpack.c.b16 %v4022, %v4006
      %v4071 = vpack.c.b16 %v4023, %v4007
      %v4072 = vpack.c.b16 %v4024, %v4008
      %v4073 = vpack.c.b16 %v4025, %v4009
      %v4074 = vpack.c.b16 %v4026, %v4010
      %v4075 = vpack.c.b16 %v4027, %v4011
      %v4076 = vpack.c.b16 %v4028, %v4012
      %v4077 = vpack.c.b16 %v4029, %v4013
      %v4078 = vpack.c.b16 %v4030, %v4014
      %v4079 = vpack.c.b16 %v4031, %v4015
      %v4080 = vpack.c.b16 %v4032, %v4016
      %v4081 = vpack.c.b16 %v4033, %v4017
      %v4082 = vpack.c.b16 %v4034, %v4018
      %v4083 = vpack.c.b16 %v4035, %v4019
      %v4084 = vpack.c.b16 %v4052, %v4036
      %v4085 = vpack.c.b16 %v4053, %v4037
      %v4086 = vpack.c.b16 %v4054, %v4038
      %v4087 = vpack.c.b16 %v4055, %v4039
      %v4088 = vpack.c.b16 %v4056, %v4040
      %v4089 = vpack.c.b16 %v4057, %v4041
      %v4090 = vpack.c.b16 %v4058, %v4042
      %v4091 = vpack.c.b16 %v4059, %v4043
      %v4092 = vpack.c.b16 %v4060, %v4044
      %v4093 = vpack.c.b16 %v4061, %v4045
      %v4094 = vpack.c.b16 %v4062, %v4046
      %v4095 = vpack.c.b16 %v4063, %v4047
      %v4096 = vpack.c.b16 %v4064, %v4048
      %v4097 = vpack.c.b16 %v4065, %v4049
      %v4098 = vpack.c.b16 %v4066, %v4050
      %v4099 = vpack.c.b16 %v4067, %v4051
      %v4133 = vsel %vm543, %v3848, 0
      %v4136 = vsel %vm543, %v3849, 0
      %v4139 = vsel %vm543, %v3850, 0
      %v4142 = vsel %vm543, %v3851, 0
      %v4145 = vsel %vm543, %v3852, 0
      %v4148 = vsel %vm543, %v3853, 0
      %v4151 = vsel %vm543, %v3854, 0
      %v4154 = vsel %vm543, %v3855, 0
      %4156 = vmatprep.subr.bf16.mxu0 %v4069
      %4157 = vmatpush1.bf16.msra.mxu0 %v4068
      %4158 = vmatprep.subr.bf16.mxu0 %v4085
      %4159 = vmatpush1.bf16.msra.mxu0 %v4084
      %4160 = vmatprep.subr.bf16.mxu0 0
      %4161 = vmatpush1.bf16.msra.mxu0 0
      %4162 = vmatprep.subr.bf16.mxu0 0
      %4163 = vmatpush1.bf16.msra.mxu0 0
      %4164 = vmatprep.subr.bf16.mxu0 0
      %4165 = vmatpush1.bf16.msra.mxu0 0
      %4166 = vmatprep.subr.bf16.mxu0 0
      %4167 = vmatpush1.bf16.msra.mxu0 0
      %4168 = vmatprep.subr.bf16.mxu0 0
      %4169 = vmatpush1.bf16.msra.mxu0 0
      %4170 = vmatprep.subr.bf16.mxu0 0
      %4171 = vmatpush1.bf16.msra.mxu0 0
      %4172 = vmatprep.subr.bf16.mxu0 0
      %4173 = vmatpush1.bf16.msra.mxu0 0
      %4174 = vmatprep.subr.bf16.mxu0 0
      %4175 = vmatpush1.bf16.msra.mxu0 0
      %4176 = vmatprep.subr.bf16.mxu0 0
      %4177 = vmatpush1.bf16.msra.mxu0 0
      %4178 = vmatprep.subr.bf16.mxu0 0
      %4179 = vmatpush1.bf16.msra.mxu0 0
      %4180 = vmatprep.subr.bf16.mxu0 0
      %4181 = vmatpush1.bf16.msra.mxu0 0
      %4182 = vmatprep.subr.bf16.mxu0 0
      %4183 = vmatpush1.bf16.msra.mxu0 0
      %4184 = vmatprep.subr.bf16.mxu0 0
      %4185 = vmatpush1.bf16.msra.mxu0 0
      %4186 = vmatprep.subr.bf16.mxu0 0
      %4187 = vmatpush1.bf16.msra.mxu0 0
      %4188 = vmatprep.mubr.bf16.mxu0 0
      %4189 = vmatmul.mubr.bf16.gmra.mrb[0].mxu0 %v4133
      %v4190 = vpop.f32.mrb[0].mxu0
      %v4191 = vadd.f32 %v3895, %v4190
      %v4192 = vpop.f32.mrb[0].mxu0
      %v4193 = vadd.f32 %v3899, %v4192
      %v4194 = vpop.f32.mrb[0].mxu0
      %v4195 = vadd.f32 %v3895, %v4194
      %v4196 = vpop.f32.mrb[0].mxu0
      %v4197 = vadd.f32 %v3899, %v4196
      %4198 = vmatprep.mubr.bf16.mxu0 0
      %4199 = vmatmul.mubr.bf16.gmra.mrb[0].mxu0 %v4136
      %v4200 = vpop.f32.mrb[0].mxu0
      %v4201 = vadd.f32 %v3895, %v4200
      %v4202 = vpop.f32.mrb[0].mxu0
      %v4203 = vadd.f32 %v3899, %v4202
      %v4204 = vpop.f32.mrb[0].mxu0
      %v4205 = vadd.f32 %v3895, %v4204
      %v4206 = vpop.f32.mrb[0].mxu0
      %v4207 = vadd.f32 %v3899, %v4206
      %4208 = vmatprep.mubr.bf16.mxu0 0
      %4209 = vmatmul.mubr.bf16.gmra.mrb[0].mxu0 %v4139
      %v4210 = vpop.f32.mrb[0].mxu0
      %v4211 = vadd.f32 %v3895, %v4210
      %v4212 = vpop.f32.mrb[0].mxu0
      %v4213 = vadd.f32 %v3899, %v4212
      %v4214 = vpop.f32.mrb[0].mxu0
      %v4215 = vadd.f32 %v3895, %v4214
      %v4216 = vpop.f32.mrb[0].mxu0
      %v4217 = vadd.f32 %v3899, %v4216
      %4218 = vmatprep.mubr.bf16.mxu0 0
      %4219 = vmatmul.mubr.bf16.gmra.mrb[0].mxu0 %v4142
      %v4220 = vpop.f32.mrb[0].mxu0
      %v4221 = vadd.f32 %v3895, %v4220
      %v4222 = vpop.f32.mrb[0].mxu0
      %v4223 = vadd.f32 %v3899, %v4222
      %v4224 = vpop.f32.mrb[0].mxu0
      %v4225 = vadd.f32 %v3895, %v4224
      %v4226 = vpop.f32.mrb[0].mxu0
      %v4227 = vadd.f32 %v3899, %v4226
      %4228 = vmatprep.mubr.bf16.mxu0 0
      %4229 = vmatmul.mubr.bf16.gmra.mrb[0].mxu0 %v4145
      %v4230 = vpop.f32.mrb[0].mxu0
      %v4231 = vadd.f32 %v3895, %v4230
      %v4232 = vpop.f32.mrb[0].mxu0
      %v4233 = vadd.f32 %v3899, %v4232
      %v4234 = vpop.f32.mrb[0].mxu0
      %v4235 = vadd.f32 %v3895, %v4234
      %v4236 = vpop.f32.mrb[0].mxu0
      %v4237 = vadd.f32 %v3899, %v4236
      %4238 = vmatprep.mubr.bf16.mxu0 0
      %4239 = vmatmul.mubr.bf16.gmra.mrb[0].mxu0 %v4148
      %v4240 = vpop.f32.mrb[0].mxu0
      %v4241 = vadd.f32 %v3895, %v4240
      %v4242 = vpop.f32.mrb[0].mxu0
      %v4243 = vadd.f32 %v3899, %v4242
      %v4244 = vpop.f32.mrb[0].mxu0
      %v4245 = vadd.f32 %v3895, %v4244
      %v4246 = vpop.f32.mrb[0].mxu0
      %v4247 = vadd.f32 %v3899, %v4246
      %4248 = vmatprep.mubr.bf16.mxu0 0
      %4249 = vmatmul.mubr.bf16.gmra.mrb[0].mxu0 %v4151
      %v4250 = vpop.f32.mrb[0].mxu0
      %v4251 = vadd.f32 %v3895, %v4250
      %v4252 = vpop.f32.mrb[0].mxu0
      %v4253 = vadd.f32 %v3899, %v4252
      %v4254 = vpop.f32.mrb[0].mxu0
      %v4255 = vadd.f32 %v3895, %v4254
      %v4256 = vpop.f32.mrb[0].mxu0
      %v4257 = vadd.f32 %v3899, %v4256
      %4258 = vmatprep.mubr.bf16.mxu0 0
      %4259 = vmatmul.mubr.bf16.gmra.mrb[0].mxu0 %v4154
      %v4260 = vpop.f32.mrb[0].mxu0
      %v4261 = vadd.f32 %v3895, %v4260
      %v4262 = vpop.f32.mrb[0].mxu0
      %v4263 = vadd.f32 %v3899, %v4262
      %v4264 = vpop.f32.mrb[0].mxu0
      %v4265 = vadd.f32 %v3895, %v4264
      %v4266 = vpop.f32.mrb[0].mxu0
      %v4267 = vadd.f32 %v3899, %v4266
      %4268 = vdwg.mxu0
      %4269 = vmatprep.subr.bf16.mxu0 %v4071
      %4270 = vmatpush1.bf16.msra.mxu0 %v4070
      %4271 = vmatprep.subr.bf16.mxu0 %v4087
      %4272 = vmatpush1.bf16.msra.mxu0 %v4086
      %4273 = vmatprep.subr.bf16.mxu0 0
      %4274 = vmatpush1.bf16.msra.mxu0 0
      %4275 = vmatprep.subr.bf16.mxu0 0
      %4276 = vmatpush1.bf16.msra.mxu0 0
      %4277 = vmatprep.subr.bf16.mxu0 0
      %4278 = vmatpush1.bf16.msra.mxu0 0
      %4279 = vmatprep.subr.bf16.mxu0 0
      %4280 = vmatpush1.bf16.msra.mxu0 0
      %4281 = vmatprep.subr.bf16.mxu0 0
      %4282 = vmatpush1.bf16.msra.mxu0 0
      %4283 = vmatprep.subr.bf16.mxu0 0
      %4284 = vmatpush1.bf16.msra.mxu0 0
      %4285 = vmatprep.subr.bf16.mxu0 0
      %4286 = vmatpush1.bf16.msra.mxu0 0
      %4287 = vmatprep.subr.bf16.mxu0 0
      %4288 = vmatpush1.bf16.msra.mxu0 0
      %4289 = vmatprep.subr.bf16.mxu0 0
      %4290 = vmatpush1.bf16.msra.mxu0 0
      %4291 = vmatprep.subr.bf16.mxu0 0
      %4292 = vmatpush1.bf16.msra.mxu0 0
      %4293 = vmatprep.subr.bf16.mxu0 0
      %4294 = vmatpush1.bf16.msra.mxu0 0
      %4295 = vmatprep.subr.bf16.mxu0 0
      %4296 = vmatpush1.bf16.msra.mxu0 0
      %4297 = vmatprep.subr.bf16.mxu0 0
      %4298 = vmatpush1.bf16.msra.mxu0 0
      %4299 = vmatprep.subr.bf16.mxu0 0
      %4300 = vmatpush1.bf16.msra.mxu0 0
      %4301 = vmatprep.mubr.bf16.mxu0 0
      %4302 = vmatmul.mubr.bf16.gmra.mrb[0].mxu0 %v4133
      %v4303 = vpop.f32.mrb[0].mxu0
      %v4304 = vadd.f32 %v3903, %v4303
      %v4305 = vpop.f32.mrb[0].mxu0
      %v4306 = vadd.f32 %v3907, %v4305
      %v4307 = vpop.f32.mrb[0].mxu0
      %v4308 = vadd.f32 %v3903, %v4307
      %v4309 = vpop.f32.mrb[0].mxu0
      %v4310 = vadd.f32 %v3907, %v4309
      %4311 = vmatprep.mubr.bf16.mxu0 0
      %4312 = vmatmul.mubr.bf16.gmra.mrb[0].mxu0 %v4136
      %v4313 = vpop.f32.mrb[0].mxu0
      %v4314 = vadd.f32 %v3903, %v4313
      %v4315 = vpop.f32.mrb[0].mxu0
      %v4316 = vadd.f32 %v3907, %v4315
      %v4317 = vpop.f32.mrb[0].mxu0
      %v4318 = vadd.f32 %v3903, %v4317
      %v4319 = vpop.f32.mrb[0].mxu0
      %v4320 = vadd.f32 %v3907, %v4319
      %4321 = vmatprep.mubr.bf16.mxu0 0
      %4322 = vmatmul.mubr.bf16.gmra.mrb[0].mxu0 %v4139
      %v4323 = vpop.f32.mrb[0].mxu0
      %v4324 = vadd.f32 %v3903, %v4323
      %v4325 = vpop.f32.mrb[0].mxu0
      %v4326 = vadd.f32 %v3907, %v4325
      %v4327 = vpop.f32.mrb[0].mxu0
      %v4328 = vadd.f32 %v3903, %v4327
      %v4329 = vpop.f32.mrb[0].mxu0
      %v4330 = vadd.f32 %v3907, %v4329
      %4331 = vmatprep.mubr.bf16.mxu0 0
      %4332 = vmatmul.mubr.bf16.gmra.mrb[0].mxu0 %v4142
      %v4333 = vpop.f32.mrb[0].mxu0
      %v4334 = vadd.f32 %v3903, %v4333
      %v4335 = vpop.f32.mrb[0].mxu0
      %v4336 = vadd.f32 %v3907, %v4335
      %v4337 = vpop.f32.mrb[0].mxu0
      %v4338 = vadd.f32 %v3903, %v4337
      %v4339 = vpop.f32.mrb[0].mxu0
      %v4340 = vadd.f32 %v3907, %v4339
      %4341 = vmatprep.mubr.bf16.mxu0 0
      %4342 = vmatmul.mubr.bf16.gmra.mrb[0].mxu0 %v4145
      %v4343 = vpop.f32.mrb[0].mxu0
      %v4344 = vadd.f32 %v3903, %v4343
      %v4345 = vpop.f32.mrb[0].mxu0
      %v4346 = vadd.f32 %v3907, %v4345
      %v4347 = vpop.f32.mrb[0].mxu0
      %v4348 = vadd.f32 %v3903, %v4347
      %v4349 = vpop.f32.mrb[0].mxu0
      %v4350 = vadd.f32 %v3907, %v4349
      %4351 = vmatprep.mubr.bf16.mxu0 0
      %4352 = vmatmul.mubr.bf16.gmra.mrb[0].mxu0 %v4148
      %v4353 = vpop.f32.mrb[0].mxu0
      %v4354 = vadd.f32 %v3903, %v4353
      %v4355 = vpop.f32.mrb[0].mxu0
      %v4356 = vadd.f32 %v3907, %v4355
      %v4357 = vpop.f32.mrb[0].mxu0
      %v4358 = vadd.f32 %v3903, %v4357
      %v4359 = vpop.f32.mrb[0].mxu0
      %v4360 = vadd.f32 %v3907, %v4359
      %4361 = vmatprep.mubr.bf16.mxu0 0
      %4362 = vmatmul.mubr.bf16.gmra.mrb[0].mxu0 %v4151
      %v4363 = vpop.f32.mrb[0].mxu0
      %v4364 = vadd.f32 %v3903, %v4363
      %v4365 = vpop.f32.mrb[0].mxu0
      %v4366 = vadd.f32 %v3907, %v4365
      %v4367 = vpop.f32.mrb[0].mxu0
      %v4368 = vadd.f32 %v3903, %v4367
      %v4369 = vpop.f32.mrb[0].mxu0
      %v4370 = vadd.f32 %v3907, %v4369
      %4371 = vmatprep.mubr.bf16.mxu0 0
      %4372 = vmatmul.mubr.bf16.gmra.mrb[0].mxu0 %v4154
      %v4373 = vpop.f32.mrb[0].mxu0
      %v4374 = vadd.f32 %v3903, %v4373
      %v4375 = vpop.f32.mrb[0].mxu0
      %v4376 = vadd.f32 %v3907, %v4375
      %v4377 = vpop.f32.mrb[0].mxu0
      %v4378 = vadd.f32 %v3903, %v4377
      %v4379 = vpop.f32.mrb[0].mxu0
      %v4380 = vadd.f32 %v3907, %v4379
      %4381 = vdwg.mxu0
      %4382 = vmatprep.subr.bf16.mxu0 %v4073
      %4383 = vmatpush1.bf16.msra.mxu0 %v4072
      %4384 = vmatprep.subr.bf16.mxu0 %v4089
      %4385 = vmatpush1.bf16.msra.mxu0 %v4088
      %4386 = vmatprep.subr.bf16.mxu0 0
      %4387 = vmatpush1.bf16.msra.mxu0 0
      %4388 = vmatprep.subr.bf16.mxu0 0
      %4389 = vmatpush1.bf16.msra.mxu0 0
      %4390 = vmatprep.subr.bf16.mxu0 0
      %4391 = vmatpush1.bf16.msra.mxu0 0
      %4392 = vmatprep.subr.bf16.mxu0 0
      %4393 = vmatpush1.bf16.msra.mxu0 0
      %4394 = vmatprep.subr.bf16.mxu0 0
      %4395 = vmatpush1.bf16.msra.mxu0 0
      %4396 = vmatprep.subr.bf16.mxu0 0
      %4397 = vmatpush1.bf16.msra.mxu0 0
      %4398 = vmatprep.subr.bf16.mxu0 0
      %4399 = vmatpush1.bf16.msra.mxu0 0
      %4400 = vmatprep.subr.bf16.mxu0 0
      %4401 = vmatpush1.bf16.msra.mxu0 0
      %4402 = vmatprep.subr.bf16.mxu0 0
      %4403 = vmatpush1.bf16.msra.mxu0 0
      %4404 = vmatprep.subr.bf16.mxu0 0
      %4405 = vmatpush1.bf16.msra.mxu0 0
      %4406 = vmatprep.subr.bf16.mxu0 0
      %4407 = vmatpush1.bf16.msra.mxu0 0
      %4408 = vmatprep.subr.bf16.mxu0 0
      %4409 = vmatpush1.bf16.msra.mxu0 0
      %4410 = vmatprep.subr.bf16.mxu0 0
      %4411 = vmatpush1.bf16.msra.mxu0 0
      %4412 = vmatprep.subr.bf16.mxu0 0
      %4413 = vmatpush1.bf16.msra.mxu0 0
      %4414 = vmatprep.mubr.bf16.mxu0 0
      %4415 = vmatmul.mubr.bf16.gmra.mrb[0].mxu0 %v4133
      %v4416 = vpop.f32.mrb[0].mxu0
      %v4417 = vadd.f32 %v3911, %v4416
      %v4418 = vpop.f32.mrb[0].mxu0
      %v4419 = vadd.f32 %v3915, %v4418
      %v4420 = vpop.f32.mrb[0].mxu0
      %v4421 = vadd.f32 %v3911, %v4420
      %v4422 = vpop.f32.mrb[0].mxu0
      %v4423 = vadd.f32 %v3915, %v4422
      %4424 = vmatprep.mubr.bf16.mxu0 0
      %4425 = vmatmul.mubr.bf16.gmra.mrb[0].mxu0 %v4136
      %v4426 = vpop.f32.mrb[0].mxu0
      %v4427 = vadd.f32 %v3911, %v4426
      %v4428 = vpop.f32.mrb[0].mxu0
      %v4429 = vadd.f32 %v3915, %v4428
      %v4430 = vpop.f32.mrb[0].mxu0
      %v4431 = vadd.f32 %v3911, %v4430
      %v4432 = vpop.f32.mrb[0].mxu0
      %v4433 = vadd.f32 %v3915, %v4432
      %4434 = vmatprep.mubr.bf16.mxu0 0
      %4435 = vmatmul.mubr.bf16.gmra.mrb[0].mxu0 %v4139
      %v4436 = vpop.f32.mrb[0].mxu0
      %v4437 = vadd.f32 %v3911, %v4436
      %v4438 = vpop.f32.mrb[0].mxu0
      %v4439 = vadd.f32 %v3915, %v4438
      %v4440 = vpop.f32.mrb[0].mxu0
      %v4441 = vadd.f32 %v3911, %v4440
      %v4442 = vpop.f32.mrb[0].mxu0
      %v4443 = vadd.f32 %v3915, %v4442
      %4444 = vmatprep.mubr.bf16.mxu0 0
      %4445 = vmatmul.mubr.bf16.gmra.mrb[0].mxu0 %v4142
      %v4446 = vpop.f32.mrb[0].mxu0
      %v4447 = vadd.f32 %v3911, %v4446
      %v4448 = vpop.f32.mrb[0].mxu0
      %v4449 = vadd.f32 %v3915, %v4448
      %v4450 = vpop.f32.mrb[0].mxu0
      %v4451 = vadd.f32 %v3911, %v4450
      %v4452 = vpop.f32.mrb[0].mxu0
      %v4453 = vadd.f32 %v3915, %v4452
      %4454 = vmatprep.mubr.bf16.mxu0 0
      %4455 = vmatmul.mubr.bf16.gmra.mrb[0].mxu0 %v4145
      %v4456 = vpop.f32.mrb[0].mxu0
      %v4457 = vadd.f32 %v3911, %v4456
      %v4458 = vpop.f32.mrb[0].mxu0
      %v4459 = vadd.f32 %v3915, %v4458
      %v4460 = vpop.f32.mrb[0].mxu0
      %v4461 = vadd.f32 %v3911, %v4460
      %v4462 = vpop.f32.mrb[0].mxu0
      %v4463 = vadd.f32 %v3915, %v4462
      %4464 = vmatprep.mubr.bf16.mxu0 0
      %4465 = vmatmul.mubr.bf16.gmra.mrb[0].mxu0 %v4148
      %v4466 = vpop.f32.mrb[0].mxu0
      %v4467 = vadd.f32 %v3911, %v4466
      %v4468 = vpop.f32.mrb[0].mxu0
      %v4469 = vadd.f32 %v3915, %v4468
      %v4470 = vpop.f32.mrb[0].mxu0
      %v4471 = vadd.f32 %v3911, %v4470
      %v4472 = vpop.f32.mrb[0].mxu0
      %v4473 = vadd.f32 %v3915, %v4472
      %4474 = vmatprep.mubr.bf16.mxu0 0
      %4475 = vmatmul.mubr.bf16.gmra.mrb[0].mxu0 %v4151
      %v4476 = vpop.f32.mrb[0].mxu0
      %v4477 = vadd.f32 %v3911, %v4476
      %v4478 = vpop.f32.mrb[0].mxu0
      %v4479 = vadd.f32 %v3915, %v4478
      %v4480 = vpop.f32.mrb[0].mxu0
      %v4481 = vadd.f32 %v3911, %v4480
      %v4482 = vpop.f32.mrb[0].mxu0
      %v4483 = vadd.f32 %v3915, %v4482
      %4484 = vmatprep.mubr.bf16.mxu0 0
      %4485 = vmatmul.mubr.bf16.gmra.mrb[0].mxu0 %v4154
      %v4486 = vpop.f32.mrb[0].mxu0
      %v4487 = vadd.f32 %v3911, %v4486
      %v4488 = vpop.f32.mrb[0].mxu0
      %v4489 = vadd.f32 %v3915, %v4488
      %v4490 = vpop.f32.mrb[0].mxu0
      %v4491 = vadd.f32 %v3911, %v4490
      %v4492 = vpop.f32.mrb[0].mxu0
      %v4493 = vadd.f32 %v3915, %v4492
      %4494 = vdwg.mxu0
      %4495 = vmatprep.subr.bf16.mxu0 %v4075
      %4496 = vmatpush1.bf16.msra.mxu0 %v4074
      %4497 = vmatprep.subr.bf16.mxu0 %v4091
      %4498 = vmatpush1.bf16.msra.mxu0 %v4090
      %4499 = vmatprep.subr.bf16.mxu0 0
      %4500 = vmatpush1.bf16.msra.mxu0 0
      %4501 = vmatprep.subr.bf16.mxu0 0
      %4502 = vmatpush1.bf16.msra.mxu0 0
      %4503 = vmatprep.subr.bf16.mxu0 0
      %4504 = vmatpush1.bf16.msra.mxu0 0
      %4505 = vmatprep.subr.bf16.mxu0 0
      %4506 = vmatpush1.bf16.msra.mxu0 0
      %4507 = vmatprep.subr.bf16.mxu0 0
      %4508 = vmatpush1.bf16.msra.mxu0 0
      %4509 = vmatprep.subr.bf16.mxu0 0
      %4510 = vmatpush1.bf16.msra.mxu0 0
      %4511 = vmatprep.subr.bf16.mxu0 0
      %4512 = vmatpush1.bf16.msra.mxu0 0
      %4513 = vmatprep.subr.bf16.mxu0 0
      %4514 = vmatpush1.bf16.msra.mxu0 0
      %4515 = vmatprep.subr.bf16.mxu0 0
      %4516 = vmatpush1.bf16.msra.mxu0 0
      %4517 = vmatprep.subr.bf16.mxu0 0
      %4518 = vmatpush1.bf16.msra.mxu0 0
      %4519 = vmatprep.subr.bf16.mxu0 0
      %4520 = vmatpush1.bf16.msra.mxu0 0
      %4521 = vmatprep.subr.bf16.mxu0 0
      %4522 = vmatpush1.bf16.msra.mxu0 0
      %4523 = vmatprep.subr.bf16.mxu0 0
      %4524 = vmatpush1.bf16.msra.mxu0 0
      %4525 = vmatprep.subr.bf16.mxu0 0
      %4526 = vmatpush1.bf16.msra.mxu0 0
      %4527 = vmatprep.mubr.bf16.mxu0 0
      %4528 = vmatmul.mubr.bf16.gmra.mrb[0].mxu0 %v4133
      %v4529 = vpop.f32.mrb[0].mxu0
      %v4530 = vadd.f32 %v3919, %v4529
      %v4531 = vpop.f32.mrb[0].mxu0
      %v4532 = vadd.f32 %v3923, %v4531
      %v4533 = vpop.f32.mrb[0].mxu0
      %v4534 = vadd.f32 %v3919, %v4533
      %v4535 = vpop.f32.mrb[0].mxu0
      %v4536 = vadd.f32 %v3923, %v4535
      %4537 = vmatprep.mubr.bf16.mxu0 0
      %4538 = vmatmul.mubr.bf16.gmra.mrb[0].mxu0 %v4136
      %v4539 = vpop.f32.mrb[0].mxu0
      %v4540 = vadd.f32 %v3919, %v4539
      %v4541 = vpop.f32.mrb[0].mxu0
      %v4542 = vadd.f32 %v3923, %v4541
      %v4543 = vpop.f32.mrb[0].mxu0
      %v4544 = vadd.f32 %v3919, %v4543
      %v4545 = vpop.f32.mrb[0].mxu0
      %v4546 = vadd.f32 %v3923, %v4545
      %4547 = vmatprep.mubr.bf16.mxu0 0
      %4548 = vmatmul.mubr.bf16.gmra.mrb[0].mxu0 %v4139
      %v4549 = vpop.f32.mrb[0].mxu0
      %v4550 = vadd.f32 %v3919, %v4549
      %v4551 = vpop.f32.mrb[0].mxu0
      %v4552 = vadd.f32 %v3923, %v4551
      %v4553 = vpop.f32.mrb[0].mxu0
      %v4554 = vadd.f32 %v3919, %v4553
      %v4555 = vpop.f32.mrb[0].mxu0
      %v4556 = vadd.f32 %v3923, %v4555
      %4557 = vmatprep.mubr.bf16.mxu0 0
      %4558 = vmatmul.mubr.bf16.gmra.mrb[0].mxu0 %v4142
      %v4559 = vpop.f32.mrb[0].mxu0
      %v4560 = vadd.f32 %v3919, %v4559
      %v4561 = vpop.f32.mrb[0].mxu0
      %v4562 = vadd.f32 %v3923, %v4561
      %v4563 = vpop.f32.mrb[0].mxu0
      %v4564 = vadd.f32 %v3919, %v4563
      %v4565 = vpop.f32.mrb[0].mxu0
      %v4566 = vadd.f32 %v3923, %v4565
      %4567 = vmatprep.mubr.bf16.mxu0 0
      %4568 = vmatmul.mubr.bf16.gmra.mrb[0].mxu0 %v4145
      %v4569 = vpop.f32.mrb[0].mxu0
      %v4570 = vadd.f32 %v3919, %v4569
      %v4571 = vpop.f32.mrb[0].mxu0
      %v4572 = vadd.f32 %v3923, %v4571
      %v4573 = vpop.f32.mrb[0].mxu0
      %v4574 = vadd.f32 %v3919, %v4573
      %v4575 = vpop.f32.mrb[0].mxu0
      %v4576 = vadd.f32 %v3923, %v4575
      %4577 = vmatprep.mubr.bf16.mxu0 0
      %4578 = vmatmul.mubr.bf16.gmra.mrb[0].mxu0 %v4148
      %v4579 = vpop.f32.mrb[0].mxu0
      %v4580 = vadd.f32 %v3919, %v4579
      %v4581 = vpop.f32.mrb[0].mxu0
      %v4582 = vadd.f32 %v3923, %v4581
      %v4583 = vpop.f32.mrb[0].mxu0
      %v4584 = vadd.f32 %v3919, %v4583
      %v4585 = vpop.f32.mrb[0].mxu0
      %v4586 = vadd.f32 %v3923, %v4585
      %4587 = vmatprep.mubr.bf16.mxu0 0
      %4588 = vmatmul.mubr.bf16.gmra.mrb[0].mxu0 %v4151
      %v4589 = vpop.f32.mrb[0].mxu0
      %v4590 = vadd.f32 %v3919, %v4589
      %v4591 = vpop.f32.mrb[0].mxu0
      %v4592 = vadd.f32 %v3923, %v4591
      %v4593 = vpop.f32.mrb[0].mxu0
      %v4594 = vadd.f32 %v3919, %v4593
      %v4595 = vpop.f32.mrb[0].mxu0
      %v4596 = vadd.f32 %v3923, %v4595
      %4597 = vmatprep.mubr.bf16.mxu0 0
      %4598 = vmatmul.mubr.bf16.gmra.mrb[0].mxu0 %v4154
      %v4599 = vpop.f32.mrb[0].mxu0
      %v4600 = vadd.f32 %v3919, %v4599
      %v4601 = vpop.f32.mrb[0].mxu0
      %v4602 = vadd.f32 %v3923, %v4601
      %v4603 = vpop.f32.mrb[0].mxu0
      %v4604 = vadd.f32 %v3919, %v4603
      %v4605 = vpop.f32.mrb[0].mxu0
      %v4606 = vadd.f32 %v3923, %v4605
      %4607 = vdwg.mxu0
      %4608 = vmatprep.subr.bf16.mxu0 %v4077
      %4609 = vmatpush1.bf16.msra.mxu0 %v4076
      %4610 = vmatprep.subr.bf16.mxu0 %v4093
      %4611 = vmatpush1.bf16.msra.mxu0 %v4092
      %4612 = vmatprep.subr.bf16.mxu0 0
      %4613 = vmatpush1.bf16.msra.mxu0 0
      %4614 = vmatprep.subr.bf16.mxu0 0
      %4615 = vmatpush1.bf16.msra.mxu0 0
      %4616 = vmatprep.subr.bf16.mxu0 0
      %4617 = vmatpush1.bf16.msra.mxu0 0
      %4618 = vmatprep.subr.bf16.mxu0 0
      %4619 = vmatpush1.bf16.msra.mxu0 0
      %4620 = vmatprep.subr.bf16.mxu0 0
      %4621 = vmatpush1.bf16.msra.mxu0 0
      %4622 = vmatprep.subr.bf16.mxu0 0
      %4623 = vmatpush1.bf16.msra.mxu0 0
      %4624 = vmatprep.subr.bf16.mxu0 0
      %4625 = vmatpush1.bf16.msra.mxu0 0
      %4626 = vmatprep.subr.bf16.mxu0 0
      %4627 = vmatpush1.bf16.msra.mxu0 0
      %4628 = vmatprep.subr.bf16.mxu0 0
      %4629 = vmatpush1.bf16.msra.mxu0 0
      %4630 = vmatprep.subr.bf16.mxu0 0
      %4631 = vmatpush1.bf16.msra.mxu0 0
      %4632 = vmatprep.subr.bf16.mxu0 0
      %4633 = vmatpush1.bf16.msra.mxu0 0
      %4634 = vmatprep.subr.bf16.mxu0 0
      %4635 = vmatpush1.bf16.msra.mxu0 0
      %4636 = vmatprep.subr.bf16.mxu0 0
      %4637 = vmatpush1.bf16.msra.mxu0 0
      %4638 = vmatprep.subr.bf16.mxu0 0
      %4639 = vmatpush1.bf16.msra.mxu0 0
      %4640 = vmatprep.mubr.bf16.mxu0 0
      %4641 = vmatmul.mubr.bf16.gmra.mrb[0].mxu0 %v4133
      %v4642 = vpop.f32.mrb[0].mxu0
      %v4643 = vadd.f32 %v3927, %v4642
      %v4644 = vpop.f32.mrb[0].mxu0
      %v4645 = vadd.f32 %v3931, %v4644
      %v4646 = vpop.f32.mrb[0].mxu0
      %v4647 = vadd.f32 %v3927, %v4646
      %v4648 = vpop.f32.mrb[0].mxu0
      %v4649 = vadd.f32 %v3931, %v4648
      %4650 = vmatprep.mubr.bf16.mxu0 0
      %4651 = vmatmul.mubr.bf16.gmra.mrb[0].mxu0 %v4136
      %v4652 = vpop.f32.mrb[0].mxu0
      %v4653 = vadd.f32 %v3927, %v4652
      %v4654 = vpop.f32.mrb[0].mxu0
      %v4655 = vadd.f32 %v3931, %v4654
      %v4656 = vpop.f32.mrb[0].mxu0
      %v4657 = vadd.f32 %v3927, %v4656
      %v4658 = vpop.f32.mrb[0].mxu0
      %v4659 = vadd.f32 %v3931, %v4658
      %4660 = vmatprep.mubr.bf16.mxu0 0
      %4661 = vmatmul.mubr.bf16.gmra.mrb[0].mxu0 %v4139
      %v4662 = vpop.f32.mrb[0].mxu0
      %v4663 = vadd.f32 %v3927, %v4662
      %v4664 = vpop.f32.mrb[0].mxu0
      %v4665 = vadd.f32 %v3931, %v4664
      %v4666 = vpop.f32.mrb[0].mxu0
      %v4667 = vadd.f32 %v3927, %v4666
      %v4668 = vpop.f32.mrb[0].mxu0
      %v4669 = vadd.f32 %v3931, %v4668
      %4670 = vmatprep.mubr.bf16.mxu0 0
      %4671 = vmatmul.mubr.bf16.gmra.mrb[0].mxu0 %v4142
      %v4672 = vpop.f32.mrb[0].mxu0
      %v4673 = vadd.f32 %v3927, %v4672
      %v4674 = vpop.f32.mrb[0].mxu0
      %v4675 = vadd.f32 %v3931, %v4674
      %v4676 = vpop.f32.mrb[0].mxu0
      %v4677 = vadd.f32 %v3927, %v4676
      %v4678 = vpop.f32.mrb[0].mxu0
      %v4679 = vadd.f32 %v3931, %v4678
      %4680 = vmatprep.mubr.bf16.mxu0 0
      %4681 = vmatmul.mubr.bf16.gmra.mrb[0].mxu0 %v4145
      %v4682 = vpop.f32.mrb[0].mxu0
      %v4683 = vadd.f32 %v3927, %v4682
      %v4684 = vpop.f32.mrb[0].mxu0
      %v4685 = vadd.f32 %v3931, %v4684
      %v4686 = vpop.f32.mrb[0].mxu0
      %v4687 = vadd.f32 %v3927, %v4686
      %v4688 = vpop.f32.mrb[0].mxu0
      %v4689 = vadd.f32 %v3931, %v4688
      %4690 = vmatprep.mubr.bf16.mxu0 0
      %4691 = vmatmul.mubr.bf16.gmra.mrb[0].mxu0 %v4148
      %v4692 = vpop.f32.mrb[0].mxu0
      %v4693 = vadd.f32 %v3927, %v4692
      %v4694 = vpop.f32.mrb[0].mxu0
      %v4695 = vadd.f32 %v3931, %v4694
      %v4696 = vpop.f32.mrb[0].mxu0
      %v4697 = vadd.f32 %v3927, %v4696
      %v4698 = vpop.f32.mrb[0].mxu0
      %v4699 = vadd.f32 %v3931, %v4698
      %4700 = vmatprep.mubr.bf16.mxu0 0
      %4701 = vmatmul.mubr.bf16.gmra.mrb[0].mxu0 %v4151
      %v4702 = vpop.f32.mrb[0].mxu0
      %v4703 = vadd.f32 %v3927, %v4702
      %v4704 = vpop.f32.mrb[0].mxu0
      %v4705 = vadd.f32 %v3931, %v4704
      %v4706 = vpop.f32.mrb[0].mxu0
      %v4707 = vadd.f32 %v3927, %v4706
      %v4708 = vpop.f32.mrb[0].mxu0
      %v4709 = vadd.f32 %v3931, %v4708
      %4710 = vmatprep.mubr.bf16.mxu0 0
      %4711 = vmatmul.mubr.bf16.gmra.mrb[0].mxu0 %v4154
      %v4712 = vpop.f32.mrb[0].mxu0
      %v4713 = vadd.f32 %v3927, %v4712
      %v4714 = vpop.f32.mrb[0].mxu0
      %v4715 = vadd.f32 %v3931, %v4714
      %v4716 = vpop.f32.mrb[0].mxu0
      %v4717 = vadd.f32 %v3927, %v4716
      %v4718 = vpop.f32.mrb[0].mxu0
      %v4719 = vadd.f32 %v3931, %v4718
      %4720 = vdwg.mxu0
      %4721 = vmatprep.subr.bf16.mxu0 %v4079
      %4722 = vmatpush1.bf16.msra.mxu0 %v4078
      %4723 = vmatprep.subr.bf16.mxu0 %v4095
      %4724 = vmatpush1.bf16.msra.mxu0 %v4094
      %4725 = vmatprep.subr.bf16.mxu0 0
      %4726 = vmatpush1.bf16.msra.mxu0 0
      %4727 = vmatprep.subr.bf16.mxu0 0
      %4728 = vmatpush1.bf16.msra.mxu0 0
      %4729 = vmatprep.subr.bf16.mxu0 0
      %4730 = vmatpush1.bf16.msra.mxu0 0
      %4731 = vmatprep.subr.bf16.mxu0 0
      %4732 = vmatpush1.bf16.msra.mxu0 0
      %4733 = vmatprep.subr.bf16.mxu0 0
      %4734 = vmatpush1.bf16.msra.mxu0 0
      %4735 = vmatprep.subr.bf16.mxu0 0
      %4736 = vmatpush1.bf16.msra.mxu0 0
      %4737 = vmatprep.subr.bf16.mxu0 0
      %4738 = vmatpush1.bf16.msra.mxu0 0
      %4739 = vmatprep.subr.bf16.mxu0 0
      %4740 = vmatpush1.bf16.msra.mxu0 0
      %4741 = vmatprep.subr.bf16.mxu0 0
      %4742 = vmatpush1.bf16.msra.mxu0 0
      %4743 = vmatprep.subr.bf16.mxu0 0
      %4744 = vmatpush1.bf16.msra.mxu0 0
      %4745 = vmatprep.subr.bf16.mxu0 0
      %4746 = vmatpush1.bf16.msra.mxu0 0
      %4747 = vmatprep.subr.bf16.mxu0 0
      %4748 = vmatpush1.bf16.msra.mxu0 0
      %4749 = vmatprep.subr.bf16.mxu0 0
      %4750 = vmatpush1.bf16.msra.mxu0 0
      %4751 = vmatprep.subr.bf16.mxu0 0
      %4752 = vmatpush1.bf16.msra.mxu0 0
      %4753 = vmatprep.mubr.bf16.mxu0 0
      %4754 = vmatmul.mubr.bf16.gmra.mrb[0].mxu0 %v4133
      %v4755 = vpop.f32.mrb[0].mxu0
      %v4756 = vadd.f32 %v3935, %v4755
      %v4757 = vpop.f32.mrb[0].mxu0
      %v4758 = vadd.f32 %v3939, %v4757
      %v4759 = vpop.f32.mrb[0].mxu0
      %v4760 = vadd.f32 %v3935, %v4759
      %v4761 = vpop.f32.mrb[0].mxu0
      %v4762 = vadd.f32 %v3939, %v4761
      %4763 = vmatprep.mubr.bf16.mxu0 0
      %4764 = vmatmul.mubr.bf16.gmra.mrb[0].mxu0 %v4136
      %v4765 = vpop.f32.mrb[0].mxu0
      %v4766 = vadd.f32 %v3935, %v4765
      %v4767 = vpop.f32.mrb[0].mxu0
      %v4768 = vadd.f32 %v3939, %v4767
      %v4769 = vpop.f32.mrb[0].mxu0
      %v4770 = vadd.f32 %v3935, %v4769
      %v4771 = vpop.f32.mrb[0].mxu0
      %v4772 = vadd.f32 %v3939, %v4771
      %4773 = vmatprep.mubr.bf16.mxu0 0
      %4774 = vmatmul.mubr.bf16.gmra.mrb[0].mxu0 %v4139
      %v4775 = vpop.f32.mrb[0].mxu0
      %v4776 = vadd.f32 %v3935, %v4775
      %v4777 = vpop.f32.mrb[0].mxu0
      %v4778 = vadd.f32 %v3939, %v4777
      %v4779 = vpop.f32.mrb[0].mxu0
      %v4780 = vadd.f32 %v3935, %v4779
      %v4781 = vpop.f32.mrb[0].mxu0
      %v4782 = vadd.f32 %v3939, %v4781
      %4783 = vmatprep.mubr.bf16.mxu0 0
      %4784 = vmatmul.mubr.bf16.gmra.mrb[0].mxu0 %v4142
      %v4785 = vpop.f32.mrb[0].mxu0
      %v4786 = vadd.f32 %v3935, %v4785
      %v4787 = vpop.f32.mrb[0].mxu0
      %v4788 = vadd.f32 %v3939, %v4787
      %v4789 = vpop.f32.mrb[0].mxu0
      %v4790 = vadd.f32 %v3935, %v4789
      %v4791 = vpop.f32.mrb[0].mxu0
      %v4792 = vadd.f32 %v3939, %v4791
      %4793 = vmatprep.mubr.bf16.mxu0 0
      %4794 = vmatmul.mubr.bf16.gmra.mrb[0].mxu0 %v4145
      %v4795 = vpop.f32.mrb[0].mxu0
      %v4796 = vadd.f32 %v3935, %v4795
      %v4797 = vpop.f32.mrb[0].mxu0
      %v4798 = vadd.f32 %v3939, %v4797
      %v4799 = vpop.f32.mrb[0].mxu0
      %v4800 = vadd.f32 %v3935, %v4799
      %v4801 = vpop.f32.mrb[0].mxu0
      %v4802 = vadd.f32 %v3939, %v4801
      %4803 = vmatprep.mubr.bf16.mxu0 0
      %4804 = vmatmul.mubr.bf16.gmra.mrb[0].mxu0 %v4148
      %v4805 = vpop.f32.mrb[0].mxu0
      %v4806 = vadd.f32 %v3935, %v4805
      %v4807 = vpop.f32.mrb[0].mxu0
      %v4808 = vadd.f32 %v3939, %v4807
      %v4809 = vpop.f32.mrb[0].mxu0
      %v4810 = vadd.f32 %v3935, %v4809
      %v4811 = vpop.f32.mrb[0].mxu0
      %v4812 = vadd.f32 %v3939, %v4811
      %4813 = vmatprep.mubr.bf16.mxu0 0
      %4814 = vmatmul.mubr.bf16.gmra.mrb[0].mxu0 %v4151
      %v4815 = vpop.f32.mrb[0].mxu0
      %v4816 = vadd.f32 %v3935, %v4815
      %v4817 = vpop.f32.mrb[0].mxu0
      %v4818 = vadd.f32 %v3939, %v4817
      %v4819 = vpop.f32.mrb[0].mxu0
      %v4820 = vadd.f32 %v3935, %v4819
      %v4821 = vpop.f32.mrb[0].mxu0
      %v4822 = vadd.f32 %v3939, %v4821
      %4823 = vmatprep.mubr.bf16.mxu0 0
      %4824 = vmatmul.mubr.bf16.gmra.mrb[0].mxu0 %v4154
      %v4825 = vpop.f32.mrb[0].mxu0
      %v4826 = vadd.f32 %v3935, %v4825
      %v4827 = vpop.f32.mrb[0].mxu0
      %v4828 = vadd.f32 %v3939, %v4827
      %v4829 = vpop.f32.mrb[0].mxu0
      %v4830 = vadd.f32 %v3935, %v4829
      %v4831 = vpop.f32.mrb[0].mxu0
      %v4832 = vadd.f32 %v3939, %v4831
      %4833 = vdwg.mxu0
      %4834 = vmatprep.subr.bf16.mxu0 %v4081
      %4835 = vmatpush1.bf16.msra.mxu0 %v4080
      %4836 = vmatprep.subr.bf16.mxu0 %v4097
      %4837 = vmatpush1.bf16.msra.mxu0 %v4096
      %4838 = vmatprep.subr.bf16.mxu0 0
      %4839 = vmatpush1.bf16.msra.mxu0 0
      %4840 = vmatprep.subr.bf16.mxu0 0
      %4841 = vmatpush1.bf16.msra.mxu0 0
      %4842 = vmatprep.subr.bf16.mxu0 0
      %4843 = vmatpush1.bf16.msra.mxu0 0
      %4844 = vmatprep.subr.bf16.mxu0 0
      %4845 = vmatpush1.bf16.msra.mxu0 0
      %4846 = vmatprep.subr.bf16.mxu0 0
      %4847 = vmatpush1.bf16.msra.mxu0 0
      %4848 = vmatprep.subr.bf16.mxu0 0
      %4849 = vmatpush1.bf16.msra.mxu0 0
      %4850 = vmatprep.subr.bf16.mxu0 0
      %4851 = vmatpush1.bf16.msra.mxu0 0
      %4852 = vmatprep.subr.bf16.mxu0 0
      %4853 = vmatpush1.bf16.msra.mxu0 0
      %4854 = vmatprep.subr.bf16.mxu0 0
      %4855 = vmatpush1.bf16.msra.mxu0 0
      %4856 = vmatprep.subr.bf16.mxu0 0
      %4857 = vmatpush1.bf16.msra.mxu0 0
      %4858 = vmatprep.subr.bf16.mxu0 0
      %4859 = vmatpush1.bf16.msra.mxu0 0
      %4860 = vmatprep.subr.bf16.mxu0 0
      %4861 = vmatpush1.bf16.msra.mxu0 0
      %4862 = vmatprep.subr.bf16.mxu0 0
      %4863 = vmatpush1.bf16.msra.mxu0 0
      %4864 = vmatprep.subr.bf16.mxu0 0
      %4865 = vmatpush1.bf16.msra.mxu0 0
      %4866 = vmatprep.mubr.bf16.mxu0 0
      %4867 = vmatmul.mubr.bf16.gmra.mrb[0].mxu0 %v4133
      %v4868 = vpop.f32.mrb[0].mxu0
      %v4869 = vadd.f32 %v3943, %v4868
      %v4870 = vpop.f32.mrb[0].mxu0
      %v4871 = vadd.f32 %v3947, %v4870
      %v4872 = vpop.f32.mrb[0].mxu0
      %v4873 = vadd.f32 %v3943, %v4872
      %v4874 = vpop.f32.mrb[0].mxu0
      %v4875 = vadd.f32 %v3947, %v4874
      %4876 = vmatprep.mubr.bf16.mxu0 0
      %4877 = vmatmul.mubr.bf16.gmra.mrb[0].mxu0 %v4136
      %v4878 = vpop.f32.mrb[0].mxu0
      %v4879 = vadd.f32 %v3943, %v4878
      %v4880 = vpop.f32.mrb[0].mxu0
      %v4881 = vadd.f32 %v3947, %v4880
      %v4882 = vpop.f32.mrb[0].mxu0
      %v4883 = vadd.f32 %v3943, %v4882
      %v4884 = vpop.f32.mrb[0].mxu0
      %v4885 = vadd.f32 %v3947, %v4884
      %4886 = vmatprep.mubr.bf16.mxu0 0
      %4887 = vmatmul.mubr.bf16.gmra.mrb[0].mxu0 %v4139
      %v4888 = vpop.f32.mrb[0].mxu0
      %v4889 = vadd.f32 %v3943, %v4888
      %v4890 = vpop.f32.mrb[0].mxu0
      %v4891 = vadd.f32 %v3947, %v4890
      %v4892 = vpop.f32.mrb[0].mxu0
      %v4893 = vadd.f32 %v3943, %v4892
      %v4894 = vpop.f32.mrb[0].mxu0
      %v4895 = vadd.f32 %v3947, %v4894
      %4896 = vmatprep.mubr.bf16.mxu0 0
      %4897 = vmatmul.mubr.bf16.gmra.mrb[0].mxu0 %v4142
      %v4898 = vpop.f32.mrb[0].mxu0
      %v4899 = vadd.f32 %v3943, %v4898
      %v4900 = vpop.f32.mrb[0].mxu0
      %v4901 = vadd.f32 %v3947, %v4900
      %v4902 = vpop.f32.mrb[0].mxu0
      %v4903 = vadd.f32 %v3943, %v4902
      %v4904 = vpop.f32.mrb[0].mxu0
      %v4905 = vadd.f32 %v3947, %v4904
      %4906 = vmatprep.mubr.bf16.mxu0 0
      %4907 = vmatmul.mubr.bf16.gmra.mrb[0].mxu0 %v4145
      %v4908 = vpop.f32.mrb[0].mxu0
      %v4909 = vadd.f32 %v3943, %v4908
      %v4910 = vpop.f32.mrb[0].mxu0
      %v4911 = vadd.f32 %v3947, %v4910
      %v4912 = vpop.f32.mrb[0].mxu0
      %v4913 = vadd.f32 %v3943, %v4912
      %v4914 = vpop.f32.mrb[0].mxu0
      %v4915 = vadd.f32 %v3947, %v4914
      %4916 = vmatprep.mubr.bf16.mxu0 0
      %4917 = vmatmul.mubr.bf16.gmra.mrb[0].mxu0 %v4148
      %v4918 = vpop.f32.mrb[0].mxu0
      %v4919 = vadd.f32 %v3943, %v4918
      %v4920 = vpop.f32.mrb[0].mxu0
      %v4921 = vadd.f32 %v3947, %v4920
      %v4922 = vpop.f32.mrb[0].mxu0
      %v4923 = vadd.f32 %v3943, %v4922
      %v4924 = vpop.f32.mrb[0].mxu0
      %v4925 = vadd.f32 %v3947, %v4924
      %4926 = vmatprep.mubr.bf16.mxu0 0
      %4927 = vmatmul.mubr.bf16.gmra.mrb[0].mxu0 %v4151
      %v4928 = vpop.f32.mrb[0].mxu0
      %v4929 = vadd.f32 %v3943, %v4928
      %v4930 = vpop.f32.mrb[0].mxu0
      %v4931 = vadd.f32 %v3947, %v4930
      %v4932 = vpop.f32.mrb[0].mxu0
      %v4933 = vadd.f32 %v3943, %v4932
      %v4934 = vpop.f32.mrb[0].mxu0
      %v4935 = vadd.f32 %v3947, %v4934
      %4936 = vmatprep.mubr.bf16.mxu0 0
      %4937 = vmatmul.mubr.bf16.gmra.mrb[0].mxu0 %v4154
      %v4938 = vpop.f32.mrb[0].mxu0
      %v4939 = vadd.f32 %v3943, %v4938
      %v4940 = vpop.f32.mrb[0].mxu0
      %v4941 = vadd.f32 %v3947, %v4940
      %v4942 = vpop.f32.mrb[0].mxu0
      %v4943 = vadd.f32 %v3943, %v4942
      %v4944 = vpop.f32.mrb[0].mxu0
      %v4945 = vadd.f32 %v3947, %v4944
      %4946 = vdwg.mxu0
      %4947 = vmatprep.subr.bf16.mxu0 %v4083
      %4948 = vmatpush1.bf16.msra.mxu0 %v4082
      %4949 = vmatprep.subr.bf16.mxu0 %v4099
      %4950 = vmatpush1.bf16.msra.mxu0 %v4098
      %4951 = vmatprep.subr.bf16.mxu0 0
      %4952 = vmatpush1.bf16.msra.mxu0 0
      %4953 = vmatprep.subr.bf16.mxu0 0
      %4954 = vmatpush1.bf16.msra.mxu0 0
      %4955 = vmatprep.subr.bf16.mxu0 0
      %4956 = vmatpush1.bf16.msra.mxu0 0
      %4957 = vmatprep.subr.bf16.mxu0 0
      %4958 = vmatpush1.bf16.msra.mxu0 0
      %4959 = vmatprep.subr.bf16.mxu0 0
      %4960 = vmatpush1.bf16.msra.mxu0 0
      %4961 = vmatprep.subr.bf16.mxu0 0
      %4962 = vmatpush1.bf16.msra.mxu0 0
      %4963 = vmatprep.subr.bf16.mxu0 0
      %4964 = vmatpush1.bf16.msra.mxu0 0
      %4965 = vmatprep.subr.bf16.mxu0 0
      %4966 = vmatpush1.bf16.msra.mxu0 0
      %4967 = vmatprep.subr.bf16.mxu0 0
      %4968 = vmatpush1.bf16.msra.mxu0 0
      %4969 = vmatprep.subr.bf16.mxu0 0
      %4970 = vmatpush1.bf16.msra.mxu0 0
      %4971 = vmatprep.subr.bf16.mxu0 0
      %4972 = vmatpush1.bf16.msra.mxu0 0
      %4973 = vmatprep.subr.bf16.mxu0 0
      %4974 = vmatpush1.bf16.msra.mxu0 0
      %4975 = vmatprep.subr.bf16.mxu0 0
      %4976 = vmatpush1.bf16.msra.mxu0 0
      %4977 = vmatprep.subr.bf16.mxu0 0
      %4978 = vmatpush1.bf16.msra.mxu0 0
      %4979 = vmatprep.mubr.bf16.mxu0 0
      %4980 = vmatmul.mubr.bf16.gmra.mrb[0].mxu0 %v4133
      %v4981 = vpop.f32.mrb[0].mxu0
      %v4982 = vadd.f32 %v3951, %v4981
      %v4983 = vpop.f32.mrb[0].mxu0
      %v4984 = vadd.f32 %v3955, %v4983
      %v4985 = vpop.f32.mrb[0].mxu0
      %v4986 = vadd.f32 %v3951, %v4985
      %v4987 = vpop.f32.mrb[0].mxu0
      %v4988 = vadd.f32 %v3955, %v4987
      %4989 = vmatprep.mubr.bf16.mxu0 0
      %4990 = vmatmul.mubr.bf16.gmra.mrb[0].mxu0 %v4136
      %v4991 = vpop.f32.mrb[0].mxu0
      %v4992 = vadd.f32 %v3951, %v4991
      %v4993 = vpop.f32.mrb[0].mxu0
      %v4994 = vadd.f32 %v3955, %v4993
      %v4995 = vpop.f32.mrb[0].mxu0
      %v4996 = vadd.f32 %v3951, %v4995
      %v4997 = vpop.f32.mrb[0].mxu0
      %v4998 = vadd.f32 %v3955, %v4997
      %4999 = vmatprep.mubr.bf16.mxu0 0
      %5000 = vmatmul.mubr.bf16.gmra.mrb[0].mxu0 %v4139
      %v5001 = vpop.f32.mrb[0].mxu0
      %v5002 = vadd.f32 %v3951, %v5001
      %v5003 = vpop.f32.mrb[0].mxu0
      %v5004 = vadd.f32 %v3955, %v5003
      %v5005 = vpop.f32.mrb[0].mxu0
      %v5006 = vadd.f32 %v3951, %v5005
      %v5007 = vpop.f32.mrb[0].mxu0
      %v5008 = vadd.f32 %v3955, %v5007
      %5009 = vmatprep.mubr.bf16.mxu0 0
      %5010 = vmatmul.mubr.bf16.gmra.mrb[0].mxu0 %v4142
      %v5011 = vpop.f32.mrb[0].mxu0
      %v5012 = vadd.f32 %v3951, %v5011
      %v5013 = vpop.f32.mrb[0].mxu0
      %v5014 = vadd.f32 %v3955, %v5013
      %v5015 = vpop.f32.mrb[0].mxu0
      %v5016 = vadd.f32 %v3951, %v5015
      %v5017 = vpop.f32.mrb[0].mxu0
      %v5018 = vadd.f32 %v3955, %v5017
      %5019 = vmatprep.mubr.bf16.mxu0 0
      %5020 = vmatmul.mubr.bf16.gmra.mrb[0].mxu0 %v4145
      %v5021 = vpop.f32.mrb[0].mxu0
      %v5022 = vadd.f32 %v3951, %v5021
      %v5023 = vpop.f32.mrb[0].mxu0
      %v5024 = vadd.f32 %v3955, %v5023
      %v5025 = vpop.f32.mrb[0].mxu0
      %v5026 = vadd.f32 %v3951, %v5025
      %v5027 = vpop.f32.mrb[0].mxu0
      %v5028 = vadd.f32 %v3955, %v5027
      %5029 = vmatprep.mubr.bf16.mxu0 0
      %5030 = vmatmul.mubr.bf16.gmra.mrb[0].mxu0 %v4148
      %v5031 = vpop.f32.mrb[0].mxu0
      %v5032 = vadd.f32 %v3951, %v5031
      %v5033 = vpop.f32.mrb[0].mxu0
      %v5034 = vadd.f32 %v3955, %v5033
      %v5035 = vpop.f32.mrb[0].mxu0
      %v5036 = vadd.f32 %v3951, %v5035
      %v5037 = vpop.f32.mrb[0].mxu0
      %v5038 = vadd.f32 %v3955, %v5037
      %5039 = vmatprep.mubr.bf16.mxu0 0
      %5040 = vmatmul.mubr.bf16.gmra.mrb[0].mxu0 %v4151
      %v5041 = vpop.f32.mrb[0].mxu0
      %v5042 = vadd.f32 %v3951, %v5041
      %v5043 = vpop.f32.mrb[0].mxu0
      %v5044 = vadd.f32 %v3955, %v5043
      %v5045 = vpop.f32.mrb[0].mxu0
      %v5046 = vadd.f32 %v3951, %v5045
      %v5047 = vpop.f32.mrb[0].mxu0
      %v5048 = vadd.f32 %v3955, %v5047
      %5049 = vmatprep.mubr.bf16.mxu0 0
      %5050 = vmatmul.mubr.bf16.gmra.mrb[0].mxu0 %v4154
      %v5051 = vpop.f32.mrb[0].mxu0
      %v5052 = vadd.f32 %v3951, %v5051
      %v5053 = vpop.f32.mrb[0].mxu0
      %v5054 = vadd.f32 %v3955, %v5053
      %v5055 = vpop.f32.mrb[0].mxu0
      %v5056 = vadd.f32 %v3951, %v5055
      %v5057 = vpop.f32.mrb[0].mxu0
      %v5058 = vadd.f32 %v3955, %v5057
      %5059 = vdwg.mxu0
      %v5060 = vmax.f32 %v4191, 0.0
      %v5061 = vmax.f32 %v4193, 0.0
      %v5062 = vmax.f32 %v4304, 0.0
      %v5063 = vmax.f32 %v4306, 0.0
      %v5064 = vmax.f32 %v4417, 0.0
      %v5065 = vmax.f32 %v4419, 0.0
      %v5066 = vmax.f32 %v4530, 0.0
      %v5067 = vmax.f32 %v4532, 0.0
      %v5068 = vmax.f32 %v4643, 0.0
      %v5069 = vmax.f32 %v4645, 0.0
      %v5070 = vmax.f32 %v4756, 0.0
      %v5071 = vmax.f32 %v4758, 0.0
      %v5072 = vmax.f32 %v4869, 0.0
      %v5073 = vmax.f32 %v4871, 0.0
      %v5074 = vmax.f32 %v4982, 0.0
      %v5075 = vmax.f32 %v4984, 0.0
      %v5076 = vmax.f32 %v4195, 0.0
      %v5077 = vmax.f32 %v4197, 0.0
      %v5078 = vmax.f32 %v4308, 0.0
      %v5079 = vmax.f32 %v4310, 0.0
      %v5080 = vmax.f32 %v4421, 0.0
      %v5081 = vmax.f32 %v4423, 0.0
      %v5082 = vmax.f32 %v4534, 0.0
      %v5083 = vmax.f32 %v4536, 0.0
      %v5084 = vmax.f32 %v4647, 0.0
      %v5085 = vmax.f32 %v4649, 0.0
      %v5086 = vmax.f32 %v4760, 0.0
      %v5087 = vmax.f32 %v4762, 0.0
      %v5088 = vmax.f32 %v4873, 0.0
      %v5089 = vmax.f32 %v4875, 0.0
      %v5090 = vmax.f32 %v4986, 0.0
      %v5091 = vmax.f32 %v4988, 0.0
      %v5092 = vmax.f32 %v4201, 0.0
      %v5093 = vmax.f32 %v4203, 0.0
      %v5094 = vmax.f32 %v4314, 0.0
      %v5095 = vmax.f32 %v4316, 0.0
      %v5096 = vmax.f32 %v4427, 0.0
      %v5097 = vmax.f32 %v4429, 0.0
      %v5098 = vmax.f32 %v4540, 0.0
      %v5099 = vmax.f32 %v4542, 0.0
      %v5100 = vmax.f32 %v4653, 0.0
      %v5101 = vmax.f32 %v4655, 0.0
      %v5102 = vmax.f32 %v4766, 0.0
      %v5103 = vmax.f32 %v4768, 0.0
      %v5104 = vmax.f32 %v4879, 0.0
      %v5105 = vmax.f32 %v4881, 0.0
      %v5106 = vmax.f32 %v4992, 0.0
      %v5107 = vmax.f32 %v4994, 0.0
      %v5108 = vmax.f32 %v4205, 0.0
      %v5109 = vmax.f32 %v4207, 0.0
      %v5110 = vmax.f32 %v4318, 0.0
      %v5111 = vmax.f32 %v4320, 0.0
      %v5112 = vmax.f32 %v4431, 0.0
      %v5113 = vmax.f32 %v4433, 0.0
      %v5114 = vmax.f32 %v4544, 0.0
      %v5115 = vmax.f32 %v4546, 0.0
      %v5116 = vmax.f32 %v4657, 0.0
      %v5117 = vmax.f32 %v4659, 0.0
      %v5118 = vmax.f32 %v4770, 0.0
      %v5119 = vmax.f32 %v4772, 0.0
      %v5120 = vmax.f32 %v4883, 0.0
      %v5121 = vmax.f32 %v4885, 0.0
      %v5122 = vmax.f32 %v4996, 0.0
      %v5123 = vmax.f32 %v4998, 0.0
      %v5124 = vmax.f32 %v4211, 0.0
      %v5125 = vmax.f32 %v4213, 0.0
      %v5126 = vmax.f32 %v4324, 0.0
      %v5127 = vmax.f32 %v4326, 0.0
      %v5128 = vmax.f32 %v4437, 0.0
      %v5129 = vmax.f32 %v4439, 0.0
      %v5130 = vmax.f32 %v4550, 0.0
      %v5131 = vmax.f32 %v4552, 0.0
      %v5132 = vmax.f32 %v4663, 0.0
      %v5133 = vmax.f32 %v4665, 0.0
      %v5134 = vmax.f32 %v4776, 0.0
      %v5135 = vmax.f32 %v4778, 0.0
      %v5136 = vmax.f32 %v4889, 0.0
      %v5137 = vmax.f32 %v4891, 0.0
      %v5138 = vmax.f32 %v5002, 0.0
      %v5139 = vmax.f32 %v5004, 0.0
      %v5140 = vmax.f32 %v4215, 0.0
      %v5141 = vmax.f32 %v4217, 0.0
      %v5142 = vmax.f32 %v4328, 0.0
      %v5143 = vmax.f32 %v4330, 0.0
      %v5144 = vmax.f32 %v4441, 0.0
      %v5145 = vmax.f32 %v4443, 0.0
      %v5146 = vmax.f32 %v4554, 0.0
      %v5147 = vmax.f32 %v4556, 0.0
      %v5148 = vmax.f32 %v4667, 0.0
      %v5149 = vmax.f32 %v4669, 0.0
      %v5150 = vmax.f32 %v4780, 0.0
      %v5151 = vmax.f32 %v4782, 0.0
      %v5152 = vmax.f32 %v4893, 0.0
      %v5153 = vmax.f32 %v4895, 0.0
      %v5154 = vmax.f32 %v5006, 0.0
      %v5155 = vmax.f32 %v5008, 0.0
      %v5156 = vmax.f32 %v4221, 0.0
      %v5157 = vmax.f32 %v4223, 0.0
      %v5158 = vmax.f32 %v4334, 0.0
      %v5159 = vmax.f32 %v4336, 0.0
      %v5160 = vmax.f32 %v4447, 0.0
      %v5161 = vmax.f32 %v4449, 0.0
      %v5162 = vmax.f32 %v4560, 0.0
      %v5163 = vmax.f32 %v4562, 0.0
      %v5164 = vmax.f32 %v4673, 0.0
      %v5165 = vmax.f32 %v4675, 0.0
      %v5166 = vmax.f32 %v4786, 0.0
      %v5167 = vmax.f32 %v4788, 0.0
      %v5168 = vmax.f32 %v4899, 0.0
      %v5169 = vmax.f32 %v4901, 0.0
      %v5170 = vmax.f32 %v5012, 0.0
      %v5171 = vmax.f32 %v5014, 0.0
      %v5172 = vmax.f32 %v4225, 0.0
      %v5173 = vmax.f32 %v4227, 0.0
      %v5174 = vmax.f32 %v4338, 0.0
      %v5175 = vmax.f32 %v4340, 0.0
      %v5176 = vmax.f32 %v4451, 0.0
      %v5177 = vmax.f32 %v4453, 0.0
      %v5178 = vmax.f32 %v4564, 0.0
      %v5179 = vmax.f32 %v4566, 0.0
      %v5180 = vmax.f32 %v4677, 0.0
      %v5181 = vmax.f32 %v4679, 0.0
      %v5182 = vmax.f32 %v4790, 0.0
      %v5183 = vmax.f32 %v4792, 0.0
      %v5184 = vmax.f32 %v4903, 0.0
      %v5185 = vmax.f32 %v4905, 0.0
      %v5186 = vmax.f32 %v5016, 0.0
      %v5187 = vmax.f32 %v5018, 0.0
      %v5188 = vmax.f32 %v4231, 0.0
      %v5189 = vmax.f32 %v4233, 0.0
      %v5190 = vmax.f32 %v4344, 0.0
      %v5191 = vmax.f32 %v4346, 0.0
      %v5192 = vmax.f32 %v4457, 0.0
      %v5193 = vmax.f32 %v4459, 0.0
      %v5194 = vmax.f32 %v4570, 0.0
      %v5195 = vmax.f32 %v4572, 0.0
      %v5196 = vmax.f32 %v4683, 0.0
      %v5197 = vmax.f32 %v4685, 0.0
      %v5198 = vmax.f32 %v4796, 0.0
      %v5199 = vmax.f32 %v4798, 0.0
      %v5200 = vmax.f32 %v4909, 0.0
      %v5201 = vmax.f32 %v4911, 0.0
      %v5202 = vmax.f32 %v5022, 0.0
      %v5203 = vmax.f32 %v5024, 0.0
      %v5204 = vmax.f32 %v4235, 0.0
      %v5205 = vmax.f32 %v4237, 0.0
      %v5206 = vmax.f32 %v4348, 0.0
      %v5207 = vmax.f32 %v4350, 0.0
      %v5208 = vmax.f32 %v4461, 0.0
      %v5209 = vmax.f32 %v4463, 0.0
      %v5210 = vmax.f32 %v4574, 0.0
      %v5211 = vmax.f32 %v4576, 0.0
      %v5212 = vmax.f32 %v4687, 0.0
      %v5213 = vmax.f32 %v4689, 0.0
      %v5214 = vmax.f32 %v4800, 0.0
      %v5215 = vmax.f32 %v4802, 0.0
      %v5216 = vmax.f32 %v4913, 0.0
      %v5217 = vmax.f32 %v4915, 0.0
      %v5218 = vmax.f32 %v5026, 0.0
      %v5219 = vmax.f32 %v5028, 0.0
      %v5220 = vmax.f32 %v4241, 0.0
      %v5221 = vmax.f32 %v4243, 0.0
      %v5222 = vmax.f32 %v4354, 0.0
      %v5223 = vmax.f32 %v4356, 0.0
      %v5224 = vmax.f32 %v4467, 0.0
      %v5225 = vmax.f32 %v4469, 0.0
      %v5226 = vmax.f32 %v4580, 0.0
      %v5227 = vmax.f32 %v4582, 0.0
      %v5228 = vmax.f32 %v4693, 0.0
      %v5229 = vmax.f32 %v4695, 0.0
      %v5230 = vmax.f32 %v4806, 0.0
      %v5231 = vmax.f32 %v4808, 0.0
      %v5232 = vmax.f32 %v4919, 0.0
      %v5233 = vmax.f32 %v4921, 0.0
      %v5234 = vmax.f32 %v5032, 0.0
      %v5235 = vmax.f32 %v5034, 0.0
      %v5236 = vmax.f32 %v4245, 0.0
      %v5237 = vmax.f32 %v4247, 0.0
      %v5238 = vmax.f32 %v4358, 0.0
      %v5239 = vmax.f32 %v4360, 0.0
      %v5240 = vmax.f32 %v4471, 0.0
      %v5241 = vmax.f32 %v4473, 0.0
      %v5242 = vmax.f32 %v4584, 0.0
      %v5243 = vmax.f32 %v4586, 0.0
      %v5244 = vmax.f32 %v4697, 0.0
      %v5245 = vmax.f32 %v4699, 0.0
      %v5246 = vmax.f32 %v4810, 0.0
      %v5247 = vmax.f32 %v4812, 0.0
      %v5248 = vmax.f32 %v4923, 0.0
      %v5249 = vmax.f32 %v4925, 0.0
      %v5250 = vmax.f32 %v5036, 0.0
      %v5251 = vmax.f32 %v5038, 0.0
      %v5252 = vmax.f32 %v4251, 0.0
      %v5253 = vmax.f32 %v4253, 0.0
      %v5254 = vmax.f32 %v4364, 0.0
      %v5255 = vmax.f32 %v4366, 0.0
      %v5256 = vmax.f32 %v4477, 0.0
      %v5257 = vmax.f32 %v4479, 0.0
      %v5258 = vmax.f32 %v4590, 0.0
      %v5259 = vmax.f32 %v4592, 0.0
      %v5260 = vmax.f32 %v4703, 0.0
      %v5261 = vmax.f32 %v4705, 0.0
      %v5262 = vmax.f32 %v4816, 0.0
      %v5263 = vmax.f32 %v4818, 0.0
      %v5264 = vmax.f32 %v4929, 0.0
      %v5265 = vmax.f32 %v4931, 0.0
      %v5266 = vmax.f32 %v5042, 0.0
      %v5267 = vmax.f32 %v5044, 0.0
      %v5268 = vmax.f32 %v4255, 0.0
      %v5269 = vmax.f32 %v4257, 0.0
      %v5270 = vmax.f32 %v4368, 0.0
      %v5271 = vmax.f32 %v4370, 0.0
      %v5272 = vmax.f32 %v4481, 0.0
      %v5273 = vmax.f32 %v4483, 0.0
      %v5274 = vmax.f32 %v4594, 0.0
      %v5275 = vmax.f32 %v4596, 0.0
      %v5276 = vmax.f32 %v4707, 0.0
      %v5277 = vmax.f32 %v4709, 0.0
      %v5278 = vmax.f32 %v4820, 0.0
      %v5279 = vmax.f32 %v4822, 0.0
      %v5280 = vmax.f32 %v4933, 0.0
      %v5281 = vmax.f32 %v4935, 0.0
      %v5282 = vmax.f32 %v5046, 0.0
      %v5283 = vmax.f32 %v5048, 0.0
      %v5284 = vmax.f32 %v4261, 0.0
      %v5285 = vmax.f32 %v4263, 0.0
      %v5286 = vmax.f32 %v4374, 0.0
      %v5287 = vmax.f32 %v4376, 0.0
      %v5288 = vmax.f32 %v4487, 0.0
      %v5289 = vmax.f32 %v4489, 0.0
      %v5290 = vmax.f32 %v4600, 0.0
      %v5291 = vmax.f32 %v4602, 0.0
      %v5292 = vmax.f32 %v4713, 0.0
      %v5293 = vmax.f32 %v4715, 0.0
      %v5294 = vmax.f32 %v4826, 0.0
      %v5295 = vmax.f32 %v4828, 0.0
      %v5296 = vmax.f32 %v4939, 0.0
      %v5297 = vmax.f32 %v4941, 0.0
      %v5298 = vmax.f32 %v5052, 0.0
      %v5299 = vmax.f32 %v5054, 0.0
      %v5300 = vmax.f32 %v4265, 0.0
      %v5301 = vmax.f32 %v4267, 0.0
      %v5302 = vmax.f32 %v4378, 0.0
      %v5303 = vmax.f32 %v4380, 0.0
      %v5304 = vmax.f32 %v4491, 0.0
      %v5305 = vmax.f32 %v4493, 0.0
      %v5306 = vmax.f32 %v4604, 0.0
      %v5307 = vmax.f32 %v4606, 0.0
      %v5308 = vmax.f32 %v4717, 0.0
      %v5309 = vmax.f32 %v4719, 0.0
      %v5310 = vmax.f32 %v4830, 0.0
      %v5311 = vmax.f32 %v4832, 0.0
      %v5312 = vmax.f32 %v4943, 0.0
      %v5313 = vmax.f32 %v4945, 0.0
      %v5314 = vmax.f32 %v5056, 0.0
      %v5315 = vmax.f32 %v5058, 0.0
      %v5316 = vpack.c.bf16 %v5076, %v5060
      %v5317 = vpack.c.bf16 %v5077, %v5061
      %v5318 = vpack.c.bf16 %v5078, %v5062
      %v5319 = vpack.c.bf16 %v5079, %v5063
      %v5320 = vpack.c.bf16 %v5080, %v5064
      %v5321 = vpack.c.bf16 %v5081, %v5065
      %v5322 = vpack.c.bf16 %v5082, %v5066
      %v5323 = vpack.c.bf16 %v5083, %v5067
      %v5324 = vpack.c.bf16 %v5084, %v5068
      %v5325 = vpack.c.bf16 %v5085, %v5069
      %v5326 = vpack.c.bf16 %v5086, %v5070
      %v5327 = vpack.c.bf16 %v5087, %v5071
      %v5328 = vpack.c.bf16 %v5088, %v5072
      %v5329 = vpack.c.bf16 %v5089, %v5073
      %v5330 = vpack.c.bf16 %v5090, %v5074
      %v5331 = vpack.c.bf16 %v5091, %v5075
      %v5332 = vpack.c.bf16 %v5108, %v5092
      %v5333 = vpack.c.bf16 %v5109, %v5093
      %v5334 = vpack.c.bf16 %v5110, %v5094
      %v5335 = vpack.c.bf16 %v5111, %v5095
      %v5336 = vpack.c.bf16 %v5112, %v5096
      %v5337 = vpack.c.bf16 %v5113, %v5097
      %v5338 = vpack.c.bf16 %v5114, %v5098
      %v5339 = vpack.c.bf16 %v5115, %v5099
      %v5340 = vpack.c.bf16 %v5116, %v5100
      %v5341 = vpack.c.bf16 %v5117, %v5101
      %v5342 = vpack.c.bf16 %v5118, %v5102
      %v5343 = vpack.c.bf16 %v5119, %v5103
      %v5344 = vpack.c.bf16 %v5120, %v5104
      %v5345 = vpack.c.bf16 %v5121, %v5105
      %v5346 = vpack.c.bf16 %v5122, %v5106
      %v5347 = vpack.c.bf16 %v5123, %v5107
      %v5348 = vpack.c.bf16 %v5140, %v5124
      %v5349 = vpack.c.bf16 %v5141, %v5125
      %v5350 = vpack.c.bf16 %v5142, %v5126
      %v5351 = vpack.c.bf16 %v5143, %v5127
      %v5352 = vpack.c.bf16 %v5144, %v5128
      %v5353 = vpack.c.bf16 %v5145, %v5129
      %v5354 = vpack.c.bf16 %v5146, %v5130
      %v5355 = vpack.c.bf16 %v5147, %v5131
      %v5356 = vpack.c.bf16 %v5148, %v5132
      %v5357 = vpack.c.bf16 %v5149, %v5133
      %v5358 = vpack.c.bf16 %v5150, %v5134
      %v5359 = vpack.c.bf16 %v5151, %v5135
      %v5360 = vpack.c.bf16 %v5152, %v5136
      %v5361 = vpack.c.bf16 %v5153, %v5137
      %v5362 = vpack.c.bf16 %v5154, %v5138
      %v5363 = vpack.c.bf16 %v5155, %v5139
      %v5364 = vpack.c.bf16 %v5172, %v5156
      %v5365 = vpack.c.bf16 %v5173, %v5157
      %v5366 = vpack.c.bf16 %v5174, %v5158
      %v5367 = vpack.c.bf16 %v5175, %v5159
      %v5368 = vpack.c.bf16 %v5176, %v5160
      %v5369 = vpack.c.bf16 %v5177, %v5161
      %v5370 = vpack.c.bf16 %v5178, %v5162
      %v5371 = vpack.c.bf16 %v5179, %v5163
      %v5372 = vpack.c.bf16 %v5180, %v5164
      %v5373 = vpack.c.bf16 %v5181, %v5165
      %v5374 = vpack.c.bf16 %v5182, %v5166
      %v5375 = vpack.c.bf16 %v5183, %v5167
      %v5376 = vpack.c.bf16 %v5184, %v5168
      %v5377 = vpack.c.bf16 %v5185, %v5169
      %v5378 = vpack.c.bf16 %v5186, %v5170
      %v5379 = vpack.c.bf16 %v5187, %v5171
      %v5380 = vpack.c.bf16 %v5204, %v5188
      %v5381 = vpack.c.bf16 %v5205, %v5189
      %v5382 = vpack.c.bf16 %v5206, %v5190
      %v5383 = vpack.c.bf16 %v5207, %v5191
      %v5384 = vpack.c.bf16 %v5208, %v5192
      %v5385 = vpack.c.bf16 %v5209, %v5193
      %v5386 = vpack.c.bf16 %v5210, %v5194
      %v5387 = vpack.c.bf16 %v5211, %v5195
      %v5388 = vpack.c.bf16 %v5212, %v5196
      %v5389 = vpack.c.bf16 %v5213, %v5197
      %v5390 = vpack.c.bf16 %v5214, %v5198
      %v5391 = vpack.c.bf16 %v5215, %v5199
      %v5392 = vpack.c.bf16 %v5216, %v5200
      %v5393 = vpack.c.bf16 %v5217, %v5201
      %v5394 = vpack.c.bf16 %v5218, %v5202
      %v5395 = vpack.c.bf16 %v5219, %v5203
      %v5396 = vpack.c.bf16 %v5236, %v5220
      %v5397 = vpack.c.bf16 %v5237, %v5221
      %v5398 = vpack.c.bf16 %v5238, %v5222
      %v5399 = vpack.c.bf16 %v5239, %v5223
      %v5400 = vpack.c.bf16 %v5240, %v5224
      %v5401 = vpack.c.bf16 %v5241, %v5225
      %v5402 = vpack.c.bf16 %v5242, %v5226
      %v5403 = vpack.c.bf16 %v5243, %v5227
      %v5404 = vpack.c.bf16 %v5244, %v5228
      %v5405 = vpack.c.bf16 %v5245, %v5229
      %v5406 = vpack.c.bf16 %v5246, %v5230
      %v5407 = vpack.c.bf16 %v5247, %v5231
      %v5408 = vpack.c.bf16 %v5248, %v5232
      %v5409 = vpack.c.bf16 %v5249, %v5233
      %v5410 = vpack.c.bf16 %v5250, %v5234
      %v5411 = vpack.c.bf16 %v5251, %v5235
      %v5412 = vpack.c.bf16 %v5268, %v5252
      %v5413 = vpack.c.bf16 %v5269, %v5253
      %v5414 = vpack.c.bf16 %v5270, %v5254
      %v5415 = vpack.c.bf16 %v5271, %v5255
      %v5416 = vpack.c.bf16 %v5272, %v5256
      %v5417 = vpack.c.bf16 %v5273, %v5257
      %v5418 = vpack.c.bf16 %v5274, %v5258
      %v5419 = vpack.c.bf16 %v5275, %v5259
      %v5420 = vpack.c.bf16 %v5276, %v5260
      %v5421 = vpack.c.bf16 %v5277, %v5261
      %v5422 = vpack.c.bf16 %v5278, %v5262
      %v5423 = vpack.c.bf16 %v5279, %v5263
      %v5424 = vpack.c.bf16 %v5280, %v5264
      %v5425 = vpack.c.bf16 %v5281, %v5265
      %v5426 = vpack.c.bf16 %v5282, %v5266
      %v5427 = vpack.c.bf16 %v5283, %v5267
      %v5428 = vpack.c.bf16 %v5300, %v5284
      %v5429 = vpack.c.bf16 %v5301, %v5285
      %v5430 = vpack.c.bf16 %v5302, %v5286
      %v5431 = vpack.c.bf16 %v5303, %v5287
      %v5432 = vpack.c.bf16 %v5304, %v5288
      %v5433 = vpack.c.bf16 %v5305, %v5289
      %v5434 = vpack.c.bf16 %v5306, %v5290
      %v5435 = vpack.c.bf16 %v5307, %v5291
      %v5436 = vpack.c.bf16 %v5308, %v5292
      %v5437 = vpack.c.bf16 %v5309, %v5293
      %v5438 = vpack.c.bf16 %v5310, %v5294
      %v5439 = vpack.c.bf16 %v5311, %v5295
      %v5440 = vpack.c.bf16 %v5312, %v5296
      %v5441 = vpack.c.bf16 %v5313, %v5297
      %v5442 = vpack.c.bf16 %v5314, %v5298
      %v5443 = vpack.c.bf16 %v5315, %v5299
      %v5444 = vld [vmem:[%s456] sm:$0xf]
      %v5445 = vld [vmem:[%s456 + $0x4] sm:$0xf]
      %v5446 = vld [vmem:[%s456 + $0x8] sm:$0xf]
      %v5447 = vld [vmem:[%s456 + $0xc] sm:$0xf]
      %v5448 = vld [vmem:[%s456 + $0x10] sm:$0xf]
      %v5449 = vld [vmem:[%s456 + $0x14] sm:$0xf]
      %v5450 = vld [vmem:[%s456 + $0x18] sm:$0xf]
      %v5451 = vld [vmem:[%s456 + $0x1c] sm:$0xf]
      %v5452 = vld [vmem:[%s456 + $0x20] sm:$0xf]
      %v5453 = vld [vmem:[%s456 + $0x24] sm:$0xf]
      %v5454 = vld [vmem:[%s456 + $0x28] sm:$0xf]
      %v5455 = vld [vmem:[%s456 + $0x2c] sm:$0xf]
      %v5456 = vld [vmem:[%s456 + $0x30] sm:$0xf]
      %v5457 = vld [vmem:[%s456 + $0x34] sm:$0xf]
      %v5458 = vld [vmem:[%s456 + $0x38] sm:$0xf]
      %v5459 = vld [vmem:[%s456 + $0x3c] sm:$0xf]
      %v5460 = vld [vmem:[%s456 + $0x40] sm:$0xf]
      %v5461 = vld [vmem:[%s456 + $0x44] sm:$0xf]
      %v5462 = vld [vmem:[%s456 + $0x48] sm:$0xf]
      %v5463 = vld [vmem:[%s456 + $0x4c] sm:$0xf]
      %v5464 = vld [vmem:[%s456 + $0x50] sm:$0xf]
      %v5465 = vld [vmem:[%s456 + $0x54] sm:$0xf]
      %v5466 = vld [vmem:[%s456 + $0x58] sm:$0xf]
      %v5467 = vld [vmem:[%s456 + $0x5c] sm:$0xf]
      %v5468 = vld [vmem:[%s456 + $0x60] sm:$0xf]
      %v5469 = vld [vmem:[%s456 + $0x64] sm:$0xf]
      %v5470 = vld [vmem:[%s456 + $0x68] sm:$0xf]
      %v5471 = vld [vmem:[%s456 + $0x6c] sm:$0xf]
      %v5472 = vld [vmem:[%s456 + $0x70] sm:$0xf]
      %v5473 = vld [vmem:[%s456 + $0x74] sm:$0xf]
      %v5474 = vld [vmem:[%s456 + $0x78] sm:$0xf]
      %v5475 = vld [vmem:[%s456 + $0x7c] sm:$0xf]
      %v5476 = vld [vmem:[%s456 + $0x80] sm:$0xf]
      %v5477 = vld [vmem:[%s456 + $0x84] sm:$0xf]
      %v5478 = vld [vmem:[%s456 + $0x88] sm:$0xf]
      %v5479 = vld [vmem:[%s456 + $0x8c] sm:$0xf]
      %v5480 = vld [vmem:[%s456 + $0x90] sm:$0xf]
      %v5481 = vld [vmem:[%s456 + $0x94] sm:$0xf]
      %v5482 = vld [vmem:[%s456 + $0x98] sm:$0xf]
      %v5483 = vld [vmem:[%s456 + $0x9c] sm:$0xf]
      %v5484 = vld [vmem:[%s456 + $0xa0] sm:$0xf]
      %v5485 = vld [vmem:[%s456 + $0xa4] sm:$0xf]
      %v5486 = vld [vmem:[%s456 + $0xa8] sm:$0xf]
      %v5487 = vld [vmem:[%s456 + $0xac] sm:$0xf]
      %v5488 = vld [vmem:[%s456 + $0xb0] sm:$0xf]
      %v5489 = vld [vmem:[%s456 + $0xb4] sm:$0xf]
      %v5490 = vld [vmem:[%s456 + $0xb8] sm:$0xf]
      %v5491 = vld [vmem:[%s456 + $0xbc] sm:$0xf]
      %v5492 = vld [vmem:[%s456 + $0xc0] sm:$0xf]
      %v5493 = vld [vmem:[%s456 + $0xc4] sm:$0xf]
      %v5494 = vld [vmem:[%s456 + $0xc8] sm:$0xf]
      %v5495 = vld [vmem:[%s456 + $0xcc] sm:$0xf]
      %v5496 = vld [vmem:[%s456 + $0xd0] sm:$0xf]
      %v5497 = vld [vmem:[%s456 + $0xd4] sm:$0xf]
      %v5498 = vld [vmem:[%s456 + $0xd8] sm:$0xf]
      %v5499 = vld [vmem:[%s456 + $0xdc] sm:$0xf]
      %v5500 = vld [vmem:[%s456 + $0xe0] sm:$0xf]
      %v5501 = vld [vmem:[%s456 + $0xe4] sm:$0xf]
      %v5502 = vld [vmem:[%s456 + $0xe8] sm:$0xf]
      %v5503 = vld [vmem:[%s456 + $0xec] sm:$0xf]
      %v5504 = vld [vmem:[%s456 + $0xf0] sm:$0xf]
      %v5505 = vld [vmem:[%s456 + $0xf4] sm:$0xf]
      %v5506 = vld [vmem:[%s456 + $0xf8] sm:$0xf]
      %v5507 = vld [vmem:[%s456 + $0xfc] sm:$0xf]
      %v5508 = vld [vmem:[%s456 + $0x100] sm:$0xf]
      %v5509 = vld [vmem:[%s456 + $0x104] sm:$0xf]
      %v5510 = vld [vmem:[%s456 + $0x108] sm:$0xf]
      %v5511 = vld [vmem:[%s456 + $0x10c] sm:$0xf]
      %v5512 = vld [vmem:[%s456 + $0x110] sm:$0xf]
      %v5513 = vld [vmem:[%s456 + $0x114] sm:$0xf]
      %v5514 = vld [vmem:[%s456 + $0x118] sm:$0xf]
      %v5515 = vld [vmem:[%s456 + $0x11c] sm:$0xf]
      %v5516 = vld [vmem:[%s456 + $0x120] sm:$0xf]
      %v5517 = vld [vmem:[%s456 + $0x124] sm:$0xf]
      %v5518 = vld [vmem:[%s456 + $0x128] sm:$0xf]
      %v5519 = vld [vmem:[%s456 + $0x12c] sm:$0xf]
      %v5520 = vld [vmem:[%s456 + $0x130] sm:$0xf]
      %v5521 = vld [vmem:[%s456 + $0x134] sm:$0xf]
      %v5522 = vld [vmem:[%s456 + $0x138] sm:$0xf]
      %v5523 = vld [vmem:[%s456 + $0x13c] sm:$0xf]
      %v5524 = vld [vmem:[%s456 + $0x140] sm:$0xf]
      %v5525 = vld [vmem:[%s456 + $0x144] sm:$0xf]
      %v5526 = vld [vmem:[%s456 + $0x148] sm:$0xf]
      %v5527 = vld [vmem:[%s456 + $0x14c] sm:$0xf]
      %v5528 = vld [vmem:[%s456 + $0x150] sm:$0xf]
      %v5529 = vld [vmem:[%s456 + $0x154] sm:$0xf]
      %v5530 = vld [vmem:[%s456 + $0x158] sm:$0xf]
      %v5531 = vld [vmem:[%s456 + $0x15c] sm:$0xf]
      %v5532 = vld [vmem:[%s456 + $0x160] sm:$0xf]
      %v5533 = vld [vmem:[%s456 + $0x164] sm:$0xf]
      %v5534 = vld [vmem:[%s456 + $0x168] sm:$0xf]
      %v5535 = vld [vmem:[%s456 + $0x16c] sm:$0xf]
      %v5536 = vld [vmem:[%s456 + $0x170] sm:$0xf]
      %v5537 = vld [vmem:[%s456 + $0x174] sm:$0xf]
      %v5538 = vld [vmem:[%s456 + $0x178] sm:$0xf]
      %v5539 = vld [vmem:[%s456 + $0x17c] sm:$0xf]
      %v5540 = vld [vmem:[%s456 + $0x180] sm:$0xf]
      %v5541 = vld [vmem:[%s456 + $0x184] sm:$0xf]
      %v5542 = vld [vmem:[%s456 + $0x188] sm:$0xf]
      %v5543 = vld [vmem:[%s456 + $0x18c] sm:$0xf]
      %v5544 = vld [vmem:[%s456 + $0x190] sm:$0xf]
      %v5545 = vld [vmem:[%s456 + $0x194] sm:$0xf]
      %v5546 = vld [vmem:[%s456 + $0x198] sm:$0xf]
      %v5547 = vld [vmem:[%s456 + $0x19c] sm:$0xf]
      %v5548 = vld [vmem:[%s456 + $0x1a0] sm:$0xf]
      %v5549 = vld [vmem:[%s456 + $0x1a4] sm:$0xf]
      %v5550 = vld [vmem:[%s456 + $0x1a8] sm:$0xf]
      %v5551 = vld [vmem:[%s456 + $0x1ac] sm:$0xf]
      %v5552 = vld [vmem:[%s456 + $0x1b0] sm:$0xf]
      %v5553 = vld [vmem:[%s456 + $0x1b4] sm:$0xf]
      %v5554 = vld [vmem:[%s456 + $0x1b8] sm:$0xf]
      %v5555 = vld [vmem:[%s456 + $0x1bc] sm:$0xf]
      %v5556 = vld [vmem:[%s456 + $0x1c0] sm:$0xf]
      %v5557 = vld [vmem:[%s456 + $0x1c4] sm:$0xf]
      %v5558 = vld [vmem:[%s456 + $0x1c8] sm:$0xf]
      %v5559 = vld [vmem:[%s456 + $0x1cc] sm:$0xf]
      %v5560 = vld [vmem:[%s456 + $0x1d0] sm:$0xf]
      %v5561 = vld [vmem:[%s456 + $0x1d4] sm:$0xf]
      %v5562 = vld [vmem:[%s456 + $0x1d8] sm:$0xf]
      %v5563 = vld [vmem:[%s456 + $0x1dc] sm:$0xf]
      %v5564 = vld [vmem:[%s456 + $0x1e0] sm:$0xf]
      %v5565 = vld [vmem:[%s456 + $0x1e4] sm:$0xf]
      %v5566 = vld [vmem:[%s456 + $0x1e8] sm:$0xf]
      %v5567 = vld [vmem:[%s456 + $0x1ec] sm:$0xf]
      %v5568 = vld [vmem:[%s456 + $0x1f0] sm:$0xf]
      %v5569 = vld [vmem:[%s456 + $0x1f4] sm:$0xf]
      %v5570 = vld [vmem:[%s456 + $0x1f8] sm:$0xf]
      %v5571 = vld [vmem:[%s456 + $0x1fc] sm:$0xf]
      %v5572 = vld [vmem:[%s456 + $0x200] sm:$0xf]
      %v5573 = vld [vmem:[%s456 + $0x204] sm:$0xf]
      %v5574 = vld [vmem:[%s456 + $0x208] sm:$0xf]
      %v5575 = vld [vmem:[%s456 + $0x20c] sm:$0xf]
      %v5576 = vld [vmem:[%s456 + $0x210] sm:$0xf]
      %v5577 = vld [vmem:[%s456 + $0x214] sm:$0xf]
      %v5578 = vld [vmem:[%s456 + $0x218] sm:$0xf]
      %v5579 = vld [vmem:[%s456 + $0x21c] sm:$0xf]
      %v5580 = vld [vmem:[%s456 + $0x220] sm:$0xf]
      %v5581 = vld [vmem:[%s456 + $0x224] sm:$0xf]
      %v5582 = vld [vmem:[%s456 + $0x228] sm:$0xf]
      %v5583 = vld [vmem:[%s456 + $0x22c] sm:$0xf]
      %v5584 = vld [vmem:[%s456 + $0x230] sm:$0xf]
      %v5585 = vld [vmem:[%s456 + $0x234] sm:$0xf]
      %v5586 = vld [vmem:[%s456 + $0x238] sm:$0xf]
      %v5587 = vld [vmem:[%s456 + $0x23c] sm:$0xf]
      %v5588 = vld [vmem:[%s456 + $0x240] sm:$0xf]
      %v5589 = vld [vmem:[%s456 + $0x244] sm:$0xf]
      %v5590 = vld [vmem:[%s456 + $0x248] sm:$0xf]
      %v5591 = vld [vmem:[%s456 + $0x24c] sm:$0xf]
      %v5592 = vld [vmem:[%s456 + $0x250] sm:$0xf]
      %v5593 = vld [vmem:[%s456 + $0x254] sm:$0xf]
      %v5594 = vld [vmem:[%s456 + $0x258] sm:$0xf]
      %v5595 = vld [vmem:[%s456 + $0x25c] sm:$0xf]
      %v5596 = vld [vmem:[%s456 + $0x260] sm:$0xf]
      %v5597 = vld [vmem:[%s456 + $0x264] sm:$0xf]
      %v5598 = vld [vmem:[%s456 + $0x268] sm:$0xf]
      %v5599 = vld [vmem:[%s456 + $0x26c] sm:$0xf]
      %v5600 = vld [vmem:[%s456 + $0x270] sm:$0xf]
      %v5601 = vld [vmem:[%s456 + $0x274] sm:$0xf]
      %v5602 = vld [vmem:[%s456 + $0x278] sm:$0xf]
      %v5603 = vld [vmem:[%s456 + $0x27c] sm:$0xf]
      %v5604 = vld [vmem:[%s456 + $0x280] sm:$0xf]
      %v5605 = vld [vmem:[%s456 + $0x284] sm:$0xf]
      %v5606 = vld [vmem:[%s456 + $0x288] sm:$0xf]
      %v5607 = vld [vmem:[%s456 + $0x28c] sm:$0xf]
      %v5608 = vld [vmem:[%s456 + $0x290] sm:$0xf]
      %v5609 = vld [vmem:[%s456 + $0x294] sm:$0xf]
      %v5610 = vld [vmem:[%s456 + $0x298] sm:$0xf]
      %v5611 = vld [vmem:[%s456 + $0x29c] sm:$0xf]
      %v5612 = vld [vmem:[%s456 + $0x2a0] sm:$0xf]
      %v5613 = vld [vmem:[%s456 + $0x2a4] sm:$0xf]
      %v5614 = vld [vmem:[%s456 + $0x2a8] sm:$0xf]
      %v5615 = vld [vmem:[%s456 + $0x2ac] sm:$0xf]
      %v5616 = vld [vmem:[%s456 + $0x2b0] sm:$0xf]
      %v5617 = vld [vmem:[%s456 + $0x2b4] sm:$0xf]
      %v5618 = vld [vmem:[%s456 + $0x2b8] sm:$0xf]
      %v5619 = vld [vmem:[%s456 + $0x2bc] sm:$0xf]
      %v5620 = vld [vmem:[%s456 + $0x2c0] sm:$0xf]
      %v5621 = vld [vmem:[%s456 + $0x2c4] sm:$0xf]
      %v5622 = vld [vmem:[%s456 + $0x2c8] sm:$0xf]
      %v5623 = vld [vmem:[%s456 + $0x2cc] sm:$0xf]
      %v5624 = vld [vmem:[%s456 + $0x2d0] sm:$0xf]
      %v5625 = vld [vmem:[%s456 + $0x2d4] sm:$0xf]
      %v5626 = vld [vmem:[%s456 + $0x2d8] sm:$0xf]
      %v5627 = vld [vmem:[%s456 + $0x2dc] sm:$0xf]
      %v5628 = vld [vmem:[%s456 + $0x2e0] sm:$0xf]
      %v5629 = vld [vmem:[%s456 + $0x2e4] sm:$0xf]
      %v5630 = vld [vmem:[%s456 + $0x2e8] sm:$0xf]
      %v5631 = vld [vmem:[%s456 + $0x2ec] sm:$0xf]
      %v5632 = vld [vmem:[%s456 + $0x2f0] sm:$0xf]
      %v5633 = vld [vmem:[%s456 + $0x2f4] sm:$0xf]
      %v5634 = vld [vmem:[%s456 + $0x2f8] sm:$0xf]
      %v5635 = vld [vmem:[%s456 + $0x2fc] sm:$0xf]
      %v5636 = vld [vmem:[%s456 + $0x300] sm:$0xf]
      %v5637 = vld [vmem:[%s456 + $0x304] sm:$0xf]
      %v5638 = vld [vmem:[%s456 + $0x308] sm:$0xf]
      %v5639 = vld [vmem:[%s456 + $0x30c] sm:$0xf]
      %v5640 = vld [vmem:[%s456 + $0x310] sm:$0xf]
      %v5641 = vld [vmem:[%s456 + $0x314] sm:$0xf]
      %v5642 = vld [vmem:[%s456 + $0x318] sm:$0xf]
      %v5643 = vld [vmem:[%s456 + $0x31c] sm:$0xf]
      %v5644 = vld [vmem:[%s456 + $0x320] sm:$0xf]
      %v5645 = vld [vmem:[%s456 + $0x324] sm:$0xf]
      %v5646 = vld [vmem:[%s456 + $0x328] sm:$0xf]
      %v5647 = vld [vmem:[%s456 + $0x32c] sm:$0xf]
      %v5648 = vld [vmem:[%s456 + $0x330] sm:$0xf]
      %v5649 = vld [vmem:[%s456 + $0x334] sm:$0xf]
      %v5650 = vld [vmem:[%s456 + $0x338] sm:$0xf]
      %v5651 = vld [vmem:[%s456 + $0x33c] sm:$0xf]
      %v5652 = vld [vmem:[%s456 + $0x340] sm:$0xf]
      %v5653 = vld [vmem:[%s456 + $0x344] sm:$0xf]
      %v5654 = vld [vmem:[%s456 + $0x348] sm:$0xf]
      %v5655 = vld [vmem:[%s456 + $0x34c] sm:$0xf]
      %v5656 = vld [vmem:[%s456 + $0x350] sm:$0xf]
      %v5657 = vld [vmem:[%s456 + $0x354] sm:$0xf]
      %v5658 = vld [vmem:[%s456 + $0x358] sm:$0xf]
      %v5659 = vld [vmem:[%s456 + $0x35c] sm:$0xf]
      %v5660 = vld [vmem:[%s456 + $0x360] sm:$0xf]
      %v5661 = vld [vmem:[%s456 + $0x364] sm:$0xf]
      %v5662 = vld [vmem:[%s456 + $0x368] sm:$0xf]
      %v5663 = vld [vmem:[%s456 + $0x36c] sm:$0xf]
      %v5664 = vld [vmem:[%s456 + $0x370] sm:$0xf]
      %v5665 = vld [vmem:[%s456 + $0x374] sm:$0xf]
      %v5666 = vld [vmem:[%s456 + $0x378] sm:$0xf]
      %v5667 = vld [vmem:[%s456 + $0x37c] sm:$0xf]
      %v5668 = vld [vmem:[%s456 + $0x380] sm:$0xf]
      %v5669 = vld [vmem:[%s456 + $0x384] sm:$0xf]
      %v5670 = vld [vmem:[%s456 + $0x388] sm:$0xf]
      %v5671 = vld [vmem:[%s456 + $0x38c] sm:$0xf]
      %v5672 = vld [vmem:[%s456 + $0x390] sm:$0xf]
      %v5673 = vld [vmem:[%s456 + $0x394] sm:$0xf]
      %v5674 = vld [vmem:[%s456 + $0x398] sm:$0xf]
      %v5675 = vld [vmem:[%s456 + $0x39c] sm:$0xf]
      %v5676 = vld [vmem:[%s456 + $0x3a0] sm:$0xf]
      %v5677 = vld [vmem:[%s456 + $0x3a4] sm:$0xf]
      %v5678 = vld [vmem:[%s456 + $0x3a8] sm:$0xf]
      %v5679 = vld [vmem:[%s456 + $0x3ac] sm:$0xf]
      %v5680 = vld [vmem:[%s456 + $0x3b0] sm:$0xf]
      %v5681 = vld [vmem:[%s456 + $0x3b4] sm:$0xf]
      %v5682 = vld [vmem:[%s456 + $0x3b8] sm:$0xf]
      %v5683 = vld [vmem:[%s456 + $0x3bc] sm:$0xf]
      %v5684 = vld [vmem:[%s456 + $0x3c0] sm:$0xf]
      %v5685 = vld [vmem:[%s456 + $0x3c4] sm:$0xf]
      %v5686 = vld [vmem:[%s456 + $0x3c8] sm:$0xf]
      %v5687 = vld [vmem:[%s456 + $0x3cc] sm:$0xf]
      %v5688 = vld [vmem:[%s456 + $0x3d0] sm:$0xf]
      %v5689 = vld [vmem:[%s456 + $0x3d4] sm:$0xf]
      %v5690 = vld [vmem:[%s456 + $0x3d8] sm:$0xf]
      %v5691 = vld [vmem:[%s456 + $0x3dc] sm:$0xf]
      %v5692 = vld [vmem:[%s456 + $0x3e0] sm:$0xf]
      %v5693 = vld [vmem:[%s456 + $0x3e4] sm:$0xf]
      %v5694 = vld [vmem:[%s456 + $0x3e8] sm:$0xf]
      %v5695 = vld [vmem:[%s456 + $0x3ec] sm:$0xf]
      %v5696 = vld [vmem:[%s456 + $0x3f0] sm:$0xf]
      %v5697 = vld [vmem:[%s456 + $0x3f4] sm:$0xf]
      %v5698 = vld [vmem:[%s456 + $0x3f8] sm:$0xf]
      %v5699 = vld [vmem:[%s456 + $0x3fc] sm:$0xf]
      %v5700 = vlaneseq
      %v5701 = vshrl.u32 %v5700, 7
      %v5702 = vsub.s32 3, %v5701
      %v5703 = vrot.slane %v466, %v5702
      %v5960 = vunpack.c.l.b16 %v5444
      %v5961 = vunpack.c.l.b16 %v5445
      %v5962 = vunpack.c.l.b16 %v5446
      %v5963 = vunpack.c.l.b16 %v5447
      %v5964 = vunpack.c.l.b16 %v5448
      %v5965 = vunpack.c.l.b16 %v5449
      %v5966 = vunpack.c.l.b16 %v5450
      %v5967 = vunpack.c.l.b16 %v5451
      %v5968 = vunpack.c.l.b16 %v5452
      %v5969 = vunpack.c.l.b16 %v5453
      %v5970 = vunpack.c.l.b16 %v5454
      %v5971 = vunpack.c.l.b16 %v5455
      %v5972 = vunpack.c.l.b16 %v5456
      %v5973 = vunpack.c.l.b16 %v5457
      %v5974 = vunpack.c.l.b16 %v5458
      %v5975 = vunpack.c.l.b16 %v5459
      %v5976 = vunpack.c.l.b16 %v5460
      %v5977 = vunpack.c.l.b16 %v5461
      %v5978 = vunpack.c.l.b16 %v5462
      %v5979 = vunpack.c.l.b16 %v5463
      %v5980 = vunpack.c.l.b16 %v5464
      %v5981 = vunpack.c.l.b16 %v5465
      %v5982 = vunpack.c.l.b16 %v5466
      %v5983 = vunpack.c.l.b16 %v5467
      %v5984 = vunpack.c.l.b16 %v5468
      %v5985 = vunpack.c.l.b16 %v5469
      %v5986 = vunpack.c.l.b16 %v5470
      %v5987 = vunpack.c.l.b16 %v5471
      %v5988 = vunpack.c.l.b16 %v5472
      %v5989 = vunpack.c.l.b16 %v5473
      %v5990 = vunpack.c.l.b16 %v5474
      %v5991 = vunpack.c.l.b16 %v5475
      %v5992 = vunpack.c.l.b16 %v5476
      %v5993 = vunpack.c.l.b16 %v5477
      %v5994 = vunpack.c.l.b16 %v5478
      %v5995 = vunpack.c.l.b16 %v5479
      %v5996 = vunpack.c.l.b16 %v5480
      %v5997 = vunpack.c.l.b16 %v5481
      %v5998 = vunpack.c.l.b16 %v5482
      %v5999 = vunpack.c.l.b16 %v5483
      %v6000 = vunpack.c.l.b16 %v5484
      %v6001 = vunpack.c.l.b16 %v5485
      %v6002 = vunpack.c.l.b16 %v5486
      %v6003 = vunpack.c.l.b16 %v5487
      %v6004 = vunpack.c.l.b16 %v5488
      %v6005 = vunpack.c.l.b16 %v5489
      %v6006 = vunpack.c.l.b16 %v5490
      %v6007 = vunpack.c.l.b16 %v5491
      %v6008 = vunpack.c.l.b16 %v5492
      %v6009 = vunpack.c.l.b16 %v5493
      %v6010 = vunpack.c.l.b16 %v5494
      %v6011 = vunpack.c.l.b16 %v5495
      %v6012 = vunpack.c.l.b16 %v5496
      %v6013 = vunpack.c.l.b16 %v5497
      %v6014 = vunpack.c.l.b16 %v5498
      %v6015 = vunpack.c.l.b16 %v5499
      %v6016 = vunpack.c.l.b16 %v5500
      %v6017 = vunpack.c.l.b16 %v5501
      %v6018 = vunpack.c.l.b16 %v5502
      %v6019 = vunpack.c.l.b16 %v5503
      %v6020 = vunpack.c.l.b16 %v5504
      %v6021 = vunpack.c.l.b16 %v5505
      %v6022 = vunpack.c.l.b16 %v5506
      %v6023 = vunpack.c.l.b16 %v5507
      %v6024 = vunpack.c.l.b16 %v5508
      %v6025 = vunpack.c.l.b16 %v5509
      %v6026 = vunpack.c.l.b16 %v5510
      %v6027 = vunpack.c.l.b16 %v5511
      %v6028 = vunpack.c.l.b16 %v5512
      %v6029 = vunpack.c.l.b16 %v5513
      %v6030 = vunpack.c.l.b16 %v5514
      %v6031 = vunpack.c.l.b16 %v5515
      %v6032 = vunpack.c.l.b16 %v5516
      %v6033 = vunpack.c.l.b16 %v5517
      %v6034 = vunpack.c.l.b16 %v5518
      %v6035 = vunpack.c.l.b16 %v5519
      %v6036 = vunpack.c.l.b16 %v5520
      %v6037 = vunpack.c.l.b16 %v5521
      %v6038 = vunpack.c.l.b16 %v5522
      %v6039 = vunpack.c.l.b16 %v5523
      %v6040 = vunpack.c.l.b16 %v5524
      %v6041 = vunpack.c.l.b16 %v5525
      %v6042 = vunpack.c.l.b16 %v5526
      %v6043 = vunpack.c.l.b16 %v5527
      %v6044 = vunpack.c.l.b16 %v5528
      %v6045 = vunpack.c.l.b16 %v5529
      %v6046 = vunpack.c.l.b16 %v5530
      %v6047 = vunpack.c.l.b16 %v5531
      %v6048 = vunpack.c.l.b16 %v5532
      %v6049 = vunpack.c.l.b16 %v5533
      %v6050 = vunpack.c.l.b16 %v5534
      %v6051 = vunpack.c.l.b16 %v5535
      %v6052 = vunpack.c.l.b16 %v5536
      %v6053 = vunpack.c.l.b16 %v5537
      %v6054 = vunpack.c.l.b16 %v5538
      %v6055 = vunpack.c.l.b16 %v5539
      %v6056 = vunpack.c.l.b16 %v5540
      %v6057 = vunpack.c.l.b16 %v5541
      %v6058 = vunpack.c.l.b16 %v5542
      %v6059 = vunpack.c.l.b16 %v5543
      %v6060 = vunpack.c.l.b16 %v5544
      %v6061 = vunpack.c.l.b16 %v5545
      %v6062 = vunpack.c.l.b16 %v5546
      %v6063 = vunpack.c.l.b16 %v5547
      %v6064 = vunpack.c.l.b16 %v5548
      %v6065 = vunpack.c.l.b16 %v5549
      %v6066 = vunpack.c.l.b16 %v5550
      %v6067 = vunpack.c.l.b16 %v5551
      %v6068 = vunpack.c.l.b16 %v5552
      %v6069 = vunpack.c.l.b16 %v5553
      %v6070 = vunpack.c.l.b16 %v5554
      %v6071 = vunpack.c.l.b16 %v5555
      %v6072 = vunpack.c.l.b16 %v5556
      %v6073 = vunpack.c.l.b16 %v5557
      %v6074 = vunpack.c.l.b16 %v5558
      %v6075 = vunpack.c.l.b16 %v5559
      %v6076 = vunpack.c.l.b16 %v5560
      %v6077 = vunpack.c.l.b16 %v5561
      %v6078 = vunpack.c.l.b16 %v5562
      %v6079 = vunpack.c.l.b16 %v5563
      %v6080 = vunpack.c.l.b16 %v5564
      %v6081 = vunpack.c.l.b16 %v5565
      %v6082 = vunpack.c.l.b16 %v5566
      %v6083 = vunpack.c.l.b16 %v5567
      %v6084 = vunpack.c.l.b16 %v5568
      %v6085 = vunpack.c.l.b16 %v5569
      %v6086 = vunpack.c.l.b16 %v5570
      %v6087 = vunpack.c.l.b16 %v5571
      %v6088 = vunpack.c.l.b16 %v5572
      %v6089 = vunpack.c.l.b16 %v5573
      %v6090 = vunpack.c.l.b16 %v5574
      %v6091 = vunpack.c.l.b16 %v5575
      %v6092 = vunpack.c.l.b16 %v5576
      %v6093 = vunpack.c.l.b16 %v5577
      %v6094 = vunpack.c.l.b16 %v5578
      %v6095 = vunpack.c.l.b16 %v5579
      %v6096 = vunpack.c.l.b16 %v5580
      %v6097 = vunpack.c.l.b16 %v5581
      %v6098 = vunpack.c.l.b16 %v5582
      %v6099 = vunpack.c.l.b16 %v5583
      %v6100 = vunpack.c.l.b16 %v5584
      %v6101 = vunpack.c.l.b16 %v5585
      %v6102 = vunpack.c.l.b16 %v5586
      %v6103 = vunpack.c.l.b16 %v5587
      %v6104 = vunpack.c.l.b16 %v5588
      %v6105 = vunpack.c.l.b16 %v5589
      %v6106 = vunpack.c.l.b16 %v5590
      %v6107 = vunpack.c.l.b16 %v5591
      %v6108 = vunpack.c.l.b16 %v5592
      %v6109 = vunpack.c.l.b16 %v5593
      %v6110 = vunpack.c.l.b16 %v5594
      %v6111 = vunpack.c.l.b16 %v5595
      %v6112 = vunpack.c.l.b16 %v5596
      %v6113 = vunpack.c.l.b16 %v5597
      %v6114 = vunpack.c.l.b16 %v5598
      %v6115 = vunpack.c.l.b16 %v5599
      %v6116 = vunpack.c.l.b16 %v5600
      %v6117 = vunpack.c.l.b16 %v5601
      %v6118 = vunpack.c.l.b16 %v5602
      %v6119 = vunpack.c.l.b16 %v5603
      %v6120 = vunpack.c.l.b16 %v5604
      %v6121 = vunpack.c.l.b16 %v5605
      %v6122 = vunpack.c.l.b16 %v5606
      %v6123 = vunpack.c.l.b16 %v5607
      %v6124 = vunpack.c.l.b16 %v5608
      %v6125 = vunpack.c.l.b16 %v5609
      %v6126 = vunpack.c.l.b16 %v5610
      %v6127 = vunpack.c.l.b16 %v5611
      %v6128 = vunpack.c.l.b16 %v5612
      %v6129 = vunpack.c.l.b16 %v5613
      %v6130 = vunpack.c.l.b16 %v5614
      %v6131 = vunpack.c.l.b16 %v5615
      %v6132 = vunpack.c.l.b16 %v5616
      %v6133 = vunpack.c.l.b16 %v5617
      %v6134 = vunpack.c.l.b16 %v5618
      %v6135 = vunpack.c.l.b16 %v5619
      %v6136 = vunpack.c.l.b16 %v5620
      %v6137 = vunpack.c.l.b16 %v5621
      %v6138 = vunpack.c.l.b16 %v5622
      %v6139 = vunpack.c.l.b16 %v5623
      %v6140 = vunpack.c.l.b16 %v5624
      %v6141 = vunpack.c.l.b16 %v5625
      %v6142 = vunpack.c.l.b16 %v5626
      %v6143 = vunpack.c.l.b16 %v5627
      %v6144 = vunpack.c.l.b16 %v5628
      %v6145 = vunpack.c.l.b16 %v5629
      %v6146 = vunpack.c.l.b16 %v5630
      %v6147 = vunpack.c.l.b16 %v5631
      %v6148 = vunpack.c.l.b16 %v5632
      %v6149 = vunpack.c.l.b16 %v5633
      %v6150 = vunpack.c.l.b16 %v5634
      %v6151 = vunpack.c.l.b16 %v5635
      %v6152 = vunpack.c.l.b16 %v5636
      %v6153 = vunpack.c.l.b16 %v5637
      %v6154 = vunpack.c.l.b16 %v5638
      %v6155 = vunpack.c.l.b16 %v5639
      %v6156 = vunpack.c.l.b16 %v5640
      %v6157 = vunpack.c.l.b16 %v5641
      %v6158 = vunpack.c.l.b16 %v5642
      %v6159 = vunpack.c.l.b16 %v5643
      %v6160 = vunpack.c.l.b16 %v5644
      %v6161 = vunpack.c.l.b16 %v5645
      %v6162 = vunpack.c.l.b16 %v5646
      %v6163 = vunpack.c.l.b16 %v5647
      %v6164 = vunpack.c.l.b16 %v5648
      %v6165 = vunpack.c.l.b16 %v5649
      %v6166 = vunpack.c.l.b16 %v5650
      %v6167 = vunpack.c.l.b16 %v5651
      %v6168 = vunpack.c.l.b16 %v5652
      %v6169 = vunpack.c.l.b16 %v5653
      %v6170 = vunpack.c.l.b16 %v5654
      %v6171 = vunpack.c.l.b16 %v5655
      %v6172 = vunpack.c.l.b16 %v5656
      %v6173 = vunpack.c.l.b16 %v5657
      %v6174 = vunpack.c.l.b16 %v5658
      %v6175 = vunpack.c.l.b16 %v5659
      %v6176 = vunpack.c.l.b16 %v5660
      %v6177 = vunpack.c.l.b16 %v5661
      %v6178 = vunpack.c.l.b16 %v5662
      %v6179 = vunpack.c.l.b16 %v5663
      %v6180 = vunpack.c.l.b16 %v5664
      %v6181 = vunpack.c.l.b16 %v5665
      %v6182 = vunpack.c.l.b16 %v5666
      %v6183 = vunpack.c.l.b16 %v5667
      %v6184 = vunpack.c.l.b16 %v5668
      %v6185 = vunpack.c.l.b16 %v5669
      %v6186 = vunpack.c.l.b16 %v5670
      %v6187 = vunpack.c.l.b16 %v5671
      %v6188 = vunpack.c.l.b16 %v5672
      %v6189 = vunpack.c.l.b16 %v5673
      %v6190 = vunpack.c.l.b16 %v5674
      %v6191 = vunpack.c.l.b16 %v5675
      %v6192 = vunpack.c.l.b16 %v5676
      %v6193 = vunpack.c.l.b16 %v5677
      %v6194 = vunpack.c.l.b16 %v5678
      %v6195 = vunpack.c.l.b16 %v5679
      %v6196 = vunpack.c.l.b16 %v5680
      %v6197 = vunpack.c.l.b16 %v5681
      %v6198 = vunpack.c.l.b16 %v5682
      %v6199 = vunpack.c.l.b16 %v5683
      %v6200 = vunpack.c.l.b16 %v5684
      %v6201 = vunpack.c.l.b16 %v5685
      %v6202 = vunpack.c.l.b16 %v5686
      %v6203 = vunpack.c.l.b16 %v5687
      %v6204 = vunpack.c.l.b16 %v5688
      %v6205 = vunpack.c.l.b16 %v5689
      %v6206 = vunpack.c.l.b16 %v5690
      %v6207 = vunpack.c.l.b16 %v5691
      %v6208 = vunpack.c.l.b16 %v5692
      %v6209 = vunpack.c.l.b16 %v5693
      %v6210 = vunpack.c.l.b16 %v5694
      %v6211 = vunpack.c.l.b16 %v5695
      %v6212 = vunpack.c.l.b16 %v5696
      %v6213 = vunpack.c.l.b16 %v5697
      %v6214 = vunpack.c.l.b16 %v5698
      %v6215 = vunpack.c.l.b16 %v5699
      %v6216 = vpack.c.b16 %v5961, %v5960
      %v6217 = vpack.c.b16 %v5963, %v5962
      %v6218 = vpack.c.b16 %v5965, %v5964
      %v6219 = vpack.c.b16 %v5967, %v5966
      %v6220 = vpack.c.b16 %v5969, %v5968
      %v6221 = vpack.c.b16 %v5971, %v5970
      %v6222 = vpack.c.b16 %v5973, %v5972
      %v6223 = vpack.c.b16 %v5975, %v5974
      %v6224 = vpack.c.b16 %v5977, %v5976
      %v6225 = vpack.c.b16 %v5979, %v5978
      %v6226 = vpack.c.b16 %v5981, %v5980
      %v6227 = vpack.c.b16 %v5983, %v5982
      %v6228 = vpack.c.b16 %v5985, %v5984
      %v6229 = vpack.c.b16 %v5987, %v5986
      %v6230 = vpack.c.b16 %v5989, %v5988
      %v6231 = vpack.c.b16 %v5991, %v5990
      %v6232 = vpack.c.b16 %v5993, %v5992
      %v6233 = vpack.c.b16 %v5995, %v5994
      %v6234 = vpack.c.b16 %v5997, %v5996
      %v6235 = vpack.c.b16 %v5999, %v5998
      %v6236 = vpack.c.b16 %v6001, %v6000
      %v6237 = vpack.c.b16 %v6003, %v6002
      %v6238 = vpack.c.b16 %v6005, %v6004
      %v6239 = vpack.c.b16 %v6007, %v6006
      %v6240 = vpack.c.b16 %v6009, %v6008
      %v6241 = vpack.c.b16 %v6011, %v6010
      %v6242 = vpack.c.b16 %v6013, %v6012
      %v6243 = vpack.c.b16 %v6015, %v6014
      %v6244 = vpack.c.b16 %v6017, %v6016
      %v6245 = vpack.c.b16 %v6019, %v6018
      %v6246 = vpack.c.b16 %v6021, %v6020
      %v6247 = vpack.c.b16 %v6023, %v6022
      %v6248 = vpack.c.b16 %v6025, %v6024
      %v6249 = vpack.c.b16 %v6027, %v6026
      %v6250 = vpack.c.b16 %v6029, %v6028
      %v6251 = vpack.c.b16 %v6031, %v6030
      %v6252 = vpack.c.b16 %v6033, %v6032
      %v6253 = vpack.c.b16 %v6035, %v6034
      %v6254 = vpack.c.b16 %v6037, %v6036
      %v6255 = vpack.c.b16 %v6039, %v6038
      %v6256 = vpack.c.b16 %v6041, %v6040
      %v6257 = vpack.c.b16 %v6043, %v6042
      %v6258 = vpack.c.b16 %v6045, %v6044
      %v6259 = vpack.c.b16 %v6047, %v6046
      %v6260 = vpack.c.b16 %v6049, %v6048
      %v6261 = vpack.c.b16 %v6051, %v6050
      %v6262 = vpack.c.b16 %v6053, %v6052
      %v6263 = vpack.c.b16 %v6055, %v6054
      %v6264 = vpack.c.b16 %v6057, %v6056
      %v6265 = vpack.c.b16 %v6059, %v6058
      %v6266 = vpack.c.b16 %v6061, %v6060
      %v6267 = vpack.c.b16 %v6063, %v6062
      %v6268 = vpack.c.b16 %v6065, %v6064
      %v6269 = vpack.c.b16 %v6067, %v6066
      %v6270 = vpack.c.b16 %v6069, %v6068
      %v6271 = vpack.c.b16 %v6071, %v6070
      %v6272 = vpack.c.b16 %v6073, %v6072
      %v6273 = vpack.c.b16 %v6075, %v6074
      %v6274 = vpack.c.b16 %v6077, %v6076
      %v6275 = vpack.c.b16 %v6079, %v6078
      %v6276 = vpack.c.b16 %v6081, %v6080
      %v6277 = vpack.c.b16 %v6083, %v6082
      %v6278 = vpack.c.b16 %v6085, %v6084
      %v6279 = vpack.c.b16 %v6087, %v6086
      %v6280 = vpack.c.b16 %v6089, %v6088
      %v6281 = vpack.c.b16 %v6091, %v6090
      %v6282 = vpack.c.b16 %v6093, %v6092
      %v6283 = vpack.c.b16 %v6095, %v6094
      %v6284 = vpack.c.b16 %v6097, %v6096
      %v6285 = vpack.c.b16 %v6099, %v6098
      %v6286 = vpack.c.b16 %v6101, %v6100
      %v6287 = vpack.c.b16 %v6103, %v6102
      %v6288 = vpack.c.b16 %v6105, %v6104
      %v6289 = vpack.c.b16 %v6107, %v6106
      %v6290 = vpack.c.b16 %v6109, %v6108
      %v6291 = vpack.c.b16 %v6111, %v6110
      %v6292 = vpack.c.b16 %v6113, %v6112
      %v6293 = vpack.c.b16 %v6115, %v6114
      %v6294 = vpack.c.b16 %v6117, %v6116
      %v6295 = vpack.c.b16 %v6119, %v6118
      %v6296 = vpack.c.b16 %v6121, %v6120
      %v6297 = vpack.c.b16 %v6123, %v6122
      %v6298 = vpack.c.b16 %v6125, %v6124
      %v6299 = vpack.c.b16 %v6127, %v6126
      %v6300 = vpack.c.b16 %v6129, %v6128
      %v6301 = vpack.c.b16 %v6131, %v6130
      %v6302 = vpack.c.b16 %v6133, %v6132
      %v6303 = vpack.c.b16 %v6135, %v6134
      %v6304 = vpack.c.b16 %v6137, %v6136
      %v6305 = vpack.c.b16 %v6139, %v6138
      %v6306 = vpack.c.b16 %v6141, %v6140
      %v6307 = vpack.c.b16 %v6143, %v6142
      %v6308 = vpack.c.b16 %v6145, %v6144
      %v6309 = vpack.c.b16 %v6147, %v6146
      %v6310 = vpack.c.b16 %v6149, %v6148
      %v6311 = vpack.c.b16 %v6151, %v6150
      %v6312 = vpack.c.b16 %v6153, %v6152
      %v6313 = vpack.c.b16 %v6155, %v6154
      %v6314 = vpack.c.b16 %v6157, %v6156
      %v6315 = vpack.c.b16 %v6159, %v6158
      %v6316 = vpack.c.b16 %v6161, %v6160
      %v6317 = vpack.c.b16 %v6163, %v6162
      %v6318 = vpack.c.b16 %v6165, %v6164
      %v6319 = vpack.c.b16 %v6167, %v6166
      %v6320 = vpack.c.b16 %v6169, %v6168
      %v6321 = vpack.c.b16 %v6171, %v6170
      %v6322 = vpack.c.b16 %v6173, %v6172
      %v6323 = vpack.c.b16 %v6175, %v6174
      %v6324 = vpack.c.b16 %v6177, %v6176
      %v6325 = vpack.c.b16 %v6179, %v6178
      %v6326 = vpack.c.b16 %v6181, %v6180
      %v6327 = vpack.c.b16 %v6183, %v6182
      %v6328 = vpack.c.b16 %v6185, %v6184
      %v6329 = vpack.c.b16 %v6187, %v6186
      %v6330 = vpack.c.b16 %v6189, %v6188
      %v6331 = vpack.c.b16 %v6191, %v6190
      %v6332 = vpack.c.b16 %v6193, %v6192
      %v6333 = vpack.c.b16 %v6195, %v6194
      %v6334 = vpack.c.b16 %v6197, %v6196
      %v6335 = vpack.c.b16 %v6199, %v6198
      %v6336 = vpack.c.b16 %v6201, %v6200
      %v6337 = vpack.c.b16 %v6203, %v6202
      %v6338 = vpack.c.b16 %v6205, %v6204
      %v6339 = vpack.c.b16 %v6207, %v6206
      %v6340 = vpack.c.b16 %v6209, %v6208
      %v6341 = vpack.c.b16 %v6211, %v6210
      %v6342 = vpack.c.b16 %v6213, %v6212
      %v6343 = vpack.c.b16 %v6215, %v6214
      %6472 = vmatprep.subr.bf16.mxu0 0
      %6473 = vmatpush1.bf16.msra.mxu0 %v6216
      %6474 = vmatprep.subr.bf16.mxu0 0
      %6475 = vmatpush1.bf16.msra.mxu0 %v6217
      %6476 = vmatprep.subr.bf16.mxu0 0
      %6477 = vmatpush1.bf16.msra.mxu0 %v6218
      %6478 = vmatprep.subr.bf16.mxu0 0
      %6479 = vmatpush1.bf16.msra.mxu0 %v6219
      %6480 = vmatprep.subr.bf16.mxu0 0
      %6481 = vmatpush1.bf16.msra.mxu0 %v6220
      %6482 = vmatprep.subr.bf16.mxu0 0
      %6483 = vmatpush1.bf16.msra.mxu0 %v6221
      %6484 = vmatprep.subr.bf16.mxu0 0
      %6485 = vmatpush1.bf16.msra.mxu0 %v6222
      %6486 = vmatprep.subr.bf16.mxu0 0
      %6487 = vmatpush1.bf16.msra.mxu0 %v6223
      %6488 = vmatprep.subr.bf16.mxu0 0
      %6489 = vmatpush1.bf16.msra.mxu0 %v6224
      %6490 = vmatprep.subr.bf16.mxu0 0
      %6491 = vmatpush1.bf16.msra.mxu0 %v6225
      %6492 = vmatprep.subr.bf16.mxu0 0
      %6493 = vmatpush1.bf16.msra.mxu0 %v6226
      %6494 = vmatprep.subr.bf16.mxu0 0
      %6495 = vmatpush1.bf16.msra.mxu0 %v6227
      %6496 = vmatprep.subr.bf16.mxu0 0
      %6497 = vmatpush1.bf16.msra.mxu0 %v6228
      %6498 = vmatprep.subr.bf16.mxu0 0
      %6499 = vmatpush1.bf16.msra.mxu0 %v6229
      %6500 = vmatprep.subr.bf16.mxu0 0
      %6501 = vmatpush1.bf16.msra.mxu0 %v6230
      %6502 = vmatprep.subr.bf16.mxu0 0
      %6503 = vmatpush1.bf16.msra.mxu0 %v6231
      %6504 = vmatprep.mubr.bf16.mxu0 %v5317
      %6505 = vmatmul.mubr.bf16.gmra.mrb[0].mxu0 %v5316
      %v6506 = vpop.f32.mrb[0].mxu0
      %v6507 = vadd.f32 %v5703, %v6506
      %v6508 = vpop.f32.mrb[0].mxu0
      %v6509 = vpop.f32.mrb[0].mxu0
      %v6510 = vadd.f32 %v5703, %v6509
      %v6511 = vpop.f32.mrb[0].mxu0
      %6512 = vmatprep.mubr.bf16.mxu0 %v5333
      %6513 = vmatmul.mubr.bf16.gmra.mrb[0].mxu0 %v5332
      %v6514 = vpop.f32.mrb[0].mxu0
      %v6515 = vadd.f32 %v5703, %v6514
      %v6516 = vpop.f32.mrb[0].mxu0
      %v6517 = vpop.f32.mrb[0].mxu0
      %v6518 = vadd.f32 %v5703, %v6517
      %v6519 = vpop.f32.mrb[0].mxu0
      %6520 = vmatprep.mubr.bf16.mxu0 %v5349
      %6521 = vmatmul.mubr.bf16.gmra.mrb[0].mxu0 %v5348
      %v6522 = vpop.f32.mrb[0].mxu0
      %v6523 = vadd.f32 %v5703, %v6522
      %v6524 = vpop.f32.mrb[0].mxu0
      %v6525 = vpop.f32.mrb[0].mxu0
      %v6526 = vadd.f32 %v5703, %v6525
      %v6527 = vpop.f32.mrb[0].mxu0
      %6528 = vmatprep.mubr.bf16.mxu0 %v5365
      %6529 = vmatmul.mubr.bf16.gmra.mrb[0].mxu0 %v5364
      %v6530 = vpop.f32.mrb[0].mxu0
      %v6531 = vadd.f32 %v5703, %v6530
      %v6532 = vpop.f32.mrb[0].mxu0
      %v6533 = vpop.f32.mrb[0].mxu0
      %v6534 = vadd.f32 %v5703, %v6533
      %v6535 = vpop.f32.mrb[0].mxu0
      %6536 = vmatprep.mubr.bf16.mxu0 %v5381
      %6537 = vmatmul.mubr.bf16.gmra.mrb[0].mxu0 %v5380
      %v6538 = vpop.f32.mrb[0].mxu0
      %v6539 = vadd.f32 %v5703, %v6538
      %v6540 = vpop.f32.mrb[0].mxu0
      %v6541 = vpop.f32.mrb[0].mxu0
      %v6542 = vadd.f32 %v5703, %v6541
      %v6543 = vpop.f32.mrb[0].mxu0
      %6544 = vmatprep.mubr.bf16.mxu0 %v5397
      %6545 = vmatmul.mubr.bf16.gmra.mrb[0].mxu0 %v5396
      %v6546 = vpop.f32.mrb[0].mxu0
      %v6547 = vadd.f32 %v5703, %v6546
      %v6548 = vpop.f32.mrb[0].mxu0
      %v6549 = vpop.f32.mrb[0].mxu0
      %v6550 = vadd.f32 %v5703, %v6549
      %v6551 = vpop.f32.mrb[0].mxu0
      %6552 = vmatprep.mubr.bf16.mxu0 %v5413
      %6553 = vmatmul.mubr.bf16.gmra.mrb[0].mxu0 %v5412
      %v6554 = vpop.f32.mrb[0].mxu0
      %v6555 = vadd.f32 %v5703, %v6554
      %v6556 = vpop.f32.mrb[0].mxu0
      %v6557 = vpop.f32.mrb[0].mxu0
      %v6558 = vadd.f32 %v5703, %v6557
      %v6559 = vpop.f32.mrb[0].mxu0
      %6560 = vmatprep.mubr.bf16.mxu0 %v5429
      %6561 = vmatmul.mubr.bf16.gmra.mrb[0].mxu0 %v5428
      %v6562 = vpop.f32.mrb[0].mxu0
      %v6563 = vadd.f32 %v5703, %v6562
      %v6564 = vpop.f32.mrb[0].mxu0
      %v6565 = vpop.f32.mrb[0].mxu0
      %v6566 = vadd.f32 %v5703, %v6565
      %v6567 = vpop.f32.mrb[0].mxu0
      %6568 = vdwg.mxu0
      %6569 = vmatprep.subr.bf16.mxu0 0
      %6570 = vmatpush1.bf16.msra.mxu0 %v6232
      %6571 = vmatprep.subr.bf16.mxu0 0
      %6572 = vmatpush1.bf16.msra.mxu0 %v6233
      %6573 = vmatprep.subr.bf16.mxu0 0
      %6574 = vmatpush1.bf16.msra.mxu0 %v6234
      %6575 = vmatprep.subr.bf16.mxu0 0
      %6576 = vmatpush1.bf16.msra.mxu0 %v6235
      %6577 = vmatprep.subr.bf16.mxu0 0
      %6578 = vmatpush1.bf16.msra.mxu0 %v6236
      %6579 = vmatprep.subr.bf16.mxu0 0
      %6580 = vmatpush1.bf16.msra.mxu0 %v6237
      %6581 = vmatprep.subr.bf16.mxu0 0
      %6582 = vmatpush1.bf16.msra.mxu0 %v6238
      %6583 = vmatprep.subr.bf16.mxu0 0
      %6584 = vmatpush1.bf16.msra.mxu0 %v6239
      %6585 = vmatprep.subr.bf16.mxu0 0
      %6586 = vmatpush1.bf16.msra.mxu0 %v6240
      %6587 = vmatprep.subr.bf16.mxu0 0
      %6588 = vmatpush1.bf16.msra.mxu0 %v6241
      %6589 = vmatprep.subr.bf16.mxu0 0
      %6590 = vmatpush1.bf16.msra.mxu0 %v6242
      %6591 = vmatprep.subr.bf16.mxu0 0
      %6592 = vmatpush1.bf16.msra.mxu0 %v6243
      %6593 = vmatprep.subr.bf16.mxu0 0
      %6594 = vmatpush1.bf16.msra.mxu0 %v6244
      %6595 = vmatprep.subr.bf16.mxu0 0
      %6596 = vmatpush1.bf16.msra.mxu0 %v6245
      %6597 = vmatprep.subr.bf16.mxu0 0
      %6598 = vmatpush1.bf16.msra.mxu0 %v6246
      %6599 = vmatprep.subr.bf16.mxu0 0
      %6600 = vmatpush1.bf16.msra.mxu0 %v6247
      %6601 = vmatprep.mubr.bf16.mxu0 %v5319
      %6602 = vmatmul.mubr.bf16.gmra.mrb[0].mxu0 %v5318
      %v6603 = vpop.f32.mrb[0].mxu0
      %v6604 = vadd.f32 %v6507, %v6603
      %v6605 = vpop.f32.mrb[0].mxu0
      %v6606 = vpop.f32.mrb[0].mxu0
      %v6607 = vadd.f32 %v6510, %v6606
      %v6608 = vpop.f32.mrb[0].mxu0
      %6609 = vmatprep.mubr.bf16.mxu0 %v5335
      %6610 = vmatmul.mubr.bf16.gmra.mrb[0].mxu0 %v5334
      %v6611 = vpop.f32.mrb[0].mxu0
      %v6612 = vadd.f32 %v6515, %v6611
      %v6613 = vpop.f32.mrb[0].mxu0
      %v6614 = vpop.f32.mrb[0].mxu0
      %v6615 = vadd.f32 %v6518, %v6614
      %v6616 = vpop.f32.mrb[0].mxu0
      %6617 = vmatprep.mubr.bf16.mxu0 %v5351
      %6618 = vmatmul.mubr.bf16.gmra.mrb[0].mxu0 %v5350
      %v6619 = vpop.f32.mrb[0].mxu0
      %v6620 = vadd.f32 %v6523, %v6619
      %v6621 = vpop.f32.mrb[0].mxu0
      %v6622 = vpop.f32.mrb[0].mxu0
      %v6623 = vadd.f32 %v6526, %v6622
      %v6624 = vpop.f32.mrb[0].mxu0
      %6625 = vmatprep.mubr.bf16.mxu0 %v5367
      %6626 = vmatmul.mubr.bf16.gmra.mrb[0].mxu0 %v5366
      %v6627 = vpop.f32.mrb[0].mxu0
      %v6628 = vadd.f32 %v6531, %v6627
      %v6629 = vpop.f32.mrb[0].mxu0
      %v6630 = vpop.f32.mrb[0].mxu0
      %v6631 = vadd.f32 %v6534, %v6630
      %v6632 = vpop.f32.mrb[0].mxu0
      %6633 = vmatprep.mubr.bf16.mxu0 %v5383
      %6634 = vmatmul.mubr.bf16.gmra.mrb[0].mxu0 %v5382
      %v6635 = vpop.f32.mrb[0].mxu0
      %v6636 = vadd.f32 %v6539, %v6635
      %v6637 = vpop.f32.mrb[0].mxu0
      %v6638 = vpop.f32.mrb[0].mxu0
      %v6639 = vadd.f32 %v6542, %v6638
      %v6640 = vpop.f32.mrb[0].mxu0
      %6641 = vmatprep.mubr.bf16.mxu0 %v5399
      %6642 = vmatmul.mubr.bf16.gmra.mrb[0].mxu0 %v5398
      %v6643 = vpop.f32.mrb[0].mxu0
      %v6644 = vadd.f32 %v6547, %v6643
      %v6645 = vpop.f32.mrb[0].mxu0
      %v6646 = vpop.f32.mrb[0].mxu0
      %v6647 = vadd.f32 %v6550, %v6646
      %v6648 = vpop.f32.mrb[0].mxu0
      %6649 = vmatprep.mubr.bf16.mxu0 %v5415
      %6650 = vmatmul.mubr.bf16.gmra.mrb[0].mxu0 %v5414
      %v6651 = vpop.f32.mrb[0].mxu0
      %v6652 = vadd.f32 %v6555, %v6651
      %v6653 = vpop.f32.mrb[0].mxu0
      %v6654 = vpop.f32.mrb[0].mxu0
      %v6655 = vadd.f32 %v6558, %v6654
      %v6656 = vpop.f32.mrb[0].mxu0
      %6657 = vmatprep.mubr.bf16.mxu0 %v5431
      %6658 = vmatmul.mubr.bf16.gmra.mrb[0].mxu0 %v5430
      %v6659 = vpop.f32.mrb[0].mxu0
      %v6660 = vadd.f32 %v6563, %v6659
      %v6661 = vpop.f32.mrb[0].mxu0
      %v6662 = vpop.f32.mrb[0].mxu0
      %v6663 = vadd.f32 %v6566, %v6662
      %v6664 = vpop.f32.mrb[0].mxu0
      %6665 = vdwg.mxu0
      %6666 = vmatprep.subr.bf16.mxu0 0
      %6667 = vmatpush1.bf16.msra.mxu0 %v6248
      %6668 = vmatprep.subr.bf16.mxu0 0
      %6669 = vmatpush1.bf16.msra.mxu0 %v6249
      %6670 = vmatprep.subr.bf16.mxu0 0
      %6671 = vmatpush1.bf16.msra.mxu0 %v6250
      %6672 = vmatprep.subr.bf16.mxu0 0
      %6673 = vmatpush1.bf16.msra.mxu0 %v6251
      %6674 = vmatprep.subr.bf16.mxu0 0
      %6675 = vmatpush1.bf16.msra.mxu0 %v6252
      %6676 = vmatprep.subr.bf16.mxu0 0
      %6677 = vmatpush1.bf16.msra.mxu0 %v6253
      %6678 = vmatprep.subr.bf16.mxu0 0
      %6679 = vmatpush1.bf16.msra.mxu0 %v6254
      %6680 = vmatprep.subr.bf16.mxu0 0
      %6681 = vmatpush1.bf16.msra.mxu0 %v6255
      %6682 = vmatprep.subr.bf16.mxu0 0
      %6683 = vmatpush1.bf16.msra.mxu0 %v6256
      %6684 = vmatprep.subr.bf16.mxu0 0
      %6685 = vmatpush1.bf16.msra.mxu0 %v6257
      %6686 = vmatprep.subr.bf16.mxu0 0
      %6687 = vmatpush1.bf16.msra.mxu0 %v6258
      %6688 = vmatprep.subr.bf16.mxu0 0
      %6689 = vmatpush1.bf16.msra.mxu0 %v6259
      %6690 = vmatprep.subr.bf16.mxu0 0
      %6691 = vmatpush1.bf16.msra.mxu0 %v6260
      %6692 = vmatprep.subr.bf16.mxu0 0
      %6693 = vmatpush1.bf16.msra.mxu0 %v6261
      %6694 = vmatprep.subr.bf16.mxu0 0
      %6695 = vmatpush1.bf16.msra.mxu0 %v6262
      %6696 = vmatprep.subr.bf16.mxu0 0
      %6697 = vmatpush1.bf16.msra.mxu0 %v6263
      %6698 = vmatprep.mubr.bf16.mxu0 %v5321
      %6699 = vmatmul.mubr.bf16.gmra.mrb[0].mxu0 %v5320
      %v6700 = vpop.f32.mrb[0].mxu0
      %v6701 = vadd.f32 %v6604, %v6700
      %v6702 = vpop.f32.mrb[0].mxu0
      %v6703 = vpop.f32.mrb[0].mxu0
      %v6704 = vadd.f32 %v6607, %v6703
      %v6705 = vpop.f32.mrb[0].mxu0
      %6706 = vmatprep.mubr.bf16.mxu0 %v5337
      %6707 = vmatmul.mubr.bf16.gmra.mrb[0].mxu0 %v5336
      %v6708 = vpop.f32.mrb[0].mxu0
      %v6709 = vadd.f32 %v6612, %v6708
      %v6710 = vpop.f32.mrb[0].mxu0
      %v6711 = vpop.f32.mrb[0].mxu0
      %v6712 = vadd.f32 %v6615, %v6711
      %v6713 = vpop.f32.mrb[0].mxu0
      %6714 = vmatprep.mubr.bf16.mxu0 %v5353
      %6715 = vmatmul.mubr.bf16.gmra.mrb[0].mxu0 %v5352
      %v6716 = vpop.f32.mrb[0].mxu0
      %v6717 = vadd.f32 %v6620, %v6716
      %v6718 = vpop.f32.mrb[0].mxu0
      %v6719 = vpop.f32.mrb[0].mxu0
      %v6720 = vadd.f32 %v6623, %v6719
      %v6721 = vpop.f32.mrb[0].mxu0
      %6722 = vmatprep.mubr.bf16.mxu0 %v5369
      %6723 = vmatmul.mubr.bf16.gmra.mrb[0].mxu0 %v5368
      %v6724 = vpop.f32.mrb[0].mxu0
      %v6725 = vadd.f32 %v6628, %v6724
      %v6726 = vpop.f32.mrb[0].mxu0
      %v6727 = vpop.f32.mrb[0].mxu0
      %v6728 = vadd.f32 %v6631, %v6727
      %v6729 = vpop.f32.mrb[0].mxu0
      %6730 = vmatprep.mubr.bf16.mxu0 %v5385
      %6731 = vmatmul.mubr.bf16.gmra.mrb[0].mxu0 %v5384
      %v6732 = vpop.f32.mrb[0].mxu0
      %v6733 = vadd.f32 %v6636, %v6732
      %v6734 = vpop.f32.mrb[0].mxu0
      %v6735 = vpop.f32.mrb[0].mxu0
      %v6736 = vadd.f32 %v6639, %v6735
      %v6737 = vpop.f32.mrb[0].mxu0
      %6738 = vmatprep.mubr.bf16.mxu0 %v5401
      %6739 = vmatmul.mubr.bf16.gmra.mrb[0].mxu0 %v5400
      %v6740 = vpop.f32.mrb[0].mxu0
      %v6741 = vadd.f32 %v6644, %v6740
      %v6742 = vpop.f32.mrb[0].mxu0
      %v6743 = vpop.f32.mrb[0].mxu0
      %v6744 = vadd.f32 %v6647, %v6743
      %v6745 = vpop.f32.mrb[0].mxu0
      %6746 = vmatprep.mubr.bf16.mxu0 %v5417
      %6747 = vmatmul.mubr.bf16.gmra.mrb[0].mxu0 %v5416
      %v6748 = vpop.f32.mrb[0].mxu0
      %v6749 = vadd.f32 %v6652, %v6748
      %v6750 = vpop.f32.mrb[0].mxu0
      %v6751 = vpop.f32.mrb[0].mxu0
      %v6752 = vadd.f32 %v6655, %v6751
      %v6753 = vpop.f32.mrb[0].mxu0
      %6754 = vmatprep.mubr.bf16.mxu0 %v5433
      %6755 = vmatmul.mubr.bf16.gmra.mrb[0].mxu0 %v5432
      %v6756 = vpop.f32.mrb[0].mxu0
      %v6757 = vadd.f32 %v6660, %v6756
      %v6758 = vpop.f32.mrb[0].mxu0
      %v6759 = vpop.f32.mrb[0].mxu0
      %v6760 = vadd.f32 %v6663, %v6759
      %v6761 = vpop.f32.mrb[0].mxu0
      %6762 = vdwg.mxu0
      %6763 = vmatprep.subr.bf16.mxu0 0
      %6764 = vmatpush1.bf16.msra.mxu0 %v6264
      %6765 = vmatprep.subr.bf16.mxu0 0
      %6766 = vmatpush1.bf16.msra.mxu0 %v6265
      %6767 = vmatprep.subr.bf16.mxu0 0
      %6768 = vmatpush1.bf16.msra.mxu0 %v6266
      %6769 = vmatprep.subr.bf16.mxu0 0
      %6770 = vmatpush1.bf16.msra.mxu0 %v6267
      %6771 = vmatprep.subr.bf16.mxu0 0
      %6772 = vmatpush1.bf16.msra.mxu0 %v6268
      %6773 = vmatprep.subr.bf16.mxu0 0
      %6774 = vmatpush1.bf16.msra.mxu0 %v6269
      %6775 = vmatprep.subr.bf16.mxu0 0
      %6776 = vmatpush1.bf16.msra.mxu0 %v6270
      %6777 = vmatprep.subr.bf16.mxu0 0
      %6778 = vmatpush1.bf16.msra.mxu0 %v6271
      %6779 = vmatprep.subr.bf16.mxu0 0
      %6780 = vmatpush1.bf16.msra.mxu0 %v6272
      %6781 = vmatprep.subr.bf16.mxu0 0
      %6782 = vmatpush1.bf16.msra.mxu0 %v6273
      %6783 = vmatprep.subr.bf16.mxu0 0
      %6784 = vmatpush1.bf16.msra.mxu0 %v6274
      %6785 = vmatprep.subr.bf16.mxu0 0
      %6786 = vmatpush1.bf16.msra.mxu0 %v6275
      %6787 = vmatprep.subr.bf16.mxu0 0
      %6788 = vmatpush1.bf16.msra.mxu0 %v6276
      %6789 = vmatprep.subr.bf16.mxu0 0
      %6790 = vmatpush1.bf16.msra.mxu0 %v6277
      %6791 = vmatprep.subr.bf16.mxu0 0
      %6792 = vmatpush1.bf16.msra.mxu0 %v6278
      %6793 = vmatprep.subr.bf16.mxu0 0
      %6794 = vmatpush1.bf16.msra.mxu0 %v6279
      %6795 = vmatprep.mubr.bf16.mxu0 %v5323
      %6796 = vmatmul.mubr.bf16.gmra.mrb[0].mxu0 %v5322
      %v6797 = vpop.f32.mrb[0].mxu0
      %v6798 = vadd.f32 %v6701, %v6797
      %v6799 = vpop.f32.mrb[0].mxu0
      %v6800 = vpop.f32.mrb[0].mxu0
      %v6801 = vadd.f32 %v6704, %v6800
      %v6802 = vpop.f32.mrb[0].mxu0
      %6803 = vmatprep.mubr.bf16.mxu0 %v5339
      %6804 = vmatmul.mubr.bf16.gmra.mrb[0].mxu0 %v5338
      %v6805 = vpop.f32.mrb[0].mxu0
      %v6806 = vadd.f32 %v6709, %v6805
      %v6807 = vpop.f32.mrb[0].mxu0
      %v6808 = vpop.f32.mrb[0].mxu0
      %v6809 = vadd.f32 %v6712, %v6808
      %v6810 = vpop.f32.mrb[0].mxu0
      %6811 = vmatprep.mubr.bf16.mxu0 %v5355
      %6812 = vmatmul.mubr.bf16.gmra.mrb[0].mxu0 %v5354
      %v6813 = vpop.f32.mrb[0].mxu0
      %v6814 = vadd.f32 %v6717, %v6813
      %v6815 = vpop.f32.mrb[0].mxu0
      %v6816 = vpop.f32.mrb[0].mxu0
      %v6817 = vadd.f32 %v6720, %v6816
      %v6818 = vpop.f32.mrb[0].mxu0
      %6819 = vmatprep.mubr.bf16.mxu0 %v5371
      %6820 = vmatmul.mubr.bf16.gmra.mrb[0].mxu0 %v5370
      %v6821 = vpop.f32.mrb[0].mxu0
      %v6822 = vadd.f32 %v6725, %v6821
      %v6823 = vpop.f32.mrb[0].mxu0
      %v6824 = vpop.f32.mrb[0].mxu0
      %v6825 = vadd.f32 %v6728, %v6824
      %v6826 = vpop.f32.mrb[0].mxu0
      %6827 = vmatprep.mubr.bf16.mxu0 %v5387
      %6828 = vmatmul.mubr.bf16.gmra.mrb[0].mxu0 %v5386
      %v6829 = vpop.f32.mrb[0].mxu0
      %v6830 = vadd.f32 %v6733, %v6829
      %v6831 = vpop.f32.mrb[0].mxu0
      %v6832 = vpop.f32.mrb[0].mxu0
      %v6833 = vadd.f32 %v6736, %v6832
      %v6834 = vpop.f32.mrb[0].mxu0
      %6835 = vmatprep.mubr.bf16.mxu0 %v5403
      %6836 = vmatmul.mubr.bf16.gmra.mrb[0].mxu0 %v5402
      %v6837 = vpop.f32.mrb[0].mxu0
      %v6838 = vadd.f32 %v6741, %v6837
      %v6839 = vpop.f32.mrb[0].mxu0
      %v6840 = vpop.f32.mrb[0].mxu0
      %v6841 = vadd.f32 %v6744, %v6840
      %v6842 = vpop.f32.mrb[0].mxu0
      %6843 = vmatprep.mubr.bf16.mxu0 %v5419
      %6844 = vmatmul.mubr.bf16.gmra.mrb[0].mxu0 %v5418
      %v6845 = vpop.f32.mrb[0].mxu0
      %v6846 = vadd.f32 %v6749, %v6845
      %v6847 = vpop.f32.mrb[0].mxu0
      %v6848 = vpop.f32.mrb[0].mxu0
      %v6849 = vadd.f32 %v6752, %v6848
      %v6850 = vpop.f32.mrb[0].mxu0
      %6851 = vmatprep.mubr.bf16.mxu0 %v5435
      %6852 = vmatmul.mubr.bf16.gmra.mrb[0].mxu0 %v5434
      %v6853 = vpop.f32.mrb[0].mxu0
      %v6854 = vadd.f32 %v6757, %v6853
      %v6855 = vpop.f32.mrb[0].mxu0
      %v6856 = vpop.f32.mrb[0].mxu0
      %v6857 = vadd.f32 %v6760, %v6856
      %v6858 = vpop.f32.mrb[0].mxu0
      %6859 = vdwg.mxu0
      %6860 = vmatprep.subr.bf16.mxu0 0
      %6861 = vmatpush1.bf16.msra.mxu0 %v6280
      %6862 = vmatprep.subr.bf16.mxu0 0
      %6863 = vmatpush1.bf16.msra.mxu0 %v6281
      %6864 = vmatprep.subr.bf16.mxu0 0
      %6865 = vmatpush1.bf16.msra.mxu0 %v6282
      %6866 = vmatprep.subr.bf16.mxu0 0
      %6867 = vmatpush1.bf16.msra.mxu0 %v6283
      %6868 = vmatprep.subr.bf16.mxu0 0
      %6869 = vmatpush1.bf16.msra.mxu0 %v6284
      %6870 = vmatprep.subr.bf16.mxu0 0
      %6871 = vmatpush1.bf16.msra.mxu0 %v6285
      %6872 = vmatprep.subr.bf16.mxu0 0
      %6873 = vmatpush1.bf16.msra.mxu0 %v6286
      %6874 = vmatprep.subr.bf16.mxu0 0
      %6875 = vmatpush1.bf16.msra.mxu0 %v6287
      %6876 = vmatprep.subr.bf16.mxu0 0
      %6877 = vmatpush1.bf16.msra.mxu0 %v6288
      %6878 = vmatprep.subr.bf16.mxu0 0
      %6879 = vmatpush1.bf16.msra.mxu0 %v6289
      %6880 = vmatprep.subr.bf16.mxu0 0
      %6881 = vmatpush1.bf16.msra.mxu0 %v6290
      %6882 = vmatprep.subr.bf16.mxu0 0
      %6883 = vmatpush1.bf16.msra.mxu0 %v6291
      %6884 = vmatprep.subr.bf16.mxu0 0
      %6885 = vmatpush1.bf16.msra.mxu0 %v6292
      %6886 = vmatprep.subr.bf16.mxu0 0
      %6887 = vmatpush1.bf16.msra.mxu0 %v6293
      %6888 = vmatprep.subr.bf16.mxu0 0
      %6889 = vmatpush1.bf16.msra.mxu0 %v6294
      %6890 = vmatprep.subr.bf16.mxu0 0
      %6891 = vmatpush1.bf16.msra.mxu0 %v6295
      %6892 = vmatprep.mubr.bf16.mxu0 %v5325
      %6893 = vmatmul.mubr.bf16.gmra.mrb[0].mxu0 %v5324
      %v6894 = vpop.f32.mrb[0].mxu0
      %v6895 = vadd.f32 %v6798, %v6894
      %v6896 = vpop.f32.mrb[0].mxu0
      %v6897 = vpop.f32.mrb[0].mxu0
      %v6898 = vadd.f32 %v6801, %v6897
      %v6899 = vpop.f32.mrb[0].mxu0
      %6900 = vmatprep.mubr.bf16.mxu0 %v5341
      %6901 = vmatmul.mubr.bf16.gmra.mrb[0].mxu0 %v5340
      %v6902 = vpop.f32.mrb[0].mxu0
      %v6903 = vadd.f32 %v6806, %v6902
      %v6904 = vpop.f32.mrb[0].mxu0
      %v6905 = vpop.f32.mrb[0].mxu0
      %v6906 = vadd.f32 %v6809, %v6905
      %v6907 = vpop.f32.mrb[0].mxu0
      %6908 = vmatprep.mubr.bf16.mxu0 %v5357
      %6909 = vmatmul.mubr.bf16.gmra.mrb[0].mxu0 %v5356
      %v6910 = vpop.f32.mrb[0].mxu0
      %v6911 = vadd.f32 %v6814, %v6910
      %v6912 = vpop.f32.mrb[0].mxu0
      %v6913 = vpop.f32.mrb[0].mxu0
      %v6914 = vadd.f32 %v6817, %v6913
      %v6915 = vpop.f32.mrb[0].mxu0
      %6916 = vmatprep.mubr.bf16.mxu0 %v5373
      %6917 = vmatmul.mubr.bf16.gmra.mrb[0].mxu0 %v5372
      %v6918 = vpop.f32.mrb[0].mxu0
      %v6919 = vadd.f32 %v6822, %v6918
      %v6920 = vpop.f32.mrb[0].mxu0
      %v6921 = vpop.f32.mrb[0].mxu0
      %v6922 = vadd.f32 %v6825, %v6921
      %v6923 = vpop.f32.mrb[0].mxu0
      %6924 = vmatprep.mubr.bf16.mxu0 %v5389
      %6925 = vmatmul.mubr.bf16.gmra.mrb[0].mxu0 %v5388
      %v6926 = vpop.f32.mrb[0].mxu0
      %v6927 = vadd.f32 %v6830, %v6926
      %v6928 = vpop.f32.mrb[0].mxu0
      %v6929 = vpop.f32.mrb[0].mxu0
      %v6930 = vadd.f32 %v6833, %v6929
      %v6931 = vpop.f32.mrb[0].mxu0
      %6932 = vmatprep.mubr.bf16.mxu0 %v5405
      %6933 = vmatmul.mubr.bf16.gmra.mrb[0].mxu0 %v5404
      %v6934 = vpop.f32.mrb[0].mxu0
      %v6935 = vadd.f32 %v6838, %v6934
      %v6936 = vpop.f32.mrb[0].mxu0
      %v6937 = vpop.f32.mrb[0].mxu0
      %v6938 = vadd.f32 %v6841, %v6937
      %v6939 = vpop.f32.mrb[0].mxu0
      %6940 = vmatprep.mubr.bf16.mxu0 %v5421
      %6941 = vmatmul.mubr.bf16.gmra.mrb[0].mxu0 %v5420
      %v6942 = vpop.f32.mrb[0].mxu0
      %v6943 = vadd.f32 %v6846, %v6942
      %v6944 = vpop.f32.mrb[0].mxu0
      %v6945 = vpop.f32.mrb[0].mxu0
      %v6946 = vadd.f32 %v6849, %v6945
      %v6947 = vpop.f32.mrb[0].mxu0
      %6948 = vmatprep.mubr.bf16.mxu0 %v5437
      %6949 = vmatmul.mubr.bf16.gmra.mrb[0].mxu0 %v5436
      %v6950 = vpop.f32.mrb[0].mxu0
      %v6951 = vadd.f32 %v6854, %v6950
      %v6952 = vpop.f32.mrb[0].mxu0
      %v6953 = vpop.f32.mrb[0].mxu0
      %v6954 = vadd.f32 %v6857, %v6953
      %v6955 = vpop.f32.mrb[0].mxu0
      %6956 = vdwg.mxu0
      %6957 = vmatprep.subr.bf16.mxu0 0
      %6958 = vmatpush1.bf16.msra.mxu0 %v6296
      %6959 = vmatprep.subr.bf16.mxu0 0
      %6960 = vmatpush1.bf16.msra.mxu0 %v6297
      %6961 = vmatprep.subr.bf16.mxu0 0
      %6962 = vmatpush1.bf16.msra.mxu0 %v6298
      %6963 = vmatprep.subr.bf16.mxu0 0
      %6964 = vmatpush1.bf16.msra.mxu0 %v6299
      %6965 = vmatprep.subr.bf16.mxu0 0
      %6966 = vmatpush1.bf16.msra.mxu0 %v6300
      %6967 = vmatprep.subr.bf16.mxu0 0
      %6968 = vmatpush1.bf16.msra.mxu0 %v6301
      %6969 = vmatprep.subr.bf16.mxu0 0
      %6970 = vmatpush1.bf16.msra.mxu0 %v6302
      %6971 = vmatprep.subr.bf16.mxu0 0
      %6972 = vmatpush1.bf16.msra.mxu0 %v6303
      %6973 = vmatprep.subr.bf16.mxu0 0
      %6974 = vmatpush1.bf16.msra.mxu0 %v6304
      %6975 = vmatprep.subr.bf16.mxu0 0
      %6976 = vmatpush1.bf16.msra.mxu0 %v6305
      %6977 = vmatprep.subr.bf16.mxu0 0
      %6978 = vmatpush1.bf16.msra.mxu0 %v6306
      %6979 = vmatprep.subr.bf16.mxu0 0
      %6980 = vmatpush1.bf16.msra.mxu0 %v6307
      %6981 = vmatprep.subr.bf16.mxu0 0
      %6982 = vmatpush1.bf16.msra.mxu0 %v6308
      %6983 = vmatprep.subr.bf16.mxu0 0
      %6984 = vmatpush1.bf16.msra.mxu0 %v6309
      %6985 = vmatprep.subr.bf16.mxu0 0
      %6986 = vmatpush1.bf16.msra.mxu0 %v6310
      %6987 = vmatprep.subr.bf16.mxu0 0
      %6988 = vmatpush1.bf16.msra.mxu0 %v6311
      %6989 = vmatprep.mubr.bf16.mxu0 %v5327
      %6990 = vmatmul.mubr.bf16.gmra.mrb[0].mxu0 %v5326
      %v6991 = vpop.f32.mrb[0].mxu0
      %v6992 = vadd.f32 %v6895, %v6991
      %v6993 = vpop.f32.mrb[0].mxu0
      %v6994 = vpop.f32.mrb[0].mxu0
      %v6995 = vadd.f32 %v6898, %v6994
      %v6996 = vpop.f32.mrb[0].mxu0
      %6997 = vmatprep.mubr.bf16.mxu0 %v5343
      %6998 = vmatmul.mubr.bf16.gmra.mrb[0].mxu0 %v5342
      %v6999 = vpop.f32.mrb[0].mxu0
      %v7000 = vadd.f32 %v6903, %v6999
      %v7001 = vpop.f32.mrb[0].mxu0
      %v7002 = vpop.f32.mrb[0].mxu0
      %v7003 = vadd.f32 %v6906, %v7002
      %v7004 = vpop.f32.mrb[0].mxu0
      %7005 = vmatprep.mubr.bf16.mxu0 %v5359
      %7006 = vmatmul.mubr.bf16.gmra.mrb[0].mxu0 %v5358
      %v7007 = vpop.f32.mrb[0].mxu0
      %v7008 = vadd.f32 %v6911, %v7007
      %v7009 = vpop.f32.mrb[0].mxu0
      %v7010 = vpop.f32.mrb[0].mxu0
      %v7011 = vadd.f32 %v6914, %v7010
      %v7012 = vpop.f32.mrb[0].mxu0
      %7013 = vmatprep.mubr.bf16.mxu0 %v5375
      %7014 = vmatmul.mubr.bf16.gmra.mrb[0].mxu0 %v5374
      %v7015 = vpop.f32.mrb[0].mxu0
      %v7016 = vadd.f32 %v6919, %v7015
      %v7017 = vpop.f32.mrb[0].mxu0
      %v7018 = vpop.f32.mrb[0].mxu0
      %v7019 = vadd.f32 %v6922, %v7018
      %v7020 = vpop.f32.mrb[0].mxu0
      %7021 = vmatprep.mubr.bf16.mxu0 %v5391
      %7022 = vmatmul.mubr.bf16.gmra.mrb[0].mxu0 %v5390
      %v7023 = vpop.f32.mrb[0].mxu0
      %v7024 = vadd.f32 %v6927, %v7023
      %v7025 = vpop.f32.mrb[0].mxu0
      %v7026 = vpop.f32.mrb[0].mxu0
      %v7027 = vadd.f32 %v6930, %v7026
      %v7028 = vpop.f32.mrb[0].mxu0
      %7029 = vmatprep.mubr.bf16.mxu0 %v5407
      %7030 = vmatmul.mubr.bf16.gmra.mrb[0].mxu0 %v5406
      %v7031 = vpop.f32.mrb[0].mxu0
      %v7032 = vadd.f32 %v6935, %v7031
      %v7033 = vpop.f32.mrb[0].mxu0
      %v7034 = vpop.f32.mrb[0].mxu0
      %v7035 = vadd.f32 %v6938, %v7034
      %v7036 = vpop.f32.mrb[0].mxu0
      %7037 = vmatprep.mubr.bf16.mxu0 %v5423
      %7038 = vmatmul.mubr.bf16.gmra.mrb[0].mxu0 %v5422
      %v7039 = vpop.f32.mrb[0].mxu0
      %v7040 = vadd.f32 %v6943, %v7039
      %v7041 = vpop.f32.mrb[0].mxu0
      %v7042 = vpop.f32.mrb[0].mxu0
      %v7043 = vadd.f32 %v6946, %v7042
      %v7044 = vpop.f32.mrb[0].mxu0
      %7045 = vmatprep.mubr.bf16.mxu0 %v5439
      %7046 = vmatmul.mubr.bf16.gmra.mrb[0].mxu0 %v5438
      %v7047 = vpop.f32.mrb[0].mxu0
      %v7048 = vadd.f32 %v6951, %v7047
      %v7049 = vpop.f32.mrb[0].mxu0
      %v7050 = vpop.f32.mrb[0].mxu0
      %v7051 = vadd.f32 %v6954, %v7050
      %v7052 = vpop.f32.mrb[0].mxu0
      %7053 = vdwg.mxu0
      %7054 = vmatprep.subr.bf16.mxu0 0
      %7055 = vmatpush1.bf16.msra.mxu0 %v6312
      %7056 = vmatprep.subr.bf16.mxu0 0
      %7057 = vmatpush1.bf16.msra.mxu0 %v6313
      %7058 = vmatprep.subr.bf16.mxu0 0
      %7059 = vmatpush1.bf16.msra.mxu0 %v6314
      %7060 = vmatprep.subr.bf16.mxu0 0
      %7061 = vmatpush1.bf16.msra.mxu0 %v6315
      %7062 = vmatprep.subr.bf16.mxu0 0
      %7063 = vmatpush1.bf16.msra.mxu0 %v6316
      %7064 = vmatprep.subr.bf16.mxu0 0
      %7065 = vmatpush1.bf16.msra.mxu0 %v6317
      %7066 = vmatprep.subr.bf16.mxu0 0
      %7067 = vmatpush1.bf16.msra.mxu0 %v6318
      %7068 = vmatprep.subr.bf16.mxu0 0
      %7069 = vmatpush1.bf16.msra.mxu0 %v6319
      %7070 = vmatprep.subr.bf16.mxu0 0
      %7071 = vmatpush1.bf16.msra.mxu0 %v6320
      %7072 = vmatprep.subr.bf16.mxu0 0
      %7073 = vmatpush1.bf16.msra.mxu0 %v6321
      %7074 = vmatprep.subr.bf16.mxu0 0
      %7075 = vmatpush1.bf16.msra.mxu0 %v6322
      %7076 = vmatprep.subr.bf16.mxu0 0
      %7077 = vmatpush1.bf16.msra.mxu0 %v6323
      %7078 = vmatprep.subr.bf16.mxu0 0
      %7079 = vmatpush1.bf16.msra.mxu0 %v6324
      %7080 = vmatprep.subr.bf16.mxu0 0
      %7081 = vmatpush1.bf16.msra.mxu0 %v6325
      %7082 = vmatprep.subr.bf16.mxu0 0
      %7083 = vmatpush1.bf16.msra.mxu0 %v6326
      %7084 = vmatprep.subr.bf16.mxu0 0
      %7085 = vmatpush1.bf16.msra.mxu0 %v6327
      %7086 = vmatprep.mubr.bf16.mxu0 %v5329
      %7087 = vmatmul.mubr.bf16.gmra.mrb[0].mxu0 %v5328
      %v7088 = vpop.f32.mrb[0].mxu0
      %v7089 = vadd.f32 %v6992, %v7088
      %v7090 = vpop.f32.mrb[0].mxu0
      %v7091 = vpop.f32.mrb[0].mxu0
      %v7092 = vadd.f32 %v6995, %v7091
      %v7093 = vpop.f32.mrb[0].mxu0
      %7094 = vmatprep.mubr.bf16.mxu0 %v5345
      %7095 = vmatmul.mubr.bf16.gmra.mrb[0].mxu0 %v5344
      %v7096 = vpop.f32.mrb[0].mxu0
      %v7097 = vadd.f32 %v7000, %v7096
      %v7098 = vpop.f32.mrb[0].mxu0
      %v7099 = vpop.f32.mrb[0].mxu0
      %v7100 = vadd.f32 %v7003, %v7099
      %v7101 = vpop.f32.mrb[0].mxu0
      %7102 = vmatprep.mubr.bf16.mxu0 %v5361
      %7103 = vmatmul.mubr.bf16.gmra.mrb[0].mxu0 %v5360
      %v7104 = vpop.f32.mrb[0].mxu0
      %v7105 = vadd.f32 %v7008, %v7104
      %v7106 = vpop.f32.mrb[0].mxu0
      %v7107 = vpop.f32.mrb[0].mxu0
      %v7108 = vadd.f32 %v7011, %v7107
      %v7109 = vpop.f32.mrb[0].mxu0
      %7110 = vmatprep.mubr.bf16.mxu0 %v5377
      %7111 = vmatmul.mubr.bf16.gmra.mrb[0].mxu0 %v5376
      %v7112 = vpop.f32.mrb[0].mxu0
      %v7113 = vadd.f32 %v7016, %v7112
      %v7114 = vpop.f32.mrb[0].mxu0
      %v7115 = vpop.f32.mrb[0].mxu0
      %v7116 = vadd.f32 %v7019, %v7115
      %v7117 = vpop.f32.mrb[0].mxu0
      %7118 = vmatprep.mubr.bf16.mxu0 %v5393
      %7119 = vmatmul.mubr.bf16.gmra.mrb[0].mxu0 %v5392
      %v7120 = vpop.f32.mrb[0].mxu0
      %v7121 = vadd.f32 %v7024, %v7120
      %v7122 = vpop.f32.mrb[0].mxu0
      %v7123 = vpop.f32.mrb[0].mxu0
      %v7124 = vadd.f32 %v7027, %v7123
      %v7125 = vpop.f32.mrb[0].mxu0
      %7126 = vmatprep.mubr.bf16.mxu0 %v5409
      %7127 = vmatmul.mubr.bf16.gmra.mrb[0].mxu0 %v5408
      %v7128 = vpop.f32.mrb[0].mxu0
      %v7129 = vadd.f32 %v7032, %v7128
      %v7130 = vpop.f32.mrb[0].mxu0
      %v7131 = vpop.f32.mrb[0].mxu0
      %v7132 = vadd.f32 %v7035, %v7131
      %v7133 = vpop.f32.mrb[0].mxu0
      %7134 = vmatprep.mubr.bf16.mxu0 %v5425
      %7135 = vmatmul.mubr.bf16.gmra.mrb[0].mxu0 %v5424
      %v7136 = vpop.f32.mrb[0].mxu0
      %v7137 = vadd.f32 %v7040, %v7136
      %v7138 = vpop.f32.mrb[0].mxu0
      %v7139 = vpop.f32.mrb[0].mxu0
      %v7140 = vadd.f32 %v7043, %v7139
      %v7141 = vpop.f32.mrb[0].mxu0
      %7142 = vmatprep.mubr.bf16.mxu0 %v5441
      %7143 = vmatmul.mubr.bf16.gmra.mrb[0].mxu0 %v5440
      %v7144 = vpop.f32.mrb[0].mxu0
      %v7145 = vadd.f32 %v7048, %v7144
      %v7146 = vpop.f32.mrb[0].mxu0
      %v7147 = vpop.f32.mrb[0].mxu0
      %v7148 = vadd.f32 %v7051, %v7147
      %v7149 = vpop.f32.mrb[0].mxu0
      %7150 = vdwg.mxu0
      %7151 = vmatprep.subr.bf16.mxu0 0
      %7152 = vmatpush1.bf16.msra.mxu0 %v6328
      %7153 = vmatprep.subr.bf16.mxu0 0
      %7154 = vmatpush1.bf16.msra.mxu0 %v6329
      %7155 = vmatprep.subr.bf16.mxu0 0
      %7156 = vmatpush1.bf16.msra.mxu0 %v6330
      %7157 = vmatprep.subr.bf16.mxu0 0
      %7158 = vmatpush1.bf16.msra.mxu0 %v6331
      %7159 = vmatprep.subr.bf16.mxu0 0
      %7160 = vmatpush1.bf16.msra.mxu0 %v6332
      %7161 = vmatprep.subr.bf16.mxu0 0
      %7162 = vmatpush1.bf16.msra.mxu0 %v6333
      %7163 = vmatprep.subr.bf16.mxu0 0
      %7164 = vmatpush1.bf16.msra.mxu0 %v6334
      %7165 = vmatprep.subr.bf16.mxu0 0
      %7166 = vmatpush1.bf16.msra.mxu0 %v6335
      %7167 = vmatprep.subr.bf16.mxu0 0
      %7168 = vmatpush1.bf16.msra.mxu0 %v6336
      %7169 = vmatprep.subr.bf16.mxu0 0
      %7170 = vmatpush1.bf16.msra.mxu0 %v6337
      %7171 = vmatprep.subr.bf16.mxu0 0
      %7172 = vmatpush1.bf16.msra.mxu0 %v6338
      %7173 = vmatprep.subr.bf16.mxu0 0
      %7174 = vmatpush1.bf16.msra.mxu0 %v6339
      %7175 = vmatprep.subr.bf16.mxu0 0
      %7176 = vmatpush1.bf16.msra.mxu0 %v6340
      %7177 = vmatprep.subr.bf16.mxu0 0
      %7178 = vmatpush1.bf16.msra.mxu0 %v6341
      %7179 = vmatprep.subr.bf16.mxu0 0
      %7180 = vmatpush1.bf16.msra.mxu0 %v6342
      %7181 = vmatprep.subr.bf16.mxu0 0
      %7182 = vmatpush1.bf16.msra.mxu0 %v6343
      %7183 = vmatprep.mubr.bf16.mxu0 %v5331
      %7184 = vmatmul.mubr.bf16.gmra.mrb[0].mxu0 %v5330
      %v7185 = vpop.f32.mrb[0].mxu0
      %v7186 = vadd.f32 %v7089, %v7185
      %v7187 = vpop.f32.mrb[0].mxu0
      %v7188 = vpop.f32.mrb[0].mxu0
      %v7189 = vadd.f32 %v7092, %v7188
      %v7190 = vpop.f32.mrb[0].mxu0
      %7191 = vmatprep.mubr.bf16.mxu0 %v5347
      %7192 = vmatmul.mubr.bf16.gmra.mrb[0].mxu0 %v5346
      %v7193 = vpop.f32.mrb[0].mxu0
      %v7194 = vadd.f32 %v7097, %v7193
      %v7195 = vpop.f32.mrb[0].mxu0
      %v7196 = vpop.f32.mrb[0].mxu0
      %v7197 = vadd.f32 %v7100, %v7196
      %v7198 = vpop.f32.mrb[0].mxu0
      %7199 = vmatprep.mubr.bf16.mxu0 %v5363
      %7200 = vmatmul.mubr.bf16.gmra.mrb[0].mxu0 %v5362
      %v7201 = vpop.f32.mrb[0].mxu0
      %v7202 = vadd.f32 %v7105, %v7201
      %v7203 = vpop.f32.mrb[0].mxu0
      %v7204 = vpop.f32.mrb[0].mxu0
      %v7205 = vadd.f32 %v7108, %v7204
      %v7206 = vpop.f32.mrb[0].mxu0
      %7207 = vmatprep.mubr.bf16.mxu0 %v5379
      %7208 = vmatmul.mubr.bf16.gmra.mrb[0].mxu0 %v5378
      %v7209 = vpop.f32.mrb[0].mxu0
      %v7210 = vadd.f32 %v7113, %v7209
      %v7211 = vpop.f32.mrb[0].mxu0
      %v7212 = vpop.f32.mrb[0].mxu0
      %v7213 = vadd.f32 %v7116, %v7212
      %v7214 = vpop.f32.mrb[0].mxu0
      %7215 = vmatprep.mubr.bf16.mxu0 %v5395
      %7216 = vmatmul.mubr.bf16.gmra.mrb[0].mxu0 %v5394
      %v7217 = vpop.f32.mrb[0].mxu0
      %v7218 = vadd.f32 %v7121, %v7217
      %v7219 = vpop.f32.mrb[0].mxu0
      %v7220 = vpop.f32.mrb[0].mxu0
      %v7221 = vadd.f32 %v7124, %v7220
      %v7222 = vpop.f32.mrb[0].mxu0
      %7223 = vmatprep.mubr.bf16.mxu0 %v5411
      %7224 = vmatmul.mubr.bf16.gmra.mrb[0].mxu0 %v5410
      %v7225 = vpop.f32.mrb[0].mxu0
      %v7226 = vadd.f32 %v7129, %v7225
      %v7227 = vpop.f32.mrb[0].mxu0
      %v7228 = vpop.f32.mrb[0].mxu0
      %v7229 = vadd.f32 %v7132, %v7228
      %v7230 = vpop.f32.mrb[0].mxu0
      %7231 = vmatprep.mubr.bf16.mxu0 %v5427
      %7232 = vmatmul.mubr.bf16.gmra.mrb[0].mxu0 %v5426
      %v7233 = vpop.f32.mrb[0].mxu0
      %v7234 = vadd.f32 %v7137, %v7233
      %v7235 = vpop.f32.mrb[0].mxu0
      %v7236 = vpop.f32.mrb[0].mxu0
      %v7237 = vadd.f32 %v7140, %v7236
      %v7238 = vpop.f32.mrb[0].mxu0
      %7239 = vmatprep.mubr.bf16.mxu0 %v5443
      %7240 = vmatmul.mubr.bf16.gmra.mrb[0].mxu0 %v5442
      %v7241 = vpop.f32.mrb[0].mxu0
      %v7242 = vadd.f32 %v7145, %v7241
      %v7243 = vpop.f32.mrb[0].mxu0
      %v7244 = vpop.f32.mrb[0].mxu0
      %v7245 = vadd.f32 %v7148, %v7244
      %v7246 = vpop.f32.mrb[0].mxu0
      %7247 = vdwg.mxu0
      %v7248 = vadd.f32 %v3832, %v7186
      %v7249 = vadd.f32 %v3833, %v7189
      %v7250 = vadd.f32 %v3834, %v7194
      %v7251 = vadd.f32 %v3835, %v7197
      %v7252 = vadd.f32 %v3836, %v7202
      %v7253 = vadd.f32 %v3837, %v7205
      %v7254 = vadd.f32 %v3838, %v7210
      %v7255 = vadd.f32 %v3839, %v7213
      %v7256 = vadd.f32 %v3840, %v7218
      %v7257 = vadd.f32 %v3841, %v7221
      %v7258 = vadd.f32 %v3842, %v7226
      %v7259 = vadd.f32 %v3843, %v7229
      %v7260 = vadd.f32 %v3844, %v7234
      %v7261 = vadd.f32 %v3845, %v7237
      %v7262 = vadd.f32 %v3846, %v7242
      %v7263 = vadd.f32 %v3847, %v7245
      %v7264 = vsel %vm543, %v7248, 0.0
      %7265 = vadd.xlane.f32.xlu0 %v7264
      %v7266 = vpop.xlane.xlu0 %7265
      %v7267 = vsel %vm543, %v7249, 0.0
      %7268 = vadd.xlane.f32.xlu0 %v7267
      %v7269 = vpop.xlane.xlu0 %7268
      %v7270 = vsel %vm543, %v7250, 0.0
      %7271 = vadd.xlane.f32.xlu0 %v7270
      %v7272 = vpop.xlane.xlu0 %7271
      %v7273 = vsel %vm543, %v7251, 0.0
      %7274 = vadd.xlane.f32.xlu0 %v7273
      %v7275 = vpop.xlane.xlu0 %7274
      %v7276 = vsel %vm543, %v7252, 0.0
      %7277 = vadd.xlane.f32.xlu0 %v7276
      %v7278 = vpop.xlane.xlu0 %7277
      %v7279 = vsel %vm543, %v7253, 0.0
      %7280 = vadd.xlane.f32.xlu0 %v7279
      %v7281 = vpop.xlane.xlu0 %7280
      %v7282 = vsel %vm543, %v7254, 0.0
      %7283 = vadd.xlane.f32.xlu0 %v7282
      %v7284 = vpop.xlane.xlu0 %7283
      %v7285 = vsel %vm543, %v7255, 0.0
      %7286 = vadd.xlane.f32.xlu0 %v7285
      %v7287 = vpop.xlane.xlu0 %7286
      %v7288 = vsel %vm543, %v7256, 0.0
      %7289 = vadd.xlane.f32.xlu0 %v7288
      %v7290 = vpop.xlane.xlu0 %7289
      %v7291 = vsel %vm543, %v7257, 0.0
      %7292 = vadd.xlane.f32.xlu0 %v7291
      %v7293 = vpop.xlane.xlu0 %7292
      %v7294 = vsel %vm543, %v7258, 0.0
      %7295 = vadd.xlane.f32.xlu0 %v7294
      %v7296 = vpop.xlane.xlu0 %7295
      %v7297 = vsel %vm543, %v7259, 0.0
      %7298 = vadd.xlane.f32.xlu0 %v7297
      %v7299 = vpop.xlane.xlu0 %7298
      %v7300 = vsel %vm543, %v7260, 0.0
      %7301 = vadd.xlane.f32.xlu0 %v7300
      %v7302 = vpop.xlane.xlu0 %7301
      %v7303 = vsel %vm543, %v7261, 0.0
      %7304 = vadd.xlane.f32.xlu0 %v7303
      %v7305 = vpop.xlane.xlu0 %7304
      %v7306 = vsel %vm543, %v7262, 0.0
      %7307 = vadd.xlane.f32.xlu0 %v7306
      %v7308 = vpop.xlane.xlu0 %7307
      %v7309 = vsel %vm543, %v7263, 0.0
      %7310 = vadd.xlane.f32.xlu0 %v7309
      %v7311 = vpop.xlane.xlu0 %7310
      %v7312 = vmul.f32 %v7266, %v3647
      %v7313 = vmul.f32 %v7269, %v3647
      %v7314 = vmul.f32 %v7272, %v3647
      %v7315 = vmul.f32 %v7275, %v3647
      %v7316 = vmul.f32 %v7278, %v3647
      %v7317 = vmul.f32 %v7281, %v3647
      %v7318 = vmul.f32 %v7284, %v3647
      %v7319 = vmul.f32 %v7287, %v3647
      %v7320 = vmul.f32 %v7290, %v3647
      %v7321 = vmul.f32 %v7293, %v3647
      %v7322 = vmul.f32 %v7296, %v3647
      %v7323 = vmul.f32 %v7299, %v3647
      %v7324 = vmul.f32 %v7302, %v3647
      %v7325 = vmul.f32 %v7305, %v3647
      %v7326 = vmul.f32 %v7308, %v3647
      %v7327 = vmul.f32 %v7311, %v3647
      %v7328 = vsub.f32 %v7248, %v7312
      %v7329 = vsub.f32 %v7249, %v7313
      %v7330 = vsub.f32 %v7250, %v7314
      %v7331 = vsub.f32 %v7251, %v7315
      %v7332 = vsub.f32 %v7252, %v7316
      %v7333 = vsub.f32 %v7253, %v7317
      %v7334 = vsub.f32 %v7254, %v7318
      %v7335 = vsub.f32 %v7255, %v7319
      %v7336 = vsub.f32 %v7256, %v7320
      %v7337 = vsub.f32 %v7257, %v7321
      %v7338 = vsub.f32 %v7258, %v7322
      %v7339 = vsub.f32 %v7259, %v7323
      %v7340 = vsub.f32 %v7260, %v7324
      %v7341 = vsub.f32 %v7261, %v7325
      %v7342 = vsub.f32 %v7262, %v7326
      %v7343 = vsub.f32 %v7263, %v7327
      %v7344 = vmul.f32 %v7328, %v7328
      %v7345 = vmul.f32 %v7329, %v7329
      %v7346 = vmul.f32 %v7330, %v7330
      %v7347 = vmul.f32 %v7331, %v7331
      %v7348 = vmul.f32 %v7332, %v7332
      %v7349 = vmul.f32 %v7333, %v7333
      %v7350 = vmul.f32 %v7334, %v7334
      %v7351 = vmul.f32 %v7335, %v7335
      %v7352 = vmul.f32 %v7336, %v7336
      %v7353 = vmul.f32 %v7337, %v7337
      %v7354 = vmul.f32 %v7338, %v7338
      %v7355 = vmul.f32 %v7339, %v7339
      %v7356 = vmul.f32 %v7340, %v7340
      %v7357 = vmul.f32 %v7341, %v7341
      %v7358 = vmul.f32 %v7342, %v7342
      %v7359 = vmul.f32 %v7343, %v7343
      %v7360 = vsel %vm543, %v7344, 0.0
      %7361 = vadd.xlane.f32.xlu0 %v7360
      %v7362 = vpop.xlane.xlu0 %7361
      %v7363 = vsel %vm543, %v7345, 0.0
      %7364 = vadd.xlane.f32.xlu0 %v7363
      %v7365 = vpop.xlane.xlu0 %7364
      %v7366 = vsel %vm543, %v7346, 0.0
      %7367 = vadd.xlane.f32.xlu0 %v7366
      %v7368 = vpop.xlane.xlu0 %7367
      %v7369 = vsel %vm543, %v7347, 0.0
      %7370 = vadd.xlane.f32.xlu0 %v7369
      %v7371 = vpop.xlane.xlu0 %7370
      %v7372 = vsel %vm543, %v7348, 0.0
      %7373 = vadd.xlane.f32.xlu0 %v7372
      %v7374 = vpop.xlane.xlu0 %7373
      %v7375 = vsel %vm543, %v7349, 0.0
      %7376 = vadd.xlane.f32.xlu0 %v7375
      %v7377 = vpop.xlane.xlu0 %7376
      %v7378 = vsel %vm543, %v7350, 0.0
      %7379 = vadd.xlane.f32.xlu0 %v7378
      %v7380 = vpop.xlane.xlu0 %7379
      %v7381 = vsel %vm543, %v7351, 0.0
      %7382 = vadd.xlane.f32.xlu0 %v7381
      %v7383 = vpop.xlane.xlu0 %7382
      %v7384 = vsel %vm543, %v7352, 0.0
      %7385 = vadd.xlane.f32.xlu0 %v7384
      %v7386 = vpop.xlane.xlu0 %7385
      %v7387 = vsel %vm543, %v7353, 0.0
      %7388 = vadd.xlane.f32.xlu0 %v7387
      %v7389 = vpop.xlane.xlu0 %7388
      %v7390 = vsel %vm543, %v7354, 0.0
      %7391 = vadd.xlane.f32.xlu0 %v7390
      %v7392 = vpop.xlane.xlu0 %7391
      %v7393 = vsel %vm543, %v7355, 0.0
      %7394 = vadd.xlane.f32.xlu0 %v7393
      %v7395 = vpop.xlane.xlu0 %7394
      %v7396 = vsel %vm543, %v7356, 0.0
      %7397 = vadd.xlane.f32.xlu0 %v7396
      %v7398 = vpop.xlane.xlu0 %7397
      %v7399 = vsel %vm543, %v7357, 0.0
      %7400 = vadd.xlane.f32.xlu0 %v7399
      %v7401 = vpop.xlane.xlu0 %7400
      %v7402 = vsel %vm543, %v7358, 0.0
      %7403 = vadd.xlane.f32.xlu0 %v7402
      %v7404 = vpop.xlane.xlu0 %7403
      %v7405 = vsel %vm543, %v7359, 0.0
      %7406 = vadd.xlane.f32.xlu0 %v7405
      %v7407 = vpop.xlane.xlu0 %7406
      %v7408 = vmul.f32 %v7362, %v3647
      %v7409 = vmul.f32 %v7365, %v3647
      %v7410 = vmul.f32 %v7368, %v3647
      %v7411 = vmul.f32 %v7371, %v3647
      %v7412 = vmul.f32 %v7374, %v3647
      %v7413 = vmul.f32 %v7377, %v3647
      %v7414 = vmul.f32 %v7380, %v3647
      %v7415 = vmul.f32 %v7383, %v3647
      %v7416 = vmul.f32 %v7386, %v3647
      %v7417 = vmul.f32 %v7389, %v3647
      %v7418 = vmul.f32 %v7392, %v3647
      %v7419 = vmul.f32 %v7395, %v3647
      %v7420 = vmul.f32 %v7398, %v3647
      %v7421 = vmul.f32 %v7401, %v3647
      %v7422 = vmul.f32 %v7404, %v3647
      %v7423 = vmul.f32 %v7407, %v3647
      %v7424 = vadd.f32 %v7408, 1e-05
      %v7425 = vadd.f32 %v7409, 1e-05
      %v7426 = vadd.f32 %v7410, 1e-05
      %v7427 = vadd.f32 %v7411, 1e-05
      %v7428 = vadd.f32 %v7412, 1e-05
      %v7429 = vadd.f32 %v7413, 1e-05
      %v7430 = vadd.f32 %v7414, 1e-05
      %v7431 = vadd.f32 %v7415, 1e-05
      %v7432 = vadd.f32 %v7416, 1e-05
      %v7433 = vadd.f32 %v7417, 1e-05
      %v7434 = vadd.f32 %v7418, 1e-05
      %v7435 = vadd.f32 %v7419, 1e-05
      %v7436 = vadd.f32 %v7420, 1e-05
      %v7437 = vadd.f32 %v7421, 1e-05
      %v7438 = vadd.f32 %v7422, 1e-05
      %v7439 = vadd.f32 %v7423, 1e-05
      %v7440 = vrsqrt.pop %v7424
      %v7441 = vrsqrt.pop %v7425
      %v7442 = vrsqrt.pop %v7426
      %v7443 = vrsqrt.pop %v7427
      %v7444 = vrsqrt.pop %v7428
      %v7445 = vrsqrt.pop %v7429
      %v7446 = vrsqrt.pop %v7430
      %v7447 = vrsqrt.pop %v7431
      %v7448 = vrsqrt.pop %v7432
      %v7449 = vrsqrt.pop %v7433
      %v7450 = vrsqrt.pop %v7434
      %v7451 = vrsqrt.pop %v7435
      %v7452 = vrsqrt.pop %v7436
      %v7453 = vrsqrt.pop %v7437
      %v7454 = vrsqrt.pop %v7438
      %v7455 = vrsqrt.pop %v7439
      %v7456 = vmul.f32 %v7328, %v7440
      %v7457 = vmul.f32 %v7329, %v7441
      %v7458 = vmul.f32 %v7330, %v7442
      %v7459 = vmul.f32 %v7331, %v7443
      %v7460 = vmul.f32 %v7332, %v7444
      %v7461 = vmul.f32 %v7333, %v7445
      %v7462 = vmul.f32 %v7334, %v7446
      %v7463 = vmul.f32 %v7335, %v7447
      %v7464 = vmul.f32 %v7336, %v7448
      %v7465 = vmul.f32 %v7337, %v7449
      %v7466 = vmul.f32 %v7338, %v7450
      %v7467 = vmul.f32 %v7339, %v7451
      %v7468 = vmul.f32 %v7340, %v7452
      %v7469 = vmul.f32 %v7341, %v7453
      %v7470 = vmul.f32 %v7342, %v7454
      %v7471 = vmul.f32 %v7343, %v7455
      %v7472 = vlaneseq
      %v7473 = vshrl.u32 %v7472, 7
      %v7474 = vsub.s32 6, %v7473
      %v7475 = vrot.slane %v466, %v7474
      %v7476 = vmul.f32 %v7456, %v7475
      %v7477 = vmul.f32 %v7457, %v7475
      %v7478 = vmul.f32 %v7458, %v7475
      %v7479 = vmul.f32 %v7459, %v7475
      %v7480 = vmul.f32 %v7460, %v7475
      %v7481 = vmul.f32 %v7461, %v7475
      %v7482 = vmul.f32 %v7462, %v7475
      %v7483 = vmul.f32 %v7463, %v7475
      %v7484 = vmul.f32 %v7464, %v7475
      %v7485 = vmul.f32 %v7465, %v7475
      %v7486 = vmul.f32 %v7466, %v7475
      %v7487 = vmul.f32 %v7467, %v7475
      %v7488 = vmul.f32 %v7468, %v7475
      %v7489 = vmul.f32 %v7469, %v7475
      %v7490 = vmul.f32 %v7470, %v7475
      %v7491 = vmul.f32 %v7471, %v7475
      %v7492 = vlaneseq
      %v7493 = vshrl.u32 %v7492, 7
      %v7494 = vsub.s32 7, %v7493
      %v7495 = vrot.slane %v466, %v7494
      %v7496 = vadd.f32 %v7476, %v7495
      %v7497 = vadd.f32 %v7477, %v7495
      %v7498 = vadd.f32 %v7478, %v7495
      %v7499 = vadd.f32 %v7479, %v7495
      %v7500 = vadd.f32 %v7480, %v7495
      %v7501 = vadd.f32 %v7481, %v7495
      %v7502 = vadd.f32 %v7482, %v7495
      %v7503 = vadd.f32 %v7483, %v7495
      %v7504 = vadd.f32 %v7484, %v7495
      %v7505 = vadd.f32 %v7485, %v7495
      %v7506 = vadd.f32 %v7486, %v7495
      %v7507 = vadd.f32 %v7487, %v7495
      %v7508 = vadd.f32 %v7488, %v7495
      %v7509 = vadd.f32 %v7489, %v7495
      %v7510 = vadd.f32 %v7490, %v7495
      %v7511 = vadd.f32 %v7491, %v7495
      %v7512 = vsel %vm543, %v7496, 0.0
      %v7513 = vsel %vm543, %v7497, 0.0
      %v7514 = vadd.f32 %v7512, %v7513
      %v7515 = vsel %vm543, %v7498, 0.0
      %v7516 = vadd.f32 %v7514, %v7515
      %v7517 = vsel %vm543, %v7499, 0.0
      %v7518 = vadd.f32 %v7516, %v7517
      %v7519 = vsel %vm543, %v7500, 0.0
      %v7520 = vadd.f32 %v7518, %v7519
      %v7521 = vsel %vm543, %v7501, 0.0
      %v7522 = vadd.f32 %v7520, %v7521
      %v7523 = vsel %vm543, %v7502, 0.0
      %v7524 = vadd.f32 %v7522, %v7523
      %v7525 = vsel %vm543, %v7503, 0.0
      %v7526 = vadd.f32 %v7524, %v7525
      %v7527 = vrot.slane %v7526, 4
      %v7528 = vadd.f32 %v7526, %v7527
      %v7529 = vrot.slane %v7528, 2
      %v7530 = vadd.f32 %v7528, %v7529
      %v7531 = vrot.slane %v7530, 1
      %v7532 = vadd.f32 %v7530, %v7531
      %v7533 = vsel %vm543, %v7504, 0.0
      %v7534 = vsel %vm543, %v7505, 0.0
      %v7535 = vadd.f32 %v7533, %v7534
      %v7536 = vsel %vm543, %v7506, 0.0
      %v7537 = vadd.f32 %v7535, %v7536
      %v7538 = vsel %vm543, %v7507, 0.0
      %v7539 = vadd.f32 %v7537, %v7538
      %v7540 = vsel %vm543, %v7508, 0.0
      %v7541 = vadd.f32 %v7539, %v7540
      %v7542 = vsel %vm543, %v7509, 0.0
      %v7543 = vadd.f32 %v7541, %v7542
      %v7544 = vsel %vm543, %v7510, 0.0
      %v7545 = vadd.f32 %v7543, %v7544
      %v7546 = vsel %vm543, %v7511, 0.0
      %v7547 = vadd.f32 %v7545, %v7546
      %v7548 = vrot.slane %v7547, 4
      %v7549 = vadd.f32 %v7547, %v7548
      %v7550 = vrot.slane %v7549, 2
      %v7551 = vadd.f32 %v7549, %v7550
      %v7552 = vrot.slane %v7551, 1
      %v7553 = vadd.f32 %v7551, %v7552
      %v7554 = vrcp.pop 64.0
      %v7555 = vmul.f32 %v7532, %v7554
      %v7556 = vmul.f32 %v7553, %v7554
      %vm7559 = vcmask 1041409
      %v7560 = vsel %vm7559, %v7556, %v7555
      %vm7562 = vcmask 254976
      %7563 = vst.msk [vmem:[%s464] sm:$0x3] %vm7562, %v7560
      %p7564 = scmp.lt.s32.totalorder %s20, 1
      %s7565 = scalar_select %p7564, %s20, 1
      %s7566 = smul.addr %s7565, 2
      %s7567 = scalar_lea.vmem %s9, %s7566
      // Predicated region
      $region57: #{model_forward.1} parent=55 // pred_check
        %p7568 = pneg %p267
      $region58: #{model_forward.1} parent=55 // pred_check_branch
        %7570 = sbr.rel (%p7568) target = $region60
      $region59: #{model_forward.1} parent=55 // pred_region
        _
      $region60: #{model_forward.1} parent=55 // pred_fallthru
        _
    $region56: #{model_forward.1} parent=5 // pred_fallthru
      _
    %p7571 = scmp.le.s32.totalorder 2, %s15
    // Predicated region
    $region61: #{model_forward.1} parent=5 // pred_check
      %p7572 = pneg %p7571
    $region62: #{model_forward.1} parent=5 // pred_check_branch
      %7574 = sbr.rel (%p7572) target = $region64
    $region63: #{model_forward.1} parent=5 // pred_region
      %s7575 = ssub.s32 %s15, 2
      // Predicated region
      $region65: #{model_forward.1} parent=63 // pred_check
        %p7576 = pneg %p273
      $region66: #{model_forward.1} parent=63 // pred_check_branch
        %7578 = sbr.rel (%p7576) target = $region68
      $region67: #{model_forward.1} parent=63 // pred_region
        %p7579 = scmp.lt.s32.totalorder %s21, 1
        %s7580 = scalar_select %p7579, %s21, 1
        %s7581 = smul.addr %s7580, 2
        %s7582 = scalar_lea.vmem %s9, %s7581
      $region68: #{model_forward.1} parent=63 // pred_fallthru
        _
    $region64: #{model_forward.1} parent=5 // pred_fallthru
      _
  $region6: #{model_forward.1} parent=0 // loop_footer
    %s19 = sadd.s32 1, %s15
  $region7: #{model_forward.1} parent=0 // loop_footer_branch
    %14 = sbr.rel target = $region3
  $region8: #{model_forward.1} parent=0 // loop_exit
    _

</llo_original>
